<compile_context>
chip_gen: v5e
topology: v5e:2x2
jax: 0.10.0
libtpu: 0.0.40
codegen_flags: <defaults>
</compile_context>

<pallas_src>
import functools
import math

import jax
import jax.numpy as jnp
import numpy as np
from jax.experimental import pallas as pl
from jax.experimental.pallas import tpu as pltpu

CODEBOOK_SIZE = 2 ** 8
QUANTIZE_DIM = int(math.log2(CODEBOOK_SIZE))  # 8

_SQRT_HALF = 0.7071067811865476


# ---------------------------------------------------------------------------
# In-kernel math helpers (operate on flat (H*W, C) f32 values)
# ---------------------------------------------------------------------------
def _erf(x):
    # Abramowitz & Stegun 7.1.26 rational approximation (max abs err ~1.5e-7).
    a1, a2, a3, a4, a5 = (0.254829592, -0.284496736, 1.421413741,
                          -1.453152027, 1.061405429)
    p = 0.3275911
    s = jnp.where(x >= 0.0, 1.0, -1.0)
    ax = jnp.abs(x)
    t = 1.0 / (1.0 + p * ax)
    poly = ((((a5 * t + a4) * t + a3) * t + a2) * t + a1) * t
    return s * (1.0 - poly * jnp.exp(-ax * ax))


def _gelu(x):
    return 0.5 * x * (1.0 + _erf(x * _SQRT_HALF))


def _taps3x3(x, tapmask, W):
    """x: (H*W, C) row-major flat activation.  Returns the 9 zero-padded 3x3
    neighbourhood taps, each (H*W, C), built with circular sublane rolls whose
    wrapped / out-of-image entries are zeroed by the precomputed tap mask."""
    HW = x.shape[0]
    taps = []
    k = 0
    for dh in (-1, 0, 1):
        for dw in (-1, 0, 1):
            s = dh * W + dw                       # flat offset of this tap
            t = x if s == 0 else pltpu.roll(x, (-s) % HW, axis=0)  # t[r] = x[r + s]
            if not (dh == 0 and dw == 0):
                t = t * tapmask[:, k:k + 1]       # zero padding / wrap masking
            taps.append(t)
            k += 1
    return taps


def _conv3x3_mxu(x, w_ref, b_ref, tapmask, W):
    """General 3x3 conv: one im2col MXU matmul with K = 9*Cin."""
    patch = jnp.concatenate(_taps3x3(x, tapmask, W), axis=1)      # (HW, 9*Cin)
    acc = jnp.dot(patch, w_ref[...], preferred_element_type=jnp.float32)
    return acc + b_ref[...]


def _conv3x3_cin1(x, w_ref, b_ref, tapmask, W):
    """Cin == 1 (encoder conv1): 9 VPU broadcast FMAs instead of a K=9 MXU dot."""
    taps = _taps3x3(x, tapmask, W)                                # 9 x (HW, 1)
    acc = taps[0] * w_ref[0:1, :]
    for k in range(1, 9):
        acc = acc + taps[k] * w_ref[k:k + 1, :]                   # (HW,1)*(1,Cout)
    return acc + b_ref[...]


def _conv3x3_cout1(x, wrow_ref, b_ref, tapmask, W):
    """Cout == 1 (decoder conv3): per-tap VPU FMAs + a single Cin-wide lane reduction.
    Avoids materializing the (HW, 9*Cin) patch and avoids an N=1 MXU dot."""
    taps = _taps3x3(x, tapmask, W)                                # 9 x (HW, Cin)
    cin = x.shape[1]
    acc = taps[0] * wrow_ref[0:1, 0:cin]
    for k in range(1, 9):
        acc = acc + taps[k] * wrow_ref[0:1, k * cin:(k + 1) * cin]
    return jnp.sum(acc, axis=1, keepdims=True) + b_ref[...]       # (HW, 1)


def _maxpool2x2(x, sel_ref, W):
    """2x2/stride-2 max pool on a flat (H*W, C) map: 2 rolls + max gather the 2x2
    window onto its top-left pixel, then a one-hot matmul subsamples those pixels."""
    HW = x.shape[0]
    m = jnp.maximum(x, pltpu.roll(x, HW - 1, axis=0))             # pair (r, r+1)
    m = jnp.maximum(m, pltpu.roll(m, HW - W, axis=0))             # + rows r+W, r+W+1
    return jnp.dot(sel_ref[...], m, preferred_element_type=jnp.float32)


# ---------------------------------------------------------------------------
# Fused forward kernel: one batch element per grid step, everything in VMEM
# ---------------------------------------------------------------------------
def _lfq_ae_kernel(x_ref,
                   w1_ref, b1_ref, w2_ref, b2_ref, w3_ref, b3_ref,
                   w4_ref, b4_ref, w5_ref, b5_ref, w6_ref, b6_ref,
                   tmf_ref, tmh_ref, pool1_ref, pool2_ref, up1_ref, up2_ref,
                   lfqw_ref,
                   out_ref, idx_ref, *, H, W):
    Wh = W // 2
    tmf = tmf_ref[...]          # (H*W, 9)     tap validity masks, full resolution
    tmh = tmh_ref[...]          # (H*W//4, 9)  tap validity masks, half resolution

    # ------------------------------ encoder ------------------------------
    x = x_ref[...]                                                 # (H*W, 1)
    h = _conv3x3_cin1(x, w1_ref, b1_ref, tmf, W)                   # (H*W, 16)
    h = _gelu(_maxpool2x2(h, pool1_ref, W))                        # (H*W/4, 16)  pool then GELU
    h = _gelu(_conv3x3_mxu(h, w2_ref, b2_ref, tmh, Wh))            # (H*W/4, 16)
    h = _conv3x3_mxu(h, w3_ref, b3_ref, tmh, Wh)                   # (H*W/4, 8)
    z = _maxpool2x2(h, pool2_ref, Wh)                              # (H*W/16, 8)

    # ------------------------------ LFQ (eval) ---------------------------
    pos = z > 0.0
    q = jnp.where(pos, 1.0, -1.0)                                  # (H*W/16, 8)
    bits = pos.astype(jnp.float32)
    idx_ref[...] = jnp.sum(bits * lfqw_ref[...], axis=1,
                           keepdims=True).astype(jnp.int32)        # (H*W/16, 1)

    # ------------------------------ decoder ------------------------------
    d = jnp.dot(up1_ref[...], q, preferred_element_type=jnp.float32)   # up 2x -> (H*W/4, 8)
    d = _gelu(_conv3x3_mxu(d, w4_ref, b4_ref, tmh, Wh))                # (H*W/4, 16)
    d = _gelu(_conv3x3_mxu(d, w5_ref, b5_ref, tmh, Wh))                # (H*W/4, 16)
    d = jnp.dot(up2_ref[...], d, preferred_element_type=jnp.float32)   # up 2x -> (H*W, 16)
    r = _conv3x3_cout1(d, w6_ref, b6_ref, tmf, W)                      # (H*W, 1)
    out_ref[...] = jnp.clip(r, -1.0, 1.0)


# ---------------------------------------------------------------------------
# Host-side constant builders (compile-time, numpy)
# ---------------------------------------------------------------------------
def _tap_mask(H, W):
    """(H*W, 9) f32: 1 where tap (dh, dw) of output pixel (i, j) lies inside the image."""
    r = np.arange(H * W)
    i, j = r // W, r % W
    cols = []
    for dh in (-1, 0, 1):
        for dw in (-1, 0, 1):
            cols.append(((i + dh >= 0) & (i + dh < H) &
                         (j + dw >= 0) & (j + dw < W)).astype(np.float32))
    return np.stack(cols, axis=1)


def _pool_select(H, W):
    """One-hot (H*W/4, H*W): picks the top-left pixel of each 2x2 window."""
    Ho, Wo = H // 2, W // 2
    S = np.zeros((Ho * Wo, H * W), np.float32)
    p = np.arange(Ho * Wo)
    S[p, (2 * (p // Wo)) * W + 2 * (p % Wo)] = 1.0
    return S


def _upsample_select(h, w):
    """One-hot (4*h*w, h*w): nearest-neighbour 2x upsample, output (i,j) <- source (i//2, j//2)."""
    Ho, Wo = 2 * h, 2 * w
    U = np.zeros((Ho * Wo, h * w), np.float32)
    p = np.arange(Ho * Wo)
    U[p, (p // Wo // 2) * w + (p % Wo) // 2] = 1.0
    return U


# ---------------------------------------------------------------------------
# Parameters (deterministic synthetic init, PyTorch-default-like uniform)
# Raw layout: conv weight (9, Cin, Cout) = flattened (kh, kw) taps; bias (Cout,)
# ---------------------------------------------------------------------------
def init_params(key):
    def conv_init(k, cin, cout):
        k1, k2 = jax.random.split(k)
        bound = 1.0 / math.sqrt(cin * 9)
        w = jax.random.uniform(k1, (9, cin, cout), jnp.float32, -bound, bound)
        b = jax.random.uniform(k2, (cout,), jnp.float32, -bound, bound)
        return w, b

    ks = jax.random.split(key, 6)
    return {
        "enc1": conv_init(ks[0], 1, 16),
        "enc2": conv_init(ks[1], 16, 16),
        "enc3": conv_init(ks[2], 16, QUANTIZE_DIM),
        "dec1": conv_init(ks[3], QUANTIZE_DIM, 16),
        "dec2": conv_init(ks[4], 16, 16),
        "dec3": conv_init(ks[5], 16, 1),
    }


# ---------------------------------------------------------------------------
# Public forward: one fused pallas_call, NCHW in / NCHW out
# ---------------------------------------------------------------------------
def lfq_autoencoder_forward(x_nchw, params):
    B, C, H, W = x_nchw.shape
    assert C == 1 and H % 4 == 0 and W % 4 == 0
    HW = H * W
    Hq, Wq = H // 4, W // 4

    # Input as flat row-major (H*W, 1) per image (channel count is 1).
    x_flat = x_nchw.reshape(B, HW, 1)

    # Weights in im2col layout: (9*Cin, Cout); dec3 (Cout=1) as a (1, 9*Cin) broadcast row.
    weights = []
    for name in ("enc1", "enc2", "enc3", "dec1", "dec2", "dec3"):
        w9, bias = params[name]
        cin, cout = w9.shape[1], w9.shape[2]
        w2d = w9.reshape(9 * cin, cout)
        if cout == 1:
            w2d = w2d.T
        weights += [w2d, bias.reshape(1, cout)]

    consts = [
        jnp.asarray(_tap_mask(H, W)),
        jnp.asarray(_tap_mask(H // 2, W // 2)),
        jnp.asarray(_pool_select(H, W)),
        jnp.asarray(_pool_select(H // 2, W // 2)),
        jnp.asarray(_upsample_select(H // 4, W // 4)),
        jnp.asarray(_upsample_select(H // 2, W // 2)),
        jnp.asarray(np.asarray(2.0 ** np.arange(QUANTIZE_DIM - 1, -1, -1),
                               dtype=np.float32).reshape(1, QUANTIZE_DIM)),
    ]

    in_specs = [pl.BlockSpec((None, HW, 1), lambda g: (g, 0, 0))]
    for a in weights + consts:
        # Constant block index -> fetched once, resident in VMEM for the whole grid.
        in_specs.append(pl.BlockSpec(a.shape, lambda g: (0, 0)))

    out_specs = (pl.BlockSpec((None, HW, 1), lambda g: (g, 0, 0)),
                 pl.BlockSpec((None, Hq * Wq, 1), lambda g: (g, 0, 0)))
    out_shape = (jax.ShapeDtypeStruct((B, HW, 1), jnp.float32),
                 jax.ShapeDtypeStruct((B, Hq * Wq, 1), jnp.int32))

    recon_flat, idx_flat = pl.pallas_call(
        functools.partial(_lfq_ae_kernel, H=H, W=W),
        out_shape=out_shape,
        grid=(B,),
        in_specs=in_specs,
        out_specs=out_specs,
        compiler_params=pltpu.CompilerParams(
            dimension_semantics=("parallel",)),   # v7x: split batch across TensorCores
    )(x_flat, *weights, *consts)

    recon = recon_flat.reshape(B, 1, H, W)
    indices = idx_flat.reshape(B, Hq, Wq)
    # TODO(synk): LFQ entropy/commitment aux loss is only nonzero in training mode;
    # eval-mode forward returns a zero scalar, reproduced here as a constant.
    entropy_aux_loss = jnp.zeros((), jnp.float32)
    return recon, indices, entropy_aux_loss


# ---------------------------------------------------------------------------
# Pure-JAX reference forward (exact-erf GELU, XLA conv) used only for validation
# ---------------------------------------------------------------------------
def reference_forward(x_nchw, params):
    def conv(h, name):
        w9, bias = params[name]
        cin, cout = w9.shape[1], w9.shape[2]
        w = w9.reshape(3, 3, cin, cout)
        y = jax.lax.conv_general_dilated(
            h, w, window_strides=(1, 1), padding="SAME",
            dimension_numbers=("NHWC", "HWIO", "NHWC"),
            precision=jax.lax.Precision.HIGHEST)
        return y + bias.reshape(1, 1, 1, cout)

    def pool(h):
        return jax.lax.reduce_window(h, -jnp.inf, jax.lax.max,
                                     (1, 2, 2, 1), (1, 2, 2, 1), "VALID")

    def up(h):
        return jnp.repeat(jnp.repeat(h, 2, axis=1), 2, axis=2)

    gelu = lambda t: jax.nn.gelu(t, approximate=False)

    x = jnp.transpose(x_nchw, (0, 2, 3, 1))
    h = conv(x, "enc1")
    h = gelu(pool(h))
    h = gelu(conv(h, "enc2"))
    h = conv(h, "enc3")
    z = pool(h)

    q = jnp.where(z > 0, 1.0, -1.0)
    lfq_w = 2.0 ** jnp.arange(QUANTIZE_DIM - 1, -1, -1, dtype=jnp.float32)
    idx = jnp.sum((z > 0).astype(jnp.float32) * lfq_w, axis=-1).astype(jnp.int32)

    d = up(q)
    d = gelu(conv(d, "dec1"))
    d = gelu(conv(d, "dec2"))
    d = up(d)
    d = conv(d, "dec3")
    recon = jnp.clip(jnp.transpose(d, (0, 3, 1, 2)), -1.0, 1.0)
    return recon, idx, jnp.zeros((), jnp.float32)


if __name__ == "__main__":
    key = jax.random.PRNGKey(0)
    pkey, xkey = jax.random.split(key)
    params = init_params(pkey)

    # Small image batch consistent with the module: 1 input channel, spatial
    # divisible by 4 (two 2x pools / two 2x upsamples).
    x = jax.random.normal(xkey, (2, 1, 16, 16), jnp.float32)

    fwd = jax.jit(lfq_autoencoder_forward)
    out, indices, aux_loss = fwd(x, params)
    jax.block_until_ready((out, indices, aux_loss))

    # Structural checks.
    assert out.shape == (2, 1, 16, 16) and out.dtype == jnp.float32
    assert indices.shape == (2, 4, 4) and indices.dtype == jnp.int32
    assert float(jnp.max(jnp.abs(out))) <= 1.0 + 1e-6
    assert int(jnp.min(indices)) >= 0 and int(jnp.max(indices)) < CODEBOOK_SIZE

    # Numerical check against the pure-JAX reference.  Tolerances absorb the erf
    # approximation / matmul rounding (and a rare sign flip of a near-zero
    # pre-quantizer value); a structural bug would produce O(0.1+) errors.
    ref_out, ref_idx, _ = jax.jit(reference_forward)(x, params)
    max_diff = float(jnp.max(jnp.abs(out - ref_out)))
    idx_match = float(jnp.mean((indices == ref_idx).astype(jnp.float32)))
    assert max_diff < 5e-2, f"recon mismatch vs JAX reference: {max_diff}"
    assert idx_match > 0.9, f"LFQ index mismatch vs JAX reference: {idx_match}"

    print("KERNEL_OK")
</pallas_src>

<mosaic_0001>
module attributes {stable_mosaic.version = 11 : i64} {
  func.func @_lfq_ae_kernel(%arg0: i32, %arg1: memref<1x256x1xf32, #tpu.memory_space<vmem>>, %arg2: memref<9x16xf32, #tpu.memory_space<vmem>>, %arg3: memref<1x16xf32, #tpu.memory_space<vmem>>, %arg4: memref<144x16xf32, #tpu.memory_space<vmem>>, %arg5: memref<1x16xf32, #tpu.memory_space<vmem>>, %arg6: memref<144x8xf32, #tpu.memory_space<vmem>>, %arg7: memref<1x8xf32, #tpu.memory_space<vmem>>, %arg8: memref<72x16xf32, #tpu.memory_space<vmem>>, %arg9: memref<1x16xf32, #tpu.memory_space<vmem>>, %arg10: memref<144x16xf32, #tpu.memory_space<vmem>>, %arg11: memref<1x16xf32, #tpu.memory_space<vmem>>, %arg12: memref<1x144xf32, #tpu.memory_space<vmem>>, %arg13: memref<1x1xf32, #tpu.memory_space<vmem>>, %arg14: memref<256x9xf32, #tpu.memory_space<vmem>>, %arg15: memref<64x9xf32, #tpu.memory_space<vmem>>, %arg16: memref<64x256xf32, #tpu.memory_space<vmem>>, %arg17: memref<16x64xf32, #tpu.memory_space<vmem>>, %arg18: memref<64x16xf32, #tpu.memory_space<vmem>>, %arg19: memref<256x64xf32, #tpu.memory_space<vmem>>, %arg20: memref<1x8xf32, #tpu.memory_space<vmem>>, %arg21: memref<1x256x1xf32, #tpu.memory_space<vmem>>, %arg22: memref<1x16x1xi32, #tpu.memory_space<vmem>>) attributes {dimension_semantics = [#tpu.dimension_semantics<parallel>], iteration_bounds = array<i64: 2>, scalar_prefetch = 0 : i64, scratch_operands = 0 : i64, tpu.core_type = #tpu.core_type<tc>, window_params = [{transform_indices = @transform_0, window_bounds = array<i64: 1, 256, 1>}, {pipeline_mode = #tpu.pipeline_mode<synchronous>, transform_indices = @transform_1, window_bounds = array<i64: 9, 16>}, {pipeline_mode = #tpu.pipeline_mode<synchronous>, transform_indices = @transform_2, window_bounds = array<i64: 1, 16>}, {pipeline_mode = #tpu.pipeline_mode<synchronous>, transform_indices = @transform_3, window_bounds = array<i64: 144, 16>}, {pipeline_mode = #tpu.pipeline_mode<synchronous>, transform_indices = @transform_4, window_bounds = array<i64: 1, 16>}, {pipeline_mode = #tpu.pipeline_mode<synchronous>, transform_indices = @transform_5, window_bounds = array<i64: 144, 8>}, {pipeline_mode = #tpu.pipeline_mode<synchronous>, transform_indices = @transform_6, window_bounds = array<i64: 1, 8>}, {pipeline_mode = #tpu.pipeline_mode<synchronous>, transform_indices = @transform_7, window_bounds = array<i64: 72, 16>}, {pipeline_mode = #tpu.pipeline_mode<synchronous>, transform_indices = @transform_8, window_bounds = array<i64: 1, 16>}, {pipeline_mode = #tpu.pipeline_mode<synchronous>, transform_indices = @transform_9, window_bounds = array<i64: 144, 16>}, {pipeline_mode = #tpu.pipeline_mode<synchronous>, transform_indices = @transform_10, window_bounds = array<i64: 1, 16>}, {pipeline_mode = #tpu.pipeline_mode<synchronous>, transform_indices = @transform_11, window_bounds = array<i64: 1, 144>}, {pipeline_mode = #tpu.pipeline_mode<synchronous>, transform_indices = @transform_12, window_bounds = array<i64: 1, 1>}, {pipeline_mode = #tpu.pipeline_mode<synchronous>, transform_indices = @transform_13, window_bounds = array<i64: 256, 9>}, {pipeline_mode = #tpu.pipeline_mode<synchronous>, transform_indices = @transform_14, window_bounds = array<i64: 64, 9>}, {pipeline_mode = #tpu.pipeline_mode<synchronous>, transform_indices = @transform_15, window_bounds = array<i64: 64, 256>}, {pipeline_mode = #tpu.pipeline_mode<synchronous>, transform_indices = @transform_16, window_bounds = array<i64: 16, 64>}, {pipeline_mode = #tpu.pipeline_mode<synchronous>, transform_indices = @transform_17, window_bounds = array<i64: 64, 16>}, {pipeline_mode = #tpu.pipeline_mode<synchronous>, transform_indices = @transform_18, window_bounds = array<i64: 256, 64>}, {pipeline_mode = #tpu.pipeline_mode<synchronous>, transform_indices = @transform_19, window_bounds = array<i64: 1, 8>}, {transform_indices = @transform_20, window_bounds = array<i64: 1, 256, 1>}, {transform_indices = @transform_21, window_bounds = array<i64: 1, 16, 1>}]} {
    %c0 = arith.constant 0 : index
    %c0_0 = arith.constant 0 : index
    %0 = vector.load %arg14[%c0, %c0_0] : memref<256x9xf32, #tpu.memory_space<vmem>>, vector<256x9xf32>
    %c0_1 = arith.constant 0 : index
    %c0_2 = arith.constant 0 : index
    %1 = vector.load %arg15[%c0_1, %c0_2] : memref<64x9xf32, #tpu.memory_space<vmem>>, vector<64x9xf32>
    %c0_3 = arith.constant 0 : index
    %c0_4 = arith.constant 0 : index
    %c0_5 = arith.constant 0 : index
    %2 = vector.load %arg1[%c0_3, %c0_4, %c0_5] : memref<1x256x1xf32, #tpu.memory_space<vmem>>, vector<1x256x1xf32>
    %3 = vector.shape_cast %2 : vector<1x256x1xf32> to vector<256x1xf32>
    %c17_i32 = arith.constant 17 : i32
    %4 = tpu.dynamic_rotate %3 by %c17_i32 dim 0 : vector<256x1xf32>, i32 -> vector<256x1xf32>
    %5 = vector.extract_strided_slice %0 {offsets = [0, 0], sizes = [256, 1], strides = [1, 1]} : vector<256x9xf32> to vector<256x1xf32>
    %6 = arith.mulf %4, %5 : vector<256x1xf32>
    %c16_i32 = arith.constant 16 : i32
    %7 = tpu.dynamic_rotate %3 by %c16_i32 dim 0 : vector<256x1xf32>, i32 -> vector<256x1xf32>
    %8 = vector.extract_strided_slice %0 {offsets = [0, 1], sizes = [256, 1], strides = [1, 1]} : vector<256x9xf32> to vector<256x1xf32>
    %9 = arith.mulf %7, %8 : vector<256x1xf32>
    %c15_i32 = arith.constant 15 : i32
    %10 = tpu.dynamic_rotate %3 by %c15_i32 dim 0 : vector<256x1xf32>, i32 -> vector<256x1xf32>
    %11 = vector.extract_strided_slice %0 {offsets = [0, 2], sizes = [256, 1], strides = [1, 1]} : vector<256x9xf32> to vector<256x1xf32>
    %12 = arith.mulf %10, %11 : vector<256x1xf32>
    %c1_i32 = arith.constant 1 : i32
    %13 = tpu.dynamic_rotate %3 by %c1_i32 dim 0 : vector<256x1xf32>, i32 -> vector<256x1xf32>
    %14 = vector.extract_strided_slice %0 {offsets = [0, 3], sizes = [256, 1], strides = [1, 1]} : vector<256x9xf32> to vector<256x1xf32>
    %15 = arith.mulf %13, %14 : vector<256x1xf32>
    %c255_i32 = arith.constant 255 : i32
    %16 = tpu.dynamic_rotate %3 by %c255_i32 dim 0 : vector<256x1xf32>, i32 -> vector<256x1xf32>
    %17 = vector.extract_strided_slice %0 {offsets = [0, 5], sizes = [256, 1], strides = [1, 1]} : vector<256x9xf32> to vector<256x1xf32>
    %18 = arith.mulf %16, %17 : vector<256x1xf32>
    %c241_i32 = arith.constant 241 : i32
    %19 = tpu.dynamic_rotate %3 by %c241_i32 dim 0 : vector<256x1xf32>, i32 -> vector<256x1xf32>
    %20 = vector.extract_strided_slice %0 {offsets = [0, 6], sizes = [256, 1], strides = [1, 1]} : vector<256x9xf32> to vector<256x1xf32>
    %21 = arith.mulf %19, %20 : vector<256x1xf32>
    %c240_i32 = arith.constant 240 : i32
    %22 = tpu.dynamic_rotate %3 by %c240_i32 dim 0 : vector<256x1xf32>, i32 -> vector<256x1xf32>
    %23 = vector.extract_strided_slice %0 {offsets = [0, 7], sizes = [256, 1], strides = [1, 1]} : vector<256x9xf32> to vector<256x1xf32>
    %24 = arith.mulf %22, %23 : vector<256x1xf32>
    %c239_i32 = arith.constant 239 : i32
    %25 = tpu.dynamic_rotate %3 by %c239_i32 dim 0 : vector<256x1xf32>, i32 -> vector<256x1xf32>
    %26 = vector.extract_strided_slice %0 {offsets = [0, 8], sizes = [256, 1], strides = [1, 1]} : vector<256x9xf32> to vector<256x1xf32>
    %27 = arith.mulf %25, %26 : vector<256x1xf32>
    %c0_6 = arith.constant 0 : index
    %c0_7 = arith.constant 0 : index
    %28 = vector.load %arg2[%c0_6, %c0_7] : memref<9x16xf32, #tpu.memory_space<vmem>>, vector<1x16xf32>
    %29 = vector.broadcast %6 : vector<256x1xf32> to vector<256x16xf32>
    %30 = vector.broadcast %28 : vector<1x16xf32> to vector<256x16xf32>
    %31 = arith.mulf %29, %30 : vector<256x16xf32>
    %c1 = arith.constant 1 : index
    %c0_8 = arith.constant 0 : index
    %32 = vector.load %arg2[%c1, %c0_8] : memref<9x16xf32, #tpu.memory_space<vmem>>, vector<1x16xf32>
    %33 = vector.broadcast %9 : vector<256x1xf32> to vector<256x16xf32>
    %34 = vector.broadcast %32 : vector<1x16xf32> to vector<256x16xf32>
    %35 = arith.mulf %33, %34 : vector<256x16xf32>
    %36 = arith.addf %31, %35 : vector<256x16xf32>
    %c2 = arith.constant 2 : index
    %c0_9 = arith.constant 0 : index
    %37 = vector.load %arg2[%c2, %c0_9] : memref<9x16xf32, #tpu.memory_space<vmem>>, vector<1x16xf32>
    %38 = vector.broadcast %12 : vector<256x1xf32> to vector<256x16xf32>
    %39 = vector.broadcast %37 : vector<1x16xf32> to vector<256x16xf32>
    %40 = arith.mulf %38, %39 : vector<256x16xf32>
    %41 = arith.addf %36, %40 : vector<256x16xf32>
    %c3 = arith.constant 3 : index
    %c0_10 = arith.constant 0 : index
    %42 = vector.load %arg2[%c3, %c0_10] : memref<9x16xf32, #tpu.memory_space<vmem>>, vector<1x16xf32>
    %43 = vector.broadcast %15 : vector<256x1xf32> to vector<256x16xf32>
    %44 = vector.broadcast %42 : vector<1x16xf32> to vector<256x16xf32>
    %45 = arith.mulf %43, %44 : vector<256x16xf32>
    %46 = arith.addf %41, %45 : vector<256x16xf32>
    %c4 = arith.constant 4 : index
    %c0_11 = arith.constant 0 : index
    %47 = vector.load %arg2[%c4, %c0_11] : memref<9x16xf32, #tpu.memory_space<vmem>>, vector<1x16xf32>
    %48 = vector.broadcast %3 : vector<256x1xf32> to vector<256x16xf32>
    %49 = vector.broadcast %47 : vector<1x16xf32> to vector<256x16xf32>
    %50 = arith.mulf %48, %49 : vector<256x16xf32>
    %51 = arith.addf %46, %50 : vector<256x16xf32>
    %c5 = arith.constant 5 : index
    %c0_12 = arith.constant 0 : index
    %52 = vector.load %arg2[%c5, %c0_12] : memref<9x16xf32, #tpu.memory_space<vmem>>, vector<1x16xf32>
    %53 = vector.broadcast %18 : vector<256x1xf32> to vector<256x16xf32>
    %54 = vector.broadcast %52 : vector<1x16xf32> to vector<256x16xf32>
    %55 = arith.mulf %53, %54 : vector<256x16xf32>
    %56 = arith.addf %51, %55 : vector<256x16xf32>
    %c6 = arith.constant 6 : index
    %c0_13 = arith.constant 0 : index
    %57 = vector.load %arg2[%c6, %c0_13] : memref<9x16xf32, #tpu.memory_space<vmem>>, vector<1x16xf32>
    %58 = vector.broadcast %21 : vector<256x1xf32> to vector<256x16xf32>
    %59 = vector.broadcast %57 : vector<1x16xf32> to vector<256x16xf32>
    %60 = arith.mulf %58, %59 : vector<256x16xf32>
    %61 = arith.addf %56, %60 : vector<256x16xf32>
    %c7 = arith.constant 7 : index
    %c0_14 = arith.constant 0 : index
    %62 = vector.load %arg2[%c7, %c0_14] : memref<9x16xf32, #tpu.memory_space<vmem>>, vector<1x16xf32>
    %63 = vector.broadcast %24 : vector<256x1xf32> to vector<256x16xf32>
    %64 = vector.broadcast %62 : vector<1x16xf32> to vector<256x16xf32>
    %65 = arith.mulf %63, %64 : vector<256x16xf32>
    %66 = arith.addf %61, %65 : vector<256x16xf32>
    %c8 = arith.constant 8 : index
    %c0_15 = arith.constant 0 : index
    %67 = vector.load %arg2[%c8, %c0_15] : memref<9x16xf32, #tpu.memory_space<vmem>>, vector<1x16xf32>
    %68 = vector.broadcast %27 : vector<256x1xf32> to vector<256x16xf32>
    %69 = vector.broadcast %67 : vector<1x16xf32> to vector<256x16xf32>
    %70 = arith.mulf %68, %69 : vector<256x16xf32>
    %71 = arith.addf %66, %70 : vector<256x16xf32>
    %c0_16 = arith.constant 0 : index
    %c0_17 = arith.constant 0 : index
    %72 = vector.load %arg3[%c0_16, %c0_17] : memref<1x16xf32, #tpu.memory_space<vmem>>, vector<1x16xf32>
    %73 = vector.broadcast %72 : vector<1x16xf32> to vector<256x16xf32>
    %74 = arith.addf %71, %73 : vector<256x16xf32>
    %c255_i32_18 = arith.constant 255 : i32
    %75 = tpu.dynamic_rotate %74 by %c255_i32_18 dim 0 : vector<256x16xf32>, i32 -> vector<256x16xf32>
    %76 = arith.maximumf %74, %75 : vector<256x16xf32>
    %c240_i32_19 = arith.constant 240 : i32
    %77 = tpu.dynamic_rotate %76 by %c240_i32_19 dim 0 : vector<256x16xf32>, i32 -> vector<256x16xf32>
    %78 = arith.maximumf %76, %77 : vector<256x16xf32>
    %c0_20 = arith.constant 0 : index
    %c0_21 = arith.constant 0 : index
    %79 = vector.load %arg16[%c0_20, %c0_21] : memref<64x256xf32, #tpu.memory_space<vmem>>, vector<64x256xf32>
    %cst = arith.constant dense<0.000000e+00> : vector<64x16xf32>
    %80 = tpu.matmul %79, %78, %cst {dimension_numbers = #tpu.dot_dimension_numbers<[1], [0], [0], [1], [0, 0, 1, 1], [], []>} : vector<64x256xf32>, vector<256x16xf32>, vector<64x16xf32> -> vector<64x16xf32>
    %cst_22 = arith.constant 5.000000e-01 : f32
    %81 = vector.broadcast %cst_22 : f32 to vector<64x16xf32>
    %82 = arith.mulf %81, %80 : vector<64x16xf32>
    %cst_23 = arith.constant 0.707106769 : f32
    %83 = vector.broadcast %cst_23 : f32 to vector<64x16xf32>
    %84 = arith.mulf %80, %83 : vector<64x16xf32>
    %cst_24 = arith.constant 0.000000e+00 : f32
    %85 = vector.broadcast %cst_24 : f32 to vector<64x16xf32>
    %86 = arith.cmpf oge, %84, %85 : vector<64x16xf32>
    %cst_25 = arith.constant 1.000000e+00 : f32
    %cst_26 = arith.constant -1.000000e+00 : f32
    %87 = vector.broadcast %cst_25 : f32 to vector<64x16xf32>
    %88 = vector.broadcast %cst_26 : f32 to vector<64x16xf32>
    %89 = arith.select %86, %87, %88 : vector<64x16xi1>, vector<64x16xf32>
    %90 = math.absf %84 : vector<64x16xf32>
    %cst_27 = arith.constant 0.327591091 : f32
    %91 = vector.broadcast %cst_27 : f32 to vector<64x16xf32>
    %92 = arith.mulf %91, %90 : vector<64x16xf32>
    %cst_28 = arith.constant 1.000000e+00 : f32
    %93 = vector.broadcast %cst_28 : f32 to vector<64x16xf32>
    %94 = arith.addf %93, %92 : vector<64x16xf32>
    %cst_29 = arith.constant 1.000000e+00 : f32
    %95 = vector.broadcast %cst_29 : f32 to vector<64x16xf32>
    %96 = arith.divf %95, %94 : vector<64x16xf32>
    %cst_30 = arith.constant 1.06140542 : f32
    %97 = vector.broadcast %cst_30 : f32 to vector<64x16xf32>
    %98 = arith.mulf %97, %96 : vector<64x16xf32>
    %cst_31 = arith.constant -1.45315206 : f32
    %99 = vector.broadcast %cst_31 : f32 to vector<64x16xf32>
    %100 = arith.addf %98, %99 : vector<64x16xf32>
    %101 = arith.mulf %100, %96 : vector<64x16xf32>
    %cst_32 = arith.constant 1.42141378 : f32
    %102 = vector.broadcast %cst_32 : f32 to vector<64x16xf32>
    %103 = arith.addf %101, %102 : vector<64x16xf32>
    %104 = arith.mulf %103, %96 : vector<64x16xf32>
    %cst_33 = arith.constant -0.284496725 : f32
    %105 = vector.broadcast %cst_33 : f32 to vector<64x16xf32>
    %106 = arith.addf %104, %105 : vector<64x16xf32>
    %107 = arith.mulf %106, %96 : vector<64x16xf32>
    %cst_34 = arith.constant 0.254829586 : f32
    %108 = vector.broadcast %cst_34 : f32 to vector<64x16xf32>
    %109 = arith.addf %107, %108 : vector<64x16xf32>
    %110 = arith.mulf %109, %96 : vector<64x16xf32>
    %cst_35 = arith.constant 0.000000e+00 : f32
    %111 = vector.broadcast %cst_35 : f32 to vector<64x16xf32>
    %112 = arith.subf %111, %90 : vector<64x16xf32>
    %113 = arith.mulf %112, %90 : vector<64x16xf32>
    %114 = math.exp %113 : vector<64x16xf32>
    %115 = arith.mulf %110, %114 : vector<64x16xf32>
    %cst_36 = arith.constant 1.000000e+00 : f32
    %116 = vector.broadcast %cst_36 : f32 to vector<64x16xf32>
    %117 = arith.subf %116, %115 : vector<64x16xf32>
    %118 = arith.mulf %89, %117 : vector<64x16xf32>
    %cst_37 = arith.constant 1.000000e+00 : f32
    %119 = vector.broadcast %cst_37 : f32 to vector<64x16xf32>
    %120 = arith.addf %119, %118 : vector<64x16xf32>
    %121 = arith.mulf %82, %120 : vector<64x16xf32>
    %c9_i32 = arith.constant 9 : i32
    %122 = tpu.dynamic_rotate %121 by %c9_i32 dim 0 : vector<64x16xf32>, i32 -> vector<64x16xf32>
    %123 = vector.extract_strided_slice %1 {offsets = [0, 0], sizes = [64, 1], strides = [1, 1]} : vector<64x9xf32> to vector<64x1xf32>
    %124 = vector.broadcast %123 : vector<64x1xf32> to vector<64x16xf32>
    %125 = arith.mulf %122, %124 : vector<64x16xf32>
    %c8_i32 = arith.constant 8 : i32
    %126 = tpu.dynamic_rotate %121 by %c8_i32 dim 0 : vector<64x16xf32>, i32 -> vector<64x16xf32>
    %127 = vector.extract_strided_slice %1 {offsets = [0, 1], sizes = [64, 1], strides = [1, 1]} : vector<64x9xf32> to vector<64x1xf32>
    %128 = vector.broadcast %127 : vector<64x1xf32> to vector<64x16xf32>
    %129 = arith.mulf %126, %128 : vector<64x16xf32>
    %c7_i32 = arith.constant 7 : i32
    %130 = tpu.dynamic_rotate %121 by %c7_i32 dim 0 : vector<64x16xf32>, i32 -> vector<64x16xf32>
    %131 = vector.extract_strided_slice %1 {offsets = [0, 2], sizes = [64, 1], strides = [1, 1]} : vector<64x9xf32> to vector<64x1xf32>
    %132 = vector.broadcast %131 : vector<64x1xf32> to vector<64x16xf32>
    %133 = arith.mulf %130, %132 : vector<64x16xf32>
    %c1_i32_38 = arith.constant 1 : i32
    %134 = tpu.dynamic_rotate %121 by %c1_i32_38 dim 0 : vector<64x16xf32>, i32 -> vector<64x16xf32>
    %135 = vector.extract_strided_slice %1 {offsets = [0, 3], sizes = [64, 1], strides = [1, 1]} : vector<64x9xf32> to vector<64x1xf32>
    %136 = vector.broadcast %135 : vector<64x1xf32> to vector<64x16xf32>
    %137 = arith.mulf %134, %136 : vector<64x16xf32>
    %c63_i32 = arith.constant 63 : i32
    %138 = tpu.dynamic_rotate %121 by %c63_i32 dim 0 : vector<64x16xf32>, i32 -> vector<64x16xf32>
    %139 = vector.extract_strided_slice %1 {offsets = [0, 5], sizes = [64, 1], strides = [1, 1]} : vector<64x9xf32> to vector<64x1xf32>
    %140 = vector.broadcast %139 : vector<64x1xf32> to vector<64x16xf32>
    %141 = arith.mulf %138, %140 : vector<64x16xf32>
    %c57_i32 = arith.constant 57 : i32
    %142 = tpu.dynamic_rotate %121 by %c57_i32 dim 0 : vector<64x16xf32>, i32 -> vector<64x16xf32>
    %143 = vector.extract_strided_slice %1 {offsets = [0, 6], sizes = [64, 1], strides = [1, 1]} : vector<64x9xf32> to vector<64x1xf32>
    %144 = vector.broadcast %143 : vector<64x1xf32> to vector<64x16xf32>
    %145 = arith.mulf %142, %144 : vector<64x16xf32>
    %c56_i32 = arith.constant 56 : i32
    %146 = tpu.dynamic_rotate %121 by %c56_i32 dim 0 : vector<64x16xf32>, i32 -> vector<64x16xf32>
    %147 = vector.extract_strided_slice %1 {offsets = [0, 7], sizes = [64, 1], strides = [1, 1]} : vector<64x9xf32> to vector<64x1xf32>
    %148 = vector.broadcast %147 : vector<64x1xf32> to vector<64x16xf32>
    %149 = arith.mulf %146, %148 : vector<64x16xf32>
    %c55_i32 = arith.constant 55 : i32
    %150 = tpu.dynamic_rotate %121 by %c55_i32 dim 0 : vector<64x16xf32>, i32 -> vector<64x16xf32>
    %151 = vector.extract_strided_slice %1 {offsets = [0, 8], sizes = [64, 1], strides = [1, 1]} : vector<64x9xf32> to vector<64x1xf32>
    %152 = vector.broadcast %151 : vector<64x1xf32> to vector<64x16xf32>
    %153 = arith.mulf %150, %152 : vector<64x16xf32>
    %154 = tpu.concatenate %125, %129, %133, %137, %121, %141, %145, %149, %153 in 1 : vector<64x16xf32>, vector<64x16xf32>, vector<64x16xf32>, vector<64x16xf32>, vector<64x16xf32>, vector<64x16xf32>, vector<64x16xf32>, vector<64x16xf32>, vector<64x16xf32> -> vector<64x144xf32>
    %c0_39 = arith.constant 0 : index
    %c0_40 = arith.constant 0 : index
    %155 = vector.load %arg4[%c0_39, %c0_40] : memref<144x16xf32, #tpu.memory_space<vmem>>, vector<144x16xf32>
    %cst_41 = arith.constant dense<0.000000e+00> : vector<64x16xf32>
    %156 = tpu.matmul %154, %155, %cst_41 {dimension_numbers = #tpu.dot_dimension_numbers<[1], [0], [0], [1], [0, 0, 1, 1], [], []>} : vector<64x144xf32>, vector<144x16xf32>, vector<64x16xf32> -> vector<64x16xf32>
    %c0_42 = arith.constant 0 : index
    %c0_43 = arith.constant 0 : index
    %157 = vector.load %arg5[%c0_42, %c0_43] : memref<1x16xf32, #tpu.memory_space<vmem>>, vector<1x16xf32>
    %158 = vector.broadcast %157 : vector<1x16xf32> to vector<64x16xf32>
    %159 = arith.addf %156, %158 : vector<64x16xf32>
    %cst_44 = arith.constant 5.000000e-01 : f32
    %160 = vector.broadcast %cst_44 : f32 to vector<64x16xf32>
    %161 = arith.mulf %160, %159 : vector<64x16xf32>
    %cst_45 = arith.constant 0.707106769 : f32
    %162 = vector.broadcast %cst_45 : f32 to vector<64x16xf32>
    %163 = arith.mulf %159, %162 : vector<64x16xf32>
    %cst_46 = arith.constant 0.000000e+00 : f32
    %164 = vector.broadcast %cst_46 : f32 to vector<64x16xf32>
    %165 = arith.cmpf oge, %163, %164 : vector<64x16xf32>
    %cst_47 = arith.constant 1.000000e+00 : f32
    %cst_48 = arith.constant -1.000000e+00 : f32
    %166 = vector.broadcast %cst_47 : f32 to vector<64x16xf32>
    %167 = vector.broadcast %cst_48 : f32 to vector<64x16xf32>
    %168 = arith.select %165, %166, %167 : vector<64x16xi1>, vector<64x16xf32>
    %169 = math.absf %163 : vector<64x16xf32>
    %cst_49 = arith.constant 0.327591091 : f32
    %170 = vector.broadcast %cst_49 : f32 to vector<64x16xf32>
    %171 = arith.mulf %170, %169 : vector<64x16xf32>
    %cst_50 = arith.constant 1.000000e+00 : f32
    %172 = vector.broadcast %cst_50 : f32 to vector<64x16xf32>
    %173 = arith.addf %172, %171 : vector<64x16xf32>
    %cst_51 = arith.constant 1.000000e+00 : f32
    %174 = vector.broadcast %cst_51 : f32 to vector<64x16xf32>
    %175 = arith.divf %174, %173 : vector<64x16xf32>
    %cst_52 = arith.constant 1.06140542 : f32
    %176 = vector.broadcast %cst_52 : f32 to vector<64x16xf32>
    %177 = arith.mulf %176, %175 : vector<64x16xf32>
    %cst_53 = arith.constant -1.45315206 : f32
    %178 = vector.broadcast %cst_53 : f32 to vector<64x16xf32>
    %179 = arith.addf %177, %178 : vector<64x16xf32>
    %180 = arith.mulf %179, %175 : vector<64x16xf32>
    %cst_54 = arith.constant 1.42141378 : f32
    %181 = vector.broadcast %cst_54 : f32 to vector<64x16xf32>
    %182 = arith.addf %180, %181 : vector<64x16xf32>
    %183 = arith.mulf %182, %175 : vector<64x16xf32>
    %cst_55 = arith.constant -0.284496725 : f32
    %184 = vector.broadcast %cst_55 : f32 to vector<64x16xf32>
    %185 = arith.addf %183, %184 : vector<64x16xf32>
    %186 = arith.mulf %185, %175 : vector<64x16xf32>
    %cst_56 = arith.constant 0.254829586 : f32
    %187 = vector.broadcast %cst_56 : f32 to vector<64x16xf32>
    %188 = arith.addf %186, %187 : vector<64x16xf32>
    %189 = arith.mulf %188, %175 : vector<64x16xf32>
    %cst_57 = arith.constant 0.000000e+00 : f32
    %190 = vector.broadcast %cst_57 : f32 to vector<64x16xf32>
    %191 = arith.subf %190, %169 : vector<64x16xf32>
    %192 = arith.mulf %191, %169 : vector<64x16xf32>
    %193 = math.exp %192 : vector<64x16xf32>
    %194 = arith.mulf %189, %193 : vector<64x16xf32>
    %cst_58 = arith.constant 1.000000e+00 : f32
    %195 = vector.broadcast %cst_58 : f32 to vector<64x16xf32>
    %196 = arith.subf %195, %194 : vector<64x16xf32>
    %197 = arith.mulf %168, %196 : vector<64x16xf32>
    %cst_59 = arith.constant 1.000000e+00 : f32
    %198 = vector.broadcast %cst_59 : f32 to vector<64x16xf32>
    %199 = arith.addf %198, %197 : vector<64x16xf32>
    %200 = arith.mulf %161, %199 : vector<64x16xf32>
    %c9_i32_60 = arith.constant 9 : i32
    %201 = tpu.dynamic_rotate %200 by %c9_i32_60 dim 0 : vector<64x16xf32>, i32 -> vector<64x16xf32>
    %202 = vector.extract_strided_slice %1 {offsets = [0, 0], sizes = [64, 1], strides = [1, 1]} : vector<64x9xf32> to vector<64x1xf32>
    %203 = vector.broadcast %202 : vector<64x1xf32> to vector<64x16xf32>
    %204 = arith.mulf %201, %203 : vector<64x16xf32>
    %c8_i32_61 = arith.constant 8 : i32
    %205 = tpu.dynamic_rotate %200 by %c8_i32_61 dim 0 : vector<64x16xf32>, i32 -> vector<64x16xf32>
    %206 = vector.extract_strided_slice %1 {offsets = [0, 1], sizes = [64, 1], strides = [1, 1]} : vector<64x9xf32> to vector<64x1xf32>
    %207 = vector.broadcast %206 : vector<64x1xf32> to vector<64x16xf32>
    %208 = arith.mulf %205, %207 : vector<64x16xf32>
    %c7_i32_62 = arith.constant 7 : i32
    %209 = tpu.dynamic_rotate %200 by %c7_i32_62 dim 0 : vector<64x16xf32>, i32 -> vector<64x16xf32>
    %210 = vector.extract_strided_slice %1 {offsets = [0, 2], sizes = [64, 1], strides = [1, 1]} : vector<64x9xf32> to vector<64x1xf32>
    %211 = vector.broadcast %210 : vector<64x1xf32> to vector<64x16xf32>
    %212 = arith.mulf %209, %211 : vector<64x16xf32>
    %c1_i32_63 = arith.constant 1 : i32
    %213 = tpu.dynamic_rotate %200 by %c1_i32_63 dim 0 : vector<64x16xf32>, i32 -> vector<64x16xf32>
    %214 = vector.extract_strided_slice %1 {offsets = [0, 3], sizes = [64, 1], strides = [1, 1]} : vector<64x9xf32> to vector<64x1xf32>
    %215 = vector.broadcast %214 : vector<64x1xf32> to vector<64x16xf32>
    %216 = arith.mulf %213, %215 : vector<64x16xf32>
    %c63_i32_64 = arith.constant 63 : i32
    %217 = tpu.dynamic_rotate %200 by %c63_i32_64 dim 0 : vector<64x16xf32>, i32 -> vector<64x16xf32>
    %218 = vector.extract_strided_slice %1 {offsets = [0, 5], sizes = [64, 1], strides = [1, 1]} : vector<64x9xf32> to vector<64x1xf32>
    %219 = vector.broadcast %218 : vector<64x1xf32> to vector<64x16xf32>
    %220 = arith.mulf %217, %219 : vector<64x16xf32>
    %c57_i32_65 = arith.constant 57 : i32
    %221 = tpu.dynamic_rotate %200 by %c57_i32_65 dim 0 : vector<64x16xf32>, i32 -> vector<64x16xf32>
    %222 = vector.extract_strided_slice %1 {offsets = [0, 6], sizes = [64, 1], strides = [1, 1]} : vector<64x9xf32> to vector<64x1xf32>
    %223 = vector.broadcast %222 : vector<64x1xf32> to vector<64x16xf32>
    %224 = arith.mulf %221, %223 : vector<64x16xf32>
    %c56_i32_66 = arith.constant 56 : i32
    %225 = tpu.dynamic_rotate %200 by %c56_i32_66 dim 0 : vector<64x16xf32>, i32 -> vector<64x16xf32>
    %226 = vector.extract_strided_slice %1 {offsets = [0, 7], sizes = [64, 1], strides = [1, 1]} : vector<64x9xf32> to vector<64x1xf32>
    %227 = vector.broadcast %226 : vector<64x1xf32> to vector<64x16xf32>
    %228 = arith.mulf %225, %227 : vector<64x16xf32>
    %c55_i32_67 = arith.constant 55 : i32
    %229 = tpu.dynamic_rotate %200 by %c55_i32_67 dim 0 : vector<64x16xf32>, i32 -> vector<64x16xf32>
    %230 = vector.extract_strided_slice %1 {offsets = [0, 8], sizes = [64, 1], strides = [1, 1]} : vector<64x9xf32> to vector<64x1xf32>
    %231 = vector.broadcast %230 : vector<64x1xf32> to vector<64x16xf32>
    %232 = arith.mulf %229, %231 : vector<64x16xf32>
    %233 = tpu.concatenate %204, %208, %212, %216, %200, %220, %224, %228, %232 in 1 : vector<64x16xf32>, vector<64x16xf32>, vector<64x16xf32>, vector<64x16xf32>, vector<64x16xf32>, vector<64x16xf32>, vector<64x16xf32>, vector<64x16xf32>, vector<64x16xf32> -> vector<64x144xf32>
    %c0_68 = arith.constant 0 : index
    %c0_69 = arith.constant 0 : index
    %234 = vector.load %arg6[%c0_68, %c0_69] : memref<144x8xf32, #tpu.memory_space<vmem>>, vector<144x8xf32>
    %cst_70 = arith.constant dense<0.000000e+00> : vector<64x8xf32>
    %235 = tpu.matmul %233, %234, %cst_70 {dimension_numbers = #tpu.dot_dimension_numbers<[1], [0], [0], [1], [0, 0, 1, 1], [], []>} : vector<64x144xf32>, vector<144x8xf32>, vector<64x8xf32> -> vector<64x8xf32>
    %c0_71 = arith.constant 0 : index
    %c0_72 = arith.constant 0 : index
    %236 = vector.load %arg7[%c0_71, %c0_72] : memref<1x8xf32, #tpu.memory_space<vmem>>, vector<1x8xf32>
    %237 = vector.broadcast %236 : vector<1x8xf32> to vector<64x8xf32>
    %238 = arith.addf %235, %237 : vector<64x8xf32>
    %c63_i32_73 = arith.constant 63 : i32
    %239 = tpu.dynamic_rotate %238 by %c63_i32_73 dim 0 : vector<64x8xf32>, i32 -> vector<64x8xf32>
    %240 = arith.maximumf %238, %239 : vector<64x8xf32>
    %c56_i32_74 = arith.constant 56 : i32
    %241 = tpu.dynamic_rotate %240 by %c56_i32_74 dim 0 : vector<64x8xf32>, i32 -> vector<64x8xf32>
    %242 = arith.maximumf %240, %241 : vector<64x8xf32>
    %c0_75 = arith.constant 0 : index
    %c0_76 = arith.constant 0 : index
    %243 = vector.load %arg17[%c0_75, %c0_76] : memref<16x64xf32, #tpu.memory_space<vmem>>, vector<16x64xf32>
    %cst_77 = arith.constant dense<0.000000e+00> : vector<16x8xf32>
    %244 = tpu.matmul %243, %242, %cst_77 {dimension_numbers = #tpu.dot_dimension_numbers<[1], [0], [0], [1], [0, 0, 1, 1], [], []>} : vector<16x64xf32>, vector<64x8xf32>, vector<16x8xf32> -> vector<16x8xf32>
    %cst_78 = arith.constant 0.000000e+00 : f32
    %245 = vector.broadcast %cst_78 : f32 to vector<16x8xf32>
    %246 = arith.cmpf ogt, %244, %245 : vector<16x8xf32>
    %cst_79 = arith.constant 1.000000e+00 : f32
    %cst_80 = arith.constant -1.000000e+00 : f32
    %247 = vector.broadcast %cst_79 : f32 to vector<16x8xf32>
    %248 = vector.broadcast %cst_80 : f32 to vector<16x8xf32>
    %249 = arith.select %246, %247, %248 : vector<16x8xi1>, vector<16x8xf32>
    %250 = arith.extui %246 : vector<16x8xi1> to vector<16x8xi32>
    %251 = arith.sitofp %250 : vector<16x8xi32> to vector<16x8xf32>
    %c0_81 = arith.constant 0 : index
    %c0_82 = arith.constant 0 : index
    %252 = vector.load %arg20[%c0_81, %c0_82] : memref<1x8xf32, #tpu.memory_space<vmem>>, vector<1x8xf32>
    %253 = vector.broadcast %252 : vector<1x8xf32> to vector<16x8xf32>
    %254 = arith.mulf %251, %253 : vector<16x8xf32>
    %cst_83 = arith.constant dense<0.000000e+00> : vector<16xf32>
    %255 = vector.multi_reduction <add>, %254, %cst_83 [1] : vector<16x8xf32> to vector<16xf32>
    %256 = vector.shape_cast %255 : vector<16xf32> to vector<16x1xf32>
    %257 = arith.fptosi %256 : vector<16x1xf32> to vector<16x1xi32>
    %c0_84 = arith.constant 0 : index
    %c0_85 = arith.constant 0 : index
    %c0_86 = arith.constant 0 : index
    %258 = vector.load %arg22[%c0_84, %c0_85, %c0_86] : memref<1x16x1xi32, #tpu.memory_space<vmem>>, vector<1x16x1xi32>
    %259 = vector.shape_cast %258 : vector<1x16x1xi32> to vector<16x1xi32>
    %260 = vector.shape_cast %257 : vector<16x1xi32> to vector<1x16x1xi32>
    tpu.vector_store %arg22[%c0_84, %c0_85, %c0_86], %260 {strides = array<i32>} : memref<1x16x1xi32, #tpu.memory_space<vmem>>, vector<1x16x1xi32>,
    %c0_87 = arith.constant 0 : index
    %c0_88 = arith.constant 0 : index
    %261 = vector.load %arg18[%c0_87, %c0_88] : memref<64x16xf32, #tpu.memory_space<vmem>>, vector<64x16xf32>
    %cst_89 = arith.constant dense<0.000000e+00> : vector<64x8xf32>
    %262 = tpu.matmul %261, %249, %cst_89 {dimension_numbers = #tpu.dot_dimension_numbers<[1], [0], [0], [1], [0, 0, 1, 1], [], []>} : vector<64x16xf32>, vector<16x8xf32>, vector<64x8xf32> -> vector<64x8xf32>
    %c9_i32_90 = arith.constant 9 : i32
    %263 = tpu.dynamic_rotate %262 by %c9_i32_90 dim 0 : vector<64x8xf32>, i32 -> vector<64x8xf32>
    %264 = vector.extract_strided_slice %1 {offsets = [0, 0], sizes = [64, 1], strides = [1, 1]} : vector<64x9xf32> to vector<64x1xf32>
    %265 = vector.broadcast %264 : vector<64x1xf32> to vector<64x8xf32>
    %266 = arith.mulf %263, %265 : vector<64x8xf32>
    %c8_i32_91 = arith.constant 8 : i32
    %267 = tpu.dynamic_rotate %262 by %c8_i32_91 dim 0 : vector<64x8xf32>, i32 -> vector<64x8xf32>
    %268 = vector.extract_strided_slice %1 {offsets = [0, 1], sizes = [64, 1], strides = [1, 1]} : vector<64x9xf32> to vector<64x1xf32>
    %269 = vector.broadcast %268 : vector<64x1xf32> to vector<64x8xf32>
    %270 = arith.mulf %267, %269 : vector<64x8xf32>
    %c7_i32_92 = arith.constant 7 : i32
    %271 = tpu.dynamic_rotate %262 by %c7_i32_92 dim 0 : vector<64x8xf32>, i32 -> vector<64x8xf32>
    %272 = vector.extract_strided_slice %1 {offsets = [0, 2], sizes = [64, 1], strides = [1, 1]} : vector<64x9xf32> to vector<64x1xf32>
    %273 = vector.broadcast %272 : vector<64x1xf32> to vector<64x8xf32>
    %274 = arith.mulf %271, %273 : vector<64x8xf32>
    %c1_i32_93 = arith.constant 1 : i32
    %275 = tpu.dynamic_rotate %262 by %c1_i32_93 dim 0 : vector<64x8xf32>, i32 -> vector<64x8xf32>
    %276 = vector.extract_strided_slice %1 {offsets = [0, 3], sizes = [64, 1], strides = [1, 1]} : vector<64x9xf32> to vector<64x1xf32>
    %277 = vector.broadcast %276 : vector<64x1xf32> to vector<64x8xf32>
    %278 = arith.mulf %275, %277 : vector<64x8xf32>
    %c63_i32_94 = arith.constant 63 : i32
    %279 = tpu.dynamic_rotate %262 by %c63_i32_94 dim 0 : vector<64x8xf32>, i32 -> vector<64x8xf32>
    %280 = vector.extract_strided_slice %1 {offsets = [0, 5], sizes = [64, 1], strides = [1, 1]} : vector<64x9xf32> to vector<64x1xf32>
    %281 = vector.broadcast %280 : vector<64x1xf32> to vector<64x8xf32>
    %282 = arith.mulf %279, %281 : vector<64x8xf32>
    %c57_i32_95 = arith.constant 57 : i32
    %283 = tpu.dynamic_rotate %262 by %c57_i32_95 dim 0 : vector<64x8xf32>, i32 -> vector<64x8xf32>
    %284 = vector.extract_strided_slice %1 {offsets = [0, 6], sizes = [64, 1], strides = [1, 1]} : vector<64x9xf32> to vector<64x1xf32>
    %285 = vector.broadcast %284 : vector<64x1xf32> to vector<64x8xf32>
    %286 = arith.mulf %283, %285 : vector<64x8xf32>
    %c56_i32_96 = arith.constant 56 : i32
    %287 = tpu.dynamic_rotate %262 by %c56_i32_96 dim 0 : vector<64x8xf32>, i32 -> vector<64x8xf32>
    %288 = vector.extract_strided_slice %1 {offsets = [0, 7], sizes = [64, 1], strides = [1, 1]} : vector<64x9xf32> to vector<64x1xf32>
    %289 = vector.broadcast %288 : vector<64x1xf32> to vector<64x8xf32>
    %290 = arith.mulf %287, %289 : vector<64x8xf32>
    %c55_i32_97 = arith.constant 55 : i32
    %291 = tpu.dynamic_rotate %262 by %c55_i32_97 dim 0 : vector<64x8xf32>, i32 -> vector<64x8xf32>
    %292 = vector.extract_strided_slice %1 {offsets = [0, 8], sizes = [64, 1], strides = [1, 1]} : vector<64x9xf32> to vector<64x1xf32>
    %293 = vector.broadcast %292 : vector<64x1xf32> to vector<64x8xf32>
    %294 = arith.mulf %291, %293 : vector<64x8xf32>
    %295 = tpu.concatenate %266, %270, %274, %278, %262, %282, %286, %290, %294 in 1 : vector<64x8xf32>, vector<64x8xf32>, vector<64x8xf32>, vector<64x8xf32>, vector<64x8xf32>, vector<64x8xf32>, vector<64x8xf32>, vector<64x8xf32>, vector<64x8xf32> -> vector<64x72xf32>
    %c0_98 = arith.constant 0 : index
    %c0_99 = arith.constant 0 : index
    %296 = vector.load %arg8[%c0_98, %c0_99] : memref<72x16xf32, #tpu.memory_space<vmem>>, vector<72x16xf32>
    %cst_100 = arith.constant dense<0.000000e+00> : vector<64x16xf32>
    %297 = tpu.matmul %295, %296, %cst_100 {dimension_numbers = #tpu.dot_dimension_numbers<[1], [0], [0], [1], [0, 0, 1, 1], [], []>} : vector<64x72xf32>, vector<72x16xf32>, vector<64x16xf32> -> vector<64x16xf32>
    %c0_101 = arith.constant 0 : index
    %c0_102 = arith.constant 0 : index
    %298 = vector.load %arg9[%c0_101, %c0_102] : memref<1x16xf32, #tpu.memory_space<vmem>>, vector<1x16xf32>
    %299 = vector.broadcast %298 : vector<1x16xf32> to vector<64x16xf32>
    %300 = arith.addf %297, %299 : vector<64x16xf32>
    %cst_103 = arith.constant 5.000000e-01 : f32
    %301 = vector.broadcast %cst_103 : f32 to vector<64x16xf32>
    %302 = arith.mulf %301, %300 : vector<64x16xf32>
    %cst_104 = arith.constant 0.707106769 : f32
    %303 = vector.broadcast %cst_104 : f32 to vector<64x16xf32>
    %304 = arith.mulf %300, %303 : vector<64x16xf32>
    %cst_105 = arith.constant 0.000000e+00 : f32
    %305 = vector.broadcast %cst_105 : f32 to vector<64x16xf32>
    %306 = arith.cmpf oge, %304, %305 : vector<64x16xf32>
    %cst_106 = arith.constant 1.000000e+00 : f32
    %cst_107 = arith.constant -1.000000e+00 : f32
    %307 = vector.broadcast %cst_106 : f32 to vector<64x16xf32>
    %308 = vector.broadcast %cst_107 : f32 to vector<64x16xf32>
    %309 = arith.select %306, %307, %308 : vector<64x16xi1>, vector<64x16xf32>
    %310 = math.absf %304 : vector<64x16xf32>
    %cst_108 = arith.constant 0.327591091 : f32
    %311 = vector.broadcast %cst_108 : f32 to vector<64x16xf32>
    %312 = arith.mulf %311, %310 : vector<64x16xf32>
    %cst_109 = arith.constant 1.000000e+00 : f32
    %313 = vector.broadcast %cst_109 : f32 to vector<64x16xf32>
    %314 = arith.addf %313, %312 : vector<64x16xf32>
    %cst_110 = arith.constant 1.000000e+00 : f32
    %315 = vector.broadcast %cst_110 : f32 to vector<64x16xf32>
    %316 = arith.divf %315, %314 : vector<64x16xf32>
    %cst_111 = arith.constant 1.06140542 : f32
    %317 = vector.broadcast %cst_111 : f32 to vector<64x16xf32>
    %318 = arith.mulf %317, %316 : vector<64x16xf32>
    %cst_112 = arith.constant -1.45315206 : f32
    %319 = vector.broadcast %cst_112 : f32 to vector<64x16xf32>
    %320 = arith.addf %318, %319 : vector<64x16xf32>
    %321 = arith.mulf %320, %316 : vector<64x16xf32>
    %cst_113 = arith.constant 1.42141378 : f32
    %322 = vector.broadcast %cst_113 : f32 to vector<64x16xf32>
    %323 = arith.addf %321, %322 : vector<64x16xf32>
    %324 = arith.mulf %323, %316 : vector<64x16xf32>
    %cst_114 = arith.constant -0.284496725 : f32
    %325 = vector.broadcast %cst_114 : f32 to vector<64x16xf32>
    %326 = arith.addf %324, %325 : vector<64x16xf32>
    %327 = arith.mulf %326, %316 : vector<64x16xf32>
    %cst_115 = arith.constant 0.254829586 : f32
    %328 = vector.broadcast %cst_115 : f32 to vector<64x16xf32>
    %329 = arith.addf %327, %328 : vector<64x16xf32>
    %330 = arith.mulf %329, %316 : vector<64x16xf32>
    %cst_116 = arith.constant 0.000000e+00 : f32
    %331 = vector.broadcast %cst_116 : f32 to vector<64x16xf32>
    %332 = arith.subf %331, %310 : vector<64x16xf32>
    %333 = arith.mulf %332, %310 : vector<64x16xf32>
    %334 = math.exp %333 : vector<64x16xf32>
    %335 = arith.mulf %330, %334 : vector<64x16xf32>
    %cst_117 = arith.constant 1.000000e+00 : f32
    %336 = vector.broadcast %cst_117 : f32 to vector<64x16xf32>
    %337 = arith.subf %336, %335 : vector<64x16xf32>
    %338 = arith.mulf %309, %337 : vector<64x16xf32>
    %cst_118 = arith.constant 1.000000e+00 : f32
    %339 = vector.broadcast %cst_118 : f32 to vector<64x16xf32>
    %340 = arith.addf %339, %338 : vector<64x16xf32>
    %341 = arith.mulf %302, %340 : vector<64x16xf32>
    %c9_i32_119 = arith.constant 9 : i32
    %342 = tpu.dynamic_rotate %341 by %c9_i32_119 dim 0 : vector<64x16xf32>, i32 -> vector<64x16xf32>
    %343 = vector.extract_strided_slice %1 {offsets = [0, 0], sizes = [64, 1], strides = [1, 1]} : vector<64x9xf32> to vector<64x1xf32>
    %344 = vector.broadcast %343 : vector<64x1xf32> to vector<64x16xf32>
    %345 = arith.mulf %342, %344 : vector<64x16xf32>
    %c8_i32_120 = arith.constant 8 : i32
    %346 = tpu.dynamic_rotate %341 by %c8_i32_120 dim 0 : vector<64x16xf32>, i32 -> vector<64x16xf32>
    %347 = vector.extract_strided_slice %1 {offsets = [0, 1], sizes = [64, 1], strides = [1, 1]} : vector<64x9xf32> to vector<64x1xf32>
    %348 = vector.broadcast %347 : vector<64x1xf32> to vector<64x16xf32>
    %349 = arith.mulf %346, %348 : vector<64x16xf32>
    %c7_i32_121 = arith.constant 7 : i32
    %350 = tpu.dynamic_rotate %341 by %c7_i32_121 dim 0 : vector<64x16xf32>, i32 -> vector<64x16xf32>
    %351 = vector.extract_strided_slice %1 {offsets = [0, 2], sizes = [64, 1], strides = [1, 1]} : vector<64x9xf32> to vector<64x1xf32>
    %352 = vector.broadcast %351 : vector<64x1xf32> to vector<64x16xf32>
    %353 = arith.mulf %350, %352 : vector<64x16xf32>
    %c1_i32_122 = arith.constant 1 : i32
    %354 = tpu.dynamic_rotate %341 by %c1_i32_122 dim 0 : vector<64x16xf32>, i32 -> vector<64x16xf32>
    %355 = vector.extract_strided_slice %1 {offsets = [0, 3], sizes = [64, 1], strides = [1, 1]} : vector<64x9xf32> to vector<64x1xf32>
    %356 = vector.broadcast %355 : vector<64x1xf32> to vector<64x16xf32>
    %357 = arith.mulf %354, %356 : vector<64x16xf32>
    %c63_i32_123 = arith.constant 63 : i32
    %358 = tpu.dynamic_rotate %341 by %c63_i32_123 dim 0 : vector<64x16xf32>, i32 -> vector<64x16xf32>
    %359 = vector.extract_strided_slice %1 {offsets = [0, 5], sizes = [64, 1], strides = [1, 1]} : vector<64x9xf32> to vector<64x1xf32>
    %360 = vector.broadcast %359 : vector<64x1xf32> to vector<64x16xf32>
    %361 = arith.mulf %358, %360 : vector<64x16xf32>
    %c57_i32_124 = arith.constant 57 : i32
    %362 = tpu.dynamic_rotate %341 by %c57_i32_124 dim 0 : vector<64x16xf32>, i32 -> vector<64x16xf32>
    %363 = vector.extract_strided_slice %1 {offsets = [0, 6], sizes = [64, 1], strides = [1, 1]} : vector<64x9xf32> to vector<64x1xf32>
    %364 = vector.broadcast %363 : vector<64x1xf32> to vector<64x16xf32>
    %365 = arith.mulf %362, %364 : vector<64x16xf32>
    %c56_i32_125 = arith.constant 56 : i32
    %366 = tpu.dynamic_rotate %341 by %c56_i32_125 dim 0 : vector<64x16xf32>, i32 -> vector<64x16xf32>
    %367 = vector.extract_strided_slice %1 {offsets = [0, 7], sizes = [64, 1], strides = [1, 1]} : vector<64x9xf32> to vector<64x1xf32>
    %368 = vector.broadcast %367 : vector<64x1xf32> to vector<64x16xf32>
    %369 = arith.mulf %366, %368 : vector<64x16xf32>
    %c55_i32_126 = arith.constant 55 : i32
    %370 = tpu.dynamic_rotate %341 by %c55_i32_126 dim 0 : vector<64x16xf32>, i32 -> vector<64x16xf32>
    %371 = vector.extract_strided_slice %1 {offsets = [0, 8], sizes = [64, 1], strides = [1, 1]} : vector<64x9xf32> to vector<64x1xf32>
    %372 = vector.broadcast %371 : vector<64x1xf32> to vector<64x16xf32>
    %373 = arith.mulf %370, %372 : vector<64x16xf32>
    %374 = tpu.concatenate %345, %349, %353, %357, %341, %361, %365, %369, %373 in 1 : vector<64x16xf32>, vector<64x16xf32>, vector<64x16xf32>, vector<64x16xf32>, vector<64x16xf32>, vector<64x16xf32>, vector<64x16xf32>, vector<64x16xf32>, vector<64x16xf32> -> vector<64x144xf32>
    %c0_127 = arith.constant 0 : index
    %c0_128 = arith.constant 0 : index
    %375 = vector.load %arg10[%c0_127, %c0_128] : memref<144x16xf32, #tpu.memory_space<vmem>>, vector<144x16xf32>
    %cst_129 = arith.constant dense<0.000000e+00> : vector<64x16xf32>
    %376 = tpu.matmul %374, %375, %cst_129 {dimension_numbers = #tpu.dot_dimension_numbers<[1], [0], [0], [1], [0, 0, 1, 1], [], []>} : vector<64x144xf32>, vector<144x16xf32>, vector<64x16xf32> -> vector<64x16xf32>
    %c0_130 = arith.constant 0 : index
    %c0_131 = arith.constant 0 : index
    %377 = vector.load %arg11[%c0_130, %c0_131] : memref<1x16xf32, #tpu.memory_space<vmem>>, vector<1x16xf32>
    %378 = vector.broadcast %377 : vector<1x16xf32> to vector<64x16xf32>
    %379 = arith.addf %376, %378 : vector<64x16xf32>
    %cst_132 = arith.constant 5.000000e-01 : f32
    %380 = vector.broadcast %cst_132 : f32 to vector<64x16xf32>
    %381 = arith.mulf %380, %379 : vector<64x16xf32>
    %cst_133 = arith.constant 0.707106769 : f32
    %382 = vector.broadcast %cst_133 : f32 to vector<64x16xf32>
    %383 = arith.mulf %379, %382 : vector<64x16xf32>
    %cst_134 = arith.constant 0.000000e+00 : f32
    %384 = vector.broadcast %cst_134 : f32 to vector<64x16xf32>
    %385 = arith.cmpf oge, %383, %384 : vector<64x16xf32>
    %cst_135 = arith.constant 1.000000e+00 : f32
    %cst_136 = arith.constant -1.000000e+00 : f32
    %386 = vector.broadcast %cst_135 : f32 to vector<64x16xf32>
    %387 = vector.broadcast %cst_136 : f32 to vector<64x16xf32>
    %388 = arith.select %385, %386, %387 : vector<64x16xi1>, vector<64x16xf32>
    %389 = math.absf %383 : vector<64x16xf32>
    %cst_137 = arith.constant 0.327591091 : f32
    %390 = vector.broadcast %cst_137 : f32 to vector<64x16xf32>
    %391 = arith.mulf %390, %389 : vector<64x16xf32>
    %cst_138 = arith.constant 1.000000e+00 : f32
    %392 = vector.broadcast %cst_138 : f32 to vector<64x16xf32>
    %393 = arith.addf %392, %391 : vector<64x16xf32>
    %cst_139 = arith.constant 1.000000e+00 : f32
    %394 = vector.broadcast %cst_139 : f32 to vector<64x16xf32>
    %395 = arith.divf %394, %393 : vector<64x16xf32>
    %cst_140 = arith.constant 1.06140542 : f32
    %396 = vector.broadcast %cst_140 : f32 to vector<64x16xf32>
    %397 = arith.mulf %396, %395 : vector<64x16xf32>
    %cst_141 = arith.constant -1.45315206 : f32
    %398 = vector.broadcast %cst_141 : f32 to vector<64x16xf32>
    %399 = arith.addf %397, %398 : vector<64x16xf32>
    %400 = arith.mulf %399, %395 : vector<64x16xf32>
    %cst_142 = arith.constant 1.42141378 : f32
    %401 = vector.broadcast %cst_142 : f32 to vector<64x16xf32>
    %402 = arith.addf %400, %401 : vector<64x16xf32>
    %403 = arith.mulf %402, %395 : vector<64x16xf32>
    %cst_143 = arith.constant -0.284496725 : f32
    %404 = vector.broadcast %cst_143 : f32 to vector<64x16xf32>
    %405 = arith.addf %403, %404 : vector<64x16xf32>
    %406 = arith.mulf %405, %395 : vector<64x16xf32>
    %cst_144 = arith.constant 0.254829586 : f32
    %407 = vector.broadcast %cst_144 : f32 to vector<64x16xf32>
    %408 = arith.addf %406, %407 : vector<64x16xf32>
    %409 = arith.mulf %408, %395 : vector<64x16xf32>
    %cst_145 = arith.constant 0.000000e+00 : f32
    %410 = vector.broadcast %cst_145 : f32 to vector<64x16xf32>
    %411 = arith.subf %410, %389 : vector<64x16xf32>
    %412 = arith.mulf %411, %389 : vector<64x16xf32>
    %413 = math.exp %412 : vector<64x16xf32>
    %414 = arith.mulf %409, %413 : vector<64x16xf32>
    %cst_146 = arith.constant 1.000000e+00 : f32
    %415 = vector.broadcast %cst_146 : f32 to vector<64x16xf32>
    %416 = arith.subf %415, %414 : vector<64x16xf32>
    %417 = arith.mulf %388, %416 : vector<64x16xf32>
    %cst_147 = arith.constant 1.000000e+00 : f32
    %418 = vector.broadcast %cst_147 : f32 to vector<64x16xf32>
    %419 = arith.addf %418, %417 : vector<64x16xf32>
    %420 = arith.mulf %381, %419 : vector<64x16xf32>
    %c0_148 = arith.constant 0 : index
    %c0_149 = arith.constant 0 : index
    %421 = vector.load %arg19[%c0_148, %c0_149] : memref<256x64xf32, #tpu.memory_space<vmem>>, vector<256x64xf32>
    %cst_150 = arith.constant dense<0.000000e+00> : vector<256x16xf32>
    %422 = tpu.matmul %421, %420, %cst_150 {dimension_numbers = #tpu.dot_dimension_numbers<[1], [0], [0], [1], [0, 0, 1, 1], [], []>} : vector<256x64xf32>, vector<64x16xf32>, vector<256x16xf32> -> vector<256x16xf32>
    %c17_i32_151 = arith.constant 17 : i32
    %423 = tpu.dynamic_rotate %422 by %c17_i32_151 dim 0 : vector<256x16xf32>, i32 -> vector<256x16xf32>
    %424 = vector.extract_strided_slice %0 {offsets = [0, 0], sizes = [256, 1], strides = [1, 1]} : vector<256x9xf32> to vector<256x1xf32>
    %425 = vector.broadcast %424 : vector<256x1xf32> to vector<256x16xf32>
    %426 = arith.mulf %423, %425 : vector<256x16xf32>
    %c16_i32_152 = arith.constant 16 : i32
    %427 = tpu.dynamic_rotate %422 by %c16_i32_152 dim 0 : vector<256x16xf32>, i32 -> vector<256x16xf32>
    %428 = vector.extract_strided_slice %0 {offsets = [0, 1], sizes = [256, 1], strides = [1, 1]} : vector<256x9xf32> to vector<256x1xf32>
    %429 = vector.broadcast %428 : vector<256x1xf32> to vector<256x16xf32>
    %430 = arith.mulf %427, %429 : vector<256x16xf32>
    %c15_i32_153 = arith.constant 15 : i32
    %431 = tpu.dynamic_rotate %422 by %c15_i32_153 dim 0 : vector<256x16xf32>, i32 -> vector<256x16xf32>
    %432 = vector.extract_strided_slice %0 {offsets = [0, 2], sizes = [256, 1], strides = [1, 1]} : vector<256x9xf32> to vector<256x1xf32>
    %433 = vector.broadcast %432 : vector<256x1xf32> to vector<256x16xf32>
    %434 = arith.mulf %431, %433 : vector<256x16xf32>
    %c1_i32_154 = arith.constant 1 : i32
    %435 = tpu.dynamic_rotate %422 by %c1_i32_154 dim 0 : vector<256x16xf32>, i32 -> vector<256x16xf32>
    %436 = vector.extract_strided_slice %0 {offsets = [0, 3], sizes = [256, 1], strides = [1, 1]} : vector<256x9xf32> to vector<256x1xf32>
    %437 = vector.broadcast %436 : vector<256x1xf32> to vector<256x16xf32>
    %438 = arith.mulf %435, %437 : vector<256x16xf32>
    %c255_i32_155 = arith.constant 255 : i32
    %439 = tpu.dynamic_rotate %422 by %c255_i32_155 dim 0 : vector<256x16xf32>, i32 -> vector<256x16xf32>
    %440 = vector.extract_strided_slice %0 {offsets = [0, 5], sizes = [256, 1], strides = [1, 1]} : vector<256x9xf32> to vector<256x1xf32>
    %441 = vector.broadcast %440 : vector<256x1xf32> to vector<256x16xf32>
    %442 = arith.mulf %439, %441 : vector<256x16xf32>
    %c241_i32_156 = arith.constant 241 : i32
    %443 = tpu.dynamic_rotate %422 by %c241_i32_156 dim 0 : vector<256x16xf32>, i32 -> vector<256x16xf32>
    %444 = vector.extract_strided_slice %0 {offsets = [0, 6], sizes = [256, 1], strides = [1, 1]} : vector<256x9xf32> to vector<256x1xf32>
    %445 = vector.broadcast %444 : vector<256x1xf32> to vector<256x16xf32>
    %446 = arith.mulf %443, %445 : vector<256x16xf32>
    %c240_i32_157 = arith.constant 240 : i32
    %447 = tpu.dynamic_rotate %422 by %c240_i32_157 dim 0 : vector<256x16xf32>, i32 -> vector<256x16xf32>
    %448 = vector.extract_strided_slice %0 {offsets = [0, 7], sizes = [256, 1], strides = [1, 1]} : vector<256x9xf32> to vector<256x1xf32>
    %449 = vector.broadcast %448 : vector<256x1xf32> to vector<256x16xf32>
    %450 = arith.mulf %447, %449 : vector<256x16xf32>
    %c239_i32_158 = arith.constant 239 : i32
    %451 = tpu.dynamic_rotate %422 by %c239_i32_158 dim 0 : vector<256x16xf32>, i32 -> vector<256x16xf32>
    %452 = vector.extract_strided_slice %0 {offsets = [0, 8], sizes = [256, 1], strides = [1, 1]} : vector<256x9xf32> to vector<256x1xf32>
    %453 = vector.broadcast %452 : vector<256x1xf32> to vector<256x16xf32>
    %454 = arith.mulf %451, %453 : vector<256x16xf32>
    %c0_159 = arith.constant 0 : index
    %c0_160 = arith.constant 0 : index
    %455 = vector.load %arg12[%c0_159, %c0_160] : memref<1x144xf32, #tpu.memory_space<vmem>>, vector<1x16xf32>
    %456 = vector.broadcast %455 : vector<1x16xf32> to vector<256x16xf32>
    %457 = arith.mulf %426, %456 : vector<256x16xf32>
    %c0_161 = arith.constant 0 : index
    %c16 = arith.constant 16 : index
    %458 = vector.load %arg12[%c0_161, %c16] : memref<1x144xf32, #tpu.memory_space<vmem>>, vector<1x16xf32>
    %459 = vector.broadcast %458 : vector<1x16xf32> to vector<256x16xf32>
    %460 = arith.mulf %430, %459 : vector<256x16xf32>
    %461 = arith.addf %457, %460 : vector<256x16xf32>
    %c0_162 = arith.constant 0 : index
    %c32 = arith.constant 32 : index
    %462 = vector.load %arg12[%c0_162, %c32] : memref<1x144xf32, #tpu.memory_space<vmem>>, vector<1x16xf32>
    %463 = vector.broadcast %462 : vector<1x16xf32> to vector<256x16xf32>
    %464 = arith.mulf %434, %463 : vector<256x16xf32>
    %465 = arith.addf %461, %464 : vector<256x16xf32>
    %c0_163 = arith.constant 0 : index
    %c48 = arith.constant 48 : index
    %466 = vector.load %arg12[%c0_163, %c48] : memref<1x144xf32, #tpu.memory_space<vmem>>, vector<1x16xf32>
    %467 = vector.broadcast %466 : vector<1x16xf32> to vector<256x16xf32>
    %468 = arith.mulf %438, %467 : vector<256x16xf32>
    %469 = arith.addf %465, %468 : vector<256x16xf32>
    %c0_164 = arith.constant 0 : index
    %c64 = arith.constant 64 : index
    %470 = vector.load %arg12[%c0_164, %c64] : memref<1x144xf32, #tpu.memory_space<vmem>>, vector<1x16xf32>
    %471 = vector.broadcast %470 : vector<1x16xf32> to vector<256x16xf32>
    %472 = arith.mulf %422, %471 : vector<256x16xf32>
    %473 = arith.addf %469, %472 : vector<256x16xf32>
    %c0_165 = arith.constant 0 : index
    %c80 = arith.constant 80 : index
    %474 = vector.load %arg12[%c0_165, %c80] : memref<1x144xf32, #tpu.memory_space<vmem>>, vector<1x16xf32>
    %475 = vector.broadcast %474 : vector<1x16xf32> to vector<256x16xf32>
    %476 = arith.mulf %442, %475 : vector<256x16xf32>
    %477 = arith.addf %473, %476 : vector<256x16xf32>
    %c0_166 = arith.constant 0 : index
    %c96 = arith.constant 96 : index
    %478 = vector.load %arg12[%c0_166, %c96] : memref<1x144xf32, #tpu.memory_space<vmem>>, vector<1x16xf32>
    %479 = vector.broadcast %478 : vector<1x16xf32> to vector<256x16xf32>
    %480 = arith.mulf %446, %479 : vector<256x16xf32>
    %481 = arith.addf %477, %480 : vector<256x16xf32>
    %c0_167 = arith.constant 0 : index
    %c112 = arith.constant 112 : index
    %482 = vector.load %arg12[%c0_167, %c112] : memref<1x144xf32, #tpu.memory_space<vmem>>, vector<1x16xf32>
    %483 = vector.broadcast %482 : vector<1x16xf32> to vector<256x16xf32>
    %484 = arith.mulf %450, %483 : vector<256x16xf32>
    %485 = arith.addf %481, %484 : vector<256x16xf32>
    %c0_168 = arith.constant 0 : index
    %c128 = arith.constant 128 : index
    %486 = vector.load %arg12[%c0_168, %c128] : memref<1x144xf32, #tpu.memory_space<vmem>>, vector<1x16xf32>
    %487 = vector.broadcast %486 : vector<1x16xf32> to vector<256x16xf32>
    %488 = arith.mulf %454, %487 : vector<256x16xf32>
    %489 = arith.addf %485, %488 : vector<256x16xf32>
    %cst_169 = arith.constant dense<0.000000e+00> : vector<256xf32>
    %490 = vector.multi_reduction <add>, %489, %cst_169 [1] : vector<256x16xf32> to vector<256xf32>
    %491 = vector.shape_cast %490 : vector<256xf32> to vector<256x1xf32>
    %c0_170 = arith.constant 0 : index
    %c0_171 = arith.constant 0 : index
    %492 = vector.load %arg13[%c0_170, %c0_171] : memref<1x1xf32, #tpu.memory_space<vmem>>, vector<1x1xf32>
    %493 = vector.broadcast %492 : vector<1x1xf32> to vector<256x1xf32>
    %494 = arith.addf %491, %493 : vector<256x1xf32>
    %cst_172 = arith.constant -1.000000e+00 : f32
    %cst_173 = arith.constant 1.000000e+00 : f32
    %495 = vector.broadcast %cst_172 : f32 to vector<256x1xf32>
    %496 = arith.maximumf %495, %494 : vector<256x1xf32>
    %497 = vector.broadcast %cst_173 : f32 to vector<256x1xf32>
    %498 = arith.minimumf %497, %496 : vector<256x1xf32>
    %c0_174 = arith.constant 0 : index
    %c0_175 = arith.constant 0 : index
    %c0_176 = arith.constant 0 : index
    %499 = vector.load %arg21[%c0_174, %c0_175, %c0_176] : memref<1x256x1xf32, #tpu.memory_space<vmem>>, vector<1x256x1xf32>
    %500 = vector.shape_cast %499 : vector<1x256x1xf32> to vector<256x1xf32>
    %501 = vector.shape_cast %498 : vector<256x1xf32> to vector<1x256x1xf32>
    tpu.vector_store %arg21[%c0_174, %c0_175, %c0_176], %501 {strides = array<i32>} : memref<1x256x1xf32, #tpu.memory_space<vmem>>, vector<1x256x1xf32>,
    return
  }
  func.func @transform_0(%arg0: i32) -> (i32, i32, i32) {
    %c0_i32 = arith.constant 0 : i32
    %c0_i32_0 = arith.constant 0 : i32
    %c0_i32_1 = arith.constant 0 : i32
    return %arg0, %c0_i32, %c0_i32_0 : i32, i32, i32
  }
  func.func @transform_1(%arg0: i32) -> (i32, i32) {
    %c0_i32 = arith.constant 0 : i32
    %c0_i32_0 = arith.constant 0 : i32
    %c0_i32_1 = arith.constant 0 : i32
    return %c0_i32, %c0_i32_0 : i32, i32
  }
  func.func @transform_2(%arg0: i32) -> (i32, i32) {
    %c0_i32 = arith.constant 0 : i32
    %c0_i32_0 = arith.constant 0 : i32
    %c0_i32_1 = arith.constant 0 : i32
    return %c0_i32, %c0_i32_0 : i32, i32
  }
  func.func @transform_3(%arg0: i32) -> (i32, i32) {
    %c0_i32 = arith.constant 0 : i32
    %c0_i32_0 = arith.constant 0 : i32
    %c0_i32_1 = arith.constant 0 : i32
    return %c0_i32, %c0_i32_0 : i32, i32
  }
  func.func @transform_4(%arg0: i32) -> (i32, i32) {
    %c0_i32 = arith.constant 0 : i32
    %c0_i32_0 = arith.constant 0 : i32
    %c0_i32_1 = arith.constant 0 : i32
    return %c0_i32, %c0_i32_0 : i32, i32
  }
  func.func @transform_5(%arg0: i32) -> (i32, i32) {
    %c0_i32 = arith.constant 0 : i32
    %c0_i32_0 = arith.constant 0 : i32
    %c0_i32_1 = arith.constant 0 : i32
    return %c0_i32, %c0_i32_0 : i32, i32
  }
  func.func @transform_6(%arg0: i32) -> (i32, i32) {
    %c0_i32 = arith.constant 0 : i32
    %c0_i32_0 = arith.constant 0 : i32
    %c0_i32_1 = arith.constant 0 : i32
    return %c0_i32, %c0_i32_0 : i32, i32
  }
  func.func @transform_7(%arg0: i32) -> (i32, i32) {
    %c0_i32 = arith.constant 0 : i32
    %c0_i32_0 = arith.constant 0 : i32
    %c0_i32_1 = arith.constant 0 : i32
    return %c0_i32, %c0_i32_0 : i32, i32
  }
  func.func @transform_8(%arg0: i32) -> (i32, i32) {
    %c0_i32 = arith.constant 0 : i32
    %c0_i32_0 = arith.constant 0 : i32
    %c0_i32_1 = arith.constant 0 : i32
    return %c0_i32, %c0_i32_0 : i32, i32
  }
  func.func @transform_9(%arg0: i32) -> (i32, i32) {
    %c0_i32 = arith.constant 0 : i32
    %c0_i32_0 = arith.constant 0 : i32
    %c0_i32_1 = arith.constant 0 : i32
    return %c0_i32, %c0_i32_0 : i32, i32
  }
  func.func @transform_10(%arg0: i32) -> (i32, i32) {
    %c0_i32 = arith.constant 0 : i32
    %c0_i32_0 = arith.constant 0 : i32
    %c0_i32_1 = arith.constant 0 : i32
    return %c0_i32, %c0_i32_0 : i32, i32
  }
  func.func @transform_11(%arg0: i32) -> (i32, i32) {
    %c0_i32 = arith.constant 0 : i32
    %c0_i32_0 = arith.constant 0 : i32
    %c0_i32_1 = arith.constant 0 : i32
    return %c0_i32, %c0_i32_0 : i32, i32
  }
  func.func @transform_12(%arg0: i32) -> (i32, i32) {
    %c0_i32 = arith.constant 0 : i32
    %c0_i32_0 = arith.constant 0 : i32
    %c0_i32_1 = arith.constant 0 : i32
    return %c0_i32, %c0_i32_0 : i32, i32
  }
  func.func @transform_13(%arg0: i32) -> (i32, i32) {
    %c0_i32 = arith.constant 0 : i32
    %c0_i32_0 = arith.constant 0 : i32
    %c0_i32_1 = arith.constant 0 : i32
    return %c0_i32, %c0_i32_0 : i32, i32
  }
  func.func @transform_14(%arg0: i32) -> (i32, i32) {
    %c0_i32 = arith.constant 0 : i32
    %c0_i32_0 = arith.constant 0 : i32
    %c0_i32_1 = arith.constant 0 : i32
    return %c0_i32, %c0_i32_0 : i32, i32
  }
  func.func @transform_15(%arg0: i32) -> (i32, i32) {
    %c0_i32 = arith.constant 0 : i32
    %c0_i32_0 = arith.constant 0 : i32
    %c0_i32_1 = arith.constant 0 : i32
    return %c0_i32, %c0_i32_0 : i32, i32
  }
  func.func @transform_16(%arg0: i32) -> (i32, i32) {
    %c0_i32 = arith.constant 0 : i32
    %c0_i32_0 = arith.constant 0 : i32
    %c0_i32_1 = arith.constant 0 : i32
    return %c0_i32, %c0_i32_0 : i32, i32
  }
  func.func @transform_17(%arg0: i32) -> (i32, i32) {
    %c0_i32 = arith.constant 0 : i32
    %c0_i32_0 = arith.constant 0 : i32
    %c0_i32_1 = arith.constant 0 : i32
    return %c0_i32, %c0_i32_0 : i32, i32
  }
  func.func @transform_18(%arg0: i32) -> (i32, i32) {
    %c0_i32 = arith.constant 0 : i32
    %c0_i32_0 = arith.constant 0 : i32
    %c0_i32_1 = arith.constant 0 : i32
    return %c0_i32, %c0_i32_0 : i32, i32
  }
  func.func @transform_19(%arg0: i32) -> (i32, i32) {
    %c0_i32 = arith.constant 0 : i32
    %c0_i32_0 = arith.constant 0 : i32
    %c0_i32_1 = arith.constant 0 : i32
    return %c0_i32, %c0_i32_0 : i32, i32
  }
  func.func @transform_20(%arg0: i32) -> (i32, i32, i32) {
    %c0_i32 = arith.constant 0 : i32
    %c0_i32_0 = arith.constant 0 : i32
    %c0_i32_1 = arith.constant 0 : i32
    return %arg0, %c0_i32, %c0_i32_0 : i32, i32, i32
  }
  func.func @transform_21(%arg0: i32) -> (i32, i32, i32) {
    %c0_i32 = arith.constant 0 : i32
    %c0_i32_0 = arith.constant 0 : i32
    %c0_i32_1 = arith.constant 0 : i32
    return %arg0, %c0_i32, %c0_i32_0 : i32, i32, i32
  }
}

</mosaic_0001>

<llo_original>
// kernel: lfq_autoencoder_forward.1
$region0: #{lfq_autoencoder_forward.1}
  #allocation0 [shape = 'u32[]', space=smem, size = 0x4, offset = 0x4, fixed_abs, tag = 'smem constant byte address 0x4 - core index']
  #allocation1 [shape = 'u32[72,128]{1,0:T(1,128)}', space=vmem, size = 0x9000, scoped, tag = 'internal scratch']
  #allocation2 [shape = 'f32[1,1]{1,0:T(1,128)S(1)}', space=vmem, size = 0x200, scoped, tag = 'scoped memory for lfq_autoencoder_forward.1']
  %s0 = inlined_call_operand.vmem [shape: f32[2,256,1], index: 0, kind: input, shape index: {}]
  %s1 = inlined_call_operand.vmem [shape: f32[9,16], index: 1, kind: input, shape index: {}]
  %s2 = inlined_call_operand.vmem [shape: f32[1,16], index: 2, kind: input, shape index: {}]
  %s3 = inlined_call_operand.vmem [shape: f32[144,16], index: 3, kind: input, shape index: {}]
  %s4 = inlined_call_operand.vmem [shape: f32[1,16], index: 4, kind: input, shape index: {}]
  %s5 = inlined_call_operand.vmem [shape: f32[144,8], index: 5, kind: input, shape index: {}]
  %s6 = inlined_call_operand.vmem [shape: f32[1,8], index: 6, kind: input, shape index: {}]
  %s7 = inlined_call_operand.hbm [shape: f32[72,16], index: 7, kind: input, shape index: {}]
  %s8 = inlined_call_operand.vmem [shape: f32[1,16], index: 8, kind: input, shape index: {}]
  %s9 = inlined_call_operand.hbm [shape: f32[144,16], index: 9, kind: input, shape index: {}]
  %s10 = inlined_call_operand.vmem [shape: f32[1,16], index: 10, kind: input, shape index: {}]
  %s11 = inlined_call_operand.vmem [shape: f32[1,144], index: 11, kind: input, shape index: {}]
  %s12 = inlined_call_operand.<no memory space> [shape: f32[1,1], index: 12, kind: input, shape index: {}]
  %s13 = inlined_call_operand.vmem [shape: f32[256,9], index: 13, kind: input, shape index: {}]
  %s14 = inlined_call_operand.vmem [shape: f32[64,9], index: 14, kind: input, shape index: {}]
  %s15 = inlined_call_operand.hbm [shape: f32[64,256], index: 15, kind: input, shape index: {}]
  %s16 = inlined_call_operand.vmem [shape: f32[16,64], index: 16, kind: input, shape index: {}]
  %s17 = inlined_call_operand.hbm [shape: f32[64,16], index: 17, kind: input, shape index: {}]
  %s18 = inlined_call_operand.vmem [shape: f32[256,64], index: 18, kind: input, shape index: {}]
  %s19 = inlined_call_operand.vmem [shape: f32[1,8], index: 19, kind: input, shape index: {}]
  %s20 = inlined_call_operand.vmem [shape: f32[2,256,1], index: 20, kind: output, shape index: {0}]
  %s21 = inlined_call_operand.vmem [shape: s32[2,16,1], index: 21, kind: output, shape index: {1}]
  %22 = xla_tuple %s20, %s21
  %s23 = sld [smem:[#allocation0]]
  $region137: #{lfq_autoencoder_forward.1} parent=0
    _
  %s25 = ssub.s32 1, %s23
  %s26 = scalar_select 0, %s25, %s23
  %v27 = vstv %s12
  %28 = vst [vmem:[#allocation2] sm:$0x1] %v27
  $region1: #{lfq_autoencoder_forward.1} parent=0
    #allocation3 [shape = 'u8[36864]{0}', space=vmem, size = 0x9000, scoped, tag = 'input window, operand 7, single buffered']
    #allocation4 [shape = 's32[2]{0}', space=sflag, size = 0x8, scoped, tag = 'scoped memory for lfq_autoencoder_forward.1']
    #allocation5 [shape = 'u8[73728]{0}', space=vmem, size = 0x12000, scoped, tag = 'input window, operand 9, single buffered']
    #allocation6 [shape = 's32[1]{0}', space=sflag, size = 0x4, scoped, tag = 'scoped memory for lfq_autoencoder_forward.1']
    #allocation7 [shape = 'u8[65536]{0}', space=vmem, size = 0x10000, scoped, tag = 'input window, operand 15, single buffered']
    #allocation8 [shape = 'u8[32768]{0}', space=vmem, size = 0x8000, scoped, tag = 'input window, operand 17, single buffered']
    #allocation9 [shape = 's32[1]{0}', space=sflag, size = 0x4, scoped, tag = 'scoped memory for lfq_autoencoder_forward.1']
    %29 = vsyncpa [#allocation4], 0
    %30 = vsyncpa [#allocation6], 0
    %31 = vsyncpa [#allocation9], 0
    loop: start=0, step=1, limit=4
    $region2: #{lfq_autoencoder_forward.1} parent=1 // loop_pre_header
      _
    $region3: #{lfq_autoencoder_forward.1} parent=1 // loop_header
      %s33 = sphi 0, %s37
      %p34 = scmp.ge.s32.totalorder %s33, 4
      %s43 = sphi 0, %s45
      %s46 = sphi 0, %s43
      %s47 = sphi 0, %s46
      %s63 = sphi 0, %s47
      %s67 = sphi 0, %s67
      %s69 = sphi 0, %s67
      %s70 = sphi 0, %s69
      %s84 = sphi 0, %s70
      %s88 = sphi 0, %s88
      %s90 = sphi 0, %s88
      %s91 = sphi 0, %s90
      %s105 = sphi 0, %s91
      %s109 = sphi 0, %s109
      %s111 = sphi 0, %s109
      %s112 = sphi 0, %s111
      %s126 = sphi 0, %s112
      %s130 = sphi 0, %s130
      %s132 = sphi 0, %s130
      %s133 = sphi 0, %s132
      %s147 = sphi 0, %s133
      %s151 = sphi 0, %s151
      %s153 = sphi 0, %s151
      %s154 = sphi 0, %s153
      %s168 = sphi 0, %s154
      %s172 = sphi 0, %s172
      %s174 = sphi 0, %s172
      %s175 = sphi 0, %s174
      %s189 = sphi 0, %s175
      %s193 = sphi 0, %s193
      %s195 = sphi 0, %s193
      %s196 = sphi 0, %s195
      %s210 = sphi 0, %s196
      %s214 = sphi 0, %s214
      %s216 = sphi 0, %s214
      %s217 = sphi 0, %s216
      %s231 = sphi 0, %s217
      %s235 = sphi 0, %s235
      %s237 = sphi 0, %s235
      %s238 = sphi 0, %s237
      %s252 = sphi 0, %s238
      %s256 = sphi 0, %s256
      %s258 = sphi 0, %s256
      %s259 = sphi 0, %s258
      %s273 = sphi 0, %s259
      %s277 = sphi 0, %s277
      %s279 = sphi 0, %s277
      %s280 = sphi 0, %s279
      %s294 = sphi 0, %s280
      %s298 = sphi 0, %s298
      %s300 = sphi 0, %s298
      %s301 = sphi 0, %s300
      %s315 = sphi 0, %s301
      %s319 = sphi 0, %s319
      %s321 = sphi 0, %s319
      %s322 = sphi 0, %s321
      %s336 = sphi 0, %s322
      %s340 = sphi 0, %s340
      %s342 = sphi 0, %s340
      %s343 = sphi 0, %s342
      %s357 = sphi 0, %s343
      %s361 = sphi 0, %s361
      %s363 = sphi 0, %s361
      %s364 = sphi 0, %s363
      %s378 = sphi 0, %s364
      %s382 = sphi 0, %s382
      %s384 = sphi 0, %s382
      %s385 = sphi 0, %s384
      %s399 = sphi 0, %s385
      %s403 = sphi 0, %s403
      %s405 = sphi 0, %s403
      %s406 = sphi 0, %s405
      %s420 = sphi 0, %s406
      %s424 = sphi 0, %s424
      %s426 = sphi 0, %s424
      %s427 = sphi 0, %s426
      %s441 = sphi 0, %s427
      %s445 = sphi 0, %s445
      %s447 = sphi 0, %s445
      %s448 = sphi 0, %s447
      %s462 = sphi 0, %s448
      %s468 = sphi 0, %s470
      %s471 = sphi 0, %s468
      %s472 = sphi 0, %s471
      %s488 = sphi 0, %s472
      %s494 = sphi 0, %s496
      %s497 = sphi 0, %s494
      %s498 = sphi 0, %s497
      %s514 = sphi 0, %s498
    $region4: #{lfq_autoencoder_forward.1} parent=1 // loop_header_branch
      %36 = sbr.rel (%p34) target = $region8
    $region5: #{lfq_autoencoder_forward.1} parent=1 // loop_body
      %s38 = ssub.s32 %s33, 1
      %s39 = ssub.s32 %s33, 2
      %s40 = sadd.s32 %s33, 1
      %s41 = ssub.s32 %s33, %s40
      %p42 = scmp.eq.s32.totalorder %s41, 0
      %s44 = sadd.s32 %s43, 1
      %s45 = scalar_select %p42, %s43, %s44
      %p48 = pneg %p42
      %p49 = scmp.eq.s32.totalorder %s33, 1
      %p50 = por %p48, %p49
      %p51 = scmp.ne.s32.totalorder %s43, %s46
      %p52 = scmp.eq.s32.totalorder %s33, 0
      %p53 = por %p51, %p52
      %p54 = scmp.ne.s32.totalorder %s43, %s46
      %p55 = scmp.eq.s32.totalorder %s38, 1
      %p56 = por %p54, %p55
      %p57 = scmp.ne.s32.totalorder %s46, %s47
      %p58 = scmp.eq.s32.totalorder %s38, 0
      %p59 = por %p57, %p58
      %p60 = scmp.ne.s32.totalorder %s46, %s47
      %p61 = scmp.eq.s32.totalorder %s39, 1
      %p62 = por %p60, %p61
      %p64 = scmp.ne.s32.totalorder %s47, %s63
      %p65 = scmp.eq.s32.totalorder %s39, 0
      %p66 = por %p64, %p65
      %s68 = sadd.s32 %s67, 1
      %p71 = scmp.eq.s32.totalorder %s33, 1
      %p72 = scmp.ne.s32.totalorder %s67, %s69
      %p73 = scmp.eq.s32.totalorder %s33, 0
      %p74 = por %p72, %p73
      %p75 = scmp.ne.s32.totalorder %s67, %s69
      %p76 = scmp.eq.s32.totalorder %s38, 1
      %p77 = por %p75, %p76
      %p78 = scmp.ne.s32.totalorder %s69, %s70
      %p79 = scmp.eq.s32.totalorder %s38, 0
      %p80 = por %p78, %p79
      %p81 = scmp.ne.s32.totalorder %s69, %s70
      %p82 = scmp.eq.s32.totalorder %s39, 1
      %p83 = por %p81, %p82
      %p85 = scmp.ne.s32.totalorder %s70, %s84
      %p86 = scmp.eq.s32.totalorder %s39, 0
      %p87 = por %p85, %p86
      %s89 = sadd.s32 %s88, 1
      %p92 = scmp.eq.s32.totalorder %s33, 1
      %p93 = scmp.ne.s32.totalorder %s88, %s90
      %p94 = scmp.eq.s32.totalorder %s33, 0
      %p95 = por %p93, %p94
      %p96 = scmp.ne.s32.totalorder %s88, %s90
      %p97 = scmp.eq.s32.totalorder %s38, 1
      %p98 = por %p96, %p97
      %p99 = scmp.ne.s32.totalorder %s90, %s91
      %p100 = scmp.eq.s32.totalorder %s38, 0
      %p101 = por %p99, %p100
      %p102 = scmp.ne.s32.totalorder %s90, %s91
      %p103 = scmp.eq.s32.totalorder %s39, 1
      %p104 = por %p102, %p103
      %p106 = scmp.ne.s32.totalorder %s91, %s105
      %p107 = scmp.eq.s32.totalorder %s39, 0
      %p108 = por %p106, %p107
      %s110 = sadd.s32 %s109, 1
      %p113 = scmp.eq.s32.totalorder %s33, 1
      %p114 = scmp.ne.s32.totalorder %s109, %s111
      %p115 = scmp.eq.s32.totalorder %s33, 0
      %p116 = por %p114, %p115
      %p117 = scmp.ne.s32.totalorder %s109, %s111
      %p118 = scmp.eq.s32.totalorder %s38, 1
      %p119 = por %p117, %p118
      %p120 = scmp.ne.s32.totalorder %s111, %s112
      %p121 = scmp.eq.s32.totalorder %s38, 0
      %p122 = por %p120, %p121
      %p123 = scmp.ne.s32.totalorder %s111, %s112
      %p124 = scmp.eq.s32.totalorder %s39, 1
      %p125 = por %p123, %p124
      %p127 = scmp.ne.s32.totalorder %s112, %s126
      %p128 = scmp.eq.s32.totalorder %s39, 0
      %p129 = por %p127, %p128
      %s131 = sadd.s32 %s130, 1
      %p134 = scmp.eq.s32.totalorder %s33, 1
      %p135 = scmp.ne.s32.totalorder %s130, %s132
      %p136 = scmp.eq.s32.totalorder %s33, 0
      %p137 = por %p135, %p136
      %p138 = scmp.ne.s32.totalorder %s130, %s132
      %p139 = scmp.eq.s32.totalorder %s38, 1
      %p140 = por %p138, %p139
      %p141 = scmp.ne.s32.totalorder %s132, %s133
      %p142 = scmp.eq.s32.totalorder %s38, 0
      %p143 = por %p141, %p142
      %p144 = scmp.ne.s32.totalorder %s132, %s133
      %p145 = scmp.eq.s32.totalorder %s39, 1
      %p146 = por %p144, %p145
      %p148 = scmp.ne.s32.totalorder %s133, %s147
      %p149 = scmp.eq.s32.totalorder %s39, 0
      %p150 = por %p148, %p149
      %s152 = sadd.s32 %s151, 1
      %p155 = scmp.eq.s32.totalorder %s33, 1
      %p156 = scmp.ne.s32.totalorder %s151, %s153
      %p157 = scmp.eq.s32.totalorder %s33, 0
      %p158 = por %p156, %p157
      %p159 = scmp.ne.s32.totalorder %s151, %s153
      %p160 = scmp.eq.s32.totalorder %s38, 1
      %p161 = por %p159, %p160
      %p162 = scmp.ne.s32.totalorder %s153, %s154
      %p163 = scmp.eq.s32.totalorder %s38, 0
      %p164 = por %p162, %p163
      %p165 = scmp.ne.s32.totalorder %s153, %s154
      %p166 = scmp.eq.s32.totalorder %s39, 1
      %p167 = por %p165, %p166
      %p169 = scmp.ne.s32.totalorder %s154, %s168
      %p170 = scmp.eq.s32.totalorder %s39, 0
      %p171 = por %p169, %p170
      %s173 = sadd.s32 %s172, 1
      %p176 = scmp.eq.s32.totalorder %s33, 1
      %p177 = scmp.ne.s32.totalorder %s172, %s174
      %p178 = scmp.eq.s32.totalorder %s33, 0
      %p179 = por %p177, %p178
      %p180 = scmp.ne.s32.totalorder %s172, %s174
      %p181 = scmp.eq.s32.totalorder %s38, 1
      %p182 = por %p180, %p181
      %p183 = scmp.ne.s32.totalorder %s174, %s175
      %p184 = scmp.eq.s32.totalorder %s38, 0
      %p185 = por %p183, %p184
      %p186 = scmp.ne.s32.totalorder %s174, %s175
      %p187 = scmp.eq.s32.totalorder %s39, 1
      %p188 = por %p186, %p187
      %p190 = scmp.ne.s32.totalorder %s175, %s189
      %p191 = scmp.eq.s32.totalorder %s39, 0
      %p192 = por %p190, %p191
      %s194 = sadd.s32 %s193, 1
      %p197 = scmp.eq.s32.totalorder %s33, 1
      %p198 = scmp.ne.s32.totalorder %s193, %s195
      %p199 = scmp.eq.s32.totalorder %s33, 0
      %p200 = por %p198, %p199
      %p201 = scmp.ne.s32.totalorder %s193, %s195
      %p202 = scmp.eq.s32.totalorder %s38, 1
      %p203 = por %p201, %p202
      %p204 = scmp.ne.s32.totalorder %s195, %s196
      %p205 = scmp.eq.s32.totalorder %s38, 0
      %p206 = por %p204, %p205
      %p207 = scmp.ne.s32.totalorder %s195, %s196
      %p208 = scmp.eq.s32.totalorder %s39, 1
      %p209 = por %p207, %p208
      %p211 = scmp.ne.s32.totalorder %s196, %s210
      %p212 = scmp.eq.s32.totalorder %s39, 0
      %p213 = por %p211, %p212
      %s215 = sadd.s32 %s214, 1
      %p218 = scmp.eq.s32.totalorder %s33, 1
      %p219 = scmp.ne.s32.totalorder %s214, %s216
      %p220 = scmp.eq.s32.totalorder %s33, 0
      %p221 = por %p219, %p220
      %p222 = scmp.ne.s32.totalorder %s214, %s216
      %p223 = scmp.eq.s32.totalorder %s38, 1
      %p224 = por %p222, %p223
      %p225 = scmp.ne.s32.totalorder %s216, %s217
      %p226 = scmp.eq.s32.totalorder %s38, 0
      %p227 = por %p225, %p226
      %p228 = scmp.ne.s32.totalorder %s216, %s217
      %p229 = scmp.eq.s32.totalorder %s39, 1
      %p230 = por %p228, %p229
      %p232 = scmp.ne.s32.totalorder %s217, %s231
      %p233 = scmp.eq.s32.totalorder %s39, 0
      %p234 = por %p232, %p233
      %s236 = sadd.s32 %s235, 1
      %p239 = scmp.eq.s32.totalorder %s33, 1
      %p240 = scmp.ne.s32.totalorder %s235, %s237
      %p241 = scmp.eq.s32.totalorder %s33, 0
      %p242 = por %p240, %p241
      %p243 = scmp.ne.s32.totalorder %s235, %s237
      %p244 = scmp.eq.s32.totalorder %s38, 1
      %p245 = por %p243, %p244
      %p246 = scmp.ne.s32.totalorder %s237, %s238
      %p247 = scmp.eq.s32.totalorder %s38, 0
      %p248 = por %p246, %p247
      %p249 = scmp.ne.s32.totalorder %s237, %s238
      %p250 = scmp.eq.s32.totalorder %s39, 1
      %p251 = por %p249, %p250
      %p253 = scmp.ne.s32.totalorder %s238, %s252
      %p254 = scmp.eq.s32.totalorder %s39, 0
      %p255 = por %p253, %p254
      %s257 = sadd.s32 %s256, 1
      %p260 = scmp.eq.s32.totalorder %s33, 1
      %p261 = scmp.ne.s32.totalorder %s256, %s258
      %p262 = scmp.eq.s32.totalorder %s33, 0
      %p263 = por %p261, %p262
      %p264 = scmp.ne.s32.totalorder %s256, %s258
      %p265 = scmp.eq.s32.totalorder %s38, 1
      %p266 = por %p264, %p265
      %p267 = scmp.ne.s32.totalorder %s258, %s259
      %p268 = scmp.eq.s32.totalorder %s38, 0
      %p269 = por %p267, %p268
      %p270 = scmp.ne.s32.totalorder %s258, %s259
      %p271 = scmp.eq.s32.totalorder %s39, 1
      %p272 = por %p270, %p271
      %p274 = scmp.ne.s32.totalorder %s259, %s273
      %p275 = scmp.eq.s32.totalorder %s39, 0
      %p276 = por %p274, %p275
      %s278 = sadd.s32 %s277, 1
      %p281 = scmp.eq.s32.totalorder %s33, 1
      %p282 = scmp.ne.s32.totalorder %s277, %s279
      %p283 = scmp.eq.s32.totalorder %s33, 0
      %p284 = por %p282, %p283
      %p285 = scmp.ne.s32.totalorder %s277, %s279
      %p286 = scmp.eq.s32.totalorder %s38, 1
      %p287 = por %p285, %p286
      %p288 = scmp.ne.s32.totalorder %s279, %s280
      %p289 = scmp.eq.s32.totalorder %s38, 0
      %p290 = por %p288, %p289
      %p291 = scmp.ne.s32.totalorder %s279, %s280
      %p292 = scmp.eq.s32.totalorder %s39, 1
      %p293 = por %p291, %p292
      %p295 = scmp.ne.s32.totalorder %s280, %s294
      %p296 = scmp.eq.s32.totalorder %s39, 0
      %p297 = por %p295, %p296
      %s299 = sadd.s32 %s298, 1
      %p302 = scmp.eq.s32.totalorder %s33, 1
      %p303 = scmp.ne.s32.totalorder %s298, %s300
      %p304 = scmp.eq.s32.totalorder %s33, 0
      %p305 = por %p303, %p304
      %p306 = scmp.ne.s32.totalorder %s298, %s300
      %p307 = scmp.eq.s32.totalorder %s38, 1
      %p308 = por %p306, %p307
      %p309 = scmp.ne.s32.totalorder %s300, %s301
      %p310 = scmp.eq.s32.totalorder %s38, 0
      %p311 = por %p309, %p310
      %p312 = scmp.ne.s32.totalorder %s300, %s301
      %p313 = scmp.eq.s32.totalorder %s39, 1
      %p314 = por %p312, %p313
      %p316 = scmp.ne.s32.totalorder %s301, %s315
      %p317 = scmp.eq.s32.totalorder %s39, 0
      %p318 = por %p316, %p317
      %s320 = sadd.s32 %s319, 1
      %p323 = scmp.eq.s32.totalorder %s33, 1
      %p324 = scmp.ne.s32.totalorder %s319, %s321
      %p325 = scmp.eq.s32.totalorder %s33, 0
      %p326 = por %p324, %p325
      %p327 = scmp.ne.s32.totalorder %s319, %s321
      %p328 = scmp.eq.s32.totalorder %s38, 1
      %p329 = por %p327, %p328
      %p330 = scmp.ne.s32.totalorder %s321, %s322
      %p331 = scmp.eq.s32.totalorder %s38, 0
      %p332 = por %p330, %p331
      %p333 = scmp.ne.s32.totalorder %s321, %s322
      %p334 = scmp.eq.s32.totalorder %s39, 1
      %p335 = por %p333, %p334
      %p337 = scmp.ne.s32.totalorder %s322, %s336
      %p338 = scmp.eq.s32.totalorder %s39, 0
      %p339 = por %p337, %p338
      %s341 = sadd.s32 %s340, 1
      %p344 = scmp.eq.s32.totalorder %s33, 1
      %p345 = scmp.ne.s32.totalorder %s340, %s342
      %p346 = scmp.eq.s32.totalorder %s33, 0
      %p347 = por %p345, %p346
      %p348 = scmp.ne.s32.totalorder %s340, %s342
      %p349 = scmp.eq.s32.totalorder %s38, 1
      %p350 = por %p348, %p349
      %p351 = scmp.ne.s32.totalorder %s342, %s343
      %p352 = scmp.eq.s32.totalorder %s38, 0
      %p353 = por %p351, %p352
      %p354 = scmp.ne.s32.totalorder %s342, %s343
      %p355 = scmp.eq.s32.totalorder %s39, 1
      %p356 = por %p354, %p355
      %p358 = scmp.ne.s32.totalorder %s343, %s357
      %p359 = scmp.eq.s32.totalorder %s39, 0
      %p360 = por %p358, %p359
      %s362 = sadd.s32 %s361, 1
      %p365 = scmp.eq.s32.totalorder %s33, 1
      %p366 = scmp.ne.s32.totalorder %s361, %s363
      %p367 = scmp.eq.s32.totalorder %s33, 0
      %p368 = por %p366, %p367
      %p369 = scmp.ne.s32.totalorder %s361, %s363
      %p370 = scmp.eq.s32.totalorder %s38, 1
      %p371 = por %p369, %p370
      %p372 = scmp.ne.s32.totalorder %s363, %s364
      %p373 = scmp.eq.s32.totalorder %s38, 0
      %p374 = por %p372, %p373
      %p375 = scmp.ne.s32.totalorder %s363, %s364
      %p376 = scmp.eq.s32.totalorder %s39, 1
      %p377 = por %p375, %p376
      %p379 = scmp.ne.s32.totalorder %s364, %s378
      %p380 = scmp.eq.s32.totalorder %s39, 0
      %p381 = por %p379, %p380
      %s383 = sadd.s32 %s382, 1
      %p386 = scmp.eq.s32.totalorder %s33, 1
      %p387 = scmp.ne.s32.totalorder %s382, %s384
      %p388 = scmp.eq.s32.totalorder %s33, 0
      %p389 = por %p387, %p388
      %p390 = scmp.ne.s32.totalorder %s382, %s384
      %p391 = scmp.eq.s32.totalorder %s38, 1
      %p392 = por %p390, %p391
      %p393 = scmp.ne.s32.totalorder %s384, %s385
      %p394 = scmp.eq.s32.totalorder %s38, 0
      %p395 = por %p393, %p394
      %p396 = scmp.ne.s32.totalorder %s384, %s385
      %p397 = scmp.eq.s32.totalorder %s39, 1
      %p398 = por %p396, %p397
      %p400 = scmp.ne.s32.totalorder %s385, %s399
      %p401 = scmp.eq.s32.totalorder %s39, 0
      %p402 = por %p400, %p401
      %s404 = sadd.s32 %s403, 1
      %p407 = scmp.eq.s32.totalorder %s33, 1
      %p408 = scmp.ne.s32.totalorder %s403, %s405
      %p409 = scmp.eq.s32.totalorder %s33, 0
      %p410 = por %p408, %p409
      %p411 = scmp.ne.s32.totalorder %s403, %s405
      %p412 = scmp.eq.s32.totalorder %s38, 1
      %p413 = por %p411, %p412
      %p414 = scmp.ne.s32.totalorder %s405, %s406
      %p415 = scmp.eq.s32.totalorder %s38, 0
      %p416 = por %p414, %p415
      %p417 = scmp.ne.s32.totalorder %s405, %s406
      %p418 = scmp.eq.s32.totalorder %s39, 1
      %p419 = por %p417, %p418
      %p421 = scmp.ne.s32.totalorder %s406, %s420
      %p422 = scmp.eq.s32.totalorder %s39, 0
      %p423 = por %p421, %p422
      %s425 = sadd.s32 %s424, 1
      %p428 = scmp.eq.s32.totalorder %s33, 1
      %p429 = scmp.ne.s32.totalorder %s424, %s426
      %p430 = scmp.eq.s32.totalorder %s33, 0
      %p431 = por %p429, %p430
      %p432 = scmp.ne.s32.totalorder %s424, %s426
      %p433 = scmp.eq.s32.totalorder %s38, 1
      %p434 = por %p432, %p433
      %p435 = scmp.ne.s32.totalorder %s426, %s427
      %p436 = scmp.eq.s32.totalorder %s38, 0
      %p437 = por %p435, %p436
      %p438 = scmp.ne.s32.totalorder %s426, %s427
      %p439 = scmp.eq.s32.totalorder %s39, 1
      %p440 = por %p438, %p439
      %p442 = scmp.ne.s32.totalorder %s427, %s441
      %p443 = scmp.eq.s32.totalorder %s39, 0
      %p444 = por %p442, %p443
      %s446 = sadd.s32 %s445, 1
      %p449 = scmp.eq.s32.totalorder %s33, 1
      %p450 = scmp.ne.s32.totalorder %s445, %s447
      %p451 = scmp.eq.s32.totalorder %s33, 0
      %p452 = por %p450, %p451
      %p453 = scmp.ne.s32.totalorder %s445, %s447
      %p454 = scmp.eq.s32.totalorder %s38, 1
      %p455 = por %p453, %p454
      %p456 = scmp.ne.s32.totalorder %s447, %s448
      %p457 = scmp.eq.s32.totalorder %s38, 0
      %p458 = por %p456, %p457
      %p459 = scmp.ne.s32.totalorder %s447, %s448
      %p460 = scmp.eq.s32.totalorder %s39, 1
      %p461 = por %p459, %p460
      %p463 = scmp.ne.s32.totalorder %s448, %s462
      %p464 = scmp.eq.s32.totalorder %s39, 0
      %p465 = por %p463, %p464
      %s466 = ssub.s32 %s33, %s40
      %p467 = scmp.eq.s32.totalorder %s466, 0
      %s469 = sadd.s32 %s468, 1
      %s470 = scalar_select %p467, %s468, %s469
      %p473 = pneg %p467
      %p474 = scmp.eq.s32.totalorder %s33, 1
      %p475 = por %p473, %p474
      %p476 = scmp.ne.s32.totalorder %s468, %s471
      %p477 = scmp.eq.s32.totalorder %s33, 0
      %p478 = por %p476, %p477
      %p479 = scmp.ne.s32.totalorder %s468, %s471
      %p480 = scmp.eq.s32.totalorder %s38, 1
      %p481 = por %p479, %p480
      %p482 = scmp.ne.s32.totalorder %s471, %s472
      %p483 = scmp.eq.s32.totalorder %s38, 0
      %p484 = por %p482, %p483
      %p485 = scmp.ne.s32.totalorder %s471, %s472
      %p486 = scmp.eq.s32.totalorder %s39, 1
      %p487 = por %p485, %p486
      %p489 = scmp.ne.s32.totalorder %s472, %s488
      %p490 = scmp.eq.s32.totalorder %s39, 0
      %p491 = por %p489, %p490
      %s492 = ssub.s32 %s33, %s40
      %p493 = scmp.eq.s32.totalorder %s492, 0
      %s495 = sadd.s32 %s494, 1
      %s496 = scalar_select %p493, %s494, %s495
      %p499 = pneg %p493
      %p500 = scmp.eq.s32.totalorder %s33, 1
      %p501 = por %p499, %p500
      %p502 = scmp.ne.s32.totalorder %s494, %s497
      %p503 = scmp.eq.s32.totalorder %s33, 0
      %p504 = por %p502, %p503
      %p505 = scmp.ne.s32.totalorder %s494, %s497
      %p506 = scmp.eq.s32.totalorder %s38, 1
      %p507 = por %p505, %p506
      %p508 = scmp.ne.s32.totalorder %s497, %s498
      %p509 = scmp.eq.s32.totalorder %s38, 0
      %p510 = por %p508, %p509
      %p511 = scmp.ne.s32.totalorder %s497, %s498
      %p512 = scmp.eq.s32.totalorder %s39, 1
      %p513 = por %p511, %p512
      %p515 = scmp.ne.s32.totalorder %s498, %s514
      %p516 = scmp.eq.s32.totalorder %s39, 0
      %p517 = por %p515, %p516
      %p518 = scmp.le.s32.totalorder 1, %s33
      %p519 = scmp.lt.s32.totalorder %s33, 3
      %p520 = pnand %p518, %p519
      %p521 = pneg %p520
      // Predicated region
      $region9: #{lfq_autoencoder_forward.1} parent=5 // pred_check
        _
      $region10: #{lfq_autoencoder_forward.1} parent=5 // pred_check_branch
        %523 = sbr.rel (%p520) target = $region12
      $region11: #{lfq_autoencoder_forward.1} parent=5 // pred_region
        %s524 = ssub.s32 %s33, 1
        // Predicated region
        $region13: #{lfq_autoencoder_forward.1} parent=11 // pred_check
          %p525 = pneg %p80
        $region14: #{lfq_autoencoder_forward.1} parent=11 // pred_check_branch
          %527 = sbr.rel (%p525) target = $region16
        $region15: #{lfq_autoencoder_forward.1} parent=11 // pred_region
          _
        $region16: #{lfq_autoencoder_forward.1} parent=11 // pred_fallthru
          _
        // Predicated region
        $region17: #{lfq_autoencoder_forward.1} parent=11 // pred_check
          %p528 = pneg %p101
        $region18: #{lfq_autoencoder_forward.1} parent=11 // pred_check_branch
          %530 = sbr.rel (%p528) target = $region20
        $region19: #{lfq_autoencoder_forward.1} parent=11 // pred_region
          _
        $region20: #{lfq_autoencoder_forward.1} parent=11 // pred_fallthru
          _
        // Predicated region
        $region21: #{lfq_autoencoder_forward.1} parent=11 // pred_check
          %p531 = pneg %p122
        $region22: #{lfq_autoencoder_forward.1} parent=11 // pred_check_branch
          %533 = sbr.rel (%p531) target = $region24
        $region23: #{lfq_autoencoder_forward.1} parent=11 // pred_region
          _
        $region24: #{lfq_autoencoder_forward.1} parent=11 // pred_fallthru
          _
        // Predicated region
        $region25: #{lfq_autoencoder_forward.1} parent=11 // pred_check
          %p534 = pneg %p143
        $region26: #{lfq_autoencoder_forward.1} parent=11 // pred_check_branch
          %536 = sbr.rel (%p534) target = $region28
        $region27: #{lfq_autoencoder_forward.1} parent=11 // pred_region
          _
        $region28: #{lfq_autoencoder_forward.1} parent=11 // pred_fallthru
          _
        // Predicated region
        $region29: #{lfq_autoencoder_forward.1} parent=11 // pred_check
          %p537 = pneg %p164
        $region30: #{lfq_autoencoder_forward.1} parent=11 // pred_check_branch
          %539 = sbr.rel (%p537) target = $region32
        $region31: #{lfq_autoencoder_forward.1} parent=11 // pred_region
          _
        $region32: #{lfq_autoencoder_forward.1} parent=11 // pred_fallthru
          _
        // Predicated region
        $region33: #{lfq_autoencoder_forward.1} parent=11 // pred_check
          %p540 = pneg %p185
        $region34: #{lfq_autoencoder_forward.1} parent=11 // pred_check_branch
          %542 = sbr.rel (%p540) target = $region36
        $region35: #{lfq_autoencoder_forward.1} parent=11 // pred_region
          _
        $region36: #{lfq_autoencoder_forward.1} parent=11 // pred_fallthru
          _
        // Predicated region
        $region37: #{lfq_autoencoder_forward.1} parent=11 // pred_check
          %p543 = pneg %p206
        $region38: #{lfq_autoencoder_forward.1} parent=11 // pred_check_branch
          %545 = sbr.rel (%p543) target = $region40
        $region39: #{lfq_autoencoder_forward.1} parent=11 // pred_region
          %547 = vsyncadd [#allocation4], 0
          %s548 = sshll.u32 %s7, 4
          %s549 = int_to_ptr.hbm [resolvable:$true] %s548
          %s550 = sshll.u32 [#allocation3], 4
          %s551 = int_to_ptr.vmem [resolvable:$true] %s550
          %556 = dma.hbm_to_vmem [thread:$0]  %s549, 1152, %s551, [#allocation4], 128, 128, 8
        $region40: #{lfq_autoencoder_forward.1} parent=11 // pred_fallthru
          _
        // Predicated region
        $region41: #{lfq_autoencoder_forward.1} parent=11 // pred_check
          %p557 = pneg %p227
        $region42: #{lfq_autoencoder_forward.1} parent=11 // pred_check_branch
          %559 = sbr.rel (%p557) target = $region44
        $region43: #{lfq_autoencoder_forward.1} parent=11 // pred_region
          _
        $region44: #{lfq_autoencoder_forward.1} parent=11 // pred_fallthru
          _
        // Predicated region
        $region45: #{lfq_autoencoder_forward.1} parent=11 // pred_check
          %p560 = pneg %p248
        $region46: #{lfq_autoencoder_forward.1} parent=11 // pred_check_branch
          %562 = sbr.rel (%p560) target = $region48
        $region47: #{lfq_autoencoder_forward.1} parent=11 // pred_region
          %564 = vsyncadd [#allocation6], 0
          %s565 = sshll.u32 %s9, 4
          %s566 = int_to_ptr.hbm [resolvable:$true] %s565
          %s567 = sshll.u32 [#allocation5], 4
          %s568 = int_to_ptr.vmem [resolvable:$true] %s567
          %573 = dma.hbm_to_vmem [thread:$0]  %s566, 2304, %s568, [#allocation6], 128, 128, 8
        $region48: #{lfq_autoencoder_forward.1} parent=11 // pred_fallthru
          _
        // Predicated region
        $region49: #{lfq_autoencoder_forward.1} parent=11 // pred_check
          %p574 = pneg %p269
        $region50: #{lfq_autoencoder_forward.1} parent=11 // pred_check_branch
          %576 = sbr.rel (%p574) target = $region52
        $region51: #{lfq_autoencoder_forward.1} parent=11 // pred_region
          _
        $region52: #{lfq_autoencoder_forward.1} parent=11 // pred_fallthru
          _
        // Predicated region
        $region53: #{lfq_autoencoder_forward.1} parent=11 // pred_check
          %p577 = pneg %p290
        $region54: #{lfq_autoencoder_forward.1} parent=11 // pred_check_branch
          %579 = sbr.rel (%p577) target = $region56
        $region55: #{lfq_autoencoder_forward.1} parent=11 // pred_region
          _
        $region56: #{lfq_autoencoder_forward.1} parent=11 // pred_fallthru
          _
        // Predicated region
        $region57: #{lfq_autoencoder_forward.1} parent=11 // pred_check
          %p580 = pneg %p311
        $region58: #{lfq_autoencoder_forward.1} parent=11 // pred_check_branch
          %582 = sbr.rel (%p580) target = $region60
        $region59: #{lfq_autoencoder_forward.1} parent=11 // pred_region
          _
        $region60: #{lfq_autoencoder_forward.1} parent=11 // pred_fallthru
          _
        // Predicated region
        $region61: #{lfq_autoencoder_forward.1} parent=11 // pred_check
          %p583 = pneg %p332
        $region62: #{lfq_autoencoder_forward.1} parent=11 // pred_check_branch
          %585 = sbr.rel (%p583) target = $region64
        $region63: #{lfq_autoencoder_forward.1} parent=11 // pred_region
          _
        $region64: #{lfq_autoencoder_forward.1} parent=11 // pred_fallthru
          _
        // Predicated region
        $region65: #{lfq_autoencoder_forward.1} parent=11 // pred_check
          %p586 = pneg %p353
        $region66: #{lfq_autoencoder_forward.1} parent=11 // pred_check_branch
          %588 = sbr.rel (%p586) target = $region68
        $region67: #{lfq_autoencoder_forward.1} parent=11 // pred_region
          _
        $region68: #{lfq_autoencoder_forward.1} parent=11 // pred_fallthru
          _
        // Predicated region
        $region69: #{lfq_autoencoder_forward.1} parent=11 // pred_check
          %p589 = pneg %p374
        $region70: #{lfq_autoencoder_forward.1} parent=11 // pred_check_branch
          %591 = sbr.rel (%p589) target = $region72
        $region71: #{lfq_autoencoder_forward.1} parent=11 // pred_region
          %593 = vsyncadd [#allocation6], 0
          %s594 = sshll.u32 %s15, 4
          %s595 = int_to_ptr.hbm [resolvable:$true] %s594
          %s596 = sshll.u32 [#allocation7], 4
          %s597 = int_to_ptr.vmem [resolvable:$true] %s596
          %602 = dma.hbm_to_vmem [thread:$0]  %s595, 2048, %s597, [#allocation6], 256, 256, 16
        $region72: #{lfq_autoencoder_forward.1} parent=11 // pred_fallthru
          _
        // Predicated region
        $region73: #{lfq_autoencoder_forward.1} parent=11 // pred_check
          %p603 = pneg %p395
        $region74: #{lfq_autoencoder_forward.1} parent=11 // pred_check_branch
          %605 = sbr.rel (%p603) target = $region76
        $region75: #{lfq_autoencoder_forward.1} parent=11 // pred_region
          _
        $region76: #{lfq_autoencoder_forward.1} parent=11 // pred_fallthru
          _
        // Predicated region
        $region77: #{lfq_autoencoder_forward.1} parent=11 // pred_check
          %p606 = pneg %p416
        $region78: #{lfq_autoencoder_forward.1} parent=11 // pred_check_branch
          %608 = sbr.rel (%p606) target = $region80
        $region79: #{lfq_autoencoder_forward.1} parent=11 // pred_region
          %610 = vsyncadd [#allocation9], 0
          %s611 = sshll.u32 %s17, 4
          %s612 = int_to_ptr.hbm [resolvable:$true] %s611
          %s613 = sshll.u32 [#allocation8], 4
          %s614 = int_to_ptr.vmem [resolvable:$true] %s613
          %619 = dma.hbm_to_vmem [thread:$0]  %s612, 1024, %s614, [#allocation9], 128, 128, 8
        $region80: #{lfq_autoencoder_forward.1} parent=11 // pred_fallthru
          _
        // Predicated region
        $region81: #{lfq_autoencoder_forward.1} parent=11 // pred_check
          %p620 = pneg %p437
        $region82: #{lfq_autoencoder_forward.1} parent=11 // pred_check_branch
          %622 = sbr.rel (%p620) target = $region84
        $region83: #{lfq_autoencoder_forward.1} parent=11 // pred_region
          _
        $region84: #{lfq_autoencoder_forward.1} parent=11 // pred_fallthru
          _
        // Predicated region
        $region85: #{lfq_autoencoder_forward.1} parent=11 // pred_check
          %p623 = pneg %p458
        $region86: #{lfq_autoencoder_forward.1} parent=11 // pred_check_branch
          %625 = sbr.rel (%p623) target = $region88
        $region87: #{lfq_autoencoder_forward.1} parent=11 // pred_region
          _
        $region88: #{lfq_autoencoder_forward.1} parent=11 // pred_fallthru
          _
      $region12: #{lfq_autoencoder_forward.1} parent=5 // pred_fallthru
        _
      %p626 = scmp.lt.s32.totalorder %s33, 2
      // Predicated region
      $region89: #{lfq_autoencoder_forward.1} parent=5 // pred_check
        %p627 = pneg %p626
      $region90: #{lfq_autoencoder_forward.1} parent=5 // pred_check_branch
        %629 = sbr.rel (%p627) target = $region92
      $region91: #{lfq_autoencoder_forward.1} parent=5 // pred_region
        // Predicated region
        $region93: #{lfq_autoencoder_forward.1} parent=91 // pred_check
          %p630 = pneg %p53
        $region94: #{lfq_autoencoder_forward.1} parent=91 // pred_check_branch
          %632 = sbr.rel (%p630) target = $region96
        $region95: #{lfq_autoencoder_forward.1} parent=91 // pred_region
          %p633 = scmp.lt.s32.totalorder %s33, 1
          %s634 = scalar_select %p633, %s33, 1
          %s635 = smul.addr %s634, 32
          %s636 = smul.addr %s635, 8
          %s637 = scalar_lea.vmem %s0, %s636
        $region96: #{lfq_autoencoder_forward.1} parent=91 // pred_fallthru
          _
      $region92: #{lfq_autoencoder_forward.1} parent=5 // pred_fallthru
        _
      %p638 = scmp.le.s32.totalorder 1, %s33
      %p639 = scmp.lt.s32.totalorder %s33, 3
      %p640 = pnand %p638, %p639
      %p641 = pneg %p640
      // Predicated region
      $region97: #{lfq_autoencoder_forward.1} parent=5 // pred_check
        _
      $region98: #{lfq_autoencoder_forward.1} parent=5 // pred_check_branch
        %643 = sbr.rel (%p640) target = $region100
      $region99: #{lfq_autoencoder_forward.1} parent=5 // pred_region
        %s644 = ssub.s32 %s33, 1
        // Predicated region
        $region101: #{lfq_autoencoder_forward.1} parent=99 // pred_check
          %p645 = pneg %p206
        $region102: #{lfq_autoencoder_forward.1} parent=99 // pred_check_branch
          %647 = sbr.rel (%p645) target = $region104
        $region103: #{lfq_autoencoder_forward.1} parent=99 // pred_region
          %649 = dma.done [#allocation4], 1152
        $region104: #{lfq_autoencoder_forward.1} parent=99 // pred_fallthru
          _
        // Predicated region
        $region105: #{lfq_autoencoder_forward.1} parent=99 // pred_check
          %p650 = pneg %p248
        $region106: #{lfq_autoencoder_forward.1} parent=99 // pred_check_branch
          %652 = sbr.rel (%p650) target = $region108
        $region107: #{lfq_autoencoder_forward.1} parent=99 // pred_region
          %654 = dma.done [#allocation6], 2304
        $region108: #{lfq_autoencoder_forward.1} parent=99 // pred_fallthru
          _
        // Predicated region
        $region109: #{lfq_autoencoder_forward.1} parent=99 // pred_check
          %p655 = pneg %p374
        $region110: #{lfq_autoencoder_forward.1} parent=99 // pred_check_branch
          %657 = sbr.rel (%p655) target = $region112
        $region111: #{lfq_autoencoder_forward.1} parent=99 // pred_region
          %659 = dma.done [#allocation6], 2048
        $region112: #{lfq_autoencoder_forward.1} parent=99 // pred_fallthru
          _
        // Predicated region
        $region113: #{lfq_autoencoder_forward.1} parent=99 // pred_check
          %p660 = pneg %p416
        $region114: #{lfq_autoencoder_forward.1} parent=99 // pred_check_branch
          %662 = sbr.rel (%p660) target = $region116
        $region115: #{lfq_autoencoder_forward.1} parent=99 // pred_region
          %664 = dma.done [#allocation9], 1024
        $region116: #{lfq_autoencoder_forward.1} parent=99 // pred_fallthru
          _
        %p665 = scmp.lt.s32.totalorder %s38, 1
        %s666 = scalar_select %p665, %s38, 1
        %s667 = smul.addr %s666, 32
        %s668 = smul.addr %s667, 8
        %s669 = scalar_lea.vmem %s0, %s668
        %p670 = pneg %p59
        %p671 = pneg %p56
        %p672 = pneg %p80
        %p673 = pneg %p77
        %p674 = pneg %p101
        %p675 = pneg %p98
        %p676 = pneg %p122
        %p677 = pneg %p119
        %p678 = pneg %p143
        %p679 = pneg %p140
        %p680 = pneg %p164
        %p681 = pneg %p161
        %p682 = pneg %p185
        %p683 = pneg %p182
        %p684 = pneg %p206
        %p685 = pneg %p203
        %p686 = pneg %p227
        %p687 = pneg %p224
        %p688 = pneg %p248
        %p689 = pneg %p245
        %p690 = pneg %p269
        %p691 = pneg %p266
        %p692 = pneg %p290
        %p693 = pneg %p287
        %p694 = pneg %p311
        %p695 = pneg %p308
        %p696 = pneg %p332
        %p697 = pneg %p329
        %p698 = pneg %p353
        %p699 = pneg %p350
        %p700 = pneg %p374
        %p701 = pneg %p371
        %p702 = pneg %p395
        %p703 = pneg %p392
        %p704 = pneg %p416
        %p705 = pneg %p413
        %p706 = pneg %p437
        %p707 = pneg %p434
        %p708 = pneg %p458
        %p709 = pneg %p455
        %p710 = pneg %p484
        %p711 = pneg %p481
        %p712 = scmp.lt.s32.totalorder %s38, 1
        %s713 = scalar_select %p712, %s38, 1
        %s714 = smul.addr %s713, 32
        %s715 = smul.addr %s714, 8
        %s716 = scalar_lea.vmem %s20, %s715
        %p717 = pneg %p510
        %p718 = pneg %p507
        %p719 = scmp.lt.s32.totalorder %s38, 1
        %s720 = scalar_select %p719, %s38, 1
        %s721 = smul.addr %s720, 2
        %s722 = smul.addr %s721, 8
        %s723 = scalar_lea.vmem %s21, %s722
        %p724 = scmp.lt.s32.totalorder %s38, 1
        %s725 = scalar_select %p724, %s38, 1
        %s726 = smul.addr %s725, 32
        %s727 = smul.addr %s726, 8
        %s728 = scalar_lea.vmem %s0, %s727
        %p729 = scmp.lt.s32.totalorder %s38, 1
        %s730 = scalar_select %p729, %s38, 1
        %s731 = smul.addr %s730, 32
        %s732 = smul.addr %s731, 8
        %s733 = scalar_lea.vmem %s20, %s732
        %p734 = scmp.lt.s32.totalorder %s38, 1
        %s735 = scalar_select %p734, %s38, 1
        %s736 = smul.addr %s735, 2
        %s737 = smul.addr %s736, 8
        %s738 = scalar_lea.vmem %s21, %s737
        %v739 = vld [vmem:[%s13] sm:$0xff]
        %v740 = vld [vmem:[%s13 + $0x8] sm:$0xff]
        %v741 = vld [vmem:[%s13 + $0x10] sm:$0xff]
        %v742 = vld [vmem:[%s13 + $0x18] sm:$0xff]
        %v743 = vld [vmem:[%s13 + $0x20] sm:$0xff]
        %v744 = vld [vmem:[%s13 + $0x28] sm:$0xff]
        %v745 = vld [vmem:[%s13 + $0x30] sm:$0xff]
        %v746 = vld [vmem:[%s13 + $0x38] sm:$0xff]
        %v747 = vld [vmem:[%s13 + $0x40] sm:$0xff]
        %v748 = vld [vmem:[%s13 + $0x48] sm:$0xff]
        %v749 = vld [vmem:[%s13 + $0x50] sm:$0xff]
        %v750 = vld [vmem:[%s13 + $0x58] sm:$0xff]
        %v751 = vld [vmem:[%s13 + $0x60] sm:$0xff]
        %v752 = vld [vmem:[%s13 + $0x68] sm:$0xff]
        %v753 = vld [vmem:[%s13 + $0x70] sm:$0xff]
        %v754 = vld [vmem:[%s13 + $0x78] sm:$0xff]
        %v755 = vld [vmem:[%s13 + $0x80] sm:$0xff]
        %v756 = vld [vmem:[%s13 + $0x88] sm:$0xff]
        %v757 = vld [vmem:[%s13 + $0x90] sm:$0xff]
        %v758 = vld [vmem:[%s13 + $0x98] sm:$0xff]
        %v759 = vld [vmem:[%s13 + $0xa0] sm:$0xff]
        %v760 = vld [vmem:[%s13 + $0xa8] sm:$0xff]
        %v761 = vld [vmem:[%s13 + $0xb0] sm:$0xff]
        %v762 = vld [vmem:[%s13 + $0xb8] sm:$0xff]
        %v763 = vld [vmem:[%s13 + $0xc0] sm:$0xff]
        %v764 = vld [vmem:[%s13 + $0xc8] sm:$0xff]
        %v765 = vld [vmem:[%s13 + $0xd0] sm:$0xff]
        %v766 = vld [vmem:[%s13 + $0xd8] sm:$0xff]
        %v767 = vld [vmem:[%s13 + $0xe0] sm:$0xff]
        %v768 = vld [vmem:[%s13 + $0xe8] sm:$0xff]
        %v769 = vld [vmem:[%s13 + $0xf0] sm:$0xff]
        %v770 = vld [vmem:[%s13 + $0xf8] sm:$0xff]
        %v771 = vld [vmem:[%s14] sm:$0xff]
        %v772 = vld [vmem:[%s14 + $0x8] sm:$0xff]
        %v773 = vld [vmem:[%s14 + $0x10] sm:$0xff]
        %v774 = vld [vmem:[%s14 + $0x18] sm:$0xff]
        %v775 = vld [vmem:[%s14 + $0x20] sm:$0xff]
        %v776 = vld [vmem:[%s14 + $0x28] sm:$0xff]
        %v777 = vld [vmem:[%s14 + $0x30] sm:$0xff]
        %v778 = vld [vmem:[%s14 + $0x38] sm:$0xff]
        %v779 = vld [vmem:[%s728] sm:$0xff]
        %v780 = vld [vmem:[%s728 + $0x8] sm:$0xff]
        %v781 = vld [vmem:[%s728 + $0x10] sm:$0xff]
        %v782 = vld [vmem:[%s728 + $0x18] sm:$0xff]
        %v783 = vld [vmem:[%s728 + $0x20] sm:$0xff]
        %v784 = vld [vmem:[%s728 + $0x28] sm:$0xff]
        %v785 = vld [vmem:[%s728 + $0x30] sm:$0xff]
        %v786 = vld [vmem:[%s728 + $0x38] sm:$0xff]
        %v787 = vld [vmem:[%s728 + $0x40] sm:$0xff]
        %v788 = vld [vmem:[%s728 + $0x48] sm:$0xff]
        %v789 = vld [vmem:[%s728 + $0x50] sm:$0xff]
        %v790 = vld [vmem:[%s728 + $0x58] sm:$0xff]
        %v791 = vld [vmem:[%s728 + $0x60] sm:$0xff]
        %v792 = vld [vmem:[%s728 + $0x68] sm:$0xff]
        %v793 = vld [vmem:[%s728 + $0x70] sm:$0xff]
        %v794 = vld [vmem:[%s728 + $0x78] sm:$0xff]
        %v795 = vld [vmem:[%s728 + $0x80] sm:$0xff]
        %v796 = vld [vmem:[%s728 + $0x88] sm:$0xff]
        %v797 = vld [vmem:[%s728 + $0x90] sm:$0xff]
        %v798 = vld [vmem:[%s728 + $0x98] sm:$0xff]
        %v799 = vld [vmem:[%s728 + $0xa0] sm:$0xff]
        %v800 = vld [vmem:[%s728 + $0xa8] sm:$0xff]
        %v801 = vld [vmem:[%s728 + $0xb0] sm:$0xff]
        %v802 = vld [vmem:[%s728 + $0xb8] sm:$0xff]
        %v803 = vld [vmem:[%s728 + $0xc0] sm:$0xff]
        %v804 = vld [vmem:[%s728 + $0xc8] sm:$0xff]
        %v805 = vld [vmem:[%s728 + $0xd0] sm:$0xff]
        %v806 = vld [vmem:[%s728 + $0xd8] sm:$0xff]
        %v807 = vld [vmem:[%s728 + $0xe0] sm:$0xff]
        %v808 = vld [vmem:[%s728 + $0xe8] sm:$0xff]
        %v809 = vld [vmem:[%s728 + $0xf0] sm:$0xff]
        %v810 = vld [vmem:[%s728 + $0xf8] sm:$0xff]
        %v811 = vrot.slane %v779, 7
        %v812 = vrot.slane %v780, 7
        %v813 = vrot.slane %v781, 7
        %v814 = vrot.slane %v782, 7
        %v815 = vrot.slane %v783, 7
        %v816 = vrot.slane %v784, 7
        %v817 = vrot.slane %v785, 7
        %v818 = vrot.slane %v786, 7
        %v819 = vrot.slane %v787, 7
        %v820 = vrot.slane %v788, 7
        %v821 = vrot.slane %v789, 7
        %v822 = vrot.slane %v790, 7
        %v823 = vrot.slane %v791, 7
        %v824 = vrot.slane %v792, 7
        %v825 = vrot.slane %v793, 7
        %v826 = vrot.slane %v794, 7
        %v827 = vrot.slane %v795, 7
        %v828 = vrot.slane %v796, 7
        %v829 = vrot.slane %v797, 7
        %v830 = vrot.slane %v798, 7
        %v831 = vrot.slane %v799, 7
        %v832 = vrot.slane %v800, 7
        %v833 = vrot.slane %v801, 7
        %v834 = vrot.slane %v802, 7
        %v835 = vrot.slane %v803, 7
        %v836 = vrot.slane %v804, 7
        %v837 = vrot.slane %v805, 7
        %v838 = vrot.slane %v806, 7
        %v839 = vrot.slane %v807, 7
        %v840 = vrot.slane %v808, 7
        %v841 = vrot.slane %v809, 7
        %v842 = vrot.slane %v810, 7
        %v843 = vlaneseq
        %v844 = vshrl.u32 %v843, 7
        %vm845 = vcmp.lt.s32.totalorder %v844, 1
        %v846 = vsel %vm845, %v841, %v842
        %v847 = vsel %vm845, %v840, %v841
        %v848 = vsel %vm845, %v839, %v840
        %v849 = vsel %vm845, %v838, %v839
        %v850 = vsel %vm845, %v837, %v838
        %v851 = vsel %vm845, %v836, %v837
        %v852 = vsel %vm845, %v835, %v836
        %v853 = vsel %vm845, %v834, %v835
        %v854 = vsel %vm845, %v833, %v834
        %v855 = vsel %vm845, %v832, %v833
        %v856 = vsel %vm845, %v831, %v832
        %v857 = vsel %vm845, %v830, %v831
        %v858 = vsel %vm845, %v829, %v830
        %v859 = vsel %vm845, %v828, %v829
        %v860 = vsel %vm845, %v827, %v828
        %v861 = vsel %vm845, %v826, %v827
        %v862 = vsel %vm845, %v825, %v826
        %v863 = vsel %vm845, %v824, %v825
        %v864 = vsel %vm845, %v823, %v824
        %v865 = vsel %vm845, %v822, %v823
        %v866 = vsel %vm845, %v821, %v822
        %v867 = vsel %vm845, %v820, %v821
        %v868 = vsel %vm845, %v819, %v820
        %v869 = vsel %vm845, %v818, %v819
        %v870 = vsel %vm845, %v817, %v818
        %v871 = vsel %vm845, %v816, %v817
        %v872 = vsel %vm845, %v815, %v816
        %v873 = vsel %vm845, %v814, %v815
        %v874 = vsel %vm845, %v813, %v814
        %v875 = vsel %vm845, %v812, %v813
        %v876 = vsel %vm845, %v811, %v812
        %v877 = vsel %vm845, %v842, %v811
        %v878 = vmul.f32 %v847, %v739
        %v879 = vmul.f32 %v846, %v740
        %v880 = vmul.f32 %v877, %v741
        %v881 = vmul.f32 %v876, %v742
        %v882 = vmul.f32 %v875, %v743
        %v883 = vmul.f32 %v874, %v744
        %v884 = vmul.f32 %v873, %v745
        %v885 = vmul.f32 %v872, %v746
        %v886 = vmul.f32 %v871, %v747
        %v887 = vmul.f32 %v870, %v748
        %v888 = vmul.f32 %v869, %v749
        %v889 = vmul.f32 %v868, %v750
        %v890 = vmul.f32 %v867, %v751
        %v891 = vmul.f32 %v866, %v752
        %v892 = vmul.f32 %v865, %v753
        %v893 = vmul.f32 %v864, %v754
        %v894 = vmul.f32 %v863, %v755
        %v895 = vmul.f32 %v862, %v756
        %v896 = vmul.f32 %v861, %v757
        %v897 = vmul.f32 %v860, %v758
        %v898 = vmul.f32 %v859, %v759
        %v899 = vmul.f32 %v858, %v760
        %v900 = vmul.f32 %v857, %v761
        %v901 = vmul.f32 %v856, %v762
        %v902 = vmul.f32 %v855, %v763
        %v903 = vmul.f32 %v854, %v764
        %v904 = vmul.f32 %v853, %v765
        %v905 = vmul.f32 %v852, %v766
        %v906 = vmul.f32 %v851, %v767
        %v907 = vmul.f32 %v850, %v768
        %v908 = vmul.f32 %v849, %v769
        %v909 = vmul.f32 %v848, %v770
        %942 = vrot.lane.b32.xlu0 %v739, 127
        %v943 = vpop.permute.xlu0 %942
        %944 = vrot.lane.b32.xlu0 %v740, 127
        %v945 = vpop.permute.xlu0 %944
        %946 = vrot.lane.b32.xlu0 %v741, 127
        %v947 = vpop.permute.xlu0 %946
        %948 = vrot.lane.b32.xlu0 %v742, 127
        %v949 = vpop.permute.xlu0 %948
        %950 = vrot.lane.b32.xlu0 %v743, 127
        %v951 = vpop.permute.xlu0 %950
        %952 = vrot.lane.b32.xlu0 %v744, 127
        %v953 = vpop.permute.xlu0 %952
        %954 = vrot.lane.b32.xlu0 %v745, 127
        %v955 = vpop.permute.xlu0 %954
        %956 = vrot.lane.b32.xlu0 %v746, 127
        %v957 = vpop.permute.xlu0 %956
        %958 = vrot.lane.b32.xlu0 %v747, 127
        %v959 = vpop.permute.xlu0 %958
        %960 = vrot.lane.b32.xlu0 %v748, 127
        %v961 = vpop.permute.xlu0 %960
        %962 = vrot.lane.b32.xlu0 %v749, 127
        %v963 = vpop.permute.xlu0 %962
        %964 = vrot.lane.b32.xlu0 %v750, 127
        %v965 = vpop.permute.xlu0 %964
        %966 = vrot.lane.b32.xlu0 %v751, 127
        %v967 = vpop.permute.xlu0 %966
        %968 = vrot.lane.b32.xlu0 %v752, 127
        %v969 = vpop.permute.xlu0 %968
        %970 = vrot.lane.b32.xlu0 %v753, 127
        %v971 = vpop.permute.xlu0 %970
        %972 = vrot.lane.b32.xlu0 %v754, 127
        %v973 = vpop.permute.xlu0 %972
        %974 = vrot.lane.b32.xlu0 %v755, 127
        %v975 = vpop.permute.xlu0 %974
        %976 = vrot.lane.b32.xlu0 %v756, 127
        %v977 = vpop.permute.xlu0 %976
        %978 = vrot.lane.b32.xlu0 %v757, 127
        %v979 = vpop.permute.xlu0 %978
        %980 = vrot.lane.b32.xlu0 %v758, 127
        %v981 = vpop.permute.xlu0 %980
        %982 = vrot.lane.b32.xlu0 %v759, 127
        %v983 = vpop.permute.xlu0 %982
        %984 = vrot.lane.b32.xlu0 %v760, 127
        %v985 = vpop.permute.xlu0 %984
        %986 = vrot.lane.b32.xlu0 %v761, 127
        %v987 = vpop.permute.xlu0 %986
        %988 = vrot.lane.b32.xlu0 %v762, 127
        %v989 = vpop.permute.xlu0 %988
        %990 = vrot.lane.b32.xlu0 %v763, 127
        %v991 = vpop.permute.xlu0 %990
        %992 = vrot.lane.b32.xlu0 %v764, 127
        %v993 = vpop.permute.xlu0 %992
        %994 = vrot.lane.b32.xlu0 %v765, 127
        %v995 = vpop.permute.xlu0 %994
        %996 = vrot.lane.b32.xlu0 %v766, 127
        %v997 = vpop.permute.xlu0 %996
        %998 = vrot.lane.b32.xlu0 %v767, 127
        %v999 = vpop.permute.xlu0 %998
        %1000 = vrot.lane.b32.xlu0 %v768, 127
        %v1001 = vpop.permute.xlu0 %1000
        %1002 = vrot.lane.b32.xlu0 %v769, 127
        %v1003 = vpop.permute.xlu0 %1002
        %1004 = vrot.lane.b32.xlu0 %v770, 127
        %v1005 = vpop.permute.xlu0 %1004
        %v1038 = vmul.f32 %v809, %v943
        %v1039 = vmul.f32 %v810, %v945
        %v1040 = vmul.f32 %v779, %v947
        %v1041 = vmul.f32 %v780, %v949
        %v1042 = vmul.f32 %v781, %v951
        %v1043 = vmul.f32 %v782, %v953
        %v1044 = vmul.f32 %v783, %v955
        %v1045 = vmul.f32 %v784, %v957
        %v1046 = vmul.f32 %v785, %v959
        %v1047 = vmul.f32 %v786, %v961
        %v1048 = vmul.f32 %v787, %v963
        %v1049 = vmul.f32 %v788, %v965
        %v1050 = vmul.f32 %v789, %v967
        %v1051 = vmul.f32 %v790, %v969
        %v1052 = vmul.f32 %v791, %v971
        %v1053 = vmul.f32 %v792, %v973
        %v1054 = vmul.f32 %v793, %v975
        %v1055 = vmul.f32 %v794, %v977
        %v1056 = vmul.f32 %v795, %v979
        %v1057 = vmul.f32 %v796, %v981
        %v1058 = vmul.f32 %v797, %v983
        %v1059 = vmul.f32 %v798, %v985
        %v1060 = vmul.f32 %v799, %v987
        %v1061 = vmul.f32 %v800, %v989
        %v1062 = vmul.f32 %v801, %v991
        %v1063 = vmul.f32 %v802, %v993
        %v1064 = vmul.f32 %v803, %v995
        %v1065 = vmul.f32 %v804, %v997
        %v1066 = vmul.f32 %v805, %v999
        %v1067 = vmul.f32 %v806, %v1001
        %v1068 = vmul.f32 %v807, %v1003
        %v1069 = vmul.f32 %v808, %v1005
        %v1070 = vrot.slane %v779, 1
        %v1071 = vrot.slane %v780, 1
        %v1072 = vrot.slane %v781, 1
        %v1073 = vrot.slane %v782, 1
        %v1074 = vrot.slane %v783, 1
        %v1075 = vrot.slane %v784, 1
        %v1076 = vrot.slane %v785, 1
        %v1077 = vrot.slane %v786, 1
        %v1078 = vrot.slane %v787, 1
        %v1079 = vrot.slane %v788, 1
        %v1080 = vrot.slane %v789, 1
        %v1081 = vrot.slane %v790, 1
        %v1082 = vrot.slane %v791, 1
        %v1083 = vrot.slane %v792, 1
        %v1084 = vrot.slane %v793, 1
        %v1085 = vrot.slane %v794, 1
        %v1086 = vrot.slane %v795, 1
        %v1087 = vrot.slane %v796, 1
        %v1088 = vrot.slane %v797, 1
        %v1089 = vrot.slane %v798, 1
        %v1090 = vrot.slane %v799, 1
        %v1091 = vrot.slane %v800, 1
        %v1092 = vrot.slane %v801, 1
        %v1093 = vrot.slane %v802, 1
        %v1094 = vrot.slane %v803, 1
        %v1095 = vrot.slane %v804, 1
        %v1096 = vrot.slane %v805, 1
        %v1097 = vrot.slane %v806, 1
        %v1098 = vrot.slane %v807, 1
        %v1099 = vrot.slane %v808, 1
        %v1100 = vrot.slane %v809, 1
        %v1101 = vrot.slane %v810, 1
        %vm1102 = vcmp.lt.s32.totalorder %v844, 7
        %v1103 = vsel %vm1102, %v1100, %v1101
        %v1104 = vsel %vm1102, %v1099, %v1100
        %v1105 = vsel %vm1102, %v1098, %v1099
        %v1106 = vsel %vm1102, %v1097, %v1098
        %v1107 = vsel %vm1102, %v1096, %v1097
        %v1108 = vsel %vm1102, %v1095, %v1096
        %v1109 = vsel %vm1102, %v1094, %v1095
        %v1110 = vsel %vm1102, %v1093, %v1094
        %v1111 = vsel %vm1102, %v1092, %v1093
        %v1112 = vsel %vm1102, %v1091, %v1092
        %v1113 = vsel %vm1102, %v1090, %v1091
        %v1114 = vsel %vm1102, %v1089, %v1090
        %v1115 = vsel %vm1102, %v1088, %v1089
        %v1116 = vsel %vm1102, %v1087, %v1088
        %v1117 = vsel %vm1102, %v1086, %v1087
        %v1118 = vsel %vm1102, %v1085, %v1086
        %v1119 = vsel %vm1102, %v1084, %v1085
        %v1120 = vsel %vm1102, %v1083, %v1084
        %v1121 = vsel %vm1102, %v1082, %v1083
        %v1122 = vsel %vm1102, %v1081, %v1082
        %v1123 = vsel %vm1102, %v1080, %v1081
        %v1124 = vsel %vm1102, %v1079, %v1080
        %v1125 = vsel %vm1102, %v1078, %v1079
        %v1126 = vsel %vm1102, %v1077, %v1078
        %v1127 = vsel %vm1102, %v1076, %v1077
        %v1128 = vsel %vm1102, %v1075, %v1076
        %v1129 = vsel %vm1102, %v1074, %v1075
        %v1130 = vsel %vm1102, %v1073, %v1074
        %v1131 = vsel %vm1102, %v1072, %v1073
        %v1132 = vsel %vm1102, %v1071, %v1072
        %v1133 = vsel %vm1102, %v1070, %v1071
        %v1134 = vsel %vm1102, %v1101, %v1070
        %1135 = vrot.lane.b32.xlu0 %v739, 126
        %v1136 = vpop.permute.xlu0 %1135
        %1137 = vrot.lane.b32.xlu0 %v740, 126
        %v1138 = vpop.permute.xlu0 %1137
        %1139 = vrot.lane.b32.xlu0 %v741, 126
        %v1140 = vpop.permute.xlu0 %1139
        %1141 = vrot.lane.b32.xlu0 %v742, 126
        %v1142 = vpop.permute.xlu0 %1141
        %1143 = vrot.lane.b32.xlu0 %v743, 126
        %v1144 = vpop.permute.xlu0 %1143
        %1145 = vrot.lane.b32.xlu0 %v744, 126
        %v1146 = vpop.permute.xlu0 %1145
        %1147 = vrot.lane.b32.xlu0 %v745, 126
        %v1148 = vpop.permute.xlu0 %1147
        %1149 = vrot.lane.b32.xlu0 %v746, 126
        %v1150 = vpop.permute.xlu0 %1149
        %1151 = vrot.lane.b32.xlu0 %v747, 126
        %v1152 = vpop.permute.xlu0 %1151
        %1153 = vrot.lane.b32.xlu0 %v748, 126
        %v1154 = vpop.permute.xlu0 %1153
        %1155 = vrot.lane.b32.xlu0 %v749, 126
        %v1156 = vpop.permute.xlu0 %1155
        %1157 = vrot.lane.b32.xlu0 %v750, 126
        %v1158 = vpop.permute.xlu0 %1157
        %1159 = vrot.lane.b32.xlu0 %v751, 126
        %v1160 = vpop.permute.xlu0 %1159
        %1161 = vrot.lane.b32.xlu0 %v752, 126
        %v1162 = vpop.permute.xlu0 %1161
        %1163 = vrot.lane.b32.xlu0 %v753, 126
        %v1164 = vpop.permute.xlu0 %1163
        %1165 = vrot.lane.b32.xlu0 %v754, 126
        %v1166 = vpop.permute.xlu0 %1165
        %1167 = vrot.lane.b32.xlu0 %v755, 126
        %v1168 = vpop.permute.xlu0 %1167
        %1169 = vrot.lane.b32.xlu0 %v756, 126
        %v1170 = vpop.permute.xlu0 %1169
        %1171 = vrot.lane.b32.xlu0 %v757, 126
        %v1172 = vpop.permute.xlu0 %1171
        %1173 = vrot.lane.b32.xlu0 %v758, 126
        %v1174 = vpop.permute.xlu0 %1173
        %1175 = vrot.lane.b32.xlu0 %v759, 126
        %v1176 = vpop.permute.xlu0 %1175
        %1177 = vrot.lane.b32.xlu0 %v760, 126
        %v1178 = vpop.permute.xlu0 %1177
        %1179 = vrot.lane.b32.xlu0 %v761, 126
        %v1180 = vpop.permute.xlu0 %1179
        %1181 = vrot.lane.b32.xlu0 %v762, 126
        %v1182 = vpop.permute.xlu0 %1181
        %1183 = vrot.lane.b32.xlu0 %v763, 126
        %v1184 = vpop.permute.xlu0 %1183
        %1185 = vrot.lane.b32.xlu0 %v764, 126
        %v1186 = vpop.permute.xlu0 %1185
        %1187 = vrot.lane.b32.xlu0 %v765, 126
        %v1188 = vpop.permute.xlu0 %1187
        %1189 = vrot.lane.b32.xlu0 %v766, 126
        %v1190 = vpop.permute.xlu0 %1189
        %1191 = vrot.lane.b32.xlu0 %v767, 126
        %v1192 = vpop.permute.xlu0 %1191
        %1193 = vrot.lane.b32.xlu0 %v768, 126
        %v1194 = vpop.permute.xlu0 %1193
        %1195 = vrot.lane.b32.xlu0 %v769, 126
        %v1196 = vpop.permute.xlu0 %1195
        %1197 = vrot.lane.b32.xlu0 %v770, 126
        %v1198 = vpop.permute.xlu0 %1197
        %v1231 = vmul.f32 %v1103, %v1136
        %v1232 = vmul.f32 %v1134, %v1138
        %v1233 = vmul.f32 %v1133, %v1140
        %v1234 = vmul.f32 %v1132, %v1142
        %v1235 = vmul.f32 %v1131, %v1144
        %v1236 = vmul.f32 %v1130, %v1146
        %v1237 = vmul.f32 %v1129, %v1148
        %v1238 = vmul.f32 %v1128, %v1150
        %v1239 = vmul.f32 %v1127, %v1152
        %v1240 = vmul.f32 %v1126, %v1154
        %v1241 = vmul.f32 %v1125, %v1156
        %v1242 = vmul.f32 %v1124, %v1158
        %v1243 = vmul.f32 %v1123, %v1160
        %v1244 = vmul.f32 %v1122, %v1162
        %v1245 = vmul.f32 %v1121, %v1164
        %v1246 = vmul.f32 %v1120, %v1166
        %v1247 = vmul.f32 %v1119, %v1168
        %v1248 = vmul.f32 %v1118, %v1170
        %v1249 = vmul.f32 %v1117, %v1172
        %v1250 = vmul.f32 %v1116, %v1174
        %v1251 = vmul.f32 %v1115, %v1176
        %v1252 = vmul.f32 %v1114, %v1178
        %v1253 = vmul.f32 %v1113, %v1180
        %v1254 = vmul.f32 %v1112, %v1182
        %v1255 = vmul.f32 %v1111, %v1184
        %v1256 = vmul.f32 %v1110, %v1186
        %v1257 = vmul.f32 %v1109, %v1188
        %v1258 = vmul.f32 %v1108, %v1190
        %v1259 = vmul.f32 %v1107, %v1192
        %v1260 = vmul.f32 %v1106, %v1194
        %v1261 = vmul.f32 %v1105, %v1196
        %v1262 = vmul.f32 %v1104, %v1198
        %1263 = vrot.lane.b32.xlu0 %v739, 125
        %v1264 = vpop.permute.xlu0 %1263
        %1265 = vrot.lane.b32.xlu0 %v740, 125
        %v1266 = vpop.permute.xlu0 %1265
        %1267 = vrot.lane.b32.xlu0 %v741, 125
        %v1268 = vpop.permute.xlu0 %1267
        %1269 = vrot.lane.b32.xlu0 %v742, 125
        %v1270 = vpop.permute.xlu0 %1269
        %1271 = vrot.lane.b32.xlu0 %v743, 125
        %v1272 = vpop.permute.xlu0 %1271
        %1273 = vrot.lane.b32.xlu0 %v744, 125
        %v1274 = vpop.permute.xlu0 %1273
        %1275 = vrot.lane.b32.xlu0 %v745, 125
        %v1276 = vpop.permute.xlu0 %1275
        %1277 = vrot.lane.b32.xlu0 %v746, 125
        %v1278 = vpop.permute.xlu0 %1277
        %1279 = vrot.lane.b32.xlu0 %v747, 125
        %v1280 = vpop.permute.xlu0 %1279
        %1281 = vrot.lane.b32.xlu0 %v748, 125
        %v1282 = vpop.permute.xlu0 %1281
        %1283 = vrot.lane.b32.xlu0 %v749, 125
        %v1284 = vpop.permute.xlu0 %1283
        %1285 = vrot.lane.b32.xlu0 %v750, 125
        %v1286 = vpop.permute.xlu0 %1285
        %1287 = vrot.lane.b32.xlu0 %v751, 125
        %v1288 = vpop.permute.xlu0 %1287
        %1289 = vrot.lane.b32.xlu0 %v752, 125
        %v1290 = vpop.permute.xlu0 %1289
        %1291 = vrot.lane.b32.xlu0 %v753, 125
        %v1292 = vpop.permute.xlu0 %1291
        %1293 = vrot.lane.b32.xlu0 %v754, 125
        %v1294 = vpop.permute.xlu0 %1293
        %1295 = vrot.lane.b32.xlu0 %v755, 125
        %v1296 = vpop.permute.xlu0 %1295
        %1297 = vrot.lane.b32.xlu0 %v756, 125
        %v1298 = vpop.permute.xlu0 %1297
        %1299 = vrot.lane.b32.xlu0 %v757, 125
        %v1300 = vpop.permute.xlu0 %1299
        %1301 = vrot.lane.b32.xlu0 %v758, 125
        %v1302 = vpop.permute.xlu0 %1301
        %1303 = vrot.lane.b32.xlu0 %v759, 125
        %v1304 = vpop.permute.xlu0 %1303
        %1305 = vrot.lane.b32.xlu0 %v760, 125
        %v1306 = vpop.permute.xlu0 %1305
        %1307 = vrot.lane.b32.xlu0 %v761, 125
        %v1308 = vpop.permute.xlu0 %1307
        %1309 = vrot.lane.b32.xlu0 %v762, 125
        %v1310 = vpop.permute.xlu0 %1309
        %1311 = vrot.lane.b32.xlu0 %v763, 125
        %v1312 = vpop.permute.xlu0 %1311
        %1313 = vrot.lane.b32.xlu0 %v764, 125
        %v1314 = vpop.permute.xlu0 %1313
        %1315 = vrot.lane.b32.xlu0 %v765, 125
        %v1316 = vpop.permute.xlu0 %1315
        %1317 = vrot.lane.b32.xlu0 %v766, 125
        %v1318 = vpop.permute.xlu0 %1317
        %1319 = vrot.lane.b32.xlu0 %v767, 125
        %v1320 = vpop.permute.xlu0 %1319
        %1321 = vrot.lane.b32.xlu0 %v768, 125
        %v1322 = vpop.permute.xlu0 %1321
        %1323 = vrot.lane.b32.xlu0 %v769, 125
        %v1324 = vpop.permute.xlu0 %1323
        %1325 = vrot.lane.b32.xlu0 %v770, 125
        %v1326 = vpop.permute.xlu0 %1325
        %v1359 = vmul.f32 %v877, %v1264
        %v1360 = vmul.f32 %v876, %v1266
        %v1361 = vmul.f32 %v875, %v1268
        %v1362 = vmul.f32 %v874, %v1270
        %v1363 = vmul.f32 %v873, %v1272
        %v1364 = vmul.f32 %v872, %v1274
        %v1365 = vmul.f32 %v871, %v1276
        %v1366 = vmul.f32 %v870, %v1278
        %v1367 = vmul.f32 %v869, %v1280
        %v1368 = vmul.f32 %v868, %v1282
        %v1369 = vmul.f32 %v867, %v1284
        %v1370 = vmul.f32 %v866, %v1286
        %v1371 = vmul.f32 %v865, %v1288
        %v1372 = vmul.f32 %v864, %v1290
        %v1373 = vmul.f32 %v863, %v1292
        %v1374 = vmul.f32 %v862, %v1294
        %v1375 = vmul.f32 %v861, %v1296
        %v1376 = vmul.f32 %v860, %v1298
        %v1377 = vmul.f32 %v859, %v1300
        %v1378 = vmul.f32 %v858, %v1302
        %v1379 = vmul.f32 %v857, %v1304
        %v1380 = vmul.f32 %v856, %v1306
        %v1381 = vmul.f32 %v855, %v1308
        %v1382 = vmul.f32 %v854, %v1310
        %v1383 = vmul.f32 %v853, %v1312
        %v1384 = vmul.f32 %v852, %v1314
        %v1385 = vmul.f32 %v851, %v1316
        %v1386 = vmul.f32 %v850, %v1318
        %v1387 = vmul.f32 %v849, %v1320
        %v1388 = vmul.f32 %v848, %v1322
        %v1389 = vmul.f32 %v847, %v1324
        %v1390 = vmul.f32 %v846, %v1326
        %1391 = vrot.lane.b32.xlu0 %v739, 123
        %v1392 = vpop.permute.xlu0 %1391
        %1393 = vrot.lane.b32.xlu0 %v740, 123
        %v1394 = vpop.permute.xlu0 %1393
        %1395 = vrot.lane.b32.xlu0 %v741, 123
        %v1396 = vpop.permute.xlu0 %1395
        %1397 = vrot.lane.b32.xlu0 %v742, 123
        %v1398 = vpop.permute.xlu0 %1397
        %1399 = vrot.lane.b32.xlu0 %v743, 123
        %v1400 = vpop.permute.xlu0 %1399
        %1401 = vrot.lane.b32.xlu0 %v744, 123
        %v1402 = vpop.permute.xlu0 %1401
        %1403 = vrot.lane.b32.xlu0 %v745, 123
        %v1404 = vpop.permute.xlu0 %1403
        %1405 = vrot.lane.b32.xlu0 %v746, 123
        %v1406 = vpop.permute.xlu0 %1405
        %1407 = vrot.lane.b32.xlu0 %v747, 123
        %v1408 = vpop.permute.xlu0 %1407
        %1409 = vrot.lane.b32.xlu0 %v748, 123
        %v1410 = vpop.permute.xlu0 %1409
        %1411 = vrot.lane.b32.xlu0 %v749, 123
        %v1412 = vpop.permute.xlu0 %1411
        %1413 = vrot.lane.b32.xlu0 %v750, 123
        %v1414 = vpop.permute.xlu0 %1413
        %1415 = vrot.lane.b32.xlu0 %v751, 123
        %v1416 = vpop.permute.xlu0 %1415
        %1417 = vrot.lane.b32.xlu0 %v752, 123
        %v1418 = vpop.permute.xlu0 %1417
        %1419 = vrot.lane.b32.xlu0 %v753, 123
        %v1420 = vpop.permute.xlu0 %1419
        %1421 = vrot.lane.b32.xlu0 %v754, 123
        %v1422 = vpop.permute.xlu0 %1421
        %1423 = vrot.lane.b32.xlu0 %v755, 123
        %v1424 = vpop.permute.xlu0 %1423
        %1425 = vrot.lane.b32.xlu0 %v756, 123
        %v1426 = vpop.permute.xlu0 %1425
        %1427 = vrot.lane.b32.xlu0 %v757, 123
        %v1428 = vpop.permute.xlu0 %1427
        %1429 = vrot.lane.b32.xlu0 %v758, 123
        %v1430 = vpop.permute.xlu0 %1429
        %1431 = vrot.lane.b32.xlu0 %v759, 123
        %v1432 = vpop.permute.xlu0 %1431
        %1433 = vrot.lane.b32.xlu0 %v760, 123
        %v1434 = vpop.permute.xlu0 %1433
        %1435 = vrot.lane.b32.xlu0 %v761, 123
        %v1436 = vpop.permute.xlu0 %1435
        %1437 = vrot.lane.b32.xlu0 %v762, 123
        %v1438 = vpop.permute.xlu0 %1437
        %1439 = vrot.lane.b32.xlu0 %v763, 123
        %v1440 = vpop.permute.xlu0 %1439
        %1441 = vrot.lane.b32.xlu0 %v764, 123
        %v1442 = vpop.permute.xlu0 %1441
        %1443 = vrot.lane.b32.xlu0 %v765, 123
        %v1444 = vpop.permute.xlu0 %1443
        %1445 = vrot.lane.b32.xlu0 %v766, 123
        %v1446 = vpop.permute.xlu0 %1445
        %1447 = vrot.lane.b32.xlu0 %v767, 123
        %v1448 = vpop.permute.xlu0 %1447
        %1449 = vrot.lane.b32.xlu0 %v768, 123
        %v1450 = vpop.permute.xlu0 %1449
        %1451 = vrot.lane.b32.xlu0 %v769, 123
        %v1452 = vpop.permute.xlu0 %1451
        %1453 = vrot.lane.b32.xlu0 %v770, 123
        %v1454 = vpop.permute.xlu0 %1453
        %v1487 = vmul.f32 %v1133, %v1392
        %v1488 = vmul.f32 %v1132, %v1394
        %v1489 = vmul.f32 %v1131, %v1396
        %v1490 = vmul.f32 %v1130, %v1398
        %v1491 = vmul.f32 %v1129, %v1400
        %v1492 = vmul.f32 %v1128, %v1402
        %v1493 = vmul.f32 %v1127, %v1404
        %v1494 = vmul.f32 %v1126, %v1406
        %v1495 = vmul.f32 %v1125, %v1408
        %v1496 = vmul.f32 %v1124, %v1410
        %v1497 = vmul.f32 %v1123, %v1412
        %v1498 = vmul.f32 %v1122, %v1414
        %v1499 = vmul.f32 %v1121, %v1416
        %v1500 = vmul.f32 %v1120, %v1418
        %v1501 = vmul.f32 %v1119, %v1420
        %v1502 = vmul.f32 %v1118, %v1422
        %v1503 = vmul.f32 %v1117, %v1424
        %v1504 = vmul.f32 %v1116, %v1426
        %v1505 = vmul.f32 %v1115, %v1428
        %v1506 = vmul.f32 %v1114, %v1430
        %v1507 = vmul.f32 %v1113, %v1432
        %v1508 = vmul.f32 %v1112, %v1434
        %v1509 = vmul.f32 %v1111, %v1436
        %v1510 = vmul.f32 %v1110, %v1438
        %v1511 = vmul.f32 %v1109, %v1440
        %v1512 = vmul.f32 %v1108, %v1442
        %v1513 = vmul.f32 %v1107, %v1444
        %v1514 = vmul.f32 %v1106, %v1446
        %v1515 = vmul.f32 %v1105, %v1448
        %v1516 = vmul.f32 %v1104, %v1450
        %v1517 = vmul.f32 %v1103, %v1452
        %v1518 = vmul.f32 %v1134, %v1454
        %1519 = vrot.lane.b32.xlu0 %v739, 122
        %v1520 = vpop.permute.xlu0 %1519
        %1521 = vrot.lane.b32.xlu0 %v740, 122
        %v1522 = vpop.permute.xlu0 %1521
        %1523 = vrot.lane.b32.xlu0 %v741, 122
        %v1524 = vpop.permute.xlu0 %1523
        %1525 = vrot.lane.b32.xlu0 %v742, 122
        %v1526 = vpop.permute.xlu0 %1525
        %1527 = vrot.lane.b32.xlu0 %v743, 122
        %v1528 = vpop.permute.xlu0 %1527
        %1529 = vrot.lane.b32.xlu0 %v744, 122
        %v1530 = vpop.permute.xlu0 %1529
        %1531 = vrot.lane.b32.xlu0 %v745, 122
        %v1532 = vpop.permute.xlu0 %1531
        %1533 = vrot.lane.b32.xlu0 %v746, 122
        %v1534 = vpop.permute.xlu0 %1533
        %1535 = vrot.lane.b32.xlu0 %v747, 122
        %v1536 = vpop.permute.xlu0 %1535
        %1537 = vrot.lane.b32.xlu0 %v748, 122
        %v1538 = vpop.permute.xlu0 %1537
        %1539 = vrot.lane.b32.xlu0 %v749, 122
        %v1540 = vpop.permute.xlu0 %1539
        %1541 = vrot.lane.b32.xlu0 %v750, 122
        %v1542 = vpop.permute.xlu0 %1541
        %1543 = vrot.lane.b32.xlu0 %v751, 122
        %v1544 = vpop.permute.xlu0 %1543
        %1545 = vrot.lane.b32.xlu0 %v752, 122
        %v1546 = vpop.permute.xlu0 %1545
        %1547 = vrot.lane.b32.xlu0 %v753, 122
        %v1548 = vpop.permute.xlu0 %1547
        %1549 = vrot.lane.b32.xlu0 %v754, 122
        %v1550 = vpop.permute.xlu0 %1549
        %1551 = vrot.lane.b32.xlu0 %v755, 122
        %v1552 = vpop.permute.xlu0 %1551
        %1553 = vrot.lane.b32.xlu0 %v756, 122
        %v1554 = vpop.permute.xlu0 %1553
        %1555 = vrot.lane.b32.xlu0 %v757, 122
        %v1556 = vpop.permute.xlu0 %1555
        %1557 = vrot.lane.b32.xlu0 %v758, 122
        %v1558 = vpop.permute.xlu0 %1557
        %1559 = vrot.lane.b32.xlu0 %v759, 122
        %v1560 = vpop.permute.xlu0 %1559
        %1561 = vrot.lane.b32.xlu0 %v760, 122
        %v1562 = vpop.permute.xlu0 %1561
        %1563 = vrot.lane.b32.xlu0 %v761, 122
        %v1564 = vpop.permute.xlu0 %1563
        %1565 = vrot.lane.b32.xlu0 %v762, 122
        %v1566 = vpop.permute.xlu0 %1565
        %1567 = vrot.lane.b32.xlu0 %v763, 122
        %v1568 = vpop.permute.xlu0 %1567
        %1569 = vrot.lane.b32.xlu0 %v764, 122
        %v1570 = vpop.permute.xlu0 %1569
        %1571 = vrot.lane.b32.xlu0 %v765, 122
        %v1572 = vpop.permute.xlu0 %1571
        %1573 = vrot.lane.b32.xlu0 %v766, 122
        %v1574 = vpop.permute.xlu0 %1573
        %1575 = vrot.lane.b32.xlu0 %v767, 122
        %v1576 = vpop.permute.xlu0 %1575
        %1577 = vrot.lane.b32.xlu0 %v768, 122
        %v1578 = vpop.permute.xlu0 %1577
        %1579 = vrot.lane.b32.xlu0 %v769, 122
        %v1580 = vpop.permute.xlu0 %1579
        %1581 = vrot.lane.b32.xlu0 %v770, 122
        %v1582 = vpop.permute.xlu0 %1581
        %v1615 = vmul.f32 %v875, %v1520
        %v1616 = vmul.f32 %v874, %v1522
        %v1617 = vmul.f32 %v873, %v1524
        %v1618 = vmul.f32 %v872, %v1526
        %v1619 = vmul.f32 %v871, %v1528
        %v1620 = vmul.f32 %v870, %v1530
        %v1621 = vmul.f32 %v869, %v1532
        %v1622 = vmul.f32 %v868, %v1534
        %v1623 = vmul.f32 %v867, %v1536
        %v1624 = vmul.f32 %v866, %v1538
        %v1625 = vmul.f32 %v865, %v1540
        %v1626 = vmul.f32 %v864, %v1542
        %v1627 = vmul.f32 %v863, %v1544
        %v1628 = vmul.f32 %v862, %v1546
        %v1629 = vmul.f32 %v861, %v1548
        %v1630 = vmul.f32 %v860, %v1550
        %v1631 = vmul.f32 %v859, %v1552
        %v1632 = vmul.f32 %v858, %v1554
        %v1633 = vmul.f32 %v857, %v1556
        %v1634 = vmul.f32 %v856, %v1558
        %v1635 = vmul.f32 %v855, %v1560
        %v1636 = vmul.f32 %v854, %v1562
        %v1637 = vmul.f32 %v853, %v1564
        %v1638 = vmul.f32 %v852, %v1566
        %v1639 = vmul.f32 %v851, %v1568
        %v1640 = vmul.f32 %v850, %v1570
        %v1641 = vmul.f32 %v849, %v1572
        %v1642 = vmul.f32 %v848, %v1574
        %v1643 = vmul.f32 %v847, %v1576
        %v1644 = vmul.f32 %v846, %v1578
        %v1645 = vmul.f32 %v877, %v1580
        %v1646 = vmul.f32 %v876, %v1582
        %1647 = vrot.lane.b32.xlu0 %v739, 121
        %v1648 = vpop.permute.xlu0 %1647
        %1649 = vrot.lane.b32.xlu0 %v740, 121
        %v1650 = vpop.permute.xlu0 %1649
        %1651 = vrot.lane.b32.xlu0 %v741, 121
        %v1652 = vpop.permute.xlu0 %1651
        %1653 = vrot.lane.b32.xlu0 %v742, 121
        %v1654 = vpop.permute.xlu0 %1653
        %1655 = vrot.lane.b32.xlu0 %v743, 121
        %v1656 = vpop.permute.xlu0 %1655
        %1657 = vrot.lane.b32.xlu0 %v744, 121
        %v1658 = vpop.permute.xlu0 %1657
        %1659 = vrot.lane.b32.xlu0 %v745, 121
        %v1660 = vpop.permute.xlu0 %1659
        %1661 = vrot.lane.b32.xlu0 %v746, 121
        %v1662 = vpop.permute.xlu0 %1661
        %1663 = vrot.lane.b32.xlu0 %v747, 121
        %v1664 = vpop.permute.xlu0 %1663
        %1665 = vrot.lane.b32.xlu0 %v748, 121
        %v1666 = vpop.permute.xlu0 %1665
        %1667 = vrot.lane.b32.xlu0 %v749, 121
        %v1668 = vpop.permute.xlu0 %1667
        %1669 = vrot.lane.b32.xlu0 %v750, 121
        %v1670 = vpop.permute.xlu0 %1669
        %1671 = vrot.lane.b32.xlu0 %v751, 121
        %v1672 = vpop.permute.xlu0 %1671
        %1673 = vrot.lane.b32.xlu0 %v752, 121
        %v1674 = vpop.permute.xlu0 %1673
        %1675 = vrot.lane.b32.xlu0 %v753, 121
        %v1676 = vpop.permute.xlu0 %1675
        %1677 = vrot.lane.b32.xlu0 %v754, 121
        %v1678 = vpop.permute.xlu0 %1677
        %1679 = vrot.lane.b32.xlu0 %v755, 121
        %v1680 = vpop.permute.xlu0 %1679
        %1681 = vrot.lane.b32.xlu0 %v756, 121
        %v1682 = vpop.permute.xlu0 %1681
        %1683 = vrot.lane.b32.xlu0 %v757, 121
        %v1684 = vpop.permute.xlu0 %1683
        %1685 = vrot.lane.b32.xlu0 %v758, 121
        %v1686 = vpop.permute.xlu0 %1685
        %1687 = vrot.lane.b32.xlu0 %v759, 121
        %v1688 = vpop.permute.xlu0 %1687
        %1689 = vrot.lane.b32.xlu0 %v760, 121
        %v1690 = vpop.permute.xlu0 %1689
        %1691 = vrot.lane.b32.xlu0 %v761, 121
        %v1692 = vpop.permute.xlu0 %1691
        %1693 = vrot.lane.b32.xlu0 %v762, 121
        %v1694 = vpop.permute.xlu0 %1693
        %1695 = vrot.lane.b32.xlu0 %v763, 121
        %v1696 = vpop.permute.xlu0 %1695
        %1697 = vrot.lane.b32.xlu0 %v764, 121
        %v1698 = vpop.permute.xlu0 %1697
        %1699 = vrot.lane.b32.xlu0 %v765, 121
        %v1700 = vpop.permute.xlu0 %1699
        %1701 = vrot.lane.b32.xlu0 %v766, 121
        %v1702 = vpop.permute.xlu0 %1701
        %1703 = vrot.lane.b32.xlu0 %v767, 121
        %v1704 = vpop.permute.xlu0 %1703
        %1705 = vrot.lane.b32.xlu0 %v768, 121
        %v1706 = vpop.permute.xlu0 %1705
        %1707 = vrot.lane.b32.xlu0 %v769, 121
        %v1708 = vpop.permute.xlu0 %1707
        %1709 = vrot.lane.b32.xlu0 %v770, 121
        %v1710 = vpop.permute.xlu0 %1709
        %v1743 = vmul.f32 %v781, %v1648
        %v1744 = vmul.f32 %v782, %v1650
        %v1745 = vmul.f32 %v783, %v1652
        %v1746 = vmul.f32 %v784, %v1654
        %v1747 = vmul.f32 %v785, %v1656
        %v1748 = vmul.f32 %v786, %v1658
        %v1749 = vmul.f32 %v787, %v1660
        %v1750 = vmul.f32 %v788, %v1662
        %v1751 = vmul.f32 %v789, %v1664
        %v1752 = vmul.f32 %v790, %v1666
        %v1753 = vmul.f32 %v791, %v1668
        %v1754 = vmul.f32 %v792, %v1670
        %v1755 = vmul.f32 %v793, %v1672
        %v1756 = vmul.f32 %v794, %v1674
        %v1757 = vmul.f32 %v795, %v1676
        %v1758 = vmul.f32 %v796, %v1678
        %v1759 = vmul.f32 %v797, %v1680
        %v1760 = vmul.f32 %v798, %v1682
        %v1761 = vmul.f32 %v799, %v1684
        %v1762 = vmul.f32 %v800, %v1686
        %v1763 = vmul.f32 %v801, %v1688
        %v1764 = vmul.f32 %v802, %v1690
        %v1765 = vmul.f32 %v803, %v1692
        %v1766 = vmul.f32 %v804, %v1694
        %v1767 = vmul.f32 %v805, %v1696
        %v1768 = vmul.f32 %v806, %v1698
        %v1769 = vmul.f32 %v807, %v1700
        %v1770 = vmul.f32 %v808, %v1702
        %v1771 = vmul.f32 %v809, %v1704
        %v1772 = vmul.f32 %v810, %v1706
        %v1773 = vmul.f32 %v779, %v1708
        %v1774 = vmul.f32 %v780, %v1710
        %1775 = vrot.lane.b32.xlu0 %v739, 120
        %v1776 = vpop.permute.xlu0 %1775
        %1777 = vrot.lane.b32.xlu0 %v740, 120
        %v1778 = vpop.permute.xlu0 %1777
        %1779 = vrot.lane.b32.xlu0 %v741, 120
        %v1780 = vpop.permute.xlu0 %1779
        %1781 = vrot.lane.b32.xlu0 %v742, 120
        %v1782 = vpop.permute.xlu0 %1781
        %1783 = vrot.lane.b32.xlu0 %v743, 120
        %v1784 = vpop.permute.xlu0 %1783
        %1785 = vrot.lane.b32.xlu0 %v744, 120
        %v1786 = vpop.permute.xlu0 %1785
        %1787 = vrot.lane.b32.xlu0 %v745, 120
        %v1788 = vpop.permute.xlu0 %1787
        %1789 = vrot.lane.b32.xlu0 %v746, 120
        %v1790 = vpop.permute.xlu0 %1789
        %1791 = vrot.lane.b32.xlu0 %v747, 120
        %v1792 = vpop.permute.xlu0 %1791
        %1793 = vrot.lane.b32.xlu0 %v748, 120
        %v1794 = vpop.permute.xlu0 %1793
        %1795 = vrot.lane.b32.xlu0 %v749, 120
        %v1796 = vpop.permute.xlu0 %1795
        %1797 = vrot.lane.b32.xlu0 %v750, 120
        %v1798 = vpop.permute.xlu0 %1797
        %1799 = vrot.lane.b32.xlu0 %v751, 120
        %v1800 = vpop.permute.xlu0 %1799
        %1801 = vrot.lane.b32.xlu0 %v752, 120
        %v1802 = vpop.permute.xlu0 %1801
        %1803 = vrot.lane.b32.xlu0 %v753, 120
        %v1804 = vpop.permute.xlu0 %1803
        %1805 = vrot.lane.b32.xlu0 %v754, 120
        %v1806 = vpop.permute.xlu0 %1805
        %1807 = vrot.lane.b32.xlu0 %v755, 120
        %v1808 = vpop.permute.xlu0 %1807
        %1809 = vrot.lane.b32.xlu0 %v756, 120
        %v1810 = vpop.permute.xlu0 %1809
        %1811 = vrot.lane.b32.xlu0 %v757, 120
        %v1812 = vpop.permute.xlu0 %1811
        %1813 = vrot.lane.b32.xlu0 %v758, 120
        %v1814 = vpop.permute.xlu0 %1813
        %1815 = vrot.lane.b32.xlu0 %v759, 120
        %v1816 = vpop.permute.xlu0 %1815
        %1817 = vrot.lane.b32.xlu0 %v760, 120
        %v1818 = vpop.permute.xlu0 %1817
        %1819 = vrot.lane.b32.xlu0 %v761, 120
        %v1820 = vpop.permute.xlu0 %1819
        %1821 = vrot.lane.b32.xlu0 %v762, 120
        %v1822 = vpop.permute.xlu0 %1821
        %1823 = vrot.lane.b32.xlu0 %v763, 120
        %v1824 = vpop.permute.xlu0 %1823
        %1825 = vrot.lane.b32.xlu0 %v764, 120
        %v1826 = vpop.permute.xlu0 %1825
        %1827 = vrot.lane.b32.xlu0 %v765, 120
        %v1828 = vpop.permute.xlu0 %1827
        %1829 = vrot.lane.b32.xlu0 %v766, 120
        %v1830 = vpop.permute.xlu0 %1829
        %1831 = vrot.lane.b32.xlu0 %v767, 120
        %v1832 = vpop.permute.xlu0 %1831
        %1833 = vrot.lane.b32.xlu0 %v768, 120
        %v1834 = vpop.permute.xlu0 %1833
        %1835 = vrot.lane.b32.xlu0 %v769, 120
        %v1836 = vpop.permute.xlu0 %1835
        %1837 = vrot.lane.b32.xlu0 %v770, 120
        %v1838 = vpop.permute.xlu0 %1837
        %v1871 = vmul.f32 %v1131, %v1776
        %v1872 = vmul.f32 %v1130, %v1778
        %v1873 = vmul.f32 %v1129, %v1780
        %v1874 = vmul.f32 %v1128, %v1782
        %v1875 = vmul.f32 %v1127, %v1784
        %v1876 = vmul.f32 %v1126, %v1786
        %v1877 = vmul.f32 %v1125, %v1788
        %v1878 = vmul.f32 %v1124, %v1790
        %v1879 = vmul.f32 %v1123, %v1792
        %v1880 = vmul.f32 %v1122, %v1794
        %v1881 = vmul.f32 %v1121, %v1796
        %v1882 = vmul.f32 %v1120, %v1798
        %v1883 = vmul.f32 %v1119, %v1800
        %v1884 = vmul.f32 %v1118, %v1802
        %v1885 = vmul.f32 %v1117, %v1804
        %v1886 = vmul.f32 %v1116, %v1806
        %v1887 = vmul.f32 %v1115, %v1808
        %v1888 = vmul.f32 %v1114, %v1810
        %v1889 = vmul.f32 %v1113, %v1812
        %v1890 = vmul.f32 %v1112, %v1814
        %v1891 = vmul.f32 %v1111, %v1816
        %v1892 = vmul.f32 %v1110, %v1818
        %v1893 = vmul.f32 %v1109, %v1820
        %v1894 = vmul.f32 %v1108, %v1822
        %v1895 = vmul.f32 %v1107, %v1824
        %v1896 = vmul.f32 %v1106, %v1826
        %v1897 = vmul.f32 %v1105, %v1828
        %v1898 = vmul.f32 %v1104, %v1830
        %v1899 = vmul.f32 %v1103, %v1832
        %v1900 = vmul.f32 %v1134, %v1834
        %v1901 = vmul.f32 %v1133, %v1836
        %v1902 = vmul.f32 %v1132, %v1838
        %v1903 = vld [vmem:[%s1] sm:$0x1]
        %1905 = vset.pattern.permute.xlu0 0
        %1906 = vperm.xlu0 %1905, %v878
        %v1907 = vpop.permute.xlu0 %1906
        %1910 = vset.pattern.permute.xlu0 0
        %1911 = vperm.xlu0 %1910, %v879
        %v1912 = vpop.permute.xlu0 %1911
        %1915 = vset.pattern.permute.xlu0 0
        %1916 = vperm.xlu0 %1915, %v880
        %v1917 = vpop.permute.xlu0 %1916
        %1920 = vset.pattern.permute.xlu0 0
        %1921 = vperm.xlu0 %1920, %v881
        %v1922 = vpop.permute.xlu0 %1921
        %1925 = vset.pattern.permute.xlu0 0
        %1926 = vperm.xlu0 %1925, %v882
        %v1927 = vpop.permute.xlu0 %1926
        %1930 = vset.pattern.permute.xlu0 0
        %1931 = vperm.xlu0 %1930, %v883
        %v1932 = vpop.permute.xlu0 %1931
        %1935 = vset.pattern.permute.xlu0 0
        %1936 = vperm.xlu0 %1935, %v884
        %v1937 = vpop.permute.xlu0 %1936
        %1940 = vset.pattern.permute.xlu0 0
        %1941 = vperm.xlu0 %1940, %v885
        %v1942 = vpop.permute.xlu0 %1941
        %1945 = vset.pattern.permute.xlu0 0
        %1946 = vperm.xlu0 %1945, %v886
        %v1947 = vpop.permute.xlu0 %1946
        %1950 = vset.pattern.permute.xlu0 0
        %1951 = vperm.xlu0 %1950, %v887
        %v1952 = vpop.permute.xlu0 %1951
        %1955 = vset.pattern.permute.xlu0 0
        %1956 = vperm.xlu0 %1955, %v888
        %v1957 = vpop.permute.xlu0 %1956
        %1960 = vset.pattern.permute.xlu0 0
        %1961 = vperm.xlu0 %1960, %v889
        %v1962 = vpop.permute.xlu0 %1961
        %1965 = vset.pattern.permute.xlu0 0
        %1966 = vperm.xlu0 %1965, %v890
        %v1967 = vpop.permute.xlu0 %1966
        %1970 = vset.pattern.permute.xlu0 0
        %1971 = vperm.xlu0 %1970, %v891
        %v1972 = vpop.permute.xlu0 %1971
        %1975 = vset.pattern.permute.xlu0 0
        %1976 = vperm.xlu0 %1975, %v892
        %v1977 = vpop.permute.xlu0 %1976
        %1980 = vset.pattern.permute.xlu0 0
        %1981 = vperm.xlu0 %1980, %v893
        %v1982 = vpop.permute.xlu0 %1981
        %1985 = vset.pattern.permute.xlu0 0
        %1986 = vperm.xlu0 %1985, %v894
        %v1987 = vpop.permute.xlu0 %1986
        %1990 = vset.pattern.permute.xlu0 0
        %1991 = vperm.xlu0 %1990, %v895
        %v1992 = vpop.permute.xlu0 %1991
        %1995 = vset.pattern.permute.xlu0 0
        %1996 = vperm.xlu0 %1995, %v896
        %v1997 = vpop.permute.xlu0 %1996
        %2000 = vset.pattern.permute.xlu0 0
        %2001 = vperm.xlu0 %2000, %v897
        %v2002 = vpop.permute.xlu0 %2001
        %2005 = vset.pattern.permute.xlu0 0
        %2006 = vperm.xlu0 %2005, %v898
        %v2007 = vpop.permute.xlu0 %2006
        %2010 = vset.pattern.permute.xlu0 0
        %2011 = vperm.xlu0 %2010, %v899
        %v2012 = vpop.permute.xlu0 %2011
        %2015 = vset.pattern.permute.xlu0 0
        %2016 = vperm.xlu0 %2015, %v900
        %v2017 = vpop.permute.xlu0 %2016
        %2020 = vset.pattern.permute.xlu0 0
        %2021 = vperm.xlu0 %2020, %v901
        %v2022 = vpop.permute.xlu0 %2021
        %2025 = vset.pattern.permute.xlu0 0
        %2026 = vperm.xlu0 %2025, %v902
        %v2027 = vpop.permute.xlu0 %2026
        %2030 = vset.pattern.permute.xlu0 0
        %2031 = vperm.xlu0 %2030, %v903
        %v2032 = vpop.permute.xlu0 %2031
        %2035 = vset.pattern.permute.xlu0 0
        %2036 = vperm.xlu0 %2035, %v904
        %v2037 = vpop.permute.xlu0 %2036
        %2040 = vset.pattern.permute.xlu0 0
        %2041 = vperm.xlu0 %2040, %v905
        %v2042 = vpop.permute.xlu0 %2041
        %2045 = vset.pattern.permute.xlu0 0
        %2046 = vperm.xlu0 %2045, %v906
        %v2047 = vpop.permute.xlu0 %2046
        %2050 = vset.pattern.permute.xlu0 0
        %2051 = vperm.xlu0 %2050, %v907
        %v2052 = vpop.permute.xlu0 %2051
        %2055 = vset.pattern.permute.xlu0 0
        %2056 = vperm.xlu0 %2055, %v908
        %v2057 = vpop.permute.xlu0 %2056
        %2060 = vset.pattern.permute.xlu0 0
        %2061 = vperm.xlu0 %2060, %v909
        %v2062 = vpop.permute.xlu0 %2061
        %v2064 = vperm.slane %v1903, 0
        %v2065 = vmul.f32 %v1907, %v2064
        %v2066 = vmul.f32 %v1912, %v2064
        %v2067 = vmul.f32 %v1917, %v2064
        %v2068 = vmul.f32 %v1922, %v2064
        %v2069 = vmul.f32 %v1927, %v2064
        %v2070 = vmul.f32 %v1932, %v2064
        %v2071 = vmul.f32 %v1937, %v2064
        %v2072 = vmul.f32 %v1942, %v2064
        %v2073 = vmul.f32 %v1947, %v2064
        %v2074 = vmul.f32 %v1952, %v2064
        %v2075 = vmul.f32 %v1957, %v2064
        %v2076 = vmul.f32 %v1962, %v2064
        %v2077 = vmul.f32 %v1967, %v2064
        %v2078 = vmul.f32 %v1972, %v2064
        %v2079 = vmul.f32 %v1977, %v2064
        %v2080 = vmul.f32 %v1982, %v2064
        %v2081 = vmul.f32 %v1987, %v2064
        %v2082 = vmul.f32 %v1992, %v2064
        %v2083 = vmul.f32 %v1997, %v2064
        %v2084 = vmul.f32 %v2002, %v2064
        %v2085 = vmul.f32 %v2007, %v2064
        %v2086 = vmul.f32 %v2012, %v2064
        %v2087 = vmul.f32 %v2017, %v2064
        %v2088 = vmul.f32 %v2022, %v2064
        %v2089 = vmul.f32 %v2027, %v2064
        %v2090 = vmul.f32 %v2032, %v2064
        %v2091 = vmul.f32 %v2037, %v2064
        %v2092 = vmul.f32 %v2042, %v2064
        %v2093 = vmul.f32 %v2047, %v2064
        %v2094 = vmul.f32 %v2052, %v2064
        %v2095 = vmul.f32 %v2057, %v2064
        %v2096 = vmul.f32 %v2062, %v2064
        %v2097 = vld [vmem:[%s1 + $0x1] sm:$0x1]
        %2099 = vset.pattern.permute.xlu0 0
        %2100 = vperm.xlu0 %2099, %v1038
        %v2101 = vpop.permute.xlu0 %2100
        %2104 = vset.pattern.permute.xlu0 0
        %2105 = vperm.xlu0 %2104, %v1039
        %v2106 = vpop.permute.xlu0 %2105
        %2109 = vset.pattern.permute.xlu0 0
        %2110 = vperm.xlu0 %2109, %v1040
        %v2111 = vpop.permute.xlu0 %2110
        %2114 = vset.pattern.permute.xlu0 0
        %2115 = vperm.xlu0 %2114, %v1041
        %v2116 = vpop.permute.xlu0 %2115
        %2119 = vset.pattern.permute.xlu0 0
        %2120 = vperm.xlu0 %2119, %v1042
        %v2121 = vpop.permute.xlu0 %2120
        %2124 = vset.pattern.permute.xlu0 0
        %2125 = vperm.xlu0 %2124, %v1043
        %v2126 = vpop.permute.xlu0 %2125
        %2129 = vset.pattern.permute.xlu0 0
        %2130 = vperm.xlu0 %2129, %v1044
        %v2131 = vpop.permute.xlu0 %2130
        %2134 = vset.pattern.permute.xlu0 0
        %2135 = vperm.xlu0 %2134, %v1045
        %v2136 = vpop.permute.xlu0 %2135
        %2139 = vset.pattern.permute.xlu0 0
        %2140 = vperm.xlu0 %2139, %v1046
        %v2141 = vpop.permute.xlu0 %2140
        %2144 = vset.pattern.permute.xlu0 0
        %2145 = vperm.xlu0 %2144, %v1047
        %v2146 = vpop.permute.xlu0 %2145
        %2149 = vset.pattern.permute.xlu0 0
        %2150 = vperm.xlu0 %2149, %v1048
        %v2151 = vpop.permute.xlu0 %2150
        %2154 = vset.pattern.permute.xlu0 0
        %2155 = vperm.xlu0 %2154, %v1049
        %v2156 = vpop.permute.xlu0 %2155
        %2159 = vset.pattern.permute.xlu0 0
        %2160 = vperm.xlu0 %2159, %v1050
        %v2161 = vpop.permute.xlu0 %2160
        %2164 = vset.pattern.permute.xlu0 0
        %2165 = vperm.xlu0 %2164, %v1051
        %v2166 = vpop.permute.xlu0 %2165
        %2169 = vset.pattern.permute.xlu0 0
        %2170 = vperm.xlu0 %2169, %v1052
        %v2171 = vpop.permute.xlu0 %2170
        %2174 = vset.pattern.permute.xlu0 0
        %2175 = vperm.xlu0 %2174, %v1053
        %v2176 = vpop.permute.xlu0 %2175
        %2179 = vset.pattern.permute.xlu0 0
        %2180 = vperm.xlu0 %2179, %v1054
        %v2181 = vpop.permute.xlu0 %2180
        %2184 = vset.pattern.permute.xlu0 0
        %2185 = vperm.xlu0 %2184, %v1055
        %v2186 = vpop.permute.xlu0 %2185
        %2189 = vset.pattern.permute.xlu0 0
        %2190 = vperm.xlu0 %2189, %v1056
        %v2191 = vpop.permute.xlu0 %2190
        %2194 = vset.pattern.permute.xlu0 0
        %2195 = vperm.xlu0 %2194, %v1057
        %v2196 = vpop.permute.xlu0 %2195
        %2199 = vset.pattern.permute.xlu0 0
        %2200 = vperm.xlu0 %2199, %v1058
        %v2201 = vpop.permute.xlu0 %2200
        %2204 = vset.pattern.permute.xlu0 0
        %2205 = vperm.xlu0 %2204, %v1059
        %v2206 = vpop.permute.xlu0 %2205
        %2209 = vset.pattern.permute.xlu0 0
        %2210 = vperm.xlu0 %2209, %v1060
        %v2211 = vpop.permute.xlu0 %2210
        %2214 = vset.pattern.permute.xlu0 0
        %2215 = vperm.xlu0 %2214, %v1061
        %v2216 = vpop.permute.xlu0 %2215
        %2219 = vset.pattern.permute.xlu0 0
        %2220 = vperm.xlu0 %2219, %v1062
        %v2221 = vpop.permute.xlu0 %2220
        %2224 = vset.pattern.permute.xlu0 0
        %2225 = vperm.xlu0 %2224, %v1063
        %v2226 = vpop.permute.xlu0 %2225
        %2229 = vset.pattern.permute.xlu0 0
        %2230 = vperm.xlu0 %2229, %v1064
        %v2231 = vpop.permute.xlu0 %2230
        %2234 = vset.pattern.permute.xlu0 0
        %2235 = vperm.xlu0 %2234, %v1065
        %v2236 = vpop.permute.xlu0 %2235
        %2239 = vset.pattern.permute.xlu0 0
        %2240 = vperm.xlu0 %2239, %v1066
        %v2241 = vpop.permute.xlu0 %2240
        %2244 = vset.pattern.permute.xlu0 0
        %2245 = vperm.xlu0 %2244, %v1067
        %v2246 = vpop.permute.xlu0 %2245
        %2249 = vset.pattern.permute.xlu0 0
        %2250 = vperm.xlu0 %2249, %v1068
        %v2251 = vpop.permute.xlu0 %2250
        %2254 = vset.pattern.permute.xlu0 0
        %2255 = vperm.xlu0 %2254, %v1069
        %v2256 = vpop.permute.xlu0 %2255
        %v2258 = vperm.slane %v2097, 0
        %v2259 = vmul.f32 %v2101, %v2258
        %v2260 = vmul.f32 %v2106, %v2258
        %v2261 = vmul.f32 %v2111, %v2258
        %v2262 = vmul.f32 %v2116, %v2258
        %v2263 = vmul.f32 %v2121, %v2258
        %v2264 = vmul.f32 %v2126, %v2258
        %v2265 = vmul.f32 %v2131, %v2258
        %v2266 = vmul.f32 %v2136, %v2258
        %v2267 = vmul.f32 %v2141, %v2258
        %v2268 = vmul.f32 %v2146, %v2258
        %v2269 = vmul.f32 %v2151, %v2258
        %v2270 = vmul.f32 %v2156, %v2258
        %v2271 = vmul.f32 %v2161, %v2258
        %v2272 = vmul.f32 %v2166, %v2258
        %v2273 = vmul.f32 %v2171, %v2258
        %v2274 = vmul.f32 %v2176, %v2258
        %v2275 = vmul.f32 %v2181, %v2258
        %v2276 = vmul.f32 %v2186, %v2258
        %v2277 = vmul.f32 %v2191, %v2258
        %v2278 = vmul.f32 %v2196, %v2258
        %v2279 = vmul.f32 %v2201, %v2258
        %v2280 = vmul.f32 %v2206, %v2258
        %v2281 = vmul.f32 %v2211, %v2258
        %v2282 = vmul.f32 %v2216, %v2258
        %v2283 = vmul.f32 %v2221, %v2258
        %v2284 = vmul.f32 %v2226, %v2258
        %v2285 = vmul.f32 %v2231, %v2258
        %v2286 = vmul.f32 %v2236, %v2258
        %v2287 = vmul.f32 %v2241, %v2258
        %v2288 = vmul.f32 %v2246, %v2258
        %v2289 = vmul.f32 %v2251, %v2258
        %v2290 = vmul.f32 %v2256, %v2258
        %v2291 = vadd.f32 %v2065, %v2259
        %v2292 = vadd.f32 %v2066, %v2260
        %v2293 = vadd.f32 %v2067, %v2261
        %v2294 = vadd.f32 %v2068, %v2262
        %v2295 = vadd.f32 %v2069, %v2263
        %v2296 = vadd.f32 %v2070, %v2264
        %v2297 = vadd.f32 %v2071, %v2265
        %v2298 = vadd.f32 %v2072, %v2266
        %v2299 = vadd.f32 %v2073, %v2267
        %v2300 = vadd.f32 %v2074, %v2268
        %v2301 = vadd.f32 %v2075, %v2269
        %v2302 = vadd.f32 %v2076, %v2270
        %v2303 = vadd.f32 %v2077, %v2271
        %v2304 = vadd.f32 %v2078, %v2272
        %v2305 = vadd.f32 %v2079, %v2273
        %v2306 = vadd.f32 %v2080, %v2274
        %v2307 = vadd.f32 %v2081, %v2275
        %v2308 = vadd.f32 %v2082, %v2276
        %v2309 = vadd.f32 %v2083, %v2277
        %v2310 = vadd.f32 %v2084, %v2278
        %v2311 = vadd.f32 %v2085, %v2279
        %v2312 = vadd.f32 %v2086, %v2280
        %v2313 = vadd.f32 %v2087, %v2281
        %v2314 = vadd.f32 %v2088, %v2282
        %v2315 = vadd.f32 %v2089, %v2283
        %v2316 = vadd.f32 %v2090, %v2284
        %v2317 = vadd.f32 %v2091, %v2285
        %v2318 = vadd.f32 %v2092, %v2286
        %v2319 = vadd.f32 %v2093, %v2287
        %v2320 = vadd.f32 %v2094, %v2288
        %v2321 = vadd.f32 %v2095, %v2289
        %v2322 = vadd.f32 %v2096, %v2290
        %v2323 = vld [vmem:[%s1 + $0x2] sm:$0x1]
        %2325 = vset.pattern.permute.xlu0 0
        %2326 = vperm.xlu0 %2325, %v1231
        %v2327 = vpop.permute.xlu0 %2326
        %2330 = vset.pattern.permute.xlu0 0
        %2331 = vperm.xlu0 %2330, %v1232
        %v2332 = vpop.permute.xlu0 %2331
        %2335 = vset.pattern.permute.xlu0 0
        %2336 = vperm.xlu0 %2335, %v1233
        %v2337 = vpop.permute.xlu0 %2336
        %2340 = vset.pattern.permute.xlu0 0
        %2341 = vperm.xlu0 %2340, %v1234
        %v2342 = vpop.permute.xlu0 %2341
        %2345 = vset.pattern.permute.xlu0 0
        %2346 = vperm.xlu0 %2345, %v1235
        %v2347 = vpop.permute.xlu0 %2346
        %2350 = vset.pattern.permute.xlu0 0
        %2351 = vperm.xlu0 %2350, %v1236
        %v2352 = vpop.permute.xlu0 %2351
        %2355 = vset.pattern.permute.xlu0 0
        %2356 = vperm.xlu0 %2355, %v1237
        %v2357 = vpop.permute.xlu0 %2356
        %2360 = vset.pattern.permute.xlu0 0
        %2361 = vperm.xlu0 %2360, %v1238
        %v2362 = vpop.permute.xlu0 %2361
        %2365 = vset.pattern.permute.xlu0 0
        %2366 = vperm.xlu0 %2365, %v1239
        %v2367 = vpop.permute.xlu0 %2366
        %2370 = vset.pattern.permute.xlu0 0
        %2371 = vperm.xlu0 %2370, %v1240
        %v2372 = vpop.permute.xlu0 %2371
        %2375 = vset.pattern.permute.xlu0 0
        %2376 = vperm.xlu0 %2375, %v1241
        %v2377 = vpop.permute.xlu0 %2376
        %2380 = vset.pattern.permute.xlu0 0
        %2381 = vperm.xlu0 %2380, %v1242
        %v2382 = vpop.permute.xlu0 %2381
        %2385 = vset.pattern.permute.xlu0 0
        %2386 = vperm.xlu0 %2385, %v1243
        %v2387 = vpop.permute.xlu0 %2386
        %2390 = vset.pattern.permute.xlu0 0
        %2391 = vperm.xlu0 %2390, %v1244
        %v2392 = vpop.permute.xlu0 %2391
        %2395 = vset.pattern.permute.xlu0 0
        %2396 = vperm.xlu0 %2395, %v1245
        %v2397 = vpop.permute.xlu0 %2396
        %2400 = vset.pattern.permute.xlu0 0
        %2401 = vperm.xlu0 %2400, %v1246
        %v2402 = vpop.permute.xlu0 %2401
        %2405 = vset.pattern.permute.xlu0 0
        %2406 = vperm.xlu0 %2405, %v1247
        %v2407 = vpop.permute.xlu0 %2406
        %2410 = vset.pattern.permute.xlu0 0
        %2411 = vperm.xlu0 %2410, %v1248
        %v2412 = vpop.permute.xlu0 %2411
        %2415 = vset.pattern.permute.xlu0 0
        %2416 = vperm.xlu0 %2415, %v1249
        %v2417 = vpop.permute.xlu0 %2416
        %2420 = vset.pattern.permute.xlu0 0
        %2421 = vperm.xlu0 %2420, %v1250
        %v2422 = vpop.permute.xlu0 %2421
        %2425 = vset.pattern.permute.xlu0 0
        %2426 = vperm.xlu0 %2425, %v1251
        %v2427 = vpop.permute.xlu0 %2426
        %2430 = vset.pattern.permute.xlu0 0
        %2431 = vperm.xlu0 %2430, %v1252
        %v2432 = vpop.permute.xlu0 %2431
        %2435 = vset.pattern.permute.xlu0 0
        %2436 = vperm.xlu0 %2435, %v1253
        %v2437 = vpop.permute.xlu0 %2436
        %2440 = vset.pattern.permute.xlu0 0
        %2441 = vperm.xlu0 %2440, %v1254
        %v2442 = vpop.permute.xlu0 %2441
        %2445 = vset.pattern.permute.xlu0 0
        %2446 = vperm.xlu0 %2445, %v1255
        %v2447 = vpop.permute.xlu0 %2446
        %2450 = vset.pattern.permute.xlu0 0
        %2451 = vperm.xlu0 %2450, %v1256
        %v2452 = vpop.permute.xlu0 %2451
        %2455 = vset.pattern.permute.xlu0 0
        %2456 = vperm.xlu0 %2455, %v1257
        %v2457 = vpop.permute.xlu0 %2456
        %2460 = vset.pattern.permute.xlu0 0
        %2461 = vperm.xlu0 %2460, %v1258
        %v2462 = vpop.permute.xlu0 %2461
        %2465 = vset.pattern.permute.xlu0 0
        %2466 = vperm.xlu0 %2465, %v1259
        %v2467 = vpop.permute.xlu0 %2466
        %2470 = vset.pattern.permute.xlu0 0
        %2471 = vperm.xlu0 %2470, %v1260
        %v2472 = vpop.permute.xlu0 %2471
        %2475 = vset.pattern.permute.xlu0 0
        %2476 = vperm.xlu0 %2475, %v1261
        %v2477 = vpop.permute.xlu0 %2476
        %2480 = vset.pattern.permute.xlu0 0
        %2481 = vperm.xlu0 %2480, %v1262
        %v2482 = vpop.permute.xlu0 %2481
        %v2484 = vperm.slane %v2323, 0
        %v2485 = vmul.f32 %v2327, %v2484
        %v2486 = vmul.f32 %v2332, %v2484
        %v2487 = vmul.f32 %v2337, %v2484
        %v2488 = vmul.f32 %v2342, %v2484
        %v2489 = vmul.f32 %v2347, %v2484
        %v2490 = vmul.f32 %v2352, %v2484
        %v2491 = vmul.f32 %v2357, %v2484
        %v2492 = vmul.f32 %v2362, %v2484
        %v2493 = vmul.f32 %v2367, %v2484
        %v2494 = vmul.f32 %v2372, %v2484
        %v2495 = vmul.f32 %v2377, %v2484
        %v2496 = vmul.f32 %v2382, %v2484
        %v2497 = vmul.f32 %v2387, %v2484
        %v2498 = vmul.f32 %v2392, %v2484
        %v2499 = vmul.f32 %v2397, %v2484
        %v2500 = vmul.f32 %v2402, %v2484
        %v2501 = vmul.f32 %v2407, %v2484
        %v2502 = vmul.f32 %v2412, %v2484
        %v2503 = vmul.f32 %v2417, %v2484
        %v2504 = vmul.f32 %v2422, %v2484
        %v2505 = vmul.f32 %v2427, %v2484
        %v2506 = vmul.f32 %v2432, %v2484
        %v2507 = vmul.f32 %v2437, %v2484
        %v2508 = vmul.f32 %v2442, %v2484
        %v2509 = vmul.f32 %v2447, %v2484
        %v2510 = vmul.f32 %v2452, %v2484
        %v2511 = vmul.f32 %v2457, %v2484
        %v2512 = vmul.f32 %v2462, %v2484
        %v2513 = vmul.f32 %v2467, %v2484
        %v2514 = vmul.f32 %v2472, %v2484
        %v2515 = vmul.f32 %v2477, %v2484
        %v2516 = vmul.f32 %v2482, %v2484
        %v2517 = vadd.f32 %v2291, %v2485
        %v2518 = vadd.f32 %v2292, %v2486
        %v2519 = vadd.f32 %v2293, %v2487
        %v2520 = vadd.f32 %v2294, %v2488
        %v2521 = vadd.f32 %v2295, %v2489
        %v2522 = vadd.f32 %v2296, %v2490
        %v2523 = vadd.f32 %v2297, %v2491
        %v2524 = vadd.f32 %v2298, %v2492
        %v2525 = vadd.f32 %v2299, %v2493
        %v2526 = vadd.f32 %v2300, %v2494
        %v2527 = vadd.f32 %v2301, %v2495
        %v2528 = vadd.f32 %v2302, %v2496
        %v2529 = vadd.f32 %v2303, %v2497
        %v2530 = vadd.f32 %v2304, %v2498
        %v2531 = vadd.f32 %v2305, %v2499
        %v2532 = vadd.f32 %v2306, %v2500
        %v2533 = vadd.f32 %v2307, %v2501
        %v2534 = vadd.f32 %v2308, %v2502
        %v2535 = vadd.f32 %v2309, %v2503
        %v2536 = vadd.f32 %v2310, %v2504
        %v2537 = vadd.f32 %v2311, %v2505
        %v2538 = vadd.f32 %v2312, %v2506
        %v2539 = vadd.f32 %v2313, %v2507
        %v2540 = vadd.f32 %v2314, %v2508
        %v2541 = vadd.f32 %v2315, %v2509
        %v2542 = vadd.f32 %v2316, %v2510
        %v2543 = vadd.f32 %v2317, %v2511
        %v2544 = vadd.f32 %v2318, %v2512
        %v2545 = vadd.f32 %v2319, %v2513
        %v2546 = vadd.f32 %v2320, %v2514
        %v2547 = vadd.f32 %v2321, %v2515
        %v2548 = vadd.f32 %v2322, %v2516
        %v2549 = vld [vmem:[%s1 + $0x3] sm:$0x1]
        %2551 = vset.pattern.permute.xlu0 0
        %2552 = vperm.xlu0 %2551, %v1359
        %v2553 = vpop.permute.xlu0 %2552
        %2556 = vset.pattern.permute.xlu0 0
        %2557 = vperm.xlu0 %2556, %v1360
        %v2558 = vpop.permute.xlu0 %2557
        %2561 = vset.pattern.permute.xlu0 0
        %2562 = vperm.xlu0 %2561, %v1361
        %v2563 = vpop.permute.xlu0 %2562
        %2566 = vset.pattern.permute.xlu0 0
        %2567 = vperm.xlu0 %2566, %v1362
        %v2568 = vpop.permute.xlu0 %2567
        %2571 = vset.pattern.permute.xlu0 0
        %2572 = vperm.xlu0 %2571, %v1363
        %v2573 = vpop.permute.xlu0 %2572
        %2576 = vset.pattern.permute.xlu0 0
        %2577 = vperm.xlu0 %2576, %v1364
        %v2578 = vpop.permute.xlu0 %2577
        %2581 = vset.pattern.permute.xlu0 0
        %2582 = vperm.xlu0 %2581, %v1365
        %v2583 = vpop.permute.xlu0 %2582
        %2586 = vset.pattern.permute.xlu0 0
        %2587 = vperm.xlu0 %2586, %v1366
        %v2588 = vpop.permute.xlu0 %2587
        %2591 = vset.pattern.permute.xlu0 0
        %2592 = vperm.xlu0 %2591, %v1367
        %v2593 = vpop.permute.xlu0 %2592
        %2596 = vset.pattern.permute.xlu0 0
        %2597 = vperm.xlu0 %2596, %v1368
        %v2598 = vpop.permute.xlu0 %2597
        %2601 = vset.pattern.permute.xlu0 0
        %2602 = vperm.xlu0 %2601, %v1369
        %v2603 = vpop.permute.xlu0 %2602
        %2606 = vset.pattern.permute.xlu0 0
        %2607 = vperm.xlu0 %2606, %v1370
        %v2608 = vpop.permute.xlu0 %2607
        %2611 = vset.pattern.permute.xlu0 0
        %2612 = vperm.xlu0 %2611, %v1371
        %v2613 = vpop.permute.xlu0 %2612
        %2616 = vset.pattern.permute.xlu0 0
        %2617 = vperm.xlu0 %2616, %v1372
        %v2618 = vpop.permute.xlu0 %2617
        %2621 = vset.pattern.permute.xlu0 0
        %2622 = vperm.xlu0 %2621, %v1373
        %v2623 = vpop.permute.xlu0 %2622
        %2626 = vset.pattern.permute.xlu0 0
        %2627 = vperm.xlu0 %2626, %v1374
        %v2628 = vpop.permute.xlu0 %2627
        %2631 = vset.pattern.permute.xlu0 0
        %2632 = vperm.xlu0 %2631, %v1375
        %v2633 = vpop.permute.xlu0 %2632
        %2636 = vset.pattern.permute.xlu0 0
        %2637 = vperm.xlu0 %2636, %v1376
        %v2638 = vpop.permute.xlu0 %2637
        %2641 = vset.pattern.permute.xlu0 0
        %2642 = vperm.xlu0 %2641, %v1377
        %v2643 = vpop.permute.xlu0 %2642
        %2646 = vset.pattern.permute.xlu0 0
        %2647 = vperm.xlu0 %2646, %v1378
        %v2648 = vpop.permute.xlu0 %2647
        %2651 = vset.pattern.permute.xlu0 0
        %2652 = vperm.xlu0 %2651, %v1379
        %v2653 = vpop.permute.xlu0 %2652
        %2656 = vset.pattern.permute.xlu0 0
        %2657 = vperm.xlu0 %2656, %v1380
        %v2658 = vpop.permute.xlu0 %2657
        %2661 = vset.pattern.permute.xlu0 0
        %2662 = vperm.xlu0 %2661, %v1381
        %v2663 = vpop.permute.xlu0 %2662
        %2666 = vset.pattern.permute.xlu0 0
        %2667 = vperm.xlu0 %2666, %v1382
        %v2668 = vpop.permute.xlu0 %2667
        %2671 = vset.pattern.permute.xlu0 0
        %2672 = vperm.xlu0 %2671, %v1383
        %v2673 = vpop.permute.xlu0 %2672
        %2676 = vset.pattern.permute.xlu0 0
        %2677 = vperm.xlu0 %2676, %v1384
        %v2678 = vpop.permute.xlu0 %2677
        %2681 = vset.pattern.permute.xlu0 0
        %2682 = vperm.xlu0 %2681, %v1385
        %v2683 = vpop.permute.xlu0 %2682
        %2686 = vset.pattern.permute.xlu0 0
        %2687 = vperm.xlu0 %2686, %v1386
        %v2688 = vpop.permute.xlu0 %2687
        %2691 = vset.pattern.permute.xlu0 0
        %2692 = vperm.xlu0 %2691, %v1387
        %v2693 = vpop.permute.xlu0 %2692
        %2696 = vset.pattern.permute.xlu0 0
        %2697 = vperm.xlu0 %2696, %v1388
        %v2698 = vpop.permute.xlu0 %2697
        %2701 = vset.pattern.permute.xlu0 0
        %2702 = vperm.xlu0 %2701, %v1389
        %v2703 = vpop.permute.xlu0 %2702
        %2706 = vset.pattern.permute.xlu0 0
        %2707 = vperm.xlu0 %2706, %v1390
        %v2708 = vpop.permute.xlu0 %2707
        %v2710 = vperm.slane %v2549, 0
        %v2711 = vmul.f32 %v2553, %v2710
        %v2712 = vmul.f32 %v2558, %v2710
        %v2713 = vmul.f32 %v2563, %v2710
        %v2714 = vmul.f32 %v2568, %v2710
        %v2715 = vmul.f32 %v2573, %v2710
        %v2716 = vmul.f32 %v2578, %v2710
        %v2717 = vmul.f32 %v2583, %v2710
        %v2718 = vmul.f32 %v2588, %v2710
        %v2719 = vmul.f32 %v2593, %v2710
        %v2720 = vmul.f32 %v2598, %v2710
        %v2721 = vmul.f32 %v2603, %v2710
        %v2722 = vmul.f32 %v2608, %v2710
        %v2723 = vmul.f32 %v2613, %v2710
        %v2724 = vmul.f32 %v2618, %v2710
        %v2725 = vmul.f32 %v2623, %v2710
        %v2726 = vmul.f32 %v2628, %v2710
        %v2727 = vmul.f32 %v2633, %v2710
        %v2728 = vmul.f32 %v2638, %v2710
        %v2729 = vmul.f32 %v2643, %v2710
        %v2730 = vmul.f32 %v2648, %v2710
        %v2731 = vmul.f32 %v2653, %v2710
        %v2732 = vmul.f32 %v2658, %v2710
        %v2733 = vmul.f32 %v2663, %v2710
        %v2734 = vmul.f32 %v2668, %v2710
        %v2735 = vmul.f32 %v2673, %v2710
        %v2736 = vmul.f32 %v2678, %v2710
        %v2737 = vmul.f32 %v2683, %v2710
        %v2738 = vmul.f32 %v2688, %v2710
        %v2739 = vmul.f32 %v2693, %v2710
        %v2740 = vmul.f32 %v2698, %v2710
        %v2741 = vmul.f32 %v2703, %v2710
        %v2742 = vmul.f32 %v2708, %v2710
        %v2743 = vadd.f32 %v2517, %v2711
        %v2744 = vadd.f32 %v2518, %v2712
        %v2745 = vadd.f32 %v2519, %v2713
        %v2746 = vadd.f32 %v2520, %v2714
        %v2747 = vadd.f32 %v2521, %v2715
        %v2748 = vadd.f32 %v2522, %v2716
        %v2749 = vadd.f32 %v2523, %v2717
        %v2750 = vadd.f32 %v2524, %v2718
        %v2751 = vadd.f32 %v2525, %v2719
        %v2752 = vadd.f32 %v2526, %v2720
        %v2753 = vadd.f32 %v2527, %v2721
        %v2754 = vadd.f32 %v2528, %v2722
        %v2755 = vadd.f32 %v2529, %v2723
        %v2756 = vadd.f32 %v2530, %v2724
        %v2757 = vadd.f32 %v2531, %v2725
        %v2758 = vadd.f32 %v2532, %v2726
        %v2759 = vadd.f32 %v2533, %v2727
        %v2760 = vadd.f32 %v2534, %v2728
        %v2761 = vadd.f32 %v2535, %v2729
        %v2762 = vadd.f32 %v2536, %v2730
        %v2763 = vadd.f32 %v2537, %v2731
        %v2764 = vadd.f32 %v2538, %v2732
        %v2765 = vadd.f32 %v2539, %v2733
        %v2766 = vadd.f32 %v2540, %v2734
        %v2767 = vadd.f32 %v2541, %v2735
        %v2768 = vadd.f32 %v2542, %v2736
        %v2769 = vadd.f32 %v2543, %v2737
        %v2770 = vadd.f32 %v2544, %v2738
        %v2771 = vadd.f32 %v2545, %v2739
        %v2772 = vadd.f32 %v2546, %v2740
        %v2773 = vadd.f32 %v2547, %v2741
        %v2774 = vadd.f32 %v2548, %v2742
        %v2775 = vld [vmem:[%s1 + $0x4] sm:$0x1]
        %2777 = vset.pattern.permute.xlu0 0
        %2778 = vperm.xlu0 %2777, %v779
        %v2779 = vpop.permute.xlu0 %2778
        %2782 = vset.pattern.permute.xlu0 0
        %2783 = vperm.xlu0 %2782, %v780
        %v2784 = vpop.permute.xlu0 %2783
        %2787 = vset.pattern.permute.xlu0 0
        %2788 = vperm.xlu0 %2787, %v781
        %v2789 = vpop.permute.xlu0 %2788
        %2792 = vset.pattern.permute.xlu0 0
        %2793 = vperm.xlu0 %2792, %v782
        %v2794 = vpop.permute.xlu0 %2793
        %2797 = vset.pattern.permute.xlu0 0
        %2798 = vperm.xlu0 %2797, %v783
        %v2799 = vpop.permute.xlu0 %2798
        %2802 = vset.pattern.permute.xlu0 0
        %2803 = vperm.xlu0 %2802, %v784
        %v2804 = vpop.permute.xlu0 %2803
        %2807 = vset.pattern.permute.xlu0 0
        %2808 = vperm.xlu0 %2807, %v785
        %v2809 = vpop.permute.xlu0 %2808
        %2812 = vset.pattern.permute.xlu0 0
        %2813 = vperm.xlu0 %2812, %v786
        %v2814 = vpop.permute.xlu0 %2813
        %2817 = vset.pattern.permute.xlu0 0
        %2818 = vperm.xlu0 %2817, %v787
        %v2819 = vpop.permute.xlu0 %2818
        %2822 = vset.pattern.permute.xlu0 0
        %2823 = vperm.xlu0 %2822, %v788
        %v2824 = vpop.permute.xlu0 %2823
        %2827 = vset.pattern.permute.xlu0 0
        %2828 = vperm.xlu0 %2827, %v789
        %v2829 = vpop.permute.xlu0 %2828
        %2832 = vset.pattern.permute.xlu0 0
        %2833 = vperm.xlu0 %2832, %v790
        %v2834 = vpop.permute.xlu0 %2833
        %2837 = vset.pattern.permute.xlu0 0
        %2838 = vperm.xlu0 %2837, %v791
        %v2839 = vpop.permute.xlu0 %2838
        %2842 = vset.pattern.permute.xlu0 0
        %2843 = vperm.xlu0 %2842, %v792
        %v2844 = vpop.permute.xlu0 %2843
        %2847 = vset.pattern.permute.xlu0 0
        %2848 = vperm.xlu0 %2847, %v793
        %v2849 = vpop.permute.xlu0 %2848
        %2852 = vset.pattern.permute.xlu0 0
        %2853 = vperm.xlu0 %2852, %v794
        %v2854 = vpop.permute.xlu0 %2853
        %2857 = vset.pattern.permute.xlu0 0
        %2858 = vperm.xlu0 %2857, %v795
        %v2859 = vpop.permute.xlu0 %2858
        %2862 = vset.pattern.permute.xlu0 0
        %2863 = vperm.xlu0 %2862, %v796
        %v2864 = vpop.permute.xlu0 %2863
        %2867 = vset.pattern.permute.xlu0 0
        %2868 = vperm.xlu0 %2867, %v797
        %v2869 = vpop.permute.xlu0 %2868
        %2872 = vset.pattern.permute.xlu0 0
        %2873 = vperm.xlu0 %2872, %v798
        %v2874 = vpop.permute.xlu0 %2873
        %2877 = vset.pattern.permute.xlu0 0
        %2878 = vperm.xlu0 %2877, %v799
        %v2879 = vpop.permute.xlu0 %2878
        %2882 = vset.pattern.permute.xlu0 0
        %2883 = vperm.xlu0 %2882, %v800
        %v2884 = vpop.permute.xlu0 %2883
        %2887 = vset.pattern.permute.xlu0 0
        %2888 = vperm.xlu0 %2887, %v801
        %v2889 = vpop.permute.xlu0 %2888
        %2892 = vset.pattern.permute.xlu0 0
        %2893 = vperm.xlu0 %2892, %v802
        %v2894 = vpop.permute.xlu0 %2893
        %2897 = vset.pattern.permute.xlu0 0
        %2898 = vperm.xlu0 %2897, %v803
        %v2899 = vpop.permute.xlu0 %2898
        %2902 = vset.pattern.permute.xlu0 0
        %2903 = vperm.xlu0 %2902, %v804
        %v2904 = vpop.permute.xlu0 %2903
        %2907 = vset.pattern.permute.xlu0 0
        %2908 = vperm.xlu0 %2907, %v805
        %v2909 = vpop.permute.xlu0 %2908
        %2912 = vset.pattern.permute.xlu0 0
        %2913 = vperm.xlu0 %2912, %v806
        %v2914 = vpop.permute.xlu0 %2913
        %2917 = vset.pattern.permute.xlu0 0
        %2918 = vperm.xlu0 %2917, %v807
        %v2919 = vpop.permute.xlu0 %2918
        %2922 = vset.pattern.permute.xlu0 0
        %2923 = vperm.xlu0 %2922, %v808
        %v2924 = vpop.permute.xlu0 %2923
        %2927 = vset.pattern.permute.xlu0 0
        %2928 = vperm.xlu0 %2927, %v809
        %v2929 = vpop.permute.xlu0 %2928
        %2932 = vset.pattern.permute.xlu0 0
        %2933 = vperm.xlu0 %2932, %v810
        %v2934 = vpop.permute.xlu0 %2933
        %v2936 = vperm.slane %v2775, 0
        %v2937 = vmul.f32 %v2779, %v2936
        %v2938 = vmul.f32 %v2784, %v2936
        %v2939 = vmul.f32 %v2789, %v2936
        %v2940 = vmul.f32 %v2794, %v2936
        %v2941 = vmul.f32 %v2799, %v2936
        %v2942 = vmul.f32 %v2804, %v2936
        %v2943 = vmul.f32 %v2809, %v2936
        %v2944 = vmul.f32 %v2814, %v2936
        %v2945 = vmul.f32 %v2819, %v2936
        %v2946 = vmul.f32 %v2824, %v2936
        %v2947 = vmul.f32 %v2829, %v2936
        %v2948 = vmul.f32 %v2834, %v2936
        %v2949 = vmul.f32 %v2839, %v2936
        %v2950 = vmul.f32 %v2844, %v2936
        %v2951 = vmul.f32 %v2849, %v2936
        %v2952 = vmul.f32 %v2854, %v2936
        %v2953 = vmul.f32 %v2859, %v2936
        %v2954 = vmul.f32 %v2864, %v2936
        %v2955 = vmul.f32 %v2869, %v2936
        %v2956 = vmul.f32 %v2874, %v2936
        %v2957 = vmul.f32 %v2879, %v2936
        %v2958 = vmul.f32 %v2884, %v2936
        %v2959 = vmul.f32 %v2889, %v2936
        %v2960 = vmul.f32 %v2894, %v2936
        %v2961 = vmul.f32 %v2899, %v2936
        %v2962 = vmul.f32 %v2904, %v2936
        %v2963 = vmul.f32 %v2909, %v2936
        %v2964 = vmul.f32 %v2914, %v2936
        %v2965 = vmul.f32 %v2919, %v2936
        %v2966 = vmul.f32 %v2924, %v2936
        %v2967 = vmul.f32 %v2929, %v2936
        %v2968 = vmul.f32 %v2934, %v2936
        %v2969 = vadd.f32 %v2743, %v2937
        %v2970 = vadd.f32 %v2744, %v2938
        %v2971 = vadd.f32 %v2745, %v2939
        %v2972 = vadd.f32 %v2746, %v2940
        %v2973 = vadd.f32 %v2747, %v2941
        %v2974 = vadd.f32 %v2748, %v2942
        %v2975 = vadd.f32 %v2749, %v2943
        %v2976 = vadd.f32 %v2750, %v2944
        %v2977 = vadd.f32 %v2751, %v2945
        %v2978 = vadd.f32 %v2752, %v2946
        %v2979 = vadd.f32 %v2753, %v2947
        %v2980 = vadd.f32 %v2754, %v2948
        %v2981 = vadd.f32 %v2755, %v2949
        %v2982 = vadd.f32 %v2756, %v2950
        %v2983 = vadd.f32 %v2757, %v2951
        %v2984 = vadd.f32 %v2758, %v2952
        %v2985 = vadd.f32 %v2759, %v2953
        %v2986 = vadd.f32 %v2760, %v2954
        %v2987 = vadd.f32 %v2761, %v2955
        %v2988 = vadd.f32 %v2762, %v2956
        %v2989 = vadd.f32 %v2763, %v2957
        %v2990 = vadd.f32 %v2764, %v2958
        %v2991 = vadd.f32 %v2765, %v2959
        %v2992 = vadd.f32 %v2766, %v2960
        %v2993 = vadd.f32 %v2767, %v2961
        %v2994 = vadd.f32 %v2768, %v2962
        %v2995 = vadd.f32 %v2769, %v2963
        %v2996 = vadd.f32 %v2770, %v2964
        %v2997 = vadd.f32 %v2771, %v2965
        %v2998 = vadd.f32 %v2772, %v2966
        %v2999 = vadd.f32 %v2773, %v2967
        %v3000 = vadd.f32 %v2774, %v2968
        %v3001 = vld [vmem:[%s1 + $0x5] sm:$0x1]
        %3003 = vset.pattern.permute.xlu0 0
        %3004 = vperm.xlu0 %3003, %v1487
        %v3005 = vpop.permute.xlu0 %3004
        %3008 = vset.pattern.permute.xlu0 0
        %3009 = vperm.xlu0 %3008, %v1488
        %v3010 = vpop.permute.xlu0 %3009
        %3013 = vset.pattern.permute.xlu0 0
        %3014 = vperm.xlu0 %3013, %v1489
        %v3015 = vpop.permute.xlu0 %3014
        %3018 = vset.pattern.permute.xlu0 0
        %3019 = vperm.xlu0 %3018, %v1490
        %v3020 = vpop.permute.xlu0 %3019
        %3023 = vset.pattern.permute.xlu0 0
        %3024 = vperm.xlu0 %3023, %v1491
        %v3025 = vpop.permute.xlu0 %3024
        %3028 = vset.pattern.permute.xlu0 0
        %3029 = vperm.xlu0 %3028, %v1492
        %v3030 = vpop.permute.xlu0 %3029
        %3033 = vset.pattern.permute.xlu0 0
        %3034 = vperm.xlu0 %3033, %v1493
        %v3035 = vpop.permute.xlu0 %3034
        %3038 = vset.pattern.permute.xlu0 0
        %3039 = vperm.xlu0 %3038, %v1494
        %v3040 = vpop.permute.xlu0 %3039
        %3043 = vset.pattern.permute.xlu0 0
        %3044 = vperm.xlu0 %3043, %v1495
        %v3045 = vpop.permute.xlu0 %3044
        %3048 = vset.pattern.permute.xlu0 0
        %3049 = vperm.xlu0 %3048, %v1496
        %v3050 = vpop.permute.xlu0 %3049
        %3053 = vset.pattern.permute.xlu0 0
        %3054 = vperm.xlu0 %3053, %v1497
        %v3055 = vpop.permute.xlu0 %3054
        %3058 = vset.pattern.permute.xlu0 0
        %3059 = vperm.xlu0 %3058, %v1498
        %v3060 = vpop.permute.xlu0 %3059
        %3063 = vset.pattern.permute.xlu0 0
        %3064 = vperm.xlu0 %3063, %v1499
        %v3065 = vpop.permute.xlu0 %3064
        %3068 = vset.pattern.permute.xlu0 0
        %3069 = vperm.xlu0 %3068, %v1500
        %v3070 = vpop.permute.xlu0 %3069
        %3073 = vset.pattern.permute.xlu0 0
        %3074 = vperm.xlu0 %3073, %v1501
        %v3075 = vpop.permute.xlu0 %3074
        %3078 = vset.pattern.permute.xlu0 0
        %3079 = vperm.xlu0 %3078, %v1502
        %v3080 = vpop.permute.xlu0 %3079
        %3083 = vset.pattern.permute.xlu0 0
        %3084 = vperm.xlu0 %3083, %v1503
        %v3085 = vpop.permute.xlu0 %3084
        %3088 = vset.pattern.permute.xlu0 0
        %3089 = vperm.xlu0 %3088, %v1504
        %v3090 = vpop.permute.xlu0 %3089
        %3093 = vset.pattern.permute.xlu0 0
        %3094 = vperm.xlu0 %3093, %v1505
        %v3095 = vpop.permute.xlu0 %3094
        %3098 = vset.pattern.permute.xlu0 0
        %3099 = vperm.xlu0 %3098, %v1506
        %v3100 = vpop.permute.xlu0 %3099
        %3103 = vset.pattern.permute.xlu0 0
        %3104 = vperm.xlu0 %3103, %v1507
        %v3105 = vpop.permute.xlu0 %3104
        %3108 = vset.pattern.permute.xlu0 0
        %3109 = vperm.xlu0 %3108, %v1508
        %v3110 = vpop.permute.xlu0 %3109
        %3113 = vset.pattern.permute.xlu0 0
        %3114 = vperm.xlu0 %3113, %v1509
        %v3115 = vpop.permute.xlu0 %3114
        %3118 = vset.pattern.permute.xlu0 0
        %3119 = vperm.xlu0 %3118, %v1510
        %v3120 = vpop.permute.xlu0 %3119
        %3123 = vset.pattern.permute.xlu0 0
        %3124 = vperm.xlu0 %3123, %v1511
        %v3125 = vpop.permute.xlu0 %3124
        %3128 = vset.pattern.permute.xlu0 0
        %3129 = vperm.xlu0 %3128, %v1512
        %v3130 = vpop.permute.xlu0 %3129
        %3133 = vset.pattern.permute.xlu0 0
        %3134 = vperm.xlu0 %3133, %v1513
        %v3135 = vpop.permute.xlu0 %3134
        %3138 = vset.pattern.permute.xlu0 0
        %3139 = vperm.xlu0 %3138, %v1514
        %v3140 = vpop.permute.xlu0 %3139
        %3143 = vset.pattern.permute.xlu0 0
        %3144 = vperm.xlu0 %3143, %v1515
        %v3145 = vpop.permute.xlu0 %3144
        %3148 = vset.pattern.permute.xlu0 0
        %3149 = vperm.xlu0 %3148, %v1516
        %v3150 = vpop.permute.xlu0 %3149
        %3153 = vset.pattern.permute.xlu0 0
        %3154 = vperm.xlu0 %3153, %v1517
        %v3155 = vpop.permute.xlu0 %3154
        %3158 = vset.pattern.permute.xlu0 0
        %3159 = vperm.xlu0 %3158, %v1518
        %v3160 = vpop.permute.xlu0 %3159
        %v3162 = vperm.slane %v3001, 0
        %v3163 = vmul.f32 %v3005, %v3162
        %v3164 = vmul.f32 %v3010, %v3162
        %v3165 = vmul.f32 %v3015, %v3162
        %v3166 = vmul.f32 %v3020, %v3162
        %v3167 = vmul.f32 %v3025, %v3162
        %v3168 = vmul.f32 %v3030, %v3162
        %v3169 = vmul.f32 %v3035, %v3162
        %v3170 = vmul.f32 %v3040, %v3162
        %v3171 = vmul.f32 %v3045, %v3162
        %v3172 = vmul.f32 %v3050, %v3162
        %v3173 = vmul.f32 %v3055, %v3162
        %v3174 = vmul.f32 %v3060, %v3162
        %v3175 = vmul.f32 %v3065, %v3162
        %v3176 = vmul.f32 %v3070, %v3162
        %v3177 = vmul.f32 %v3075, %v3162
        %v3178 = vmul.f32 %v3080, %v3162
        %v3179 = vmul.f32 %v3085, %v3162
        %v3180 = vmul.f32 %v3090, %v3162
        %v3181 = vmul.f32 %v3095, %v3162
        %v3182 = vmul.f32 %v3100, %v3162
        %v3183 = vmul.f32 %v3105, %v3162
        %v3184 = vmul.f32 %v3110, %v3162
        %v3185 = vmul.f32 %v3115, %v3162
        %v3186 = vmul.f32 %v3120, %v3162
        %v3187 = vmul.f32 %v3125, %v3162
        %v3188 = vmul.f32 %v3130, %v3162
        %v3189 = vmul.f32 %v3135, %v3162
        %v3190 = vmul.f32 %v3140, %v3162
        %v3191 = vmul.f32 %v3145, %v3162
        %v3192 = vmul.f32 %v3150, %v3162
        %v3193 = vmul.f32 %v3155, %v3162
        %v3194 = vmul.f32 %v3160, %v3162
        %v3195 = vadd.f32 %v2969, %v3163
        %v3196 = vadd.f32 %v2970, %v3164
        %v3197 = vadd.f32 %v2971, %v3165
        %v3198 = vadd.f32 %v2972, %v3166
        %v3199 = vadd.f32 %v2973, %v3167
        %v3200 = vadd.f32 %v2974, %v3168
        %v3201 = vadd.f32 %v2975, %v3169
        %v3202 = vadd.f32 %v2976, %v3170
        %v3203 = vadd.f32 %v2977, %v3171
        %v3204 = vadd.f32 %v2978, %v3172
        %v3205 = vadd.f32 %v2979, %v3173
        %v3206 = vadd.f32 %v2980, %v3174
        %v3207 = vadd.f32 %v2981, %v3175
        %v3208 = vadd.f32 %v2982, %v3176
        %v3209 = vadd.f32 %v2983, %v3177
        %v3210 = vadd.f32 %v2984, %v3178
        %v3211 = vadd.f32 %v2985, %v3179
        %v3212 = vadd.f32 %v2986, %v3180
        %v3213 = vadd.f32 %v2987, %v3181
        %v3214 = vadd.f32 %v2988, %v3182
        %v3215 = vadd.f32 %v2989, %v3183
        %v3216 = vadd.f32 %v2990, %v3184
        %v3217 = vadd.f32 %v2991, %v3185
        %v3218 = vadd.f32 %v2992, %v3186
        %v3219 = vadd.f32 %v2993, %v3187
        %v3220 = vadd.f32 %v2994, %v3188
        %v3221 = vadd.f32 %v2995, %v3189
        %v3222 = vadd.f32 %v2996, %v3190
        %v3223 = vadd.f32 %v2997, %v3191
        %v3224 = vadd.f32 %v2998, %v3192
        %v3225 = vadd.f32 %v2999, %v3193
        %v3226 = vadd.f32 %v3000, %v3194
        %v3227 = vld [vmem:[%s1 + $0x6] sm:$0x1]
        %3229 = vset.pattern.permute.xlu0 0
        %3230 = vperm.xlu0 %3229, %v1615
        %v3231 = vpop.permute.xlu0 %3230
        %3234 = vset.pattern.permute.xlu0 0
        %3235 = vperm.xlu0 %3234, %v1616
        %v3236 = vpop.permute.xlu0 %3235
        %3239 = vset.pattern.permute.xlu0 0
        %3240 = vperm.xlu0 %3239, %v1617
        %v3241 = vpop.permute.xlu0 %3240
        %3244 = vset.pattern.permute.xlu0 0
        %3245 = vperm.xlu0 %3244, %v1618
        %v3246 = vpop.permute.xlu0 %3245
        %3249 = vset.pattern.permute.xlu0 0
        %3250 = vperm.xlu0 %3249, %v1619
        %v3251 = vpop.permute.xlu0 %3250
        %3254 = vset.pattern.permute.xlu0 0
        %3255 = vperm.xlu0 %3254, %v1620
        %v3256 = vpop.permute.xlu0 %3255
        %3259 = vset.pattern.permute.xlu0 0
        %3260 = vperm.xlu0 %3259, %v1621
        %v3261 = vpop.permute.xlu0 %3260
        %3264 = vset.pattern.permute.xlu0 0
        %3265 = vperm.xlu0 %3264, %v1622
        %v3266 = vpop.permute.xlu0 %3265
        %3269 = vset.pattern.permute.xlu0 0
        %3270 = vperm.xlu0 %3269, %v1623
        %v3271 = vpop.permute.xlu0 %3270
        %3274 = vset.pattern.permute.xlu0 0
        %3275 = vperm.xlu0 %3274, %v1624
        %v3276 = vpop.permute.xlu0 %3275
        %3279 = vset.pattern.permute.xlu0 0
        %3280 = vperm.xlu0 %3279, %v1625
        %v3281 = vpop.permute.xlu0 %3280
        %3284 = vset.pattern.permute.xlu0 0
        %3285 = vperm.xlu0 %3284, %v1626
        %v3286 = vpop.permute.xlu0 %3285
        %3289 = vset.pattern.permute.xlu0 0
        %3290 = vperm.xlu0 %3289, %v1627
        %v3291 = vpop.permute.xlu0 %3290
        %3294 = vset.pattern.permute.xlu0 0
        %3295 = vperm.xlu0 %3294, %v1628
        %v3296 = vpop.permute.xlu0 %3295
        %3299 = vset.pattern.permute.xlu0 0
        %3300 = vperm.xlu0 %3299, %v1629
        %v3301 = vpop.permute.xlu0 %3300
        %3304 = vset.pattern.permute.xlu0 0
        %3305 = vperm.xlu0 %3304, %v1630
        %v3306 = vpop.permute.xlu0 %3305
        %3309 = vset.pattern.permute.xlu0 0
        %3310 = vperm.xlu0 %3309, %v1631
        %v3311 = vpop.permute.xlu0 %3310
        %3314 = vset.pattern.permute.xlu0 0
        %3315 = vperm.xlu0 %3314, %v1632
        %v3316 = vpop.permute.xlu0 %3315
        %3319 = vset.pattern.permute.xlu0 0
        %3320 = vperm.xlu0 %3319, %v1633
        %v3321 = vpop.permute.xlu0 %3320
        %3324 = vset.pattern.permute.xlu0 0
        %3325 = vperm.xlu0 %3324, %v1634
        %v3326 = vpop.permute.xlu0 %3325
        %3329 = vset.pattern.permute.xlu0 0
        %3330 = vperm.xlu0 %3329, %v1635
        %v3331 = vpop.permute.xlu0 %3330
        %3334 = vset.pattern.permute.xlu0 0
        %3335 = vperm.xlu0 %3334, %v1636
        %v3336 = vpop.permute.xlu0 %3335
        %3339 = vset.pattern.permute.xlu0 0
        %3340 = vperm.xlu0 %3339, %v1637
        %v3341 = vpop.permute.xlu0 %3340
        %3344 = vset.pattern.permute.xlu0 0
        %3345 = vperm.xlu0 %3344, %v1638
        %v3346 = vpop.permute.xlu0 %3345
        %3349 = vset.pattern.permute.xlu0 0
        %3350 = vperm.xlu0 %3349, %v1639
        %v3351 = vpop.permute.xlu0 %3350
        %3354 = vset.pattern.permute.xlu0 0
        %3355 = vperm.xlu0 %3354, %v1640
        %v3356 = vpop.permute.xlu0 %3355
        %3359 = vset.pattern.permute.xlu0 0
        %3360 = vperm.xlu0 %3359, %v1641
        %v3361 = vpop.permute.xlu0 %3360
        %3364 = vset.pattern.permute.xlu0 0
        %3365 = vperm.xlu0 %3364, %v1642
        %v3366 = vpop.permute.xlu0 %3365
        %3369 = vset.pattern.permute.xlu0 0
        %3370 = vperm.xlu0 %3369, %v1643
        %v3371 = vpop.permute.xlu0 %3370
        %3374 = vset.pattern.permute.xlu0 0
        %3375 = vperm.xlu0 %3374, %v1644
        %v3376 = vpop.permute.xlu0 %3375
        %3379 = vset.pattern.permute.xlu0 0
        %3380 = vperm.xlu0 %3379, %v1645
        %v3381 = vpop.permute.xlu0 %3380
        %3384 = vset.pattern.permute.xlu0 0
        %3385 = vperm.xlu0 %3384, %v1646
        %v3386 = vpop.permute.xlu0 %3385
        %v3388 = vperm.slane %v3227, 0
        %v3389 = vmul.f32 %v3231, %v3388
        %v3390 = vmul.f32 %v3236, %v3388
        %v3391 = vmul.f32 %v3241, %v3388
        %v3392 = vmul.f32 %v3246, %v3388
        %v3393 = vmul.f32 %v3251, %v3388
        %v3394 = vmul.f32 %v3256, %v3388
        %v3395 = vmul.f32 %v3261, %v3388
        %v3396 = vmul.f32 %v3266, %v3388
        %v3397 = vmul.f32 %v3271, %v3388
        %v3398 = vmul.f32 %v3276, %v3388
        %v3399 = vmul.f32 %v3281, %v3388
        %v3400 = vmul.f32 %v3286, %v3388
        %v3401 = vmul.f32 %v3291, %v3388
        %v3402 = vmul.f32 %v3296, %v3388
        %v3403 = vmul.f32 %v3301, %v3388
        %v3404 = vmul.f32 %v3306, %v3388
        %v3405 = vmul.f32 %v3311, %v3388
        %v3406 = vmul.f32 %v3316, %v3388
        %v3407 = vmul.f32 %v3321, %v3388
        %v3408 = vmul.f32 %v3326, %v3388
        %v3409 = vmul.f32 %v3331, %v3388
        %v3410 = vmul.f32 %v3336, %v3388
        %v3411 = vmul.f32 %v3341, %v3388
        %v3412 = vmul.f32 %v3346, %v3388
        %v3413 = vmul.f32 %v3351, %v3388
        %v3414 = vmul.f32 %v3356, %v3388
        %v3415 = vmul.f32 %v3361, %v3388
        %v3416 = vmul.f32 %v3366, %v3388
        %v3417 = vmul.f32 %v3371, %v3388
        %v3418 = vmul.f32 %v3376, %v3388
        %v3419 = vmul.f32 %v3381, %v3388
        %v3420 = vmul.f32 %v3386, %v3388
        %v3421 = vadd.f32 %v3195, %v3389
        %v3422 = vadd.f32 %v3196, %v3390
        %v3423 = vadd.f32 %v3197, %v3391
        %v3424 = vadd.f32 %v3198, %v3392
        %v3425 = vadd.f32 %v3199, %v3393
        %v3426 = vadd.f32 %v3200, %v3394
        %v3427 = vadd.f32 %v3201, %v3395
        %v3428 = vadd.f32 %v3202, %v3396
        %v3429 = vadd.f32 %v3203, %v3397
        %v3430 = vadd.f32 %v3204, %v3398
        %v3431 = vadd.f32 %v3205, %v3399
        %v3432 = vadd.f32 %v3206, %v3400
        %v3433 = vadd.f32 %v3207, %v3401
        %v3434 = vadd.f32 %v3208, %v3402
        %v3435 = vadd.f32 %v3209, %v3403
        %v3436 = vadd.f32 %v3210, %v3404
        %v3437 = vadd.f32 %v3211, %v3405
        %v3438 = vadd.f32 %v3212, %v3406
        %v3439 = vadd.f32 %v3213, %v3407
        %v3440 = vadd.f32 %v3214, %v3408
        %v3441 = vadd.f32 %v3215, %v3409
        %v3442 = vadd.f32 %v3216, %v3410
        %v3443 = vadd.f32 %v3217, %v3411
        %v3444 = vadd.f32 %v3218, %v3412
        %v3445 = vadd.f32 %v3219, %v3413
        %v3446 = vadd.f32 %v3220, %v3414
        %v3447 = vadd.f32 %v3221, %v3415
        %v3448 = vadd.f32 %v3222, %v3416
        %v3449 = vadd.f32 %v3223, %v3417
        %v3450 = vadd.f32 %v3224, %v3418
        %v3451 = vadd.f32 %v3225, %v3419
        %v3452 = vadd.f32 %v3226, %v3420
        %v3453 = vld [vmem:[%s1 + $0x7] sm:$0x1]
        %3455 = vset.pattern.permute.xlu0 0
        %3456 = vperm.xlu0 %3455, %v1743
        %v3457 = vpop.permute.xlu0 %3456
        %3460 = vset.pattern.permute.xlu0 0
        %3461 = vperm.xlu0 %3460, %v1744
        %v3462 = vpop.permute.xlu0 %3461
        %3465 = vset.pattern.permute.xlu0 0
        %3466 = vperm.xlu0 %3465, %v1745
        %v3467 = vpop.permute.xlu0 %3466
        %3470 = vset.pattern.permute.xlu0 0
        %3471 = vperm.xlu0 %3470, %v1746
        %v3472 = vpop.permute.xlu0 %3471
        %3475 = vset.pattern.permute.xlu0 0
        %3476 = vperm.xlu0 %3475, %v1747
        %v3477 = vpop.permute.xlu0 %3476
        %3480 = vset.pattern.permute.xlu0 0
        %3481 = vperm.xlu0 %3480, %v1748
        %v3482 = vpop.permute.xlu0 %3481
        %3485 = vset.pattern.permute.xlu0 0
        %3486 = vperm.xlu0 %3485, %v1749
        %v3487 = vpop.permute.xlu0 %3486
        %3490 = vset.pattern.permute.xlu0 0
        %3491 = vperm.xlu0 %3490, %v1750
        %v3492 = vpop.permute.xlu0 %3491
        %3495 = vset.pattern.permute.xlu0 0
        %3496 = vperm.xlu0 %3495, %v1751
        %v3497 = vpop.permute.xlu0 %3496
        %3500 = vset.pattern.permute.xlu0 0
        %3501 = vperm.xlu0 %3500, %v1752
        %v3502 = vpop.permute.xlu0 %3501
        %3505 = vset.pattern.permute.xlu0 0
        %3506 = vperm.xlu0 %3505, %v1753
        %v3507 = vpop.permute.xlu0 %3506
        %3510 = vset.pattern.permute.xlu0 0
        %3511 = vperm.xlu0 %3510, %v1754
        %v3512 = vpop.permute.xlu0 %3511
        %3515 = vset.pattern.permute.xlu0 0
        %3516 = vperm.xlu0 %3515, %v1755
        %v3517 = vpop.permute.xlu0 %3516
        %3520 = vset.pattern.permute.xlu0 0
        %3521 = vperm.xlu0 %3520, %v1756
        %v3522 = vpop.permute.xlu0 %3521
        %3525 = vset.pattern.permute.xlu0 0
        %3526 = vperm.xlu0 %3525, %v1757
        %v3527 = vpop.permute.xlu0 %3526
        %3530 = vset.pattern.permute.xlu0 0
        %3531 = vperm.xlu0 %3530, %v1758
        %v3532 = vpop.permute.xlu0 %3531
        %3535 = vset.pattern.permute.xlu0 0
        %3536 = vperm.xlu0 %3535, %v1759
        %v3537 = vpop.permute.xlu0 %3536
        %3540 = vset.pattern.permute.xlu0 0
        %3541 = vperm.xlu0 %3540, %v1760
        %v3542 = vpop.permute.xlu0 %3541
        %3545 = vset.pattern.permute.xlu0 0
        %3546 = vperm.xlu0 %3545, %v1761
        %v3547 = vpop.permute.xlu0 %3546
        %3550 = vset.pattern.permute.xlu0 0
        %3551 = vperm.xlu0 %3550, %v1762
        %v3552 = vpop.permute.xlu0 %3551
        %3555 = vset.pattern.permute.xlu0 0
        %3556 = vperm.xlu0 %3555, %v1763
        %v3557 = vpop.permute.xlu0 %3556
        %3560 = vset.pattern.permute.xlu0 0
        %3561 = vperm.xlu0 %3560, %v1764
        %v3562 = vpop.permute.xlu0 %3561
        %3565 = vset.pattern.permute.xlu0 0
        %3566 = vperm.xlu0 %3565, %v1765
        %v3567 = vpop.permute.xlu0 %3566
        %3570 = vset.pattern.permute.xlu0 0
        %3571 = vperm.xlu0 %3570, %v1766
        %v3572 = vpop.permute.xlu0 %3571
        %3575 = vset.pattern.permute.xlu0 0
        %3576 = vperm.xlu0 %3575, %v1767
        %v3577 = vpop.permute.xlu0 %3576
        %3580 = vset.pattern.permute.xlu0 0
        %3581 = vperm.xlu0 %3580, %v1768
        %v3582 = vpop.permute.xlu0 %3581
        %3585 = vset.pattern.permute.xlu0 0
        %3586 = vperm.xlu0 %3585, %v1769
        %v3587 = vpop.permute.xlu0 %3586
        %3590 = vset.pattern.permute.xlu0 0
        %3591 = vperm.xlu0 %3590, %v1770
        %v3592 = vpop.permute.xlu0 %3591
        %3595 = vset.pattern.permute.xlu0 0
        %3596 = vperm.xlu0 %3595, %v1771
        %v3597 = vpop.permute.xlu0 %3596
        %3600 = vset.pattern.permute.xlu0 0
        %3601 = vperm.xlu0 %3600, %v1772
        %v3602 = vpop.permute.xlu0 %3601
        %3605 = vset.pattern.permute.xlu0 0
        %3606 = vperm.xlu0 %3605, %v1773
        %v3607 = vpop.permute.xlu0 %3606
        %3610 = vset.pattern.permute.xlu0 0
        %3611 = vperm.xlu0 %3610, %v1774
        %v3612 = vpop.permute.xlu0 %3611
        %v3614 = vperm.slane %v3453, 0
        %v3615 = vmul.f32 %v3457, %v3614
        %v3616 = vmul.f32 %v3462, %v3614
        %v3617 = vmul.f32 %v3467, %v3614
        %v3618 = vmul.f32 %v3472, %v3614
        %v3619 = vmul.f32 %v3477, %v3614
        %v3620 = vmul.f32 %v3482, %v3614
        %v3621 = vmul.f32 %v3487, %v3614
        %v3622 = vmul.f32 %v3492, %v3614
        %v3623 = vmul.f32 %v3497, %v3614
        %v3624 = vmul.f32 %v3502, %v3614
        %v3625 = vmul.f32 %v3507, %v3614
        %v3626 = vmul.f32 %v3512, %v3614
        %v3627 = vmul.f32 %v3517, %v3614
        %v3628 = vmul.f32 %v3522, %v3614
        %v3629 = vmul.f32 %v3527, %v3614
        %v3630 = vmul.f32 %v3532, %v3614
        %v3631 = vmul.f32 %v3537, %v3614
        %v3632 = vmul.f32 %v3542, %v3614
        %v3633 = vmul.f32 %v3547, %v3614
        %v3634 = vmul.f32 %v3552, %v3614
        %v3635 = vmul.f32 %v3557, %v3614
        %v3636 = vmul.f32 %v3562, %v3614
        %v3637 = vmul.f32 %v3567, %v3614
        %v3638 = vmul.f32 %v3572, %v3614
        %v3639 = vmul.f32 %v3577, %v3614
        %v3640 = vmul.f32 %v3582, %v3614
        %v3641 = vmul.f32 %v3587, %v3614
        %v3642 = vmul.f32 %v3592, %v3614
        %v3643 = vmul.f32 %v3597, %v3614
        %v3644 = vmul.f32 %v3602, %v3614
        %v3645 = vmul.f32 %v3607, %v3614
        %v3646 = vmul.f32 %v3612, %v3614
        %v3647 = vadd.f32 %v3421, %v3615
        %v3648 = vadd.f32 %v3422, %v3616
        %v3649 = vadd.f32 %v3423, %v3617
        %v3650 = vadd.f32 %v3424, %v3618
        %v3651 = vadd.f32 %v3425, %v3619
        %v3652 = vadd.f32 %v3426, %v3620
        %v3653 = vadd.f32 %v3427, %v3621
        %v3654 = vadd.f32 %v3428, %v3622
        %v3655 = vadd.f32 %v3429, %v3623
        %v3656 = vadd.f32 %v3430, %v3624
        %v3657 = vadd.f32 %v3431, %v3625
        %v3658 = vadd.f32 %v3432, %v3626
        %v3659 = vadd.f32 %v3433, %v3627
        %v3660 = vadd.f32 %v3434, %v3628
        %v3661 = vadd.f32 %v3435, %v3629
        %v3662 = vadd.f32 %v3436, %v3630
        %v3663 = vadd.f32 %v3437, %v3631
        %v3664 = vadd.f32 %v3438, %v3632
        %v3665 = vadd.f32 %v3439, %v3633
        %v3666 = vadd.f32 %v3440, %v3634
        %v3667 = vadd.f32 %v3441, %v3635
        %v3668 = vadd.f32 %v3442, %v3636
        %v3669 = vadd.f32 %v3443, %v3637
        %v3670 = vadd.f32 %v3444, %v3638
        %v3671 = vadd.f32 %v3445, %v3639
        %v3672 = vadd.f32 %v3446, %v3640
        %v3673 = vadd.f32 %v3447, %v3641
        %v3674 = vadd.f32 %v3448, %v3642
        %v3675 = vadd.f32 %v3449, %v3643
        %v3676 = vadd.f32 %v3450, %v3644
        %v3677 = vadd.f32 %v3451, %v3645
        %v3678 = vadd.f32 %v3452, %v3646
        %v3679 = vld [vmem:[%s1 + $0x8] sm:$0x1]
        %3681 = vset.pattern.permute.xlu0 0
        %3682 = vperm.xlu0 %3681, %v1871
        %v3683 = vpop.permute.xlu0 %3682
        %3686 = vset.pattern.permute.xlu0 0
        %3687 = vperm.xlu0 %3686, %v1872
        %v3688 = vpop.permute.xlu0 %3687
        %3691 = vset.pattern.permute.xlu0 0
        %3692 = vperm.xlu0 %3691, %v1873
        %v3693 = vpop.permute.xlu0 %3692
        %3696 = vset.pattern.permute.xlu0 0
        %3697 = vperm.xlu0 %3696, %v1874
        %v3698 = vpop.permute.xlu0 %3697
        %3701 = vset.pattern.permute.xlu0 0
        %3702 = vperm.xlu0 %3701, %v1875
        %v3703 = vpop.permute.xlu0 %3702
        %3706 = vset.pattern.permute.xlu0 0
        %3707 = vperm.xlu0 %3706, %v1876
        %v3708 = vpop.permute.xlu0 %3707
        %3711 = vset.pattern.permute.xlu0 0
        %3712 = vperm.xlu0 %3711, %v1877
        %v3713 = vpop.permute.xlu0 %3712
        %3716 = vset.pattern.permute.xlu0 0
        %3717 = vperm.xlu0 %3716, %v1878
        %v3718 = vpop.permute.xlu0 %3717
        %3721 = vset.pattern.permute.xlu0 0
        %3722 = vperm.xlu0 %3721, %v1879
        %v3723 = vpop.permute.xlu0 %3722
        %3726 = vset.pattern.permute.xlu0 0
        %3727 = vperm.xlu0 %3726, %v1880
        %v3728 = vpop.permute.xlu0 %3727
        %3731 = vset.pattern.permute.xlu0 0
        %3732 = vperm.xlu0 %3731, %v1881
        %v3733 = vpop.permute.xlu0 %3732
        %3736 = vset.pattern.permute.xlu0 0
        %3737 = vperm.xlu0 %3736, %v1882
        %v3738 = vpop.permute.xlu0 %3737
        %3741 = vset.pattern.permute.xlu0 0
        %3742 = vperm.xlu0 %3741, %v1883
        %v3743 = vpop.permute.xlu0 %3742
        %3746 = vset.pattern.permute.xlu0 0
        %3747 = vperm.xlu0 %3746, %v1884
        %v3748 = vpop.permute.xlu0 %3747
        %3751 = vset.pattern.permute.xlu0 0
        %3752 = vperm.xlu0 %3751, %v1885
        %v3753 = vpop.permute.xlu0 %3752
        %3756 = vset.pattern.permute.xlu0 0
        %3757 = vperm.xlu0 %3756, %v1886
        %v3758 = vpop.permute.xlu0 %3757
        %3761 = vset.pattern.permute.xlu0 0
        %3762 = vperm.xlu0 %3761, %v1887
        %v3763 = vpop.permute.xlu0 %3762
        %3766 = vset.pattern.permute.xlu0 0
        %3767 = vperm.xlu0 %3766, %v1888
        %v3768 = vpop.permute.xlu0 %3767
        %3771 = vset.pattern.permute.xlu0 0
        %3772 = vperm.xlu0 %3771, %v1889
        %v3773 = vpop.permute.xlu0 %3772
        %3776 = vset.pattern.permute.xlu0 0
        %3777 = vperm.xlu0 %3776, %v1890
        %v3778 = vpop.permute.xlu0 %3777
        %3781 = vset.pattern.permute.xlu0 0
        %3782 = vperm.xlu0 %3781, %v1891
        %v3783 = vpop.permute.xlu0 %3782
        %3786 = vset.pattern.permute.xlu0 0
        %3787 = vperm.xlu0 %3786, %v1892
        %v3788 = vpop.permute.xlu0 %3787
        %3791 = vset.pattern.permute.xlu0 0
        %3792 = vperm.xlu0 %3791, %v1893
        %v3793 = vpop.permute.xlu0 %3792
        %3796 = vset.pattern.permute.xlu0 0
        %3797 = vperm.xlu0 %3796, %v1894
        %v3798 = vpop.permute.xlu0 %3797
        %3801 = vset.pattern.permute.xlu0 0
        %3802 = vperm.xlu0 %3801, %v1895
        %v3803 = vpop.permute.xlu0 %3802
        %3806 = vset.pattern.permute.xlu0 0
        %3807 = vperm.xlu0 %3806, %v1896
        %v3808 = vpop.permute.xlu0 %3807
        %3811 = vset.pattern.permute.xlu0 0
        %3812 = vperm.xlu0 %3811, %v1897
        %v3813 = vpop.permute.xlu0 %3812
        %3816 = vset.pattern.permute.xlu0 0
        %3817 = vperm.xlu0 %3816, %v1898
        %v3818 = vpop.permute.xlu0 %3817
        %3821 = vset.pattern.permute.xlu0 0
        %3822 = vperm.xlu0 %3821, %v1899
        %v3823 = vpop.permute.xlu0 %3822
        %3826 = vset.pattern.permute.xlu0 0
        %3827 = vperm.xlu0 %3826, %v1900
        %v3828 = vpop.permute.xlu0 %3827
        %3831 = vset.pattern.permute.xlu0 0
        %3832 = vperm.xlu0 %3831, %v1901
        %v3833 = vpop.permute.xlu0 %3832
        %3836 = vset.pattern.permute.xlu0 0
        %3837 = vperm.xlu0 %3836, %v1902
        %v3838 = vpop.permute.xlu0 %3837
        %v3840 = vperm.slane %v3679, 0
        %v3841 = vmul.f32 %v3683, %v3840
        %v3842 = vmul.f32 %v3688, %v3840
        %v3843 = vmul.f32 %v3693, %v3840
        %v3844 = vmul.f32 %v3698, %v3840
        %v3845 = vmul.f32 %v3703, %v3840
        %v3846 = vmul.f32 %v3708, %v3840
        %v3847 = vmul.f32 %v3713, %v3840
        %v3848 = vmul.f32 %v3718, %v3840
        %v3849 = vmul.f32 %v3723, %v3840
        %v3850 = vmul.f32 %v3728, %v3840
        %v3851 = vmul.f32 %v3733, %v3840
        %v3852 = vmul.f32 %v3738, %v3840
        %v3853 = vmul.f32 %v3743, %v3840
        %v3854 = vmul.f32 %v3748, %v3840
        %v3855 = vmul.f32 %v3753, %v3840
        %v3856 = vmul.f32 %v3758, %v3840
        %v3857 = vmul.f32 %v3763, %v3840
        %v3858 = vmul.f32 %v3768, %v3840
        %v3859 = vmul.f32 %v3773, %v3840
        %v3860 = vmul.f32 %v3778, %v3840
        %v3861 = vmul.f32 %v3783, %v3840
        %v3862 = vmul.f32 %v3788, %v3840
        %v3863 = vmul.f32 %v3793, %v3840
        %v3864 = vmul.f32 %v3798, %v3840
        %v3865 = vmul.f32 %v3803, %v3840
        %v3866 = vmul.f32 %v3808, %v3840
        %v3867 = vmul.f32 %v3813, %v3840
        %v3868 = vmul.f32 %v3818, %v3840
        %v3869 = vmul.f32 %v3823, %v3840
        %v3870 = vmul.f32 %v3828, %v3840
        %v3871 = vmul.f32 %v3833, %v3840
        %v3872 = vmul.f32 %v3838, %v3840
        %v3873 = vadd.f32 %v3647, %v3841
        %v3874 = vadd.f32 %v3648, %v3842
        %v3875 = vadd.f32 %v3649, %v3843
        %v3876 = vadd.f32 %v3650, %v3844
        %v3877 = vadd.f32 %v3651, %v3845
        %v3878 = vadd.f32 %v3652, %v3846
        %v3879 = vadd.f32 %v3653, %v3847
        %v3880 = vadd.f32 %v3654, %v3848
        %v3881 = vadd.f32 %v3655, %v3849
        %v3882 = vadd.f32 %v3656, %v3850
        %v3883 = vadd.f32 %v3657, %v3851
        %v3884 = vadd.f32 %v3658, %v3852
        %v3885 = vadd.f32 %v3659, %v3853
        %v3886 = vadd.f32 %v3660, %v3854
        %v3887 = vadd.f32 %v3661, %v3855
        %v3888 = vadd.f32 %v3662, %v3856
        %v3889 = vadd.f32 %v3663, %v3857
        %v3890 = vadd.f32 %v3664, %v3858
        %v3891 = vadd.f32 %v3665, %v3859
        %v3892 = vadd.f32 %v3666, %v3860
        %v3893 = vadd.f32 %v3667, %v3861
        %v3894 = vadd.f32 %v3668, %v3862
        %v3895 = vadd.f32 %v3669, %v3863
        %v3896 = vadd.f32 %v3670, %v3864
        %v3897 = vadd.f32 %v3671, %v3865
        %v3898 = vadd.f32 %v3672, %v3866
        %v3899 = vadd.f32 %v3673, %v3867
        %v3900 = vadd.f32 %v3674, %v3868
        %v3901 = vadd.f32 %v3675, %v3869
        %v3902 = vadd.f32 %v3676, %v3870
        %v3903 = vadd.f32 %v3677, %v3871
        %v3904 = vadd.f32 %v3678, %v3872
        %v3905 = vld [vmem:[%s2] sm:$0x1]
        %v3907 = vperm.slane %v3905, 0
        %v3909 = vadd.f32 %v3873, %v3907
        %v3910 = vadd.f32 %v3874, %v3907
        %v3911 = vadd.f32 %v3875, %v3907
        %v3912 = vadd.f32 %v3876, %v3907
        %v3913 = vadd.f32 %v3877, %v3907
        %v3914 = vadd.f32 %v3878, %v3907
        %v3915 = vadd.f32 %v3879, %v3907
        %v3916 = vadd.f32 %v3880, %v3907
        %v3917 = vadd.f32 %v3881, %v3907
        %v3918 = vadd.f32 %v3882, %v3907
        %v3919 = vadd.f32 %v3883, %v3907
        %v3920 = vadd.f32 %v3884, %v3907
        %v3921 = vadd.f32 %v3885, %v3907
        %v3922 = vadd.f32 %v3886, %v3907
        %v3923 = vadd.f32 %v3887, %v3907
        %v3924 = vadd.f32 %v3888, %v3907
        %v3925 = vadd.f32 %v3889, %v3907
        %v3926 = vadd.f32 %v3890, %v3907
        %v3927 = vadd.f32 %v3891, %v3907
        %v3928 = vadd.f32 %v3892, %v3907
        %v3929 = vadd.f32 %v3893, %v3907
        %v3930 = vadd.f32 %v3894, %v3907
        %v3931 = vadd.f32 %v3895, %v3907
        %v3932 = vadd.f32 %v3896, %v3907
        %v3933 = vadd.f32 %v3897, %v3907
        %v3934 = vadd.f32 %v3898, %v3907
        %v3935 = vadd.f32 %v3899, %v3907
        %v3936 = vadd.f32 %v3900, %v3907
        %v3937 = vadd.f32 %v3901, %v3907
        %v3938 = vadd.f32 %v3902, %v3907
        %v3939 = vadd.f32 %v3903, %v3907
        %v3940 = vadd.f32 %v3904, %v3907
        %v3941 = vrot.slane %v3909, 1
        %v3942 = vrot.slane %v3910, 1
        %v3943 = vrot.slane %v3911, 1
        %v3944 = vrot.slane %v3912, 1
        %v3945 = vrot.slane %v3913, 1
        %v3946 = vrot.slane %v3914, 1
        %v3947 = vrot.slane %v3915, 1
        %v3948 = vrot.slane %v3916, 1
        %v3949 = vrot.slane %v3917, 1
        %v3950 = vrot.slane %v3918, 1
        %v3951 = vrot.slane %v3919, 1
        %v3952 = vrot.slane %v3920, 1
        %v3953 = vrot.slane %v3921, 1
        %v3954 = vrot.slane %v3922, 1
        %v3955 = vrot.slane %v3923, 1
        %v3956 = vrot.slane %v3924, 1
        %v3957 = vrot.slane %v3925, 1
        %v3958 = vrot.slane %v3926, 1
        %v3959 = vrot.slane %v3927, 1
        %v3960 = vrot.slane %v3928, 1
        %v3961 = vrot.slane %v3929, 1
        %v3962 = vrot.slane %v3930, 1
        %v3963 = vrot.slane %v3931, 1
        %v3964 = vrot.slane %v3932, 1
        %v3965 = vrot.slane %v3933, 1
        %v3966 = vrot.slane %v3934, 1
        %v3967 = vrot.slane %v3935, 1
        %v3968 = vrot.slane %v3936, 1
        %v3969 = vrot.slane %v3937, 1
        %v3970 = vrot.slane %v3938, 1
        %v3971 = vrot.slane %v3939, 1
        %v3972 = vrot.slane %v3940, 1
        %v3973 = vsel %vm1102, %v3971, %v3972
        %v3974 = vsel %vm1102, %v3970, %v3971
        %v3975 = vsel %vm1102, %v3969, %v3970
        %v3976 = vsel %vm1102, %v3968, %v3969
        %v3977 = vsel %vm1102, %v3967, %v3968
        %v3978 = vsel %vm1102, %v3966, %v3967
        %v3979 = vsel %vm1102, %v3965, %v3966
        %v3980 = vsel %vm1102, %v3964, %v3965
        %v3981 = vsel %vm1102, %v3963, %v3964
        %v3982 = vsel %vm1102, %v3962, %v3963
        %v3983 = vsel %vm1102, %v3961, %v3962
        %v3984 = vsel %vm1102, %v3960, %v3961
        %v3985 = vsel %vm1102, %v3959, %v3960
        %v3986 = vsel %vm1102, %v3958, %v3959
        %v3987 = vsel %vm1102, %v3957, %v3958
        %v3988 = vsel %vm1102, %v3956, %v3957
        %v3989 = vsel %vm1102, %v3955, %v3956
        %v3990 = vsel %vm1102, %v3954, %v3955
        %v3991 = vsel %vm1102, %v3953, %v3954
        %v3992 = vsel %vm1102, %v3952, %v3953
        %v3993 = vsel %vm1102, %v3951, %v3952
        %v3994 = vsel %vm1102, %v3950, %v3951
        %v3995 = vsel %vm1102, %v3949, %v3950
        %v3996 = vsel %vm1102, %v3948, %v3949
        %v3997 = vsel %vm1102, %v3947, %v3948
        %v3998 = vsel %vm1102, %v3946, %v3947
        %v3999 = vsel %vm1102, %v3945, %v3946
        %v4000 = vsel %vm1102, %v3944, %v3945
        %v4001 = vsel %vm1102, %v3943, %v3944
        %v4002 = vsel %vm1102, %v3942, %v3943
        %v4003 = vsel %vm1102, %v3941, %v3942
        %v4004 = vsel %vm1102, %v3972, %v3941
        %v4005 = vmax.f32 %v3909, %v4003
        %v4006 = vmax.f32 %v3910, %v4002
        %v4007 = vmax.f32 %v3911, %v4001
        %v4008 = vmax.f32 %v3912, %v4000
        %v4009 = vmax.f32 %v3913, %v3999
        %v4010 = vmax.f32 %v3914, %v3998
        %v4011 = vmax.f32 %v3915, %v3997
        %v4012 = vmax.f32 %v3916, %v3996
        %v4013 = vmax.f32 %v3917, %v3995
        %v4014 = vmax.f32 %v3918, %v3994
        %v4015 = vmax.f32 %v3919, %v3993
        %v4016 = vmax.f32 %v3920, %v3992
        %v4017 = vmax.f32 %v3921, %v3991
        %v4018 = vmax.f32 %v3922, %v3990
        %v4019 = vmax.f32 %v3923, %v3989
        %v4020 = vmax.f32 %v3924, %v3988
        %v4021 = vmax.f32 %v3925, %v3987
        %v4022 = vmax.f32 %v3926, %v3986
        %v4023 = vmax.f32 %v3927, %v3985
        %v4024 = vmax.f32 %v3928, %v3984
        %v4025 = vmax.f32 %v3929, %v3983
        %v4026 = vmax.f32 %v3930, %v3982
        %v4027 = vmax.f32 %v3931, %v3981
        %v4028 = vmax.f32 %v3932, %v3980
        %v4029 = vmax.f32 %v3933, %v3979
        %v4030 = vmax.f32 %v3934, %v3978
        %v4031 = vmax.f32 %v3935, %v3977
        %v4032 = vmax.f32 %v3936, %v3976
        %v4033 = vmax.f32 %v3937, %v3975
        %v4034 = vmax.f32 %v3938, %v3974
        %v4035 = vmax.f32 %v3939, %v3973
        %v4036 = vmax.f32 %v3940, %v4004
        %v4037 = vmax.f32 %v4005, %v4007
        %v4038 = vmax.f32 %v4006, %v4008
        %v4039 = vmax.f32 %v4007, %v4009
        %v4040 = vmax.f32 %v4008, %v4010
        %v4041 = vmax.f32 %v4009, %v4011
        %v4042 = vmax.f32 %v4010, %v4012
        %v4043 = vmax.f32 %v4011, %v4013
        %v4044 = vmax.f32 %v4012, %v4014
        %v4045 = vmax.f32 %v4013, %v4015
        %v4046 = vmax.f32 %v4014, %v4016
        %v4047 = vmax.f32 %v4015, %v4017
        %v4048 = vmax.f32 %v4016, %v4018
        %v4049 = vmax.f32 %v4017, %v4019
        %v4050 = vmax.f32 %v4018, %v4020
        %v4051 = vmax.f32 %v4019, %v4021
        %v4052 = vmax.f32 %v4020, %v4022
        %v4053 = vmax.f32 %v4021, %v4023
        %v4054 = vmax.f32 %v4022, %v4024
        %v4055 = vmax.f32 %v4023, %v4025
        %v4056 = vmax.f32 %v4024, %v4026
        %v4057 = vmax.f32 %v4025, %v4027
        %v4058 = vmax.f32 %v4026, %v4028
        %v4059 = vmax.f32 %v4027, %v4029
        %v4060 = vmax.f32 %v4028, %v4030
        %v4061 = vmax.f32 %v4029, %v4031
        %v4062 = vmax.f32 %v4030, %v4032
        %v4063 = vmax.f32 %v4031, %v4033
        %v4064 = vmax.f32 %v4032, %v4034
        %v4065 = vmax.f32 %v4033, %v4035
        %v4066 = vmax.f32 %v4034, %v4036
        %v4067 = vmax.f32 %v4035, %v4005
        %v4068 = vmax.f32 %v4036, %v4006
        %v4069 = vld [vmem:[#allocation7] sm:$0xff]
        %v4070 = vld [vmem:[#allocation7 + $0x8] sm:$0xff]
        %v4071 = vld [vmem:[#allocation7 + $0x10] sm:$0xff]
        %v4072 = vld [vmem:[#allocation7 + $0x18] sm:$0xff]
        %v4073 = vld [vmem:[#allocation7 + $0x20] sm:$0xff]
        %v4074 = vld [vmem:[#allocation7 + $0x28] sm:$0xff]
        %v4075 = vld [vmem:[#allocation7 + $0x30] sm:$0xff]
        %v4076 = vld [vmem:[#allocation7 + $0x38] sm:$0xff]
        %v4077 = vld [vmem:[#allocation7 + $0x40] sm:$0xff]
        %v4078 = vld [vmem:[#allocation7 + $0x48] sm:$0xff]
        %v4079 = vld [vmem:[#allocation7 + $0x50] sm:$0xff]
        %v4080 = vld [vmem:[#allocation7 + $0x58] sm:$0xff]
        %v4081 = vld [vmem:[#allocation7 + $0x60] sm:$0xff]
        %v4082 = vld [vmem:[#allocation7 + $0x68] sm:$0xff]
        %v4083 = vld [vmem:[#allocation7 + $0x70] sm:$0xff]
        %v4084 = vld [vmem:[#allocation7 + $0x78] sm:$0xff]
        %4085 = vmatpush.msra.mxu0 %v4052
        %4086 = vmatpush.msra.mxu0 %v4051
        %4087 = vmatpush.msra.mxu0 %v4050
        %4088 = vmatpush.msra.mxu0 %v4049
        %4089 = vmatpush.msra.mxu0 %v4048
        %4090 = vmatpush.msra.mxu0 %v4047
        %4091 = vmatpush.msra.mxu0 %v4046
        %4092 = vmatpush.msra.mxu0 %v4045
        %4093 = vmatpush.msra.mxu0 %v4044
        %4094 = vmatpush.msra.mxu0 %v4043
        %4095 = vmatpush.msra.mxu0 %v4042
        %4096 = vmatpush.msra.mxu0 %v4041
        %4097 = vmatpush.msra.mxu0 %v4040
        %4098 = vmatpush.msra.mxu0 %v4039
        %4099 = vmatpush.msra.mxu0 %v4038
        %4100 = vmatpush.msra.mxu0 %v4037
        %4101 = vmatmul.f32.gmra.mxu0 %v4069
        %v4102 = vpop.f32.mrf.mxu0
        %v4103 = vadd.f32 0.0, %v4102
        %4104 = vmatmul.f32.gmra.mxu0 %v4071
        %v4105 = vpop.f32.mrf.mxu0
        %v4106 = vadd.f32 0.0, %v4105
        %4107 = vmatmul.f32.gmra.mxu0 %v4073
        %v4108 = vpop.f32.mrf.mxu0
        %v4109 = vadd.f32 0.0, %v4108
        %4110 = vmatmul.f32.gmra.mxu0 %v4075
        %v4111 = vpop.f32.mrf.mxu0
        %v4112 = vadd.f32 0.0, %v4111
        %4113 = vmatmul.f32.gmra.mxu0 %v4077
        %v4114 = vpop.f32.mrf.mxu0
        %v4115 = vadd.f32 0.0, %v4114
        %4116 = vmatmul.f32.gmra.mxu0 %v4079
        %v4117 = vpop.f32.mrf.mxu0
        %v4118 = vadd.f32 0.0, %v4117
        %4119 = vmatmul.f32.gmra.mxu0 %v4081
        %v4120 = vpop.f32.mrf.mxu0
        %v4121 = vadd.f32 0.0, %v4120
        %4122 = vmatmul.f32.gmra.mxu0 %v4083
        %v4123 = vpop.f32.mrf.mxu0
        %v4124 = vadd.f32 0.0, %v4123
        %4125 = vdwg.mxu0
        %4126 = vmatpush.msra.mxu0 %v4068
        %4127 = vmatpush.msra.mxu0 %v4067
        %4128 = vmatpush.msra.mxu0 %v4066
        %4129 = vmatpush.msra.mxu0 %v4065
        %4130 = vmatpush.msra.mxu0 %v4064
        %4131 = vmatpush.msra.mxu0 %v4063
        %4132 = vmatpush.msra.mxu0 %v4062
        %4133 = vmatpush.msra.mxu0 %v4061
        %4134 = vmatpush.msra.mxu0 %v4060
        %4135 = vmatpush.msra.mxu0 %v4059
        %4136 = vmatpush.msra.mxu0 %v4058
        %4137 = vmatpush.msra.mxu0 %v4057
        %4138 = vmatpush.msra.mxu0 %v4056
        %4139 = vmatpush.msra.mxu0 %v4055
        %4140 = vmatpush.msra.mxu0 %v4054
        %4141 = vmatpush.msra.mxu0 %v4053
        %4142 = vmatmul.f32.gmra.mxu0 %v4070
        %v4143 = vpop.f32.mrf.mxu0
        %v4144 = vadd.f32 %v4103, %v4143
        %4145 = vmatmul.f32.gmra.mxu0 %v4072
        %v4146 = vpop.f32.mrf.mxu0
        %v4147 = vadd.f32 %v4106, %v4146
        %4148 = vmatmul.f32.gmra.mxu0 %v4074
        %v4149 = vpop.f32.mrf.mxu0
        %v4150 = vadd.f32 %v4109, %v4149
        %4151 = vmatmul.f32.gmra.mxu0 %v4076
        %v4152 = vpop.f32.mrf.mxu0
        %v4153 = vadd.f32 %v4112, %v4152
        %4154 = vmatmul.f32.gmra.mxu0 %v4078
        %v4155 = vpop.f32.mrf.mxu0
        %v4156 = vadd.f32 %v4115, %v4155
        %4157 = vmatmul.f32.gmra.mxu0 %v4080
        %v4158 = vpop.f32.mrf.mxu0
        %v4159 = vadd.f32 %v4118, %v4158
        %4160 = vmatmul.f32.gmra.mxu0 %v4082
        %v4161 = vpop.f32.mrf.mxu0
        %v4162 = vadd.f32 %v4121, %v4161
        %4163 = vmatmul.f32.gmra.mxu0 %v4084
        %v4164 = vpop.f32.mrf.mxu0
        %v4165 = vadd.f32 %v4124, %v4164
        %4166 = vdwg.mxu0
        %v4167 = vmul.f32 %v4144, 0.5
        %v4168 = vmul.f32 %v4147, 0.5
        %v4169 = vmul.f32 %v4150, 0.5
        %v4170 = vmul.f32 %v4153, 0.5
        %v4171 = vmul.f32 %v4156, 0.5
        %v4172 = vmul.f32 %v4159, 0.5
        %v4173 = vmul.f32 %v4162, 0.5
        %v4174 = vmul.f32 %v4165, 0.5
        %v4175 = vmul.f32 %v4144, 0.70710677
        %v4176 = vmul.f32 %v4147, 0.70710677
        %v4177 = vmul.f32 %v4150, 0.70710677
        %v4178 = vmul.f32 %v4153, 0.70710677
        %v4179 = vmul.f32 %v4156, 0.70710677
        %v4180 = vmul.f32 %v4159, 0.70710677
        %v4181 = vmul.f32 %v4162, 0.70710677
        %v4182 = vmul.f32 %v4165, 0.70710677
        %vm4183 = vcmp.ge.f32.partialorder %v4175, 0.0
        %vm4184 = vcmp.ge.f32.partialorder %v4176, 0.0
        %vm4185 = vcmp.ge.f32.partialorder %v4177, 0.0
        %vm4186 = vcmp.ge.f32.partialorder %v4178, 0.0
        %vm4187 = vcmp.ge.f32.partialorder %v4179, 0.0
        %vm4188 = vcmp.ge.f32.partialorder %v4180, 0.0
        %vm4189 = vcmp.ge.f32.partialorder %v4181, 0.0
        %vm4190 = vcmp.ge.f32.partialorder %v4182, 0.0
        %v4191 = vsel %vm4183, 1.0, -1.0
        %v4192 = vsel %vm4184, 1.0, -1.0
        %v4193 = vsel %vm4185, 1.0, -1.0
        %v4194 = vsel %vm4186, 1.0, -1.0
        %v4195 = vsel %vm4187, 1.0, -1.0
        %v4196 = vsel %vm4188, 1.0, -1.0
        %v4197 = vsel %vm4189, 1.0, -1.0
        %v4198 = vsel %vm4190, 1.0, -1.0
        %v4199 = vand.u32 2147483647, %v4175
        %v4200 = vand.u32 2147483647, %v4176
        %v4201 = vand.u32 2147483647, %v4177
        %v4202 = vand.u32 2147483647, %v4178
        %v4203 = vand.u32 2147483647, %v4179
        %v4204 = vand.u32 2147483647, %v4180
        %v4205 = vand.u32 2147483647, %v4181
        %v4206 = vand.u32 2147483647, %v4182
        %v4207 = vmul.f32 %v4199, 0.3275911
        %v4208 = vmul.f32 %v4200, 0.3275911
        %v4209 = vmul.f32 %v4201, 0.3275911
        %v4210 = vmul.f32 %v4202, 0.3275911
        %v4211 = vmul.f32 %v4203, 0.3275911
        %v4212 = vmul.f32 %v4204, 0.3275911
        %v4213 = vmul.f32 %v4205, 0.3275911
        %v4214 = vmul.f32 %v4206, 0.3275911
        %v4215 = vadd.f32 %v4207, 1.0
        %v4216 = vadd.f32 %v4208, 1.0
        %v4217 = vadd.f32 %v4209, 1.0
        %v4218 = vadd.f32 %v4210, 1.0
        %v4219 = vadd.f32 %v4211, 1.0
        %v4220 = vadd.f32 %v4212, 1.0
        %v4221 = vadd.f32 %v4213, 1.0
        %v4222 = vadd.f32 %v4214, 1.0
        %v4223 = vrcp.pop %v4215
        %v4224 = vmul.f32 %v4215, %v4223
        %v4225 = vsub.f32 1.0, %v4224
        %v4226 = vmul.f32 %v4223, %v4225
        %v4227 = vadd.f32 %v4223, %v4226
        %vm4228 = vweird.f32 %v4215
        %vm4229 = vweird.f32 %v4223
        %vm4230 = vmor %vm4228, %vm4229
        %v4231 = vsel %vm4230, %v4223, %v4227
        %v4232 = vand.u32 2147483647, %v4215
        %vm4233 = vcmp.eq.f32.partialorder %v4232, 8.507059e+37
        %v4234 = vand.u32 %v4215, 2147483648
        %v4235 = vor.u32 1.1754944e-38, %v4234
        %v4236 = vsel %vm4233, %v4235, %v4231
        %v4237 = vmul.f32 1.0, %v4236
        %v4238 = vrcp.pop %v4216
        %v4239 = vmul.f32 %v4216, %v4238
        %v4240 = vsub.f32 1.0, %v4239
        %v4241 = vmul.f32 %v4238, %v4240
        %v4242 = vadd.f32 %v4238, %v4241
        %vm4243 = vweird.f32 %v4216
        %vm4244 = vweird.f32 %v4238
        %vm4245 = vmor %vm4243, %vm4244
        %v4246 = vsel %vm4245, %v4238, %v4242
        %v4247 = vand.u32 2147483647, %v4216
        %vm4248 = vcmp.eq.f32.partialorder %v4247, 8.507059e+37
        %v4249 = vand.u32 %v4216, 2147483648
        %v4250 = vor.u32 1.1754944e-38, %v4249
        %v4251 = vsel %vm4248, %v4250, %v4246
        %v4252 = vmul.f32 1.0, %v4251
        %v4253 = vrcp.pop %v4217
        %v4254 = vmul.f32 %v4217, %v4253
        %v4255 = vsub.f32 1.0, %v4254
        %v4256 = vmul.f32 %v4253, %v4255
        %v4257 = vadd.f32 %v4253, %v4256
        %vm4258 = vweird.f32 %v4217
        %vm4259 = vweird.f32 %v4253
        %vm4260 = vmor %vm4258, %vm4259
        %v4261 = vsel %vm4260, %v4253, %v4257
        %v4262 = vand.u32 2147483647, %v4217
        %vm4263 = vcmp.eq.f32.partialorder %v4262, 8.507059e+37
        %v4264 = vand.u32 %v4217, 2147483648
        %v4265 = vor.u32 1.1754944e-38, %v4264
        %v4266 = vsel %vm4263, %v4265, %v4261
        %v4267 = vmul.f32 1.0, %v4266
        %v4268 = vrcp.pop %v4218
        %v4269 = vmul.f32 %v4218, %v4268
        %v4270 = vsub.f32 1.0, %v4269
        %v4271 = vmul.f32 %v4268, %v4270
        %v4272 = vadd.f32 %v4268, %v4271
        %vm4273 = vweird.f32 %v4218
        %vm4274 = vweird.f32 %v4268
        %vm4275 = vmor %vm4273, %vm4274
        %v4276 = vsel %vm4275, %v4268, %v4272
        %v4277 = vand.u32 2147483647, %v4218
        %vm4278 = vcmp.eq.f32.partialorder %v4277, 8.507059e+37
        %v4279 = vand.u32 %v4218, 2147483648
        %v4280 = vor.u32 1.1754944e-38, %v4279
        %v4281 = vsel %vm4278, %v4280, %v4276
        %v4282 = vmul.f32 1.0, %v4281
        %v4283 = vrcp.pop %v4219
        %v4284 = vmul.f32 %v4219, %v4283
        %v4285 = vsub.f32 1.0, %v4284
        %v4286 = vmul.f32 %v4283, %v4285
        %v4287 = vadd.f32 %v4283, %v4286
        %vm4288 = vweird.f32 %v4219
        %vm4289 = vweird.f32 %v4283
        %vm4290 = vmor %vm4288, %vm4289
        %v4291 = vsel %vm4290, %v4283, %v4287
        %v4292 = vand.u32 2147483647, %v4219
        %vm4293 = vcmp.eq.f32.partialorder %v4292, 8.507059e+37
        %v4294 = vand.u32 %v4219, 2147483648
        %v4295 = vor.u32 1.1754944e-38, %v4294
        %v4296 = vsel %vm4293, %v4295, %v4291
        %v4297 = vmul.f32 1.0, %v4296
        %v4298 = vrcp.pop %v4220
        %v4299 = vmul.f32 %v4220, %v4298
        %v4300 = vsub.f32 1.0, %v4299
        %v4301 = vmul.f32 %v4298, %v4300
        %v4302 = vadd.f32 %v4298, %v4301
        %vm4303 = vweird.f32 %v4220
        %vm4304 = vweird.f32 %v4298
        %vm4305 = vmor %vm4303, %vm4304
        %v4306 = vsel %vm4305, %v4298, %v4302
        %v4307 = vand.u32 2147483647, %v4220
        %vm4308 = vcmp.eq.f32.partialorder %v4307, 8.507059e+37
        %v4309 = vand.u32 %v4220, 2147483648
        %v4310 = vor.u32 1.1754944e-38, %v4309
        %v4311 = vsel %vm4308, %v4310, %v4306
        %v4312 = vmul.f32 1.0, %v4311
        %v4313 = vrcp.pop %v4221
        %v4314 = vmul.f32 %v4221, %v4313
        %v4315 = vsub.f32 1.0, %v4314
        %v4316 = vmul.f32 %v4313, %v4315
        %v4317 = vadd.f32 %v4313, %v4316
        %vm4318 = vweird.f32 %v4221
        %vm4319 = vweird.f32 %v4313
        %vm4320 = vmor %vm4318, %vm4319
        %v4321 = vsel %vm4320, %v4313, %v4317
        %v4322 = vand.u32 2147483647, %v4221
        %vm4323 = vcmp.eq.f32.partialorder %v4322, 8.507059e+37
        %v4324 = vand.u32 %v4221, 2147483648
        %v4325 = vor.u32 1.1754944e-38, %v4324
        %v4326 = vsel %vm4323, %v4325, %v4321
        %v4327 = vmul.f32 1.0, %v4326
        %v4328 = vrcp.pop %v4222
        %v4329 = vmul.f32 %v4222, %v4328
        %v4330 = vsub.f32 1.0, %v4329
        %v4331 = vmul.f32 %v4328, %v4330
        %v4332 = vadd.f32 %v4328, %v4331
        %vm4333 = vweird.f32 %v4222
        %vm4334 = vweird.f32 %v4328
        %vm4335 = vmor %vm4333, %vm4334
        %v4336 = vsel %vm4335, %v4328, %v4332
        %v4337 = vand.u32 2147483647, %v4222
        %vm4338 = vcmp.eq.f32.partialorder %v4337, 8.507059e+37
        %v4339 = vand.u32 %v4222, 2147483648
        %v4340 = vor.u32 1.1754944e-38, %v4339
        %v4341 = vsel %vm4338, %v4340, %v4336
        %v4342 = vmul.f32 1.0, %v4341
        %v4343 = vmul.f32 %v4237, 1.0614054
        %v4344 = vmul.f32 %v4252, 1.0614054
        %v4345 = vmul.f32 %v4267, 1.0614054
        %v4346 = vmul.f32 %v4282, 1.0614054
        %v4347 = vmul.f32 %v4297, 1.0614054
        %v4348 = vmul.f32 %v4312, 1.0614054
        %v4349 = vmul.f32 %v4327, 1.0614054
        %v4350 = vmul.f32 %v4342, 1.0614054
        %v4351 = vadd.f32 %v4343, -1.4531521
        %v4352 = vadd.f32 %v4344, -1.4531521
        %v4353 = vadd.f32 %v4345, -1.4531521
        %v4354 = vadd.f32 %v4346, -1.4531521
        %v4355 = vadd.f32 %v4347, -1.4531521
        %v4356 = vadd.f32 %v4348, -1.4531521
        %v4357 = vadd.f32 %v4349, -1.4531521
        %v4358 = vadd.f32 %v4350, -1.4531521
        %v4359 = vmul.f32 %v4351, %v4237
        %v4360 = vmul.f32 %v4352, %v4252
        %v4361 = vmul.f32 %v4353, %v4267
        %v4362 = vmul.f32 %v4354, %v4282
        %v4363 = vmul.f32 %v4355, %v4297
        %v4364 = vmul.f32 %v4356, %v4312
        %v4365 = vmul.f32 %v4357, %v4327
        %v4366 = vmul.f32 %v4358, %v4342
        %v4367 = vadd.f32 %v4359, 1.4214138
        %v4368 = vadd.f32 %v4360, 1.4214138
        %v4369 = vadd.f32 %v4361, 1.4214138
        %v4370 = vadd.f32 %v4362, 1.4214138
        %v4371 = vadd.f32 %v4363, 1.4214138
        %v4372 = vadd.f32 %v4364, 1.4214138
        %v4373 = vadd.f32 %v4365, 1.4214138
        %v4374 = vadd.f32 %v4366, 1.4214138
        %v4375 = vmul.f32 %v4367, %v4237
        %v4376 = vmul.f32 %v4368, %v4252
        %v4377 = vmul.f32 %v4369, %v4267
        %v4378 = vmul.f32 %v4370, %v4282
        %v4379 = vmul.f32 %v4371, %v4297
        %v4380 = vmul.f32 %v4372, %v4312
        %v4381 = vmul.f32 %v4373, %v4327
        %v4382 = vmul.f32 %v4374, %v4342
        %v4383 = vadd.f32 %v4375, -0.28449672
        %v4384 = vadd.f32 %v4376, -0.28449672
        %v4385 = vadd.f32 %v4377, -0.28449672
        %v4386 = vadd.f32 %v4378, -0.28449672
        %v4387 = vadd.f32 %v4379, -0.28449672
        %v4388 = vadd.f32 %v4380, -0.28449672
        %v4389 = vadd.f32 %v4381, -0.28449672
        %v4390 = vadd.f32 %v4382, -0.28449672
        %v4391 = vmul.f32 %v4383, %v4237
        %v4392 = vmul.f32 %v4384, %v4252
        %v4393 = vmul.f32 %v4385, %v4267
        %v4394 = vmul.f32 %v4386, %v4282
        %v4395 = vmul.f32 %v4387, %v4297
        %v4396 = vmul.f32 %v4388, %v4312
        %v4397 = vmul.f32 %v4389, %v4327
        %v4398 = vmul.f32 %v4390, %v4342
        %v4399 = vadd.f32 %v4391, 0.2548296
        %v4400 = vadd.f32 %v4392, 0.2548296
        %v4401 = vadd.f32 %v4393, 0.2548296
        %v4402 = vadd.f32 %v4394, 0.2548296
        %v4403 = vadd.f32 %v4395, 0.2548296
        %v4404 = vadd.f32 %v4396, 0.2548296
        %v4405 = vadd.f32 %v4397, 0.2548296
        %v4406 = vadd.f32 %v4398, 0.2548296
        %v4407 = vmul.f32 %v4399, %v4237
        %v4408 = vmul.f32 %v4400, %v4252
        %v4409 = vmul.f32 %v4401, %v4267
        %v4410 = vmul.f32 %v4402, %v4282
        %v4411 = vmul.f32 %v4403, %v4297
        %v4412 = vmul.f32 %v4404, %v4312
        %v4413 = vmul.f32 %v4405, %v4327
        %v4414 = vmul.f32 %v4406, %v4342
        %v4415 = vsub.f32 0.0, %v4199
        %v4416 = vsub.f32 0.0, %v4200
        %v4417 = vsub.f32 0.0, %v4201
        %v4418 = vsub.f32 0.0, %v4202
        %v4419 = vsub.f32 0.0, %v4203
        %v4420 = vsub.f32 0.0, %v4204
        %v4421 = vsub.f32 0.0, %v4205
        %v4422 = vsub.f32 0.0, %v4206
        %v4423 = vmul.f32 %v4415, %v4199
        %v4424 = vmul.f32 %v4416, %v4200
        %v4425 = vmul.f32 %v4417, %v4201
        %v4426 = vmul.f32 %v4418, %v4202
        %v4427 = vmul.f32 %v4419, %v4203
        %v4428 = vmul.f32 %v4420, %v4204
        %v4429 = vmul.f32 %v4421, %v4205
        %v4430 = vmul.f32 %v4422, %v4206
        %v4431 = vmul.f32 %v4423, 1.442695
        %v4432 = vpow.pop %v4431
        %v4433 = vmul.f32 %v4424, 1.442695
        %v4434 = vpow.pop %v4433
        %v4435 = vmul.f32 %v4425, 1.442695
        %v4436 = vpow.pop %v4435
        %v4437 = vmul.f32 %v4426, 1.442695
        %v4438 = vpow.pop %v4437
        %v4439 = vmul.f32 %v4427, 1.442695
        %v4440 = vpow.pop %v4439
        %v4441 = vmul.f32 %v4428, 1.442695
        %v4442 = vpow.pop %v4441
        %v4443 = vmul.f32 %v4429, 1.442695
        %v4444 = vpow.pop %v4443
        %v4445 = vmul.f32 %v4430, 1.442695
        %v4446 = vpow.pop %v4445
        %v4447 = vmul.f32 %v4407, %v4432
        %v4448 = vmul.f32 %v4408, %v4434
        %v4449 = vmul.f32 %v4409, %v4436
        %v4450 = vmul.f32 %v4410, %v4438
        %v4451 = vmul.f32 %v4411, %v4440
        %v4452 = vmul.f32 %v4412, %v4442
        %v4453 = vmul.f32 %v4413, %v4444
        %v4454 = vmul.f32 %v4414, %v4446
        %v4455 = vsub.f32 1.0, %v4447
        %v4456 = vsub.f32 1.0, %v4448
        %v4457 = vsub.f32 1.0, %v4449
        %v4458 = vsub.f32 1.0, %v4450
        %v4459 = vsub.f32 1.0, %v4451
        %v4460 = vsub.f32 1.0, %v4452
        %v4461 = vsub.f32 1.0, %v4453
        %v4462 = vsub.f32 1.0, %v4454
        %v4463 = vmul.f32 %v4191, %v4455
        %v4464 = vmul.f32 %v4192, %v4456
        %v4465 = vmul.f32 %v4193, %v4457
        %v4466 = vmul.f32 %v4194, %v4458
        %v4467 = vmul.f32 %v4195, %v4459
        %v4468 = vmul.f32 %v4196, %v4460
        %v4469 = vmul.f32 %v4197, %v4461
        %v4470 = vmul.f32 %v4198, %v4462
        %v4471 = vadd.f32 %v4463, 1.0
        %v4472 = vadd.f32 %v4464, 1.0
        %v4473 = vadd.f32 %v4465, 1.0
        %v4474 = vadd.f32 %v4466, 1.0
        %v4475 = vadd.f32 %v4467, 1.0
        %v4476 = vadd.f32 %v4468, 1.0
        %v4477 = vadd.f32 %v4469, 1.0
        %v4478 = vadd.f32 %v4470, 1.0
        %v4479 = vmul.f32 %v4167, %v4471
        %v4480 = vmul.f32 %v4168, %v4472
        %v4481 = vmul.f32 %v4169, %v4473
        %v4482 = vmul.f32 %v4170, %v4474
        %v4483 = vmul.f32 %v4171, %v4475
        %v4484 = vmul.f32 %v4172, %v4476
        %v4485 = vmul.f32 %v4173, %v4477
        %v4486 = vmul.f32 %v4174, %v4478
        %v4487 = vrot.slane %v4479, 7
        %v4488 = vrot.slane %v4480, 7
        %v4489 = vrot.slane %v4481, 7
        %v4490 = vrot.slane %v4482, 7
        %v4491 = vrot.slane %v4483, 7
        %v4492 = vrot.slane %v4484, 7
        %v4493 = vrot.slane %v4485, 7
        %v4494 = vrot.slane %v4486, 7
        %v4495 = vsel %vm845, %v4493, %v4494
        %v4496 = vsel %vm845, %v4492, %v4493
        %v4497 = vsel %vm845, %v4491, %v4492
        %v4498 = vsel %vm845, %v4490, %v4491
        %v4499 = vsel %vm845, %v4489, %v4490
        %v4500 = vsel %vm845, %v4488, %v4489
        %v4501 = vsel %vm845, %v4487, %v4488
        %v4502 = vsel %vm845, %v4494, %v4487
        %4504 = vset.pattern.permute.xlu0 0
        %4505 = vperm.xlu0 %4504, %v771
        %v4506 = vpop.permute.xlu0 %4505
        %4509 = vset.pattern.permute.xlu0 0
        %4510 = vperm.xlu0 %4509, %v772
        %v4511 = vpop.permute.xlu0 %4510
        %4514 = vset.pattern.permute.xlu0 0
        %4515 = vperm.xlu0 %4514, %v773
        %v4516 = vpop.permute.xlu0 %4515
        %4519 = vset.pattern.permute.xlu0 0
        %4520 = vperm.xlu0 %4519, %v774
        %v4521 = vpop.permute.xlu0 %4520
        %4524 = vset.pattern.permute.xlu0 0
        %4525 = vperm.xlu0 %4524, %v775
        %v4526 = vpop.permute.xlu0 %4525
        %4529 = vset.pattern.permute.xlu0 0
        %4530 = vperm.xlu0 %4529, %v776
        %v4531 = vpop.permute.xlu0 %4530
        %4534 = vset.pattern.permute.xlu0 0
        %4535 = vperm.xlu0 %4534, %v777
        %v4536 = vpop.permute.xlu0 %4535
        %4539 = vset.pattern.permute.xlu0 0
        %4540 = vperm.xlu0 %4539, %v778
        %v4541 = vpop.permute.xlu0 %4540
        %v4543 = vmul.f32 %v4495, %v4506
        %v4544 = vmul.f32 %v4502, %v4511
        %v4545 = vmul.f32 %v4501, %v4516
        %v4546 = vmul.f32 %v4500, %v4521
        %v4547 = vmul.f32 %v4499, %v4526
        %v4548 = vmul.f32 %v4498, %v4531
        %v4549 = vmul.f32 %v4497, %v4536
        %v4550 = vmul.f32 %v4496, %v4541
        %4551 = vset.pattern.permute.xlu0 1
        %4552 = vperm.xlu0 %4551, %v771
        %v4553 = vpop.permute.xlu0 %4552
        %4555 = vset.pattern.permute.xlu0 1
        %4556 = vperm.xlu0 %4555, %v772
        %v4557 = vpop.permute.xlu0 %4556
        %4559 = vset.pattern.permute.xlu0 1
        %4560 = vperm.xlu0 %4559, %v773
        %v4561 = vpop.permute.xlu0 %4560
        %4563 = vset.pattern.permute.xlu0 1
        %4564 = vperm.xlu0 %4563, %v774
        %v4565 = vpop.permute.xlu0 %4564
        %4567 = vset.pattern.permute.xlu0 1
        %4568 = vperm.xlu0 %4567, %v775
        %v4569 = vpop.permute.xlu0 %4568
        %4571 = vset.pattern.permute.xlu0 1
        %4572 = vperm.xlu0 %4571, %v776
        %v4573 = vpop.permute.xlu0 %4572
        %4575 = vset.pattern.permute.xlu0 1
        %4576 = vperm.xlu0 %4575, %v777
        %v4577 = vpop.permute.xlu0 %4576
        %4579 = vset.pattern.permute.xlu0 1
        %4580 = vperm.xlu0 %4579, %v778
        %v4581 = vpop.permute.xlu0 %4580
        %v4583 = vmul.f32 %v4486, %v4553
        %v4584 = vmul.f32 %v4479, %v4557
        %v4585 = vmul.f32 %v4480, %v4561
        %v4586 = vmul.f32 %v4481, %v4565
        %v4587 = vmul.f32 %v4482, %v4569
        %v4588 = vmul.f32 %v4483, %v4573
        %v4589 = vmul.f32 %v4484, %v4577
        %v4590 = vmul.f32 %v4485, %v4581
        %v4591 = vrot.slane %v4479, 1
        %v4592 = vrot.slane %v4480, 1
        %v4593 = vrot.slane %v4481, 1
        %v4594 = vrot.slane %v4482, 1
        %v4595 = vrot.slane %v4483, 1
        %v4596 = vrot.slane %v4484, 1
        %v4597 = vrot.slane %v4485, 1
        %v4598 = vrot.slane %v4486, 1
        %v4599 = vsel %vm1102, %v4597, %v4598
        %v4600 = vsel %vm1102, %v4596, %v4597
        %v4601 = vsel %vm1102, %v4595, %v4596
        %v4602 = vsel %vm1102, %v4594, %v4595
        %v4603 = vsel %vm1102, %v4593, %v4594
        %v4604 = vsel %vm1102, %v4592, %v4593
        %v4605 = vsel %vm1102, %v4591, %v4592
        %v4606 = vsel %vm1102, %v4598, %v4591
        %4607 = vset.pattern.permute.xlu0 2
        %4608 = vperm.xlu0 %4607, %v771
        %v4609 = vpop.permute.xlu0 %4608
        %4611 = vset.pattern.permute.xlu0 2
        %4612 = vperm.xlu0 %4611, %v772
        %v4613 = vpop.permute.xlu0 %4612
        %4615 = vset.pattern.permute.xlu0 2
        %4616 = vperm.xlu0 %4615, %v773
        %v4617 = vpop.permute.xlu0 %4616
        %4619 = vset.pattern.permute.xlu0 2
        %4620 = vperm.xlu0 %4619, %v774
        %v4621 = vpop.permute.xlu0 %4620
        %4623 = vset.pattern.permute.xlu0 2
        %4624 = vperm.xlu0 %4623, %v775
        %v4625 = vpop.permute.xlu0 %4624
        %4627 = vset.pattern.permute.xlu0 2
        %4628 = vperm.xlu0 %4627, %v776
        %v4629 = vpop.permute.xlu0 %4628
        %4631 = vset.pattern.permute.xlu0 2
        %4632 = vperm.xlu0 %4631, %v777
        %v4633 = vpop.permute.xlu0 %4632
        %4635 = vset.pattern.permute.xlu0 2
        %4636 = vperm.xlu0 %4635, %v778
        %v4637 = vpop.permute.xlu0 %4636
        %v4639 = vmul.f32 %v4606, %v4609
        %v4640 = vmul.f32 %v4605, %v4613
        %v4641 = vmul.f32 %v4604, %v4617
        %v4642 = vmul.f32 %v4603, %v4621
        %v4643 = vmul.f32 %v4602, %v4625
        %v4644 = vmul.f32 %v4601, %v4629
        %v4645 = vmul.f32 %v4600, %v4633
        %v4646 = vmul.f32 %v4599, %v4637
        %4647 = vset.pattern.permute.xlu0 3
        %4648 = vperm.xlu0 %4647, %v771
        %v4649 = vpop.permute.xlu0 %4648
        %4651 = vset.pattern.permute.xlu0 3
        %4652 = vperm.xlu0 %4651, %v772
        %v4653 = vpop.permute.xlu0 %4652
        %4655 = vset.pattern.permute.xlu0 3
        %4656 = vperm.xlu0 %4655, %v773
        %v4657 = vpop.permute.xlu0 %4656
        %4659 = vset.pattern.permute.xlu0 3
        %4660 = vperm.xlu0 %4659, %v774
        %v4661 = vpop.permute.xlu0 %4660
        %4663 = vset.pattern.permute.xlu0 3
        %4664 = vperm.xlu0 %4663, %v775
        %v4665 = vpop.permute.xlu0 %4664
        %4667 = vset.pattern.permute.xlu0 3
        %4668 = vperm.xlu0 %4667, %v776
        %v4669 = vpop.permute.xlu0 %4668
        %4671 = vset.pattern.permute.xlu0 3
        %4672 = vperm.xlu0 %4671, %v777
        %v4673 = vpop.permute.xlu0 %4672
        %4675 = vset.pattern.permute.xlu0 3
        %4676 = vperm.xlu0 %4675, %v778
        %v4677 = vpop.permute.xlu0 %4676
        %v4679 = vmul.f32 %v4502, %v4649
        %v4680 = vmul.f32 %v4501, %v4653
        %v4681 = vmul.f32 %v4500, %v4657
        %v4682 = vmul.f32 %v4499, %v4661
        %v4683 = vmul.f32 %v4498, %v4665
        %v4684 = vmul.f32 %v4497, %v4669
        %v4685 = vmul.f32 %v4496, %v4673
        %v4686 = vmul.f32 %v4495, %v4677
        %4687 = vset.pattern.permute.xlu0 5
        %4688 = vperm.xlu0 %4687, %v771
        %v4689 = vpop.permute.xlu0 %4688
        %4691 = vset.pattern.permute.xlu0 5
        %4692 = vperm.xlu0 %4691, %v772
        %v4693 = vpop.permute.xlu0 %4692
        %4695 = vset.pattern.permute.xlu0 5
        %4696 = vperm.xlu0 %4695, %v773
        %v4697 = vpop.permute.xlu0 %4696
        %4699 = vset.pattern.permute.xlu0 5
        %4700 = vperm.xlu0 %4699, %v774
        %v4701 = vpop.permute.xlu0 %4700
        %4703 = vset.pattern.permute.xlu0 5
        %4704 = vperm.xlu0 %4703, %v775
        %v4705 = vpop.permute.xlu0 %4704
        %4707 = vset.pattern.permute.xlu0 5
        %4708 = vperm.xlu0 %4707, %v776
        %v4709 = vpop.permute.xlu0 %4708
        %4711 = vset.pattern.permute.xlu0 5
        %4712 = vperm.xlu0 %4711, %v777
        %v4713 = vpop.permute.xlu0 %4712
        %4715 = vset.pattern.permute.xlu0 5
        %4716 = vperm.xlu0 %4715, %v778
        %v4717 = vpop.permute.xlu0 %4716
        %v4719 = vmul.f32 %v4605, %v4689
        %v4720 = vmul.f32 %v4604, %v4693
        %v4721 = vmul.f32 %v4603, %v4697
        %v4722 = vmul.f32 %v4602, %v4701
        %v4723 = vmul.f32 %v4601, %v4705
        %v4724 = vmul.f32 %v4600, %v4709
        %v4725 = vmul.f32 %v4599, %v4713
        %v4726 = vmul.f32 %v4606, %v4717
        %4727 = vset.pattern.permute.xlu0 6
        %4728 = vperm.xlu0 %4727, %v771
        %v4729 = vpop.permute.xlu0 %4728
        %4731 = vset.pattern.permute.xlu0 6
        %4732 = vperm.xlu0 %4731, %v772
        %v4733 = vpop.permute.xlu0 %4732
        %4735 = vset.pattern.permute.xlu0 6
        %4736 = vperm.xlu0 %4735, %v773
        %v4737 = vpop.permute.xlu0 %4736
        %4739 = vset.pattern.permute.xlu0 6
        %4740 = vperm.xlu0 %4739, %v774
        %v4741 = vpop.permute.xlu0 %4740
        %4743 = vset.pattern.permute.xlu0 6
        %4744 = vperm.xlu0 %4743, %v775
        %v4745 = vpop.permute.xlu0 %4744
        %4747 = vset.pattern.permute.xlu0 6
        %4748 = vperm.xlu0 %4747, %v776
        %v4749 = vpop.permute.xlu0 %4748
        %4751 = vset.pattern.permute.xlu0 6
        %4752 = vperm.xlu0 %4751, %v777
        %v4753 = vpop.permute.xlu0 %4752
        %4755 = vset.pattern.permute.xlu0 6
        %4756 = vperm.xlu0 %4755, %v778
        %v4757 = vpop.permute.xlu0 %4756
        %v4759 = vmul.f32 %v4501, %v4729
        %v4760 = vmul.f32 %v4500, %v4733
        %v4761 = vmul.f32 %v4499, %v4737
        %v4762 = vmul.f32 %v4498, %v4741
        %v4763 = vmul.f32 %v4497, %v4745
        %v4764 = vmul.f32 %v4496, %v4749
        %v4765 = vmul.f32 %v4495, %v4753
        %v4766 = vmul.f32 %v4502, %v4757
        %4767 = vset.pattern.permute.xlu0 7
        %4768 = vperm.xlu0 %4767, %v771
        %v4769 = vpop.permute.xlu0 %4768
        %4771 = vset.pattern.permute.xlu0 7
        %4772 = vperm.xlu0 %4771, %v772
        %v4773 = vpop.permute.xlu0 %4772
        %4775 = vset.pattern.permute.xlu0 7
        %4776 = vperm.xlu0 %4775, %v773
        %v4777 = vpop.permute.xlu0 %4776
        %4779 = vset.pattern.permute.xlu0 7
        %4780 = vperm.xlu0 %4779, %v774
        %v4781 = vpop.permute.xlu0 %4780
        %4783 = vset.pattern.permute.xlu0 7
        %4784 = vperm.xlu0 %4783, %v775
        %v4785 = vpop.permute.xlu0 %4784
        %4787 = vset.pattern.permute.xlu0 7
        %4788 = vperm.xlu0 %4787, %v776
        %v4789 = vpop.permute.xlu0 %4788
        %4791 = vset.pattern.permute.xlu0 7
        %4792 = vperm.xlu0 %4791, %v777
        %v4793 = vpop.permute.xlu0 %4792
        %4795 = vset.pattern.permute.xlu0 7
        %4796 = vperm.xlu0 %4795, %v778
        %v4797 = vpop.permute.xlu0 %4796
        %v4799 = vmul.f32 %v4480, %v4769
        %v4800 = vmul.f32 %v4481, %v4773
        %v4801 = vmul.f32 %v4482, %v4777
        %v4802 = vmul.f32 %v4483, %v4781
        %v4803 = vmul.f32 %v4484, %v4785
        %v4804 = vmul.f32 %v4485, %v4789
        %v4805 = vmul.f32 %v4486, %v4793
        %v4806 = vmul.f32 %v4479, %v4797
        %4807 = vset.pattern.permute.xlu0 8
        %4808 = vperm.xlu0 %4807, %v771
        %v4809 = vpop.permute.xlu0 %4808
        %4811 = vset.pattern.permute.xlu0 8
        %4812 = vperm.xlu0 %4811, %v772
        %v4813 = vpop.permute.xlu0 %4812
        %4815 = vset.pattern.permute.xlu0 8
        %4816 = vperm.xlu0 %4815, %v773
        %v4817 = vpop.permute.xlu0 %4816
        %4819 = vset.pattern.permute.xlu0 8
        %4820 = vperm.xlu0 %4819, %v774
        %v4821 = vpop.permute.xlu0 %4820
        %4823 = vset.pattern.permute.xlu0 8
        %4824 = vperm.xlu0 %4823, %v775
        %v4825 = vpop.permute.xlu0 %4824
        %4827 = vset.pattern.permute.xlu0 8
        %4828 = vperm.xlu0 %4827, %v776
        %v4829 = vpop.permute.xlu0 %4828
        %4831 = vset.pattern.permute.xlu0 8
        %4832 = vperm.xlu0 %4831, %v777
        %v4833 = vpop.permute.xlu0 %4832
        %4835 = vset.pattern.permute.xlu0 8
        %4836 = vperm.xlu0 %4835, %v778
        %v4837 = vpop.permute.xlu0 %4836
        %v4839 = vmul.f32 %v4604, %v4809
        %v4840 = vmul.f32 %v4603, %v4813
        %v4841 = vmul.f32 %v4602, %v4817
        %v4842 = vmul.f32 %v4601, %v4821
        %v4843 = vmul.f32 %v4600, %v4825
        %v4844 = vmul.f32 %v4599, %v4829
        %v4845 = vmul.f32 %v4606, %v4833
        %v4846 = vmul.f32 %v4605, %v4837
        %4855 = vrot.lane.b32.xlu0 %v4583, 16
        %v4856 = vpop.permute.xlu0 %4855
        %4857 = vrot.lane.b32.xlu0 %v4584, 16
        %v4858 = vpop.permute.xlu0 %4857
        %4859 = vrot.lane.b32.xlu0 %v4585, 16
        %v4860 = vpop.permute.xlu0 %4859
        %4861 = vrot.lane.b32.xlu0 %v4586, 16
        %v4862 = vpop.permute.xlu0 %4861
        %4863 = vrot.lane.b32.xlu0 %v4587, 16
        %v4864 = vpop.permute.xlu0 %4863
        %4865 = vrot.lane.b32.xlu0 %v4588, 16
        %v4866 = vpop.permute.xlu0 %4865
        %4867 = vrot.lane.b32.xlu0 %v4589, 16
        %v4868 = vpop.permute.xlu0 %4867
        %4869 = vrot.lane.b32.xlu0 %v4590, 16
        %v4870 = vpop.permute.xlu0 %4869
        %4887 = vrot.lane.b32.xlu0 %v4639, 32
        %v4888 = vpop.permute.xlu0 %4887
        %4889 = vrot.lane.b32.xlu0 %v4640, 32
        %v4890 = vpop.permute.xlu0 %4889
        %4891 = vrot.lane.b32.xlu0 %v4641, 32
        %v4892 = vpop.permute.xlu0 %4891
        %4893 = vrot.lane.b32.xlu0 %v4642, 32
        %v4894 = vpop.permute.xlu0 %4893
        %4895 = vrot.lane.b32.xlu0 %v4643, 32
        %v4896 = vpop.permute.xlu0 %4895
        %4897 = vrot.lane.b32.xlu0 %v4644, 32
        %v4898 = vpop.permute.xlu0 %4897
        %4899 = vrot.lane.b32.xlu0 %v4645, 32
        %v4900 = vpop.permute.xlu0 %4899
        %4901 = vrot.lane.b32.xlu0 %v4646, 32
        %v4902 = vpop.permute.xlu0 %4901
        %4919 = vrot.lane.b32.xlu0 %v4679, 48
        %v4920 = vpop.permute.xlu0 %4919
        %4921 = vrot.lane.b32.xlu0 %v4680, 48
        %v4922 = vpop.permute.xlu0 %4921
        %4923 = vrot.lane.b32.xlu0 %v4681, 48
        %v4924 = vpop.permute.xlu0 %4923
        %4925 = vrot.lane.b32.xlu0 %v4682, 48
        %v4926 = vpop.permute.xlu0 %4925
        %4927 = vrot.lane.b32.xlu0 %v4683, 48
        %v4928 = vpop.permute.xlu0 %4927
        %4929 = vrot.lane.b32.xlu0 %v4684, 48
        %v4930 = vpop.permute.xlu0 %4929
        %4931 = vrot.lane.b32.xlu0 %v4685, 48
        %v4932 = vpop.permute.xlu0 %4931
        %4933 = vrot.lane.b32.xlu0 %v4686, 48
        %v4934 = vpop.permute.xlu0 %4933
        %4951 = vrot.lane.b32.xlu0 %v4479, 64
        %v4952 = vpop.permute.xlu0 %4951
        %4953 = vrot.lane.b32.xlu0 %v4480, 64
        %v4954 = vpop.permute.xlu0 %4953
        %4955 = vrot.lane.b32.xlu0 %v4481, 64
        %v4956 = vpop.permute.xlu0 %4955
        %4957 = vrot.lane.b32.xlu0 %v4482, 64
        %v4958 = vpop.permute.xlu0 %4957
        %4959 = vrot.lane.b32.xlu0 %v4483, 64
        %v4960 = vpop.permute.xlu0 %4959
        %4961 = vrot.lane.b32.xlu0 %v4484, 64
        %v4962 = vpop.permute.xlu0 %4961
        %4963 = vrot.lane.b32.xlu0 %v4485, 64
        %v4964 = vpop.permute.xlu0 %4963
        %4965 = vrot.lane.b32.xlu0 %v4486, 64
        %v4966 = vpop.permute.xlu0 %4965
        %4983 = vrot.lane.b32.xlu0 %v4719, 80
        %v4984 = vpop.permute.xlu0 %4983
        %4985 = vrot.lane.b32.xlu0 %v4720, 80
        %v4986 = vpop.permute.xlu0 %4985
        %4987 = vrot.lane.b32.xlu0 %v4721, 80
        %v4988 = vpop.permute.xlu0 %4987
        %4989 = vrot.lane.b32.xlu0 %v4722, 80
        %v4990 = vpop.permute.xlu0 %4989
        %4991 = vrot.lane.b32.xlu0 %v4723, 80
        %v4992 = vpop.permute.xlu0 %4991
        %4993 = vrot.lane.b32.xlu0 %v4724, 80
        %v4994 = vpop.permute.xlu0 %4993
        %4995 = vrot.lane.b32.xlu0 %v4725, 80
        %v4996 = vpop.permute.xlu0 %4995
        %4997 = vrot.lane.b32.xlu0 %v4726, 80
        %v4998 = vpop.permute.xlu0 %4997
        %5015 = vrot.lane.b32.xlu0 %v4759, 96
        %v5016 = vpop.permute.xlu0 %5015
        %5017 = vrot.lane.b32.xlu0 %v4760, 96
        %v5018 = vpop.permute.xlu0 %5017
        %5019 = vrot.lane.b32.xlu0 %v4761, 96
        %v5020 = vpop.permute.xlu0 %5019
        %5021 = vrot.lane.b32.xlu0 %v4762, 96
        %v5022 = vpop.permute.xlu0 %5021
        %5023 = vrot.lane.b32.xlu0 %v4763, 96
        %v5024 = vpop.permute.xlu0 %5023
        %5025 = vrot.lane.b32.xlu0 %v4764, 96
        %v5026 = vpop.permute.xlu0 %5025
        %5027 = vrot.lane.b32.xlu0 %v4765, 96
        %v5028 = vpop.permute.xlu0 %5027
        %5029 = vrot.lane.b32.xlu0 %v4766, 96
        %v5030 = vpop.permute.xlu0 %5029
        %5047 = vrot.lane.b32.xlu0 %v4799, 112
        %v5048 = vpop.permute.xlu0 %5047
        %5049 = vrot.lane.b32.xlu0 %v4800, 112
        %v5050 = vpop.permute.xlu0 %5049
        %5051 = vrot.lane.b32.xlu0 %v4801, 112
        %v5052 = vpop.permute.xlu0 %5051
        %5053 = vrot.lane.b32.xlu0 %v4802, 112
        %v5054 = vpop.permute.xlu0 %5053
        %5055 = vrot.lane.b32.xlu0 %v4803, 112
        %v5056 = vpop.permute.xlu0 %5055
        %5057 = vrot.lane.b32.xlu0 %v4804, 112
        %v5058 = vpop.permute.xlu0 %5057
        %5059 = vrot.lane.b32.xlu0 %v4805, 112
        %v5060 = vpop.permute.xlu0 %5059
        %5061 = vrot.lane.b32.xlu0 %v4806, 112
        %v5062 = vpop.permute.xlu0 %5061
        %vm5071 = vcmask 130048
        %v5072 = vsel %vm5071, %v4543, %v4856
        %v5073 = vsel %vm5071, %v4544, %v4858
        %v5074 = vsel %vm5071, %v4545, %v4860
        %v5075 = vsel %vm5071, %v4546, %v4862
        %v5076 = vsel %vm5071, %v4547, %v4864
        %v5077 = vsel %vm5071, %v4548, %v4866
        %v5078 = vsel %vm5071, %v4549, %v4868
        %v5079 = vsel %vm5071, %v4550, %v4870
        %vm5080 = vcmask 261120
        %v5081 = vsel %vm5080, %v5072, %v4888
        %v5082 = vsel %vm5080, %v5073, %v4890
        %v5083 = vsel %vm5080, %v5074, %v4892
        %v5084 = vsel %vm5080, %v5075, %v4894
        %v5085 = vsel %vm5080, %v5076, %v4896
        %v5086 = vsel %vm5080, %v5077, %v4898
        %v5087 = vsel %vm5080, %v5078, %v4900
        %v5088 = vsel %vm5080, %v5079, %v4902
        %vm5089 = vcmask 392192
        %v5090 = vsel %vm5089, %v5081, %v4920
        %v5091 = vsel %vm5089, %v5082, %v4922
        %v5092 = vsel %vm5089, %v5083, %v4924
        %v5093 = vsel %vm5089, %v5084, %v4926
        %v5094 = vsel %vm5089, %v5085, %v4928
        %v5095 = vsel %vm5089, %v5086, %v4930
        %v5096 = vsel %vm5089, %v5087, %v4932
        %v5097 = vsel %vm5089, %v5088, %v4934
        %vm5098 = vcmask 523264
        %v5099 = vsel %vm5098, %v5090, %v4952
        %v5100 = vsel %vm5098, %v5091, %v4954
        %v5101 = vsel %vm5098, %v5092, %v4956
        %v5102 = vsel %vm5098, %v5093, %v4958
        %v5103 = vsel %vm5098, %v5094, %v4960
        %v5104 = vsel %vm5098, %v5095, %v4962
        %v5105 = vsel %vm5098, %v5096, %v4964
        %v5106 = vsel %vm5098, %v5097, %v4966
        %vm5107 = vcmask 654336
        %v5108 = vsel %vm5107, %v5099, %v4984
        %v5109 = vsel %vm5107, %v5100, %v4986
        %v5110 = vsel %vm5107, %v5101, %v4988
        %v5111 = vsel %vm5107, %v5102, %v4990
        %v5112 = vsel %vm5107, %v5103, %v4992
        %v5113 = vsel %vm5107, %v5104, %v4994
        %v5114 = vsel %vm5107, %v5105, %v4996
        %v5115 = vsel %vm5107, %v5106, %v4998
        %vm5116 = vcmask 785408
        %v5117 = vsel %vm5116, %v5108, %v5016
        %v5118 = vsel %vm5116, %v5109, %v5018
        %v5119 = vsel %vm5116, %v5110, %v5020
        %v5120 = vsel %vm5116, %v5111, %v5022
        %v5121 = vsel %vm5116, %v5112, %v5024
        %v5122 = vsel %vm5116, %v5113, %v5026
        %v5123 = vsel %vm5116, %v5114, %v5028
        %v5124 = vsel %vm5116, %v5115, %v5030
        %vm5125 = vcmask 916480
        %v5126 = vsel %vm5125, %v5117, %v5048
        %v5127 = vsel %vm5125, %v5118, %v5050
        %v5128 = vsel %vm5125, %v5119, %v5052
        %v5129 = vsel %vm5125, %v5120, %v5054
        %v5130 = vsel %vm5125, %v5121, %v5056
        %v5131 = vsel %vm5125, %v5122, %v5058
        %v5132 = vsel %vm5125, %v5123, %v5060
        %v5133 = vsel %vm5125, %v5124, %v5062
        %v5134 = vld [vmem:[%s3] sm:$0xff]
        %v5135 = vld [vmem:[%s3 + $0x8] sm:$0xff]
        %v5136 = vld [vmem:[%s3 + $0x10] sm:$0xff]
        %v5137 = vld [vmem:[%s3 + $0x18] sm:$0xff]
        %v5138 = vld [vmem:[%s3 + $0x20] sm:$0xff]
        %v5139 = vld [vmem:[%s3 + $0x28] sm:$0xff]
        %v5140 = vld [vmem:[%s3 + $0x30] sm:$0xff]
        %v5141 = vld [vmem:[%s3 + $0x38] sm:$0xff]
        %v5142 = vld [vmem:[%s3 + $0x40] sm:$0xff]
        %v5143 = vld [vmem:[%s3 + $0x48] sm:$0xff]
        %v5144 = vld [vmem:[%s3 + $0x50] sm:$0xff]
        %v5145 = vld [vmem:[%s3 + $0x58] sm:$0xff]
        %v5146 = vld [vmem:[%s3 + $0x60] sm:$0xff]
        %v5147 = vld [vmem:[%s3 + $0x68] sm:$0xff]
        %v5148 = vld [vmem:[%s3 + $0x70] sm:$0xff]
        %v5149 = vld [vmem:[%s3 + $0x78] sm:$0xff]
        %v5150 = vld [vmem:[%s3 + $0x80] sm:$0xff]
        %v5151 = vld [vmem:[%s3 + $0x88] sm:$0xff]
        %v5152 = vld [vmem:[%s4] sm:$0x1]
        %v5154 = vperm.slane %v5152, 0
        %v5157 = vsel %vm5071, %v4839, 0
        %v5160 = vsel %vm5071, %v4840, 0
        %v5163 = vsel %vm5071, %v4841, 0
        %v5166 = vsel %vm5071, %v4842, 0
        %v5169 = vsel %vm5071, %v4843, 0
        %v5172 = vsel %vm5071, %v4844, 0
        %v5175 = vsel %vm5071, %v4845, 0
        %v5178 = vsel %vm5071, %v4846, 0
        %5180 = vmatpush.msra.mxu0 %v5149
        %5181 = vmatpush.msra.mxu0 %v5148
        %5182 = vmatpush.msra.mxu0 %v5147
        %5183 = vmatpush.msra.mxu0 %v5146
        %5184 = vmatpush.msra.mxu0 %v5145
        %5185 = vmatpush.msra.mxu0 %v5144
        %5186 = vmatpush.msra.mxu0 %v5143
        %5187 = vmatpush.msra.mxu0 %v5142
        %5188 = vmatpush.msra.mxu0 %v5141
        %5189 = vmatpush.msra.mxu0 %v5140
        %5190 = vmatpush.msra.mxu0 %v5139
        %5191 = vmatpush.msra.mxu0 %v5138
        %5192 = vmatpush.msra.mxu0 %v5137
        %5193 = vmatpush.msra.mxu0 %v5136
        %5194 = vmatpush.msra.mxu0 %v5135
        %5195 = vmatpush.msra.mxu0 %v5134
        %5196 = vmatmul.f32.gmra.mxu0 %v5126
        %v5197 = vpop.f32.mrf.mxu0
        %v5198 = vadd.f32 %v5154, %v5197
        %5199 = vmatmul.f32.gmra.mxu0 %v5127
        %v5200 = vpop.f32.mrf.mxu0
        %v5201 = vadd.f32 %v5154, %v5200
        %5202 = vmatmul.f32.gmra.mxu0 %v5128
        %v5203 = vpop.f32.mrf.mxu0
        %v5204 = vadd.f32 %v5154, %v5203
        %5205 = vmatmul.f32.gmra.mxu0 %v5129
        %v5206 = vpop.f32.mrf.mxu0
        %v5207 = vadd.f32 %v5154, %v5206
        %5208 = vmatmul.f32.gmra.mxu0 %v5130
        %v5209 = vpop.f32.mrf.mxu0
        %v5210 = vadd.f32 %v5154, %v5209
        %5211 = vmatmul.f32.gmra.mxu0 %v5131
        %v5212 = vpop.f32.mrf.mxu0
        %v5213 = vadd.f32 %v5154, %v5212
        %5214 = vmatmul.f32.gmra.mxu0 %v5132
        %v5215 = vpop.f32.mrf.mxu0
        %v5216 = vadd.f32 %v5154, %v5215
        %5217 = vmatmul.f32.gmra.mxu0 %v5133
        %v5218 = vpop.f32.mrf.mxu0
        %v5219 = vadd.f32 %v5154, %v5218
        %5220 = vdwg.mxu0
        %5221 = vmatpush.msra.mxu0 0.0
        %5222 = vmatpush.msra.mxu0 0.0
        %5223 = vmatpush.msra.mxu0 0.0
        %5224 = vmatpush.msra.mxu0 0.0
        %5225 = vmatpush.msra.mxu0 0.0
        %5226 = vmatpush.msra.mxu0 0.0
        %5227 = vmatpush.msra.mxu0 0.0
        %5228 = vmatpush.msra.mxu0 0.0
        %5229 = vmatpush.msra.mxu0 0.0
        %5230 = vmatpush.msra.mxu0 0.0
        %5231 = vmatpush.msra.mxu0 0.0
        %5232 = vmatpush.msra.mxu0 0.0
        %5233 = vmatpush.msra.mxu0 0.0
        %5234 = vmatpush.msra.mxu0 0.0
        %5235 = vmatpush.msra.mxu0 %v5151
        %5236 = vmatpush.msra.mxu0 %v5150
        %5237 = vmatmul.f32.gmra.mxu0 %v5157
        %v5238 = vpop.f32.mrf.mxu0
        %v5239 = vadd.f32 %v5198, %v5238
        %5240 = vmatmul.f32.gmra.mxu0 %v5160
        %v5241 = vpop.f32.mrf.mxu0
        %v5242 = vadd.f32 %v5201, %v5241
        %5243 = vmatmul.f32.gmra.mxu0 %v5163
        %v5244 = vpop.f32.mrf.mxu0
        %v5245 = vadd.f32 %v5204, %v5244
        %5246 = vmatmul.f32.gmra.mxu0 %v5166
        %v5247 = vpop.f32.mrf.mxu0
        %v5248 = vadd.f32 %v5207, %v5247
        %5249 = vmatmul.f32.gmra.mxu0 %v5169
        %v5250 = vpop.f32.mrf.mxu0
        %v5251 = vadd.f32 %v5210, %v5250
        %5252 = vmatmul.f32.gmra.mxu0 %v5172
        %v5253 = vpop.f32.mrf.mxu0
        %v5254 = vadd.f32 %v5213, %v5253
        %5255 = vmatmul.f32.gmra.mxu0 %v5175
        %v5256 = vpop.f32.mrf.mxu0
        %v5257 = vadd.f32 %v5216, %v5256
        %5258 = vmatmul.f32.gmra.mxu0 %v5178
        %v5259 = vpop.f32.mrf.mxu0
        %v5260 = vadd.f32 %v5219, %v5259
        %5261 = vdwg.mxu0
        %v5262 = vmul.f32 %v5239, 0.5
        %v5263 = vmul.f32 %v5242, 0.5
        %v5264 = vmul.f32 %v5245, 0.5
        %v5265 = vmul.f32 %v5248, 0.5
        %v5266 = vmul.f32 %v5251, 0.5
        %v5267 = vmul.f32 %v5254, 0.5
        %v5268 = vmul.f32 %v5257, 0.5
        %v5269 = vmul.f32 %v5260, 0.5
        %v5270 = vmul.f32 %v5239, 0.70710677
        %v5271 = vmul.f32 %v5242, 0.70710677
        %v5272 = vmul.f32 %v5245, 0.70710677
        %v5273 = vmul.f32 %v5248, 0.70710677
        %v5274 = vmul.f32 %v5251, 0.70710677
        %v5275 = vmul.f32 %v5254, 0.70710677
        %v5276 = vmul.f32 %v5257, 0.70710677
        %v5277 = vmul.f32 %v5260, 0.70710677
        %vm5278 = vcmp.ge.f32.partialorder %v5270, 0.0
        %vm5279 = vcmp.ge.f32.partialorder %v5271, 0.0
        %vm5280 = vcmp.ge.f32.partialorder %v5272, 0.0
        %vm5281 = vcmp.ge.f32.partialorder %v5273, 0.0
        %vm5282 = vcmp.ge.f32.partialorder %v5274, 0.0
        %vm5283 = vcmp.ge.f32.partialorder %v5275, 0.0
        %vm5284 = vcmp.ge.f32.partialorder %v5276, 0.0
        %vm5285 = vcmp.ge.f32.partialorder %v5277, 0.0
        %v5286 = vsel %vm5278, 1.0, -1.0
        %v5287 = vsel %vm5279, 1.0, -1.0
        %v5288 = vsel %vm5280, 1.0, -1.0
        %v5289 = vsel %vm5281, 1.0, -1.0
        %v5290 = vsel %vm5282, 1.0, -1.0
        %v5291 = vsel %vm5283, 1.0, -1.0
        %v5292 = vsel %vm5284, 1.0, -1.0
        %v5293 = vsel %vm5285, 1.0, -1.0
        %v5294 = vand.u32 2147483647, %v5270
        %v5295 = vand.u32 2147483647, %v5271
        %v5296 = vand.u32 2147483647, %v5272
        %v5297 = vand.u32 2147483647, %v5273
        %v5298 = vand.u32 2147483647, %v5274
        %v5299 = vand.u32 2147483647, %v5275
        %v5300 = vand.u32 2147483647, %v5276
        %v5301 = vand.u32 2147483647, %v5277
        %v5302 = vmul.f32 %v5294, 0.3275911
        %v5303 = vmul.f32 %v5295, 0.3275911
        %v5304 = vmul.f32 %v5296, 0.3275911
        %v5305 = vmul.f32 %v5297, 0.3275911
        %v5306 = vmul.f32 %v5298, 0.3275911
        %v5307 = vmul.f32 %v5299, 0.3275911
        %v5308 = vmul.f32 %v5300, 0.3275911
        %v5309 = vmul.f32 %v5301, 0.3275911
        %v5310 = vadd.f32 %v5302, 1.0
        %v5311 = vadd.f32 %v5303, 1.0
        %v5312 = vadd.f32 %v5304, 1.0
        %v5313 = vadd.f32 %v5305, 1.0
        %v5314 = vadd.f32 %v5306, 1.0
        %v5315 = vadd.f32 %v5307, 1.0
        %v5316 = vadd.f32 %v5308, 1.0
        %v5317 = vadd.f32 %v5309, 1.0
        %v5318 = vrcp.pop %v5310
        %v5319 = vmul.f32 %v5310, %v5318
        %v5320 = vsub.f32 1.0, %v5319
        %v5321 = vmul.f32 %v5318, %v5320
        %v5322 = vadd.f32 %v5318, %v5321
        %vm5323 = vweird.f32 %v5310
        %vm5324 = vweird.f32 %v5318
        %vm5325 = vmor %vm5323, %vm5324
        %v5326 = vsel %vm5325, %v5318, %v5322
        %v5327 = vand.u32 2147483647, %v5310
        %vm5328 = vcmp.eq.f32.partialorder %v5327, 8.507059e+37
        %v5329 = vand.u32 %v5310, 2147483648
        %v5330 = vor.u32 1.1754944e-38, %v5329
        %v5331 = vsel %vm5328, %v5330, %v5326
        %v5332 = vmul.f32 1.0, %v5331
        %v5333 = vrcp.pop %v5311
        %v5334 = vmul.f32 %v5311, %v5333
        %v5335 = vsub.f32 1.0, %v5334
        %v5336 = vmul.f32 %v5333, %v5335
        %v5337 = vadd.f32 %v5333, %v5336
        %vm5338 = vweird.f32 %v5311
        %vm5339 = vweird.f32 %v5333
        %vm5340 = vmor %vm5338, %vm5339
        %v5341 = vsel %vm5340, %v5333, %v5337
        %v5342 = vand.u32 2147483647, %v5311
        %vm5343 = vcmp.eq.f32.partialorder %v5342, 8.507059e+37
        %v5344 = vand.u32 %v5311, 2147483648
        %v5345 = vor.u32 1.1754944e-38, %v5344
        %v5346 = vsel %vm5343, %v5345, %v5341
        %v5347 = vmul.f32 1.0, %v5346
        %v5348 = vrcp.pop %v5312
        %v5349 = vmul.f32 %v5312, %v5348
        %v5350 = vsub.f32 1.0, %v5349
        %v5351 = vmul.f32 %v5348, %v5350
        %v5352 = vadd.f32 %v5348, %v5351
        %vm5353 = vweird.f32 %v5312
        %vm5354 = vweird.f32 %v5348
        %vm5355 = vmor %vm5353, %vm5354
        %v5356 = vsel %vm5355, %v5348, %v5352
        %v5357 = vand.u32 2147483647, %v5312
        %vm5358 = vcmp.eq.f32.partialorder %v5357, 8.507059e+37
        %v5359 = vand.u32 %v5312, 2147483648
        %v5360 = vor.u32 1.1754944e-38, %v5359
        %v5361 = vsel %vm5358, %v5360, %v5356
        %v5362 = vmul.f32 1.0, %v5361
        %v5363 = vrcp.pop %v5313
        %v5364 = vmul.f32 %v5313, %v5363
        %v5365 = vsub.f32 1.0, %v5364
        %v5366 = vmul.f32 %v5363, %v5365
        %v5367 = vadd.f32 %v5363, %v5366
        %vm5368 = vweird.f32 %v5313
        %vm5369 = vweird.f32 %v5363
        %vm5370 = vmor %vm5368, %vm5369
        %v5371 = vsel %vm5370, %v5363, %v5367
        %v5372 = vand.u32 2147483647, %v5313
        %vm5373 = vcmp.eq.f32.partialorder %v5372, 8.507059e+37
        %v5374 = vand.u32 %v5313, 2147483648
        %v5375 = vor.u32 1.1754944e-38, %v5374
        %v5376 = vsel %vm5373, %v5375, %v5371
        %v5377 = vmul.f32 1.0, %v5376
        %v5378 = vrcp.pop %v5314
        %v5379 = vmul.f32 %v5314, %v5378
        %v5380 = vsub.f32 1.0, %v5379
        %v5381 = vmul.f32 %v5378, %v5380
        %v5382 = vadd.f32 %v5378, %v5381
        %vm5383 = vweird.f32 %v5314
        %vm5384 = vweird.f32 %v5378
        %vm5385 = vmor %vm5383, %vm5384
        %v5386 = vsel %vm5385, %v5378, %v5382
        %v5387 = vand.u32 2147483647, %v5314
        %vm5388 = vcmp.eq.f32.partialorder %v5387, 8.507059e+37
        %v5389 = vand.u32 %v5314, 2147483648
        %v5390 = vor.u32 1.1754944e-38, %v5389
        %v5391 = vsel %vm5388, %v5390, %v5386
        %v5392 = vmul.f32 1.0, %v5391
        %v5393 = vrcp.pop %v5315
        %v5394 = vmul.f32 %v5315, %v5393
        %v5395 = vsub.f32 1.0, %v5394
        %v5396 = vmul.f32 %v5393, %v5395
        %v5397 = vadd.f32 %v5393, %v5396
        %vm5398 = vweird.f32 %v5315
        %vm5399 = vweird.f32 %v5393
        %vm5400 = vmor %vm5398, %vm5399
        %v5401 = vsel %vm5400, %v5393, %v5397
        %v5402 = vand.u32 2147483647, %v5315
        %vm5403 = vcmp.eq.f32.partialorder %v5402, 8.507059e+37
        %v5404 = vand.u32 %v5315, 2147483648
        %v5405 = vor.u32 1.1754944e-38, %v5404
        %v5406 = vsel %vm5403, %v5405, %v5401
        %v5407 = vmul.f32 1.0, %v5406
        %v5408 = vrcp.pop %v5316
        %v5409 = vmul.f32 %v5316, %v5408
        %v5410 = vsub.f32 1.0, %v5409
        %v5411 = vmul.f32 %v5408, %v5410
        %v5412 = vadd.f32 %v5408, %v5411
        %vm5413 = vweird.f32 %v5316
        %vm5414 = vweird.f32 %v5408
        %vm5415 = vmor %vm5413, %vm5414
        %v5416 = vsel %vm5415, %v5408, %v5412
        %v5417 = vand.u32 2147483647, %v5316
        %vm5418 = vcmp.eq.f32.partialorder %v5417, 8.507059e+37
        %v5419 = vand.u32 %v5316, 2147483648
        %v5420 = vor.u32 1.1754944e-38, %v5419
        %v5421 = vsel %vm5418, %v5420, %v5416
        %v5422 = vmul.f32 1.0, %v5421
        %v5423 = vrcp.pop %v5317
        %v5424 = vmul.f32 %v5317, %v5423
        %v5425 = vsub.f32 1.0, %v5424
        %v5426 = vmul.f32 %v5423, %v5425
        %v5427 = vadd.f32 %v5423, %v5426
        %vm5428 = vweird.f32 %v5317
        %vm5429 = vweird.f32 %v5423
        %vm5430 = vmor %vm5428, %vm5429
        %v5431 = vsel %vm5430, %v5423, %v5427
        %v5432 = vand.u32 2147483647, %v5317
        %vm5433 = vcmp.eq.f32.partialorder %v5432, 8.507059e+37
        %v5434 = vand.u32 %v5317, 2147483648
        %v5435 = vor.u32 1.1754944e-38, %v5434
        %v5436 = vsel %vm5433, %v5435, %v5431
        %v5437 = vmul.f32 1.0, %v5436
        %v5438 = vmul.f32 %v5332, 1.0614054
        %v5439 = vmul.f32 %v5347, 1.0614054
        %v5440 = vmul.f32 %v5362, 1.0614054
        %v5441 = vmul.f32 %v5377, 1.0614054
        %v5442 = vmul.f32 %v5392, 1.0614054
        %v5443 = vmul.f32 %v5407, 1.0614054
        %v5444 = vmul.f32 %v5422, 1.0614054
        %v5445 = vmul.f32 %v5437, 1.0614054
        %v5446 = vadd.f32 %v5438, -1.4531521
        %v5447 = vadd.f32 %v5439, -1.4531521
        %v5448 = vadd.f32 %v5440, -1.4531521
        %v5449 = vadd.f32 %v5441, -1.4531521
        %v5450 = vadd.f32 %v5442, -1.4531521
        %v5451 = vadd.f32 %v5443, -1.4531521
        %v5452 = vadd.f32 %v5444, -1.4531521
        %v5453 = vadd.f32 %v5445, -1.4531521
        %v5454 = vmul.f32 %v5446, %v5332
        %v5455 = vmul.f32 %v5447, %v5347
        %v5456 = vmul.f32 %v5448, %v5362
        %v5457 = vmul.f32 %v5449, %v5377
        %v5458 = vmul.f32 %v5450, %v5392
        %v5459 = vmul.f32 %v5451, %v5407
        %v5460 = vmul.f32 %v5452, %v5422
        %v5461 = vmul.f32 %v5453, %v5437
        %v5462 = vadd.f32 %v5454, 1.4214138
        %v5463 = vadd.f32 %v5455, 1.4214138
        %v5464 = vadd.f32 %v5456, 1.4214138
        %v5465 = vadd.f32 %v5457, 1.4214138
        %v5466 = vadd.f32 %v5458, 1.4214138
        %v5467 = vadd.f32 %v5459, 1.4214138
        %v5468 = vadd.f32 %v5460, 1.4214138
        %v5469 = vadd.f32 %v5461, 1.4214138
        %v5470 = vmul.f32 %v5462, %v5332
        %v5471 = vmul.f32 %v5463, %v5347
        %v5472 = vmul.f32 %v5464, %v5362
        %v5473 = vmul.f32 %v5465, %v5377
        %v5474 = vmul.f32 %v5466, %v5392
        %v5475 = vmul.f32 %v5467, %v5407
        %v5476 = vmul.f32 %v5468, %v5422
        %v5477 = vmul.f32 %v5469, %v5437
        %v5478 = vadd.f32 %v5470, -0.28449672
        %v5479 = vadd.f32 %v5471, -0.28449672
        %v5480 = vadd.f32 %v5472, -0.28449672
        %v5481 = vadd.f32 %v5473, -0.28449672
        %v5482 = vadd.f32 %v5474, -0.28449672
        %v5483 = vadd.f32 %v5475, -0.28449672
        %v5484 = vadd.f32 %v5476, -0.28449672
        %v5485 = vadd.f32 %v5477, -0.28449672
        %v5486 = vmul.f32 %v5478, %v5332
        %v5487 = vmul.f32 %v5479, %v5347
        %v5488 = vmul.f32 %v5480, %v5362
        %v5489 = vmul.f32 %v5481, %v5377
        %v5490 = vmul.f32 %v5482, %v5392
        %v5491 = vmul.f32 %v5483, %v5407
        %v5492 = vmul.f32 %v5484, %v5422
        %v5493 = vmul.f32 %v5485, %v5437
        %v5494 = vadd.f32 %v5486, 0.2548296
        %v5495 = vadd.f32 %v5487, 0.2548296
        %v5496 = vadd.f32 %v5488, 0.2548296
        %v5497 = vadd.f32 %v5489, 0.2548296
        %v5498 = vadd.f32 %v5490, 0.2548296
        %v5499 = vadd.f32 %v5491, 0.2548296
        %v5500 = vadd.f32 %v5492, 0.2548296
        %v5501 = vadd.f32 %v5493, 0.2548296
        %v5502 = vmul.f32 %v5494, %v5332
        %v5503 = vmul.f32 %v5495, %v5347
        %v5504 = vmul.f32 %v5496, %v5362
        %v5505 = vmul.f32 %v5497, %v5377
        %v5506 = vmul.f32 %v5498, %v5392
        %v5507 = vmul.f32 %v5499, %v5407
        %v5508 = vmul.f32 %v5500, %v5422
        %v5509 = vmul.f32 %v5501, %v5437
        %v5510 = vsub.f32 0.0, %v5294
        %v5511 = vsub.f32 0.0, %v5295
        %v5512 = vsub.f32 0.0, %v5296
        %v5513 = vsub.f32 0.0, %v5297
        %v5514 = vsub.f32 0.0, %v5298
        %v5515 = vsub.f32 0.0, %v5299
        %v5516 = vsub.f32 0.0, %v5300
        %v5517 = vsub.f32 0.0, %v5301
        %v5518 = vmul.f32 %v5510, %v5294
        %v5519 = vmul.f32 %v5511, %v5295
        %v5520 = vmul.f32 %v5512, %v5296
        %v5521 = vmul.f32 %v5513, %v5297
        %v5522 = vmul.f32 %v5514, %v5298
        %v5523 = vmul.f32 %v5515, %v5299
        %v5524 = vmul.f32 %v5516, %v5300
        %v5525 = vmul.f32 %v5517, %v5301
        %v5526 = vmul.f32 %v5518, 1.442695
        %v5527 = vpow.pop %v5526
        %v5528 = vmul.f32 %v5519, 1.442695
        %v5529 = vpow.pop %v5528
        %v5530 = vmul.f32 %v5520, 1.442695
        %v5531 = vpow.pop %v5530
        %v5532 = vmul.f32 %v5521, 1.442695
        %v5533 = vpow.pop %v5532
        %v5534 = vmul.f32 %v5522, 1.442695
        %v5535 = vpow.pop %v5534
        %v5536 = vmul.f32 %v5523, 1.442695
        %v5537 = vpow.pop %v5536
        %v5538 = vmul.f32 %v5524, 1.442695
        %v5539 = vpow.pop %v5538
        %v5540 = vmul.f32 %v5525, 1.442695
        %v5541 = vpow.pop %v5540
        %v5542 = vmul.f32 %v5502, %v5527
        %v5543 = vmul.f32 %v5503, %v5529
        %v5544 = vmul.f32 %v5504, %v5531
        %v5545 = vmul.f32 %v5505, %v5533
        %v5546 = vmul.f32 %v5506, %v5535
        %v5547 = vmul.f32 %v5507, %v5537
        %v5548 = vmul.f32 %v5508, %v5539
        %v5549 = vmul.f32 %v5509, %v5541
        %v5550 = vsub.f32 1.0, %v5542
        %v5551 = vsub.f32 1.0, %v5543
        %v5552 = vsub.f32 1.0, %v5544
        %v5553 = vsub.f32 1.0, %v5545
        %v5554 = vsub.f32 1.0, %v5546
        %v5555 = vsub.f32 1.0, %v5547
        %v5556 = vsub.f32 1.0, %v5548
        %v5557 = vsub.f32 1.0, %v5549
        %v5558 = vmul.f32 %v5286, %v5550
        %v5559 = vmul.f32 %v5287, %v5551
        %v5560 = vmul.f32 %v5288, %v5552
        %v5561 = vmul.f32 %v5289, %v5553
        %v5562 = vmul.f32 %v5290, %v5554
        %v5563 = vmul.f32 %v5291, %v5555
        %v5564 = vmul.f32 %v5292, %v5556
        %v5565 = vmul.f32 %v5293, %v5557
        %v5566 = vadd.f32 %v5558, 1.0
        %v5567 = vadd.f32 %v5559, 1.0
        %v5568 = vadd.f32 %v5560, 1.0
        %v5569 = vadd.f32 %v5561, 1.0
        %v5570 = vadd.f32 %v5562, 1.0
        %v5571 = vadd.f32 %v5563, 1.0
        %v5572 = vadd.f32 %v5564, 1.0
        %v5573 = vadd.f32 %v5565, 1.0
        %v5574 = vmul.f32 %v5262, %v5566
        %v5575 = vmul.f32 %v5263, %v5567
        %v5576 = vmul.f32 %v5264, %v5568
        %v5577 = vmul.f32 %v5265, %v5569
        %v5578 = vmul.f32 %v5266, %v5570
        %v5579 = vmul.f32 %v5267, %v5571
        %v5580 = vmul.f32 %v5268, %v5572
        %v5581 = vmul.f32 %v5269, %v5573
        %v5582 = vrot.slane %v5574, 7
        %v5583 = vrot.slane %v5575, 7
        %v5584 = vrot.slane %v5576, 7
        %v5585 = vrot.slane %v5577, 7
        %v5586 = vrot.slane %v5578, 7
        %v5587 = vrot.slane %v5579, 7
        %v5588 = vrot.slane %v5580, 7
        %v5589 = vrot.slane %v5581, 7
        %v5590 = vsel %vm845, %v5588, %v5589
        %v5591 = vsel %vm845, %v5587, %v5588
        %v5592 = vsel %vm845, %v5586, %v5587
        %v5593 = vsel %vm845, %v5585, %v5586
        %v5594 = vsel %vm845, %v5584, %v5585
        %v5595 = vsel %vm845, %v5583, %v5584
        %v5596 = vsel %vm845, %v5582, %v5583
        %v5597 = vsel %vm845, %v5589, %v5582
        %v5598 = vmul.f32 %v5590, %v4506
        %v5599 = vmul.f32 %v5597, %v4511
        %v5600 = vmul.f32 %v5596, %v4516
        %v5601 = vmul.f32 %v5595, %v4521
        %v5602 = vmul.f32 %v5594, %v4526
        %v5603 = vmul.f32 %v5593, %v4531
        %v5604 = vmul.f32 %v5592, %v4536
        %v5605 = vmul.f32 %v5591, %v4541
        %v5606 = vmul.f32 %v5581, %v4553
        %v5607 = vmul.f32 %v5574, %v4557
        %v5608 = vmul.f32 %v5575, %v4561
        %v5609 = vmul.f32 %v5576, %v4565
        %v5610 = vmul.f32 %v5577, %v4569
        %v5611 = vmul.f32 %v5578, %v4573
        %v5612 = vmul.f32 %v5579, %v4577
        %v5613 = vmul.f32 %v5580, %v4581
        %v5614 = vrot.slane %v5574, 1
        %v5615 = vrot.slane %v5575, 1
        %v5616 = vrot.slane %v5576, 1
        %v5617 = vrot.slane %v5577, 1
        %v5618 = vrot.slane %v5578, 1
        %v5619 = vrot.slane %v5579, 1
        %v5620 = vrot.slane %v5580, 1
        %v5621 = vrot.slane %v5581, 1
        %v5622 = vsel %vm1102, %v5620, %v5621
        %v5623 = vsel %vm1102, %v5619, %v5620
        %v5624 = vsel %vm1102, %v5618, %v5619
        %v5625 = vsel %vm1102, %v5617, %v5618
        %v5626 = vsel %vm1102, %v5616, %v5617
        %v5627 = vsel %vm1102, %v5615, %v5616
        %v5628 = vsel %vm1102, %v5614, %v5615
        %v5629 = vsel %vm1102, %v5621, %v5614
        %v5630 = vmul.f32 %v5629, %v4609
        %v5631 = vmul.f32 %v5628, %v4613
        %v5632 = vmul.f32 %v5627, %v4617
        %v5633 = vmul.f32 %v5626, %v4621
        %v5634 = vmul.f32 %v5625, %v4625
        %v5635 = vmul.f32 %v5624, %v4629
        %v5636 = vmul.f32 %v5623, %v4633
        %v5637 = vmul.f32 %v5622, %v4637
        %v5638 = vmul.f32 %v5597, %v4649
        %v5639 = vmul.f32 %v5596, %v4653
        %v5640 = vmul.f32 %v5595, %v4657
        %v5641 = vmul.f32 %v5594, %v4661
        %v5642 = vmul.f32 %v5593, %v4665
        %v5643 = vmul.f32 %v5592, %v4669
        %v5644 = vmul.f32 %v5591, %v4673
        %v5645 = vmul.f32 %v5590, %v4677
        %v5646 = vmul.f32 %v5628, %v4689
        %v5647 = vmul.f32 %v5627, %v4693
        %v5648 = vmul.f32 %v5626, %v4697
        %v5649 = vmul.f32 %v5625, %v4701
        %v5650 = vmul.f32 %v5624, %v4705
        %v5651 = vmul.f32 %v5623, %v4709
        %v5652 = vmul.f32 %v5622, %v4713
        %v5653 = vmul.f32 %v5629, %v4717
        %v5654 = vmul.f32 %v5596, %v4729
        %v5655 = vmul.f32 %v5595, %v4733
        %v5656 = vmul.f32 %v5594, %v4737
        %v5657 = vmul.f32 %v5593, %v4741
        %v5658 = vmul.f32 %v5592, %v4745
        %v5659 = vmul.f32 %v5591, %v4749
        %v5660 = vmul.f32 %v5590, %v4753
        %v5661 = vmul.f32 %v5597, %v4757
        %v5662 = vmul.f32 %v5575, %v4769
        %v5663 = vmul.f32 %v5576, %v4773
        %v5664 = vmul.f32 %v5577, %v4777
        %v5665 = vmul.f32 %v5578, %v4781
        %v5666 = vmul.f32 %v5579, %v4785
        %v5667 = vmul.f32 %v5580, %v4789
        %v5668 = vmul.f32 %v5581, %v4793
        %v5669 = vmul.f32 %v5574, %v4797
        %v5670 = vmul.f32 %v5627, %v4809
        %v5671 = vmul.f32 %v5626, %v4813
        %v5672 = vmul.f32 %v5625, %v4817
        %v5673 = vmul.f32 %v5624, %v4821
        %v5674 = vmul.f32 %v5623, %v4825
        %v5675 = vmul.f32 %v5622, %v4829
        %v5676 = vmul.f32 %v5629, %v4833
        %v5677 = vmul.f32 %v5628, %v4837
        %5686 = vrot.lane.b32.xlu0 %v5606, 16
        %v5687 = vpop.permute.xlu0 %5686
        %5688 = vrot.lane.b32.xlu0 %v5607, 16
        %v5689 = vpop.permute.xlu0 %5688
        %5690 = vrot.lane.b32.xlu0 %v5608, 16
        %v5691 = vpop.permute.xlu0 %5690
        %5692 = vrot.lane.b32.xlu0 %v5609, 16
        %v5693 = vpop.permute.xlu0 %5692
        %5694 = vrot.lane.b32.xlu0 %v5610, 16
        %v5695 = vpop.permute.xlu0 %5694
        %5696 = vrot.lane.b32.xlu0 %v5611, 16
        %v5697 = vpop.permute.xlu0 %5696
        %5698 = vrot.lane.b32.xlu0 %v5612, 16
        %v5699 = vpop.permute.xlu0 %5698
        %5700 = vrot.lane.b32.xlu0 %v5613, 16
        %v5701 = vpop.permute.xlu0 %5700
        %5718 = vrot.lane.b32.xlu0 %v5630, 32
        %v5719 = vpop.permute.xlu0 %5718
        %5720 = vrot.lane.b32.xlu0 %v5631, 32
        %v5721 = vpop.permute.xlu0 %5720
        %5722 = vrot.lane.b32.xlu0 %v5632, 32
        %v5723 = vpop.permute.xlu0 %5722
        %5724 = vrot.lane.b32.xlu0 %v5633, 32
        %v5725 = vpop.permute.xlu0 %5724
        %5726 = vrot.lane.b32.xlu0 %v5634, 32
        %v5727 = vpop.permute.xlu0 %5726
        %5728 = vrot.lane.b32.xlu0 %v5635, 32
        %v5729 = vpop.permute.xlu0 %5728
        %5730 = vrot.lane.b32.xlu0 %v5636, 32
        %v5731 = vpop.permute.xlu0 %5730
        %5732 = vrot.lane.b32.xlu0 %v5637, 32
        %v5733 = vpop.permute.xlu0 %5732
        %5750 = vrot.lane.b32.xlu0 %v5638, 48
        %v5751 = vpop.permute.xlu0 %5750
        %5752 = vrot.lane.b32.xlu0 %v5639, 48
        %v5753 = vpop.permute.xlu0 %5752
        %5754 = vrot.lane.b32.xlu0 %v5640, 48
        %v5755 = vpop.permute.xlu0 %5754
        %5756 = vrot.lane.b32.xlu0 %v5641, 48
        %v5757 = vpop.permute.xlu0 %5756
        %5758 = vrot.lane.b32.xlu0 %v5642, 48
        %v5759 = vpop.permute.xlu0 %5758
        %5760 = vrot.lane.b32.xlu0 %v5643, 48
        %v5761 = vpop.permute.xlu0 %5760
        %5762 = vrot.lane.b32.xlu0 %v5644, 48
        %v5763 = vpop.permute.xlu0 %5762
        %5764 = vrot.lane.b32.xlu0 %v5645, 48
        %v5765 = vpop.permute.xlu0 %5764
        %5782 = vrot.lane.b32.xlu0 %v5574, 64
        %v5783 = vpop.permute.xlu0 %5782
        %5784 = vrot.lane.b32.xlu0 %v5575, 64
        %v5785 = vpop.permute.xlu0 %5784
        %5786 = vrot.lane.b32.xlu0 %v5576, 64
        %v5787 = vpop.permute.xlu0 %5786
        %5788 = vrot.lane.b32.xlu0 %v5577, 64
        %v5789 = vpop.permute.xlu0 %5788
        %5790 = vrot.lane.b32.xlu0 %v5578, 64
        %v5791 = vpop.permute.xlu0 %5790
        %5792 = vrot.lane.b32.xlu0 %v5579, 64
        %v5793 = vpop.permute.xlu0 %5792
        %5794 = vrot.lane.b32.xlu0 %v5580, 64
        %v5795 = vpop.permute.xlu0 %5794
        %5796 = vrot.lane.b32.xlu0 %v5581, 64
        %v5797 = vpop.permute.xlu0 %5796
        %5814 = vrot.lane.b32.xlu0 %v5646, 80
        %v5815 = vpop.permute.xlu0 %5814
        %5816 = vrot.lane.b32.xlu0 %v5647, 80
        %v5817 = vpop.permute.xlu0 %5816
        %5818 = vrot.lane.b32.xlu0 %v5648, 80
        %v5819 = vpop.permute.xlu0 %5818
        %5820 = vrot.lane.b32.xlu0 %v5649, 80
        %v5821 = vpop.permute.xlu0 %5820
        %5822 = vrot.lane.b32.xlu0 %v5650, 80
        %v5823 = vpop.permute.xlu0 %5822
        %5824 = vrot.lane.b32.xlu0 %v5651, 80
        %v5825 = vpop.permute.xlu0 %5824
        %5826 = vrot.lane.b32.xlu0 %v5652, 80
        %v5827 = vpop.permute.xlu0 %5826
        %5828 = vrot.lane.b32.xlu0 %v5653, 80
        %v5829 = vpop.permute.xlu0 %5828
        %5846 = vrot.lane.b32.xlu0 %v5654, 96
        %v5847 = vpop.permute.xlu0 %5846
        %5848 = vrot.lane.b32.xlu0 %v5655, 96
        %v5849 = vpop.permute.xlu0 %5848
        %5850 = vrot.lane.b32.xlu0 %v5656, 96
        %v5851 = vpop.permute.xlu0 %5850
        %5852 = vrot.lane.b32.xlu0 %v5657, 96
        %v5853 = vpop.permute.xlu0 %5852
        %5854 = vrot.lane.b32.xlu0 %v5658, 96
        %v5855 = vpop.permute.xlu0 %5854
        %5856 = vrot.lane.b32.xlu0 %v5659, 96
        %v5857 = vpop.permute.xlu0 %5856
        %5858 = vrot.lane.b32.xlu0 %v5660, 96
        %v5859 = vpop.permute.xlu0 %5858
        %5860 = vrot.lane.b32.xlu0 %v5661, 96
        %v5861 = vpop.permute.xlu0 %5860
        %5878 = vrot.lane.b32.xlu0 %v5662, 112
        %v5879 = vpop.permute.xlu0 %5878
        %5880 = vrot.lane.b32.xlu0 %v5663, 112
        %v5881 = vpop.permute.xlu0 %5880
        %5882 = vrot.lane.b32.xlu0 %v5664, 112
        %v5883 = vpop.permute.xlu0 %5882
        %5884 = vrot.lane.b32.xlu0 %v5665, 112
        %v5885 = vpop.permute.xlu0 %5884
        %5886 = vrot.lane.b32.xlu0 %v5666, 112
        %v5887 = vpop.permute.xlu0 %5886
        %5888 = vrot.lane.b32.xlu0 %v5667, 112
        %v5889 = vpop.permute.xlu0 %5888
        %5890 = vrot.lane.b32.xlu0 %v5668, 112
        %v5891 = vpop.permute.xlu0 %5890
        %5892 = vrot.lane.b32.xlu0 %v5669, 112
        %v5893 = vpop.permute.xlu0 %5892
        %v5902 = vsel %vm5071, %v5598, %v5687
        %v5903 = vsel %vm5071, %v5599, %v5689
        %v5904 = vsel %vm5071, %v5600, %v5691
        %v5905 = vsel %vm5071, %v5601, %v5693
        %v5906 = vsel %vm5071, %v5602, %v5695
        %v5907 = vsel %vm5071, %v5603, %v5697
        %v5908 = vsel %vm5071, %v5604, %v5699
        %v5909 = vsel %vm5071, %v5605, %v5701
        %v5910 = vsel %vm5080, %v5902, %v5719
        %v5911 = vsel %vm5080, %v5903, %v5721
        %v5912 = vsel %vm5080, %v5904, %v5723
        %v5913 = vsel %vm5080, %v5905, %v5725
        %v5914 = vsel %vm5080, %v5906, %v5727
        %v5915 = vsel %vm5080, %v5907, %v5729
        %v5916 = vsel %vm5080, %v5908, %v5731
        %v5917 = vsel %vm5080, %v5909, %v5733
        %v5918 = vsel %vm5089, %v5910, %v5751
        %v5919 = vsel %vm5089, %v5911, %v5753
        %v5920 = vsel %vm5089, %v5912, %v5755
        %v5921 = vsel %vm5089, %v5913, %v5757
        %v5922 = vsel %vm5089, %v5914, %v5759
        %v5923 = vsel %vm5089, %v5915, %v5761
        %v5924 = vsel %vm5089, %v5916, %v5763
        %v5925 = vsel %vm5089, %v5917, %v5765
        %v5926 = vsel %vm5098, %v5918, %v5783
        %v5927 = vsel %vm5098, %v5919, %v5785
        %v5928 = vsel %vm5098, %v5920, %v5787
        %v5929 = vsel %vm5098, %v5921, %v5789
        %v5930 = vsel %vm5098, %v5922, %v5791
        %v5931 = vsel %vm5098, %v5923, %v5793
        %v5932 = vsel %vm5098, %v5924, %v5795
        %v5933 = vsel %vm5098, %v5925, %v5797
        %v5934 = vsel %vm5107, %v5926, %v5815
        %v5935 = vsel %vm5107, %v5927, %v5817
        %v5936 = vsel %vm5107, %v5928, %v5819
        %v5937 = vsel %vm5107, %v5929, %v5821
        %v5938 = vsel %vm5107, %v5930, %v5823
        %v5939 = vsel %vm5107, %v5931, %v5825
        %v5940 = vsel %vm5107, %v5932, %v5827
        %v5941 = vsel %vm5107, %v5933, %v5829
        %v5942 = vsel %vm5116, %v5934, %v5847
        %v5943 = vsel %vm5116, %v5935, %v5849
        %v5944 = vsel %vm5116, %v5936, %v5851
        %v5945 = vsel %vm5116, %v5937, %v5853
        %v5946 = vsel %vm5116, %v5938, %v5855
        %v5947 = vsel %vm5116, %v5939, %v5857
        %v5948 = vsel %vm5116, %v5940, %v5859
        %v5949 = vsel %vm5116, %v5941, %v5861
        %v5950 = vsel %vm5125, %v5942, %v5879
        %v5951 = vsel %vm5125, %v5943, %v5881
        %v5952 = vsel %vm5125, %v5944, %v5883
        %v5953 = vsel %vm5125, %v5945, %v5885
        %v5954 = vsel %vm5125, %v5946, %v5887
        %v5955 = vsel %vm5125, %v5947, %v5889
        %v5956 = vsel %vm5125, %v5948, %v5891
        %v5957 = vsel %vm5125, %v5949, %v5893
        %v5958 = vld [vmem:[%s5] sm:$0xff]
        %v5959 = vld [vmem:[%s5 + $0x8] sm:$0xff]
        %v5960 = vld [vmem:[%s5 + $0x10] sm:$0xff]
        %v5961 = vld [vmem:[%s5 + $0x18] sm:$0xff]
        %v5962 = vld [vmem:[%s5 + $0x20] sm:$0xff]
        %v5963 = vld [vmem:[%s5 + $0x28] sm:$0xff]
        %v5964 = vld [vmem:[%s5 + $0x30] sm:$0xff]
        %v5965 = vld [vmem:[%s5 + $0x38] sm:$0xff]
        %v5966 = vld [vmem:[%s5 + $0x40] sm:$0xff]
        %v5967 = vld [vmem:[%s5 + $0x48] sm:$0xff]
        %v5968 = vld [vmem:[%s5 + $0x50] sm:$0xff]
        %v5969 = vld [vmem:[%s5 + $0x58] sm:$0xff]
        %v5970 = vld [vmem:[%s5 + $0x60] sm:$0xff]
        %v5971 = vld [vmem:[%s5 + $0x68] sm:$0xff]
        %v5972 = vld [vmem:[%s5 + $0x70] sm:$0xff]
        %v5973 = vld [vmem:[%s5 + $0x78] sm:$0xff]
        %v5974 = vld [vmem:[%s5 + $0x80] sm:$0xff]
        %v5975 = vld [vmem:[%s5 + $0x88] sm:$0xff]
        %v5976 = vld [vmem:[%s6] sm:$0x1]
        %v5978 = vperm.slane %v5976, 0
        %v5981 = vsel %vm5071, %v5670, 0
        %v5984 = vsel %vm5071, %v5671, 0
        %v5987 = vsel %vm5071, %v5672, 0
        %v5990 = vsel %vm5071, %v5673, 0
        %v5993 = vsel %vm5071, %v5674, 0
        %v5996 = vsel %vm5071, %v5675, 0
        %v5999 = vsel %vm5071, %v5676, 0
        %v6002 = vsel %vm5071, %v5677, 0
        %6004 = vmatpush.msra.mxu0 %v5973
        %6005 = vmatpush.msra.mxu0 %v5972
        %6006 = vmatpush.msra.mxu0 %v5971
        %6007 = vmatpush.msra.mxu0 %v5970
        %6008 = vmatpush.msra.mxu0 %v5969
        %6009 = vmatpush.msra.mxu0 %v5968
        %6010 = vmatpush.msra.mxu0 %v5967
        %6011 = vmatpush.msra.mxu0 %v5966
        %6012 = vmatpush.msra.mxu0 %v5965
        %6013 = vmatpush.msra.mxu0 %v5964
        %6014 = vmatpush.msra.mxu0 %v5963
        %6015 = vmatpush.msra.mxu0 %v5962
        %6016 = vmatpush.msra.mxu0 %v5961
        %6017 = vmatpush.msra.mxu0 %v5960
        %6018 = vmatpush.msra.mxu0 %v5959
        %6019 = vmatpush.msra.mxu0 %v5958
        %6020 = vmatmul.f32.gmra.mxu0 %v5950
        %v6021 = vpop.f32.mrf.mxu0
        %v6022 = vadd.f32 %v5978, %v6021
        %6023 = vmatmul.f32.gmra.mxu0 %v5951
        %v6024 = vpop.f32.mrf.mxu0
        %v6025 = vadd.f32 %v5978, %v6024
        %6026 = vmatmul.f32.gmra.mxu0 %v5952
        %v6027 = vpop.f32.mrf.mxu0
        %v6028 = vadd.f32 %v5978, %v6027
        %6029 = vmatmul.f32.gmra.mxu0 %v5953
        %v6030 = vpop.f32.mrf.mxu0
        %v6031 = vadd.f32 %v5978, %v6030
        %6032 = vmatmul.f32.gmra.mxu0 %v5954
        %v6033 = vpop.f32.mrf.mxu0
        %v6034 = vadd.f32 %v5978, %v6033
        %6035 = vmatmul.f32.gmra.mxu0 %v5955
        %v6036 = vpop.f32.mrf.mxu0
        %v6037 = vadd.f32 %v5978, %v6036
        %6038 = vmatmul.f32.gmra.mxu0 %v5956
        %v6039 = vpop.f32.mrf.mxu0
        %v6040 = vadd.f32 %v5978, %v6039
        %6041 = vmatmul.f32.gmra.mxu0 %v5957
        %v6042 = vpop.f32.mrf.mxu0
        %v6043 = vadd.f32 %v5978, %v6042
        %6044 = vdwg.mxu0
        %6045 = vmatpush.msra.mxu0 0.0
        %6046 = vmatpush.msra.mxu0 0.0
        %6047 = vmatpush.msra.mxu0 0.0
        %6048 = vmatpush.msra.mxu0 0.0
        %6049 = vmatpush.msra.mxu0 0.0
        %6050 = vmatpush.msra.mxu0 0.0
        %6051 = vmatpush.msra.mxu0 0.0
        %6052 = vmatpush.msra.mxu0 0.0
        %6053 = vmatpush.msra.mxu0 0.0
        %6054 = vmatpush.msra.mxu0 0.0
        %6055 = vmatpush.msra.mxu0 0.0
        %6056 = vmatpush.msra.mxu0 0.0
        %6057 = vmatpush.msra.mxu0 0.0
        %6058 = vmatpush.msra.mxu0 0.0
        %6059 = vmatpush.msra.mxu0 %v5975
        %6060 = vmatpush.msra.mxu0 %v5974
        %6061 = vmatmul.f32.gmra.mxu0 %v5981
        %v6062 = vpop.f32.mrf.mxu0
        %v6063 = vadd.f32 %v6022, %v6062
        %6064 = vmatmul.f32.gmra.mxu0 %v5984
        %v6065 = vpop.f32.mrf.mxu0
        %v6066 = vadd.f32 %v6025, %v6065
        %6067 = vmatmul.f32.gmra.mxu0 %v5987
        %v6068 = vpop.f32.mrf.mxu0
        %v6069 = vadd.f32 %v6028, %v6068
        %6070 = vmatmul.f32.gmra.mxu0 %v5990
        %v6071 = vpop.f32.mrf.mxu0
        %v6072 = vadd.f32 %v6031, %v6071
        %6073 = vmatmul.f32.gmra.mxu0 %v5993
        %v6074 = vpop.f32.mrf.mxu0
        %v6075 = vadd.f32 %v6034, %v6074
        %6076 = vmatmul.f32.gmra.mxu0 %v5996
        %v6077 = vpop.f32.mrf.mxu0
        %v6078 = vadd.f32 %v6037, %v6077
        %6079 = vmatmul.f32.gmra.mxu0 %v5999
        %v6080 = vpop.f32.mrf.mxu0
        %v6081 = vadd.f32 %v6040, %v6080
        %6082 = vmatmul.f32.gmra.mxu0 %v6002
        %v6083 = vpop.f32.mrf.mxu0
        %v6084 = vadd.f32 %v6043, %v6083
        %6085 = vdwg.mxu0
        %v6086 = vrot.slane %v6063, 1
        %v6087 = vrot.slane %v6066, 1
        %v6088 = vrot.slane %v6069, 1
        %v6089 = vrot.slane %v6072, 1
        %v6090 = vrot.slane %v6075, 1
        %v6091 = vrot.slane %v6078, 1
        %v6092 = vrot.slane %v6081, 1
        %v6093 = vrot.slane %v6084, 1
        %v6094 = vsel %vm1102, %v6092, %v6093
        %v6095 = vsel %vm1102, %v6091, %v6092
        %v6096 = vsel %vm1102, %v6090, %v6091
        %v6097 = vsel %vm1102, %v6089, %v6090
        %v6098 = vsel %vm1102, %v6088, %v6089
        %v6099 = vsel %vm1102, %v6087, %v6088
        %v6100 = vsel %vm1102, %v6086, %v6087
        %v6101 = vsel %vm1102, %v6093, %v6086
        %v6102 = vmax.f32 %v6063, %v6100
        %v6103 = vmax.f32 %v6066, %v6099
        %v6104 = vmax.f32 %v6069, %v6098
        %v6105 = vmax.f32 %v6072, %v6097
        %v6106 = vmax.f32 %v6075, %v6096
        %v6107 = vmax.f32 %v6078, %v6095
        %v6108 = vmax.f32 %v6081, %v6094
        %v6109 = vmax.f32 %v6084, %v6101
        %v6110 = vmax.f32 %v6102, %v6103
        %v6111 = vmax.f32 %v6103, %v6104
        %v6112 = vmax.f32 %v6104, %v6105
        %v6113 = vmax.f32 %v6105, %v6106
        %v6114 = vmax.f32 %v6106, %v6107
        %v6115 = vmax.f32 %v6107, %v6108
        %v6116 = vmax.f32 %v6108, %v6109
        %v6117 = vmax.f32 %v6109, %v6102
        %v6118 = vld [vmem:[%s16] sm:$0xff]
        %v6119 = vld [vmem:[%s16 + $0x8] sm:$0xff]
        %v6121 = vsel %vm5098, %v6118, 0
        %v6124 = vsel %vm5098, %v6119, 0
        %6126 = vmatpush.msra.mxu0 0.0
        %6127 = vmatpush.msra.mxu0 0.0
        %6128 = vmatpush.msra.mxu0 0.0
        %6129 = vmatpush.msra.mxu0 0.0
        %6130 = vmatpush.msra.mxu0 0.0
        %6131 = vmatpush.msra.mxu0 0.0
        %6132 = vmatpush.msra.mxu0 0.0
        %6133 = vmatpush.msra.mxu0 0.0
        %6134 = vmatpush.msra.mxu0 %v6117
        %6135 = vmatpush.msra.mxu0 %v6116
        %6136 = vmatpush.msra.mxu0 %v6115
        %6137 = vmatpush.msra.mxu0 %v6114
        %6138 = vmatpush.msra.mxu0 %v6113
        %6139 = vmatpush.msra.mxu0 %v6112
        %6140 = vmatpush.msra.mxu0 %v6111
        %6141 = vmatpush.msra.mxu0 %v6110
        %6142 = vmatmul.f32.gmra.mxu0 %v6121
        %v6143 = vpop.f32.mrf.mxu0
        %v6144 = vadd.f32 0.0, %v6143
        %6145 = vmatmul.f32.gmra.mxu0 %v6124
        %v6146 = vpop.f32.mrf.mxu0
        %v6147 = vadd.f32 0.0, %v6146
        %6148 = vdwg.mxu0
        %vm6149 = vcmp.gt.f32.partialorder %v6144, 0.0
        %vm6150 = vcmp.gt.f32.partialorder %v6147, 0.0
        %v6151 = vsel %vm6149, 1.0, -1.0
        %v6152 = vsel %vm6150, 1.0, -1.0
        %v6153 = vsel %vm6149, 1, 0
        %v6154 = vsel %vm6150, 1, 0
        %v6155 = vcvt.s32.f32 %v6153
        %v6156 = vcvt.s32.f32 %v6154
        %v6157 = vld [vmem:[%s19] sm:$0x1]
        %v6159 = vperm.slane %v6157, 0
        %v6161 = vmul.f32 %v6155, %v6159
        %v6162 = vmul.f32 %v6156, %v6159
        %vm6163 = vcmask 64512
        %v6164 = vsel %vm6163, %v6161, 0.0
        %6165 = vadd.xlane.f32.xlu0 %v6164
        %v6166 = vpop.xlane.xlu0 %6165
        %v6167 = vsel %vm6163, %v6162, 0.0
        %6168 = vadd.xlane.f32.xlu0 %v6167
        %v6169 = vpop.xlane.xlu0 %6168
        %v6170 = vcvt.f32.s32.to.zero.pseudo %v6166
        %v6171 = vcvt.f32.s32.to.zero.pseudo %v6169
        %vm6172 = vcmask 7168
        %6173 = vst.msk [vmem:[%s738] sm:$0xff] %vm6172, %v6170
        %6174 = vst.msk [vmem:[%s738 + $0x8] sm:$0xff] %vm6172, %v6171
        %v6175 = vld [vmem:[#allocation8] sm:$0xff]
        %v6176 = vld [vmem:[#allocation8 + $0x8] sm:$0xff]
        %v6177 = vld [vmem:[#allocation8 + $0x10] sm:$0xff]
        %v6178 = vld [vmem:[#allocation8 + $0x18] sm:$0xff]
        %v6179 = vld [vmem:[#allocation8 + $0x20] sm:$0xff]
        %v6180 = vld [vmem:[#allocation8 + $0x28] sm:$0xff]
        %v6181 = vld [vmem:[#allocation8 + $0x30] sm:$0xff]
        %v6182 = vld [vmem:[#allocation8 + $0x38] sm:$0xff]
        %v6184 = vsel %vm5071, %v6175, 0
        %v6187 = vsel %vm5071, %v6176, 0
        %v6190 = vsel %vm5071, %v6177, 0
        %v6193 = vsel %vm5071, %v6178, 0
        %v6196 = vsel %vm5071, %v6179, 0
        %v6199 = vsel %vm5071, %v6180, 0
        %v6202 = vsel %vm5071, %v6181, 0
        %v6205 = vsel %vm5071, %v6182, 0
        %6207 = vmatpush.msra.mxu0 0.0
        %6208 = vmatpush.msra.mxu0 0.0
        %6209 = vmatpush.msra.mxu0 0.0
        %6210 = vmatpush.msra.mxu0 0.0
        %6211 = vmatpush.msra.mxu0 0.0
        %6212 = vmatpush.msra.mxu0 0.0
        %6213 = vmatpush.msra.mxu0 0.0
        %6214 = vmatpush.msra.mxu0 0.0
        %6215 = vmatpush.msra.mxu0 0.0
        %6216 = vmatpush.msra.mxu0 0.0
        %6217 = vmatpush.msra.mxu0 0.0
        %6218 = vmatpush.msra.mxu0 0.0
        %6219 = vmatpush.msra.mxu0 0.0
        %6220 = vmatpush.msra.mxu0 0.0
        %6221 = vmatpush.msra.mxu0 %v6152
        %6222 = vmatpush.msra.mxu0 %v6151
        %6223 = vmatmul.f32.gmra.mxu0 %v6184
        %v6224 = vpop.f32.mrf.mxu0
        %v6225 = vadd.f32 0.0, %v6224
        %6226 = vmatmul.f32.gmra.mxu0 %v6187
        %v6227 = vpop.f32.mrf.mxu0
        %v6228 = vadd.f32 0.0, %v6227
        %6229 = vmatmul.f32.gmra.mxu0 %v6190
        %v6230 = vpop.f32.mrf.mxu0
        %v6231 = vadd.f32 0.0, %v6230
        %6232 = vmatmul.f32.gmra.mxu0 %v6193
        %v6233 = vpop.f32.mrf.mxu0
        %v6234 = vadd.f32 0.0, %v6233
        %6235 = vmatmul.f32.gmra.mxu0 %v6196
        %v6236 = vpop.f32.mrf.mxu0
        %v6237 = vadd.f32 0.0, %v6236
        %6238 = vmatmul.f32.gmra.mxu0 %v6199
        %v6239 = vpop.f32.mrf.mxu0
        %v6240 = vadd.f32 0.0, %v6239
        %6241 = vmatmul.f32.gmra.mxu0 %v6202
        %v6242 = vpop.f32.mrf.mxu0
        %v6243 = vadd.f32 0.0, %v6242
        %6244 = vmatmul.f32.gmra.mxu0 %v6205
        %v6245 = vpop.f32.mrf.mxu0
        %v6246 = vadd.f32 0.0, %v6245
        %6247 = vdwg.mxu0
        %v6248 = vrot.slane %v6225, 7
        %v6249 = vrot.slane %v6228, 7
        %v6250 = vrot.slane %v6231, 7
        %v6251 = vrot.slane %v6234, 7
        %v6252 = vrot.slane %v6237, 7
        %v6253 = vrot.slane %v6240, 7
        %v6254 = vrot.slane %v6243, 7
        %v6255 = vrot.slane %v6246, 7
        %v6256 = vsel %vm845, %v6254, %v6255
        %v6257 = vsel %vm845, %v6253, %v6254
        %v6258 = vsel %vm845, %v6252, %v6253
        %v6259 = vsel %vm845, %v6251, %v6252
        %v6260 = vsel %vm845, %v6250, %v6251
        %v6261 = vsel %vm845, %v6249, %v6250
        %v6262 = vsel %vm845, %v6248, %v6249
        %v6263 = vsel %vm845, %v6255, %v6248
        %v6264 = vmul.f32 %v6256, %v4506
        %v6265 = vmul.f32 %v6263, %v4511
        %v6266 = vmul.f32 %v6262, %v4516
        %v6267 = vmul.f32 %v6261, %v4521
        %v6268 = vmul.f32 %v6260, %v4526
        %v6269 = vmul.f32 %v6259, %v4531
        %v6270 = vmul.f32 %v6258, %v4536
        %v6271 = vmul.f32 %v6257, %v4541
        %v6272 = vmul.f32 %v6246, %v4553
        %v6273 = vmul.f32 %v6225, %v4557
        %v6274 = vmul.f32 %v6228, %v4561
        %v6275 = vmul.f32 %v6231, %v4565
        %v6276 = vmul.f32 %v6234, %v4569
        %v6277 = vmul.f32 %v6237, %v4573
        %v6278 = vmul.f32 %v6240, %v4577
        %v6279 = vmul.f32 %v6243, %v4581
        %v6280 = vrot.slane %v6225, 1
        %v6281 = vrot.slane %v6228, 1
        %v6282 = vrot.slane %v6231, 1
        %v6283 = vrot.slane %v6234, 1
        %v6284 = vrot.slane %v6237, 1
        %v6285 = vrot.slane %v6240, 1
        %v6286 = vrot.slane %v6243, 1
        %v6287 = vrot.slane %v6246, 1
        %v6288 = vsel %vm1102, %v6286, %v6287
        %v6289 = vsel %vm1102, %v6285, %v6286
        %v6290 = vsel %vm1102, %v6284, %v6285
        %v6291 = vsel %vm1102, %v6283, %v6284
        %v6292 = vsel %vm1102, %v6282, %v6283
        %v6293 = vsel %vm1102, %v6281, %v6282
        %v6294 = vsel %vm1102, %v6280, %v6281
        %v6295 = vsel %vm1102, %v6287, %v6280
        %v6296 = vmul.f32 %v6295, %v4609
        %v6297 = vmul.f32 %v6294, %v4613
        %v6298 = vmul.f32 %v6293, %v4617
        %v6299 = vmul.f32 %v6292, %v4621
        %v6300 = vmul.f32 %v6291, %v4625
        %v6301 = vmul.f32 %v6290, %v4629
        %v6302 = vmul.f32 %v6289, %v4633
        %v6303 = vmul.f32 %v6288, %v4637
        %v6304 = vmul.f32 %v6263, %v4649
        %v6305 = vmul.f32 %v6262, %v4653
        %v6306 = vmul.f32 %v6261, %v4657
        %v6307 = vmul.f32 %v6260, %v4661
        %v6308 = vmul.f32 %v6259, %v4665
        %v6309 = vmul.f32 %v6258, %v4669
        %v6310 = vmul.f32 %v6257, %v4673
        %v6311 = vmul.f32 %v6256, %v4677
        %v6312 = vmul.f32 %v6294, %v4689
        %v6313 = vmul.f32 %v6293, %v4693
        %v6314 = vmul.f32 %v6292, %v4697
        %v6315 = vmul.f32 %v6291, %v4701
        %v6316 = vmul.f32 %v6290, %v4705
        %v6317 = vmul.f32 %v6289, %v4709
        %v6318 = vmul.f32 %v6288, %v4713
        %v6319 = vmul.f32 %v6295, %v4717
        %v6320 = vmul.f32 %v6262, %v4729
        %v6321 = vmul.f32 %v6261, %v4733
        %v6322 = vmul.f32 %v6260, %v4737
        %v6323 = vmul.f32 %v6259, %v4741
        %v6324 = vmul.f32 %v6258, %v4745
        %v6325 = vmul.f32 %v6257, %v4749
        %v6326 = vmul.f32 %v6256, %v4753
        %v6327 = vmul.f32 %v6263, %v4757
        %v6328 = vmul.f32 %v6228, %v4769
        %v6329 = vmul.f32 %v6231, %v4773
        %v6330 = vmul.f32 %v6234, %v4777
        %v6331 = vmul.f32 %v6237, %v4781
        %v6332 = vmul.f32 %v6240, %v4785
        %v6333 = vmul.f32 %v6243, %v4789
        %v6334 = vmul.f32 %v6246, %v4793
        %v6335 = vmul.f32 %v6225, %v4797
        %v6336 = vmul.f32 %v6293, %v4809
        %v6337 = vmul.f32 %v6292, %v4813
        %v6338 = vmul.f32 %v6291, %v4817
        %v6339 = vmul.f32 %v6290, %v4821
        %v6340 = vmul.f32 %v6289, %v4825
        %v6341 = vmul.f32 %v6288, %v4829
        %v6342 = vmul.f32 %v6295, %v4833
        %v6343 = vmul.f32 %v6294, %v4837
        %6352 = vrot.lane.b32.xlu0 %v6272, 8
        %v6353 = vpop.permute.xlu0 %6352
        %6354 = vrot.lane.b32.xlu0 %v6273, 8
        %v6355 = vpop.permute.xlu0 %6354
        %6356 = vrot.lane.b32.xlu0 %v6274, 8
        %v6357 = vpop.permute.xlu0 %6356
        %6358 = vrot.lane.b32.xlu0 %v6275, 8
        %v6359 = vpop.permute.xlu0 %6358
        %6360 = vrot.lane.b32.xlu0 %v6276, 8
        %v6361 = vpop.permute.xlu0 %6360
        %6362 = vrot.lane.b32.xlu0 %v6277, 8
        %v6363 = vpop.permute.xlu0 %6362
        %6364 = vrot.lane.b32.xlu0 %v6278, 8
        %v6365 = vpop.permute.xlu0 %6364
        %6366 = vrot.lane.b32.xlu0 %v6279, 8
        %v6367 = vpop.permute.xlu0 %6366
        %6384 = vrot.lane.b32.xlu0 %v6296, 16
        %v6385 = vpop.permute.xlu0 %6384
        %6386 = vrot.lane.b32.xlu0 %v6297, 16
        %v6387 = vpop.permute.xlu0 %6386
        %6388 = vrot.lane.b32.xlu0 %v6298, 16
        %v6389 = vpop.permute.xlu0 %6388
        %6390 = vrot.lane.b32.xlu0 %v6299, 16
        %v6391 = vpop.permute.xlu0 %6390
        %6392 = vrot.lane.b32.xlu0 %v6300, 16
        %v6393 = vpop.permute.xlu0 %6392
        %6394 = vrot.lane.b32.xlu0 %v6301, 16
        %v6395 = vpop.permute.xlu0 %6394
        %6396 = vrot.lane.b32.xlu0 %v6302, 16
        %v6397 = vpop.permute.xlu0 %6396
        %6398 = vrot.lane.b32.xlu0 %v6303, 16
        %v6399 = vpop.permute.xlu0 %6398
        %6416 = vrot.lane.b32.xlu0 %v6304, 24
        %v6417 = vpop.permute.xlu0 %6416
        %6418 = vrot.lane.b32.xlu0 %v6305, 24
        %v6419 = vpop.permute.xlu0 %6418
        %6420 = vrot.lane.b32.xlu0 %v6306, 24
        %v6421 = vpop.permute.xlu0 %6420
        %6422 = vrot.lane.b32.xlu0 %v6307, 24
        %v6423 = vpop.permute.xlu0 %6422
        %6424 = vrot.lane.b32.xlu0 %v6308, 24
        %v6425 = vpop.permute.xlu0 %6424
        %6426 = vrot.lane.b32.xlu0 %v6309, 24
        %v6427 = vpop.permute.xlu0 %6426
        %6428 = vrot.lane.b32.xlu0 %v6310, 24
        %v6429 = vpop.permute.xlu0 %6428
        %6430 = vrot.lane.b32.xlu0 %v6311, 24
        %v6431 = vpop.permute.xlu0 %6430
        %6448 = vrot.lane.b32.xlu0 %v6225, 32
        %v6449 = vpop.permute.xlu0 %6448
        %6450 = vrot.lane.b32.xlu0 %v6228, 32
        %v6451 = vpop.permute.xlu0 %6450
        %6452 = vrot.lane.b32.xlu0 %v6231, 32
        %v6453 = vpop.permute.xlu0 %6452
        %6454 = vrot.lane.b32.xlu0 %v6234, 32
        %v6455 = vpop.permute.xlu0 %6454
        %6456 = vrot.lane.b32.xlu0 %v6237, 32
        %v6457 = vpop.permute.xlu0 %6456
        %6458 = vrot.lane.b32.xlu0 %v6240, 32
        %v6459 = vpop.permute.xlu0 %6458
        %6460 = vrot.lane.b32.xlu0 %v6243, 32
        %v6461 = vpop.permute.xlu0 %6460
        %6462 = vrot.lane.b32.xlu0 %v6246, 32
        %v6463 = vpop.permute.xlu0 %6462
        %6480 = vrot.lane.b32.xlu0 %v6312, 40
        %v6481 = vpop.permute.xlu0 %6480
        %6482 = vrot.lane.b32.xlu0 %v6313, 40
        %v6483 = vpop.permute.xlu0 %6482
        %6484 = vrot.lane.b32.xlu0 %v6314, 40
        %v6485 = vpop.permute.xlu0 %6484
        %6486 = vrot.lane.b32.xlu0 %v6315, 40
        %v6487 = vpop.permute.xlu0 %6486
        %6488 = vrot.lane.b32.xlu0 %v6316, 40
        %v6489 = vpop.permute.xlu0 %6488
        %6490 = vrot.lane.b32.xlu0 %v6317, 40
        %v6491 = vpop.permute.xlu0 %6490
        %6492 = vrot.lane.b32.xlu0 %v6318, 40
        %v6493 = vpop.permute.xlu0 %6492
        %6494 = vrot.lane.b32.xlu0 %v6319, 40
        %v6495 = vpop.permute.xlu0 %6494
        %6512 = vrot.lane.b32.xlu0 %v6320, 48
        %v6513 = vpop.permute.xlu0 %6512
        %6514 = vrot.lane.b32.xlu0 %v6321, 48
        %v6515 = vpop.permute.xlu0 %6514
        %6516 = vrot.lane.b32.xlu0 %v6322, 48
        %v6517 = vpop.permute.xlu0 %6516
        %6518 = vrot.lane.b32.xlu0 %v6323, 48
        %v6519 = vpop.permute.xlu0 %6518
        %6520 = vrot.lane.b32.xlu0 %v6324, 48
        %v6521 = vpop.permute.xlu0 %6520
        %6522 = vrot.lane.b32.xlu0 %v6325, 48
        %v6523 = vpop.permute.xlu0 %6522
        %6524 = vrot.lane.b32.xlu0 %v6326, 48
        %v6525 = vpop.permute.xlu0 %6524
        %6526 = vrot.lane.b32.xlu0 %v6327, 48
        %v6527 = vpop.permute.xlu0 %6526
        %6544 = vrot.lane.b32.xlu0 %v6328, 56
        %v6545 = vpop.permute.xlu0 %6544
        %6546 = vrot.lane.b32.xlu0 %v6329, 56
        %v6547 = vpop.permute.xlu0 %6546
        %6548 = vrot.lane.b32.xlu0 %v6330, 56
        %v6549 = vpop.permute.xlu0 %6548
        %6550 = vrot.lane.b32.xlu0 %v6331, 56
        %v6551 = vpop.permute.xlu0 %6550
        %6552 = vrot.lane.b32.xlu0 %v6332, 56
        %v6553 = vpop.permute.xlu0 %6552
        %6554 = vrot.lane.b32.xlu0 %v6333, 56
        %v6555 = vpop.permute.xlu0 %6554
        %6556 = vrot.lane.b32.xlu0 %v6334, 56
        %v6557 = vpop.permute.xlu0 %6556
        %6558 = vrot.lane.b32.xlu0 %v6335, 56
        %v6559 = vpop.permute.xlu0 %6558
        %6576 = vrot.lane.b32.xlu0 %v6336, 64
        %v6577 = vpop.permute.xlu0 %6576
        %6578 = vrot.lane.b32.xlu0 %v6337, 64
        %v6579 = vpop.permute.xlu0 %6578
        %6580 = vrot.lane.b32.xlu0 %v6338, 64
        %v6581 = vpop.permute.xlu0 %6580
        %6582 = vrot.lane.b32.xlu0 %v6339, 64
        %v6583 = vpop.permute.xlu0 %6582
        %6584 = vrot.lane.b32.xlu0 %v6340, 64
        %v6585 = vpop.permute.xlu0 %6584
        %6586 = vrot.lane.b32.xlu0 %v6341, 64
        %v6587 = vpop.permute.xlu0 %6586
        %6588 = vrot.lane.b32.xlu0 %v6342, 64
        %v6589 = vpop.permute.xlu0 %6588
        %6590 = vrot.lane.b32.xlu0 %v6343, 64
        %v6591 = vpop.permute.xlu0 %6590
        %v6600 = vsel %vm6163, %v6264, %v6353
        %v6601 = vsel %vm6163, %v6265, %v6355
        %v6602 = vsel %vm6163, %v6266, %v6357
        %v6603 = vsel %vm6163, %v6267, %v6359
        %v6604 = vsel %vm6163, %v6268, %v6361
        %v6605 = vsel %vm6163, %v6269, %v6363
        %v6606 = vsel %vm6163, %v6270, %v6365
        %v6607 = vsel %vm6163, %v6271, %v6367
        %v6608 = vsel %vm5071, %v6600, %v6385
        %v6609 = vsel %vm5071, %v6601, %v6387
        %v6610 = vsel %vm5071, %v6602, %v6389
        %v6611 = vsel %vm5071, %v6603, %v6391
        %v6612 = vsel %vm5071, %v6604, %v6393
        %v6613 = vsel %vm5071, %v6605, %v6395
        %v6614 = vsel %vm5071, %v6606, %v6397
        %v6615 = vsel %vm5071, %v6607, %v6399
        %vm6616 = vcmask 195584
        %v6617 = vsel %vm6616, %v6608, %v6417
        %v6618 = vsel %vm6616, %v6609, %v6419
        %v6619 = vsel %vm6616, %v6610, %v6421
        %v6620 = vsel %vm6616, %v6611, %v6423
        %v6621 = vsel %vm6616, %v6612, %v6425
        %v6622 = vsel %vm6616, %v6613, %v6427
        %v6623 = vsel %vm6616, %v6614, %v6429
        %v6624 = vsel %vm6616, %v6615, %v6431
        %v6625 = vsel %vm5080, %v6617, %v6449
        %v6626 = vsel %vm5080, %v6618, %v6451
        %v6627 = vsel %vm5080, %v6619, %v6453
        %v6628 = vsel %vm5080, %v6620, %v6455
        %v6629 = vsel %vm5080, %v6621, %v6457
        %v6630 = vsel %vm5080, %v6622, %v6459
        %v6631 = vsel %vm5080, %v6623, %v6461
        %v6632 = vsel %vm5080, %v6624, %v6463
        %vm6633 = vcmask 326656
        %v6634 = vsel %vm6633, %v6625, %v6481
        %v6635 = vsel %vm6633, %v6626, %v6483
        %v6636 = vsel %vm6633, %v6627, %v6485
        %v6637 = vsel %vm6633, %v6628, %v6487
        %v6638 = vsel %vm6633, %v6629, %v6489
        %v6639 = vsel %vm6633, %v6630, %v6491
        %v6640 = vsel %vm6633, %v6631, %v6493
        %v6641 = vsel %vm6633, %v6632, %v6495
        %v6642 = vsel %vm5089, %v6634, %v6513
        %v6643 = vsel %vm5089, %v6635, %v6515
        %v6644 = vsel %vm5089, %v6636, %v6517
        %v6645 = vsel %vm5089, %v6637, %v6519
        %v6646 = vsel %vm5089, %v6638, %v6521
        %v6647 = vsel %vm5089, %v6639, %v6523
        %v6648 = vsel %vm5089, %v6640, %v6525
        %v6649 = vsel %vm5089, %v6641, %v6527
        %vm6650 = vcmask 457728
        %v6651 = vsel %vm6650, %v6642, %v6545
        %v6652 = vsel %vm6650, %v6643, %v6547
        %v6653 = vsel %vm6650, %v6644, %v6549
        %v6654 = vsel %vm6650, %v6645, %v6551
        %v6655 = vsel %vm6650, %v6646, %v6553
        %v6656 = vsel %vm6650, %v6647, %v6555
        %v6657 = vsel %vm6650, %v6648, %v6557
        %v6658 = vsel %vm6650, %v6649, %v6559
        %v6659 = vsel %vm5098, %v6651, %v6577
        %v6660 = vsel %vm5098, %v6652, %v6579
        %v6661 = vsel %vm5098, %v6653, %v6581
        %v6662 = vsel %vm5098, %v6654, %v6583
        %v6663 = vsel %vm5098, %v6655, %v6585
        %v6664 = vsel %vm5098, %v6656, %v6587
        %v6665 = vsel %vm5098, %v6657, %v6589
        %v6666 = vsel %vm5098, %v6658, %v6591
        %v6667 = vld [vmem:[#allocation3] sm:$0xff]
        %v6668 = vld [vmem:[#allocation3 + $0x8] sm:$0xff]
        %v6669 = vld [vmem:[#allocation3 + $0x10] sm:$0xff]
        %v6670 = vld [vmem:[#allocation3 + $0x18] sm:$0xff]
        %v6671 = vld [vmem:[#allocation3 + $0x20] sm:$0xff]
        %v6672 = vld [vmem:[#allocation3 + $0x28] sm:$0xff]
        %v6673 = vld [vmem:[#allocation3 + $0x30] sm:$0xff]
        %v6674 = vld [vmem:[#allocation3 + $0x38] sm:$0xff]
        %v6675 = vld [vmem:[#allocation3 + $0x40] sm:$0xff]
        %v6676 = vld [vmem:[%s8] sm:$0x1]
        %v6678 = vperm.slane %v6676, 0
        %vm6680 = vcmask 588800
        %v6682 = vsel %vm6680, %v6659, 0
        %v6685 = vsel %vm6680, %v6660, 0
        %v6688 = vsel %vm6680, %v6661, 0
        %v6691 = vsel %vm6680, %v6662, 0
        %v6694 = vsel %vm6680, %v6663, 0
        %v6697 = vsel %vm6680, %v6664, 0
        %v6700 = vsel %vm6680, %v6665, 0
        %v6703 = vsel %vm6680, %v6666, 0
        %6705 = vmatpush.msra.mxu0 0.0
        %6706 = vmatpush.msra.mxu0 0.0
        %6707 = vmatpush.msra.mxu0 0.0
        %6708 = vmatpush.msra.mxu0 0.0
        %6709 = vmatpush.msra.mxu0 0.0
        %6710 = vmatpush.msra.mxu0 0.0
        %6711 = vmatpush.msra.mxu0 0.0
        %6712 = vmatpush.msra.mxu0 %v6675
        %6713 = vmatpush.msra.mxu0 %v6674
        %6714 = vmatpush.msra.mxu0 %v6673
        %6715 = vmatpush.msra.mxu0 %v6672
        %6716 = vmatpush.msra.mxu0 %v6671
        %6717 = vmatpush.msra.mxu0 %v6670
        %6718 = vmatpush.msra.mxu0 %v6669
        %6719 = vmatpush.msra.mxu0 %v6668
        %6720 = vmatpush.msra.mxu0 %v6667
        %6721 = vmatmul.f32.gmra.mxu0 %v6682
        %v6722 = vpop.f32.mrf.mxu0
        %v6723 = vadd.f32 %v6678, %v6722
        %6724 = vmatmul.f32.gmra.mxu0 %v6685
        %v6725 = vpop.f32.mrf.mxu0
        %v6726 = vadd.f32 %v6678, %v6725
        %6727 = vmatmul.f32.gmra.mxu0 %v6688
        %v6728 = vpop.f32.mrf.mxu0
        %v6729 = vadd.f32 %v6678, %v6728
        %6730 = vmatmul.f32.gmra.mxu0 %v6691
        %v6731 = vpop.f32.mrf.mxu0
        %v6732 = vadd.f32 %v6678, %v6731
        %6733 = vmatmul.f32.gmra.mxu0 %v6694
        %v6734 = vpop.f32.mrf.mxu0
        %v6735 = vadd.f32 %v6678, %v6734
        %6736 = vmatmul.f32.gmra.mxu0 %v6697
        %v6737 = vpop.f32.mrf.mxu0
        %v6738 = vadd.f32 %v6678, %v6737
        %6739 = vmatmul.f32.gmra.mxu0 %v6700
        %v6740 = vpop.f32.mrf.mxu0
        %v6741 = vadd.f32 %v6678, %v6740
        %6742 = vmatmul.f32.gmra.mxu0 %v6703
        %v6743 = vpop.f32.mrf.mxu0
        %v6744 = vadd.f32 %v6678, %v6743
        %6745 = vdwg.mxu0
        %v6746 = vmul.f32 %v6723, 0.5
        %v6747 = vmul.f32 %v6726, 0.5
        %v6748 = vmul.f32 %v6729, 0.5
        %v6749 = vmul.f32 %v6732, 0.5
        %v6750 = vmul.f32 %v6735, 0.5
        %v6751 = vmul.f32 %v6738, 0.5
        %v6752 = vmul.f32 %v6741, 0.5
        %v6753 = vmul.f32 %v6744, 0.5
        %v6754 = vmul.f32 %v6723, 0.70710677
        %v6755 = vmul.f32 %v6726, 0.70710677
        %v6756 = vmul.f32 %v6729, 0.70710677
        %v6757 = vmul.f32 %v6732, 0.70710677
        %v6758 = vmul.f32 %v6735, 0.70710677
        %v6759 = vmul.f32 %v6738, 0.70710677
        %v6760 = vmul.f32 %v6741, 0.70710677
        %v6761 = vmul.f32 %v6744, 0.70710677
        %vm6762 = vcmp.ge.f32.partialorder %v6754, 0.0
        %vm6763 = vcmp.ge.f32.partialorder %v6755, 0.0
        %vm6764 = vcmp.ge.f32.partialorder %v6756, 0.0
        %vm6765 = vcmp.ge.f32.partialorder %v6757, 0.0
        %vm6766 = vcmp.ge.f32.partialorder %v6758, 0.0
        %vm6767 = vcmp.ge.f32.partialorder %v6759, 0.0
        %vm6768 = vcmp.ge.f32.partialorder %v6760, 0.0
        %vm6769 = vcmp.ge.f32.partialorder %v6761, 0.0
        %v6770 = vsel %vm6762, 1.0, -1.0
        %v6771 = vsel %vm6763, 1.0, -1.0
        %v6772 = vsel %vm6764, 1.0, -1.0
        %v6773 = vsel %vm6765, 1.0, -1.0
        %v6774 = vsel %vm6766, 1.0, -1.0
        %v6775 = vsel %vm6767, 1.0, -1.0
        %v6776 = vsel %vm6768, 1.0, -1.0
        %v6777 = vsel %vm6769, 1.0, -1.0
        %v6778 = vand.u32 2147483647, %v6754
        %v6779 = vand.u32 2147483647, %v6755
        %v6780 = vand.u32 2147483647, %v6756
        %v6781 = vand.u32 2147483647, %v6757
        %v6782 = vand.u32 2147483647, %v6758
        %v6783 = vand.u32 2147483647, %v6759
        %v6784 = vand.u32 2147483647, %v6760
        %v6785 = vand.u32 2147483647, %v6761
        %v6786 = vmul.f32 %v6778, 0.3275911
        %v6787 = vmul.f32 %v6779, 0.3275911
        %v6788 = vmul.f32 %v6780, 0.3275911
        %v6789 = vmul.f32 %v6781, 0.3275911
        %v6790 = vmul.f32 %v6782, 0.3275911
        %v6791 = vmul.f32 %v6783, 0.3275911
        %v6792 = vmul.f32 %v6784, 0.3275911
        %v6793 = vmul.f32 %v6785, 0.3275911
        %v6794 = vadd.f32 %v6786, 1.0
        %v6795 = vadd.f32 %v6787, 1.0
        %v6796 = vadd.f32 %v6788, 1.0
        %v6797 = vadd.f32 %v6789, 1.0
        %v6798 = vadd.f32 %v6790, 1.0
        %v6799 = vadd.f32 %v6791, 1.0
        %v6800 = vadd.f32 %v6792, 1.0
        %v6801 = vadd.f32 %v6793, 1.0
        %v6802 = vrcp.pop %v6794
        %v6803 = vmul.f32 %v6794, %v6802
        %v6804 = vsub.f32 1.0, %v6803
        %v6805 = vmul.f32 %v6802, %v6804
        %v6806 = vadd.f32 %v6802, %v6805
        %vm6807 = vweird.f32 %v6794
        %vm6808 = vweird.f32 %v6802
        %vm6809 = vmor %vm6807, %vm6808
        %v6810 = vsel %vm6809, %v6802, %v6806
        %v6811 = vand.u32 2147483647, %v6794
        %vm6812 = vcmp.eq.f32.partialorder %v6811, 8.507059e+37
        %v6813 = vand.u32 %v6794, 2147483648
        %v6814 = vor.u32 1.1754944e-38, %v6813
        %v6815 = vsel %vm6812, %v6814, %v6810
        %v6816 = vmul.f32 1.0, %v6815
        %v6817 = vrcp.pop %v6795
        %v6818 = vmul.f32 %v6795, %v6817
        %v6819 = vsub.f32 1.0, %v6818
        %v6820 = vmul.f32 %v6817, %v6819
        %v6821 = vadd.f32 %v6817, %v6820
        %vm6822 = vweird.f32 %v6795
        %vm6823 = vweird.f32 %v6817
        %vm6824 = vmor %vm6822, %vm6823
        %v6825 = vsel %vm6824, %v6817, %v6821
        %v6826 = vand.u32 2147483647, %v6795
        %vm6827 = vcmp.eq.f32.partialorder %v6826, 8.507059e+37
        %v6828 = vand.u32 %v6795, 2147483648
        %v6829 = vor.u32 1.1754944e-38, %v6828
        %v6830 = vsel %vm6827, %v6829, %v6825
        %v6831 = vmul.f32 1.0, %v6830
        %v6832 = vrcp.pop %v6796
        %v6833 = vmul.f32 %v6796, %v6832
        %v6834 = vsub.f32 1.0, %v6833
        %v6835 = vmul.f32 %v6832, %v6834
        %v6836 = vadd.f32 %v6832, %v6835
        %vm6837 = vweird.f32 %v6796
        %vm6838 = vweird.f32 %v6832
        %vm6839 = vmor %vm6837, %vm6838
        %v6840 = vsel %vm6839, %v6832, %v6836
        %v6841 = vand.u32 2147483647, %v6796
        %vm6842 = vcmp.eq.f32.partialorder %v6841, 8.507059e+37
        %v6843 = vand.u32 %v6796, 2147483648
        %v6844 = vor.u32 1.1754944e-38, %v6843
        %v6845 = vsel %vm6842, %v6844, %v6840
        %v6846 = vmul.f32 1.0, %v6845
        %v6847 = vrcp.pop %v6797
        %v6848 = vmul.f32 %v6797, %v6847
        %v6849 = vsub.f32 1.0, %v6848
        %v6850 = vmul.f32 %v6847, %v6849
        %v6851 = vadd.f32 %v6847, %v6850
        %vm6852 = vweird.f32 %v6797
        %vm6853 = vweird.f32 %v6847
        %vm6854 = vmor %vm6852, %vm6853
        %v6855 = vsel %vm6854, %v6847, %v6851
        %v6856 = vand.u32 2147483647, %v6797
        %vm6857 = vcmp.eq.f32.partialorder %v6856, 8.507059e+37
        %v6858 = vand.u32 %v6797, 2147483648
        %v6859 = vor.u32 1.1754944e-38, %v6858
        %v6860 = vsel %vm6857, %v6859, %v6855
        %v6861 = vmul.f32 1.0, %v6860
        %v6862 = vrcp.pop %v6798
        %v6863 = vmul.f32 %v6798, %v6862
        %v6864 = vsub.f32 1.0, %v6863
        %v6865 = vmul.f32 %v6862, %v6864
        %v6866 = vadd.f32 %v6862, %v6865
        %vm6867 = vweird.f32 %v6798
        %vm6868 = vweird.f32 %v6862
        %vm6869 = vmor %vm6867, %vm6868
        %v6870 = vsel %vm6869, %v6862, %v6866
        %v6871 = vand.u32 2147483647, %v6798
        %vm6872 = vcmp.eq.f32.partialorder %v6871, 8.507059e+37
        %v6873 = vand.u32 %v6798, 2147483648
        %v6874 = vor.u32 1.1754944e-38, %v6873
        %v6875 = vsel %vm6872, %v6874, %v6870
        %v6876 = vmul.f32 1.0, %v6875
        %v6877 = vrcp.pop %v6799
        %v6878 = vmul.f32 %v6799, %v6877
        %v6879 = vsub.f32 1.0, %v6878
        %v6880 = vmul.f32 %v6877, %v6879
        %v6881 = vadd.f32 %v6877, %v6880
        %vm6882 = vweird.f32 %v6799
        %vm6883 = vweird.f32 %v6877
        %vm6884 = vmor %vm6882, %vm6883
        %v6885 = vsel %vm6884, %v6877, %v6881
        %v6886 = vand.u32 2147483647, %v6799
        %vm6887 = vcmp.eq.f32.partialorder %v6886, 8.507059e+37
        %v6888 = vand.u32 %v6799, 2147483648
        %v6889 = vor.u32 1.1754944e-38, %v6888
        %v6890 = vsel %vm6887, %v6889, %v6885
        %v6891 = vmul.f32 1.0, %v6890
        %v6892 = vrcp.pop %v6800
        %v6893 = vmul.f32 %v6800, %v6892
        %v6894 = vsub.f32 1.0, %v6893
        %v6895 = vmul.f32 %v6892, %v6894
        %v6896 = vadd.f32 %v6892, %v6895
        %vm6897 = vweird.f32 %v6800
        %vm6898 = vweird.f32 %v6892
        %vm6899 = vmor %vm6897, %vm6898
        %v6900 = vsel %vm6899, %v6892, %v6896
        %v6901 = vand.u32 2147483647, %v6800
        %vm6902 = vcmp.eq.f32.partialorder %v6901, 8.507059e+37
        %v6903 = vand.u32 %v6800, 2147483648
        %v6904 = vor.u32 1.1754944e-38, %v6903
        %v6905 = vsel %vm6902, %v6904, %v6900
        %v6906 = vmul.f32 1.0, %v6905
        %v6907 = vrcp.pop %v6801
        %v6908 = vmul.f32 %v6801, %v6907
        %v6909 = vsub.f32 1.0, %v6908
        %v6910 = vmul.f32 %v6907, %v6909
        %v6911 = vadd.f32 %v6907, %v6910
        %vm6912 = vweird.f32 %v6801
        %vm6913 = vweird.f32 %v6907
        %vm6914 = vmor %vm6912, %vm6913
        %v6915 = vsel %vm6914, %v6907, %v6911
        %v6916 = vand.u32 2147483647, %v6801
        %vm6917 = vcmp.eq.f32.partialorder %v6916, 8.507059e+37
        %v6918 = vand.u32 %v6801, 2147483648
        %v6919 = vor.u32 1.1754944e-38, %v6918
        %v6920 = vsel %vm6917, %v6919, %v6915
        %v6921 = vmul.f32 1.0, %v6920
        %v6922 = vmul.f32 %v6816, 1.0614054
        %v6923 = vmul.f32 %v6831, 1.0614054
        %v6924 = vmul.f32 %v6846, 1.0614054
        %v6925 = vmul.f32 %v6861, 1.0614054
        %v6926 = vmul.f32 %v6876, 1.0614054
        %v6927 = vmul.f32 %v6891, 1.0614054
        %v6928 = vmul.f32 %v6906, 1.0614054
        %v6929 = vmul.f32 %v6921, 1.0614054
        %v6930 = vadd.f32 %v6922, -1.4531521
        %v6931 = vadd.f32 %v6923, -1.4531521
        %v6932 = vadd.f32 %v6924, -1.4531521
        %v6933 = vadd.f32 %v6925, -1.4531521
        %v6934 = vadd.f32 %v6926, -1.4531521
        %v6935 = vadd.f32 %v6927, -1.4531521
        %v6936 = vadd.f32 %v6928, -1.4531521
        %v6937 = vadd.f32 %v6929, -1.4531521
        %v6938 = vmul.f32 %v6930, %v6816
        %v6939 = vmul.f32 %v6931, %v6831
        %v6940 = vmul.f32 %v6932, %v6846
        %v6941 = vmul.f32 %v6933, %v6861
        %v6942 = vmul.f32 %v6934, %v6876
        %v6943 = vmul.f32 %v6935, %v6891
        %v6944 = vmul.f32 %v6936, %v6906
        %v6945 = vmul.f32 %v6937, %v6921
        %v6946 = vadd.f32 %v6938, 1.4214138
        %v6947 = vadd.f32 %v6939, 1.4214138
        %v6948 = vadd.f32 %v6940, 1.4214138
        %v6949 = vadd.f32 %v6941, 1.4214138
        %v6950 = vadd.f32 %v6942, 1.4214138
        %v6951 = vadd.f32 %v6943, 1.4214138
        %v6952 = vadd.f32 %v6944, 1.4214138
        %v6953 = vadd.f32 %v6945, 1.4214138
        %v6954 = vmul.f32 %v6946, %v6816
        %v6955 = vmul.f32 %v6947, %v6831
        %v6956 = vmul.f32 %v6948, %v6846
        %v6957 = vmul.f32 %v6949, %v6861
        %v6958 = vmul.f32 %v6950, %v6876
        %v6959 = vmul.f32 %v6951, %v6891
        %v6960 = vmul.f32 %v6952, %v6906
        %v6961 = vmul.f32 %v6953, %v6921
        %v6962 = vadd.f32 %v6954, -0.28449672
        %v6963 = vadd.f32 %v6955, -0.28449672
        %v6964 = vadd.f32 %v6956, -0.28449672
        %v6965 = vadd.f32 %v6957, -0.28449672
        %v6966 = vadd.f32 %v6958, -0.28449672
        %v6967 = vadd.f32 %v6959, -0.28449672
        %v6968 = vadd.f32 %v6960, -0.28449672
        %v6969 = vadd.f32 %v6961, -0.28449672
        %v6970 = vmul.f32 %v6962, %v6816
        %v6971 = vmul.f32 %v6963, %v6831
        %v6972 = vmul.f32 %v6964, %v6846
        %v6973 = vmul.f32 %v6965, %v6861
        %v6974 = vmul.f32 %v6966, %v6876
        %v6975 = vmul.f32 %v6967, %v6891
        %v6976 = vmul.f32 %v6968, %v6906
        %v6977 = vmul.f32 %v6969, %v6921
        %v6978 = vadd.f32 %v6970, 0.2548296
        %v6979 = vadd.f32 %v6971, 0.2548296
        %v6980 = vadd.f32 %v6972, 0.2548296
        %v6981 = vadd.f32 %v6973, 0.2548296
        %v6982 = vadd.f32 %v6974, 0.2548296
        %v6983 = vadd.f32 %v6975, 0.2548296
        %v6984 = vadd.f32 %v6976, 0.2548296
        %v6985 = vadd.f32 %v6977, 0.2548296
        %v6986 = vmul.f32 %v6978, %v6816
        %v6987 = vmul.f32 %v6979, %v6831
        %v6988 = vmul.f32 %v6980, %v6846
        %v6989 = vmul.f32 %v6981, %v6861
        %v6990 = vmul.f32 %v6982, %v6876
        %v6991 = vmul.f32 %v6983, %v6891
        %v6992 = vmul.f32 %v6984, %v6906
        %v6993 = vmul.f32 %v6985, %v6921
        %v6994 = vsub.f32 0.0, %v6778
        %v6995 = vsub.f32 0.0, %v6779
        %v6996 = vsub.f32 0.0, %v6780
        %v6997 = vsub.f32 0.0, %v6781
        %v6998 = vsub.f32 0.0, %v6782
        %v6999 = vsub.f32 0.0, %v6783
        %v7000 = vsub.f32 0.0, %v6784
        %v7001 = vsub.f32 0.0, %v6785
        %v7002 = vmul.f32 %v6994, %v6778
        %v7003 = vmul.f32 %v6995, %v6779
        %v7004 = vmul.f32 %v6996, %v6780
        %v7005 = vmul.f32 %v6997, %v6781
        %v7006 = vmul.f32 %v6998, %v6782
        %v7007 = vmul.f32 %v6999, %v6783
        %v7008 = vmul.f32 %v7000, %v6784
        %v7009 = vmul.f32 %v7001, %v6785
        %v7010 = vmul.f32 %v7002, 1.442695
        %v7011 = vpow.pop %v7010
        %v7012 = vmul.f32 %v7003, 1.442695
        %v7013 = vpow.pop %v7012
        %v7014 = vmul.f32 %v7004, 1.442695
        %v7015 = vpow.pop %v7014
        %v7016 = vmul.f32 %v7005, 1.442695
        %v7017 = vpow.pop %v7016
        %v7018 = vmul.f32 %v7006, 1.442695
        %v7019 = vpow.pop %v7018
        %v7020 = vmul.f32 %v7007, 1.442695
        %v7021 = vpow.pop %v7020
        %v7022 = vmul.f32 %v7008, 1.442695
        %v7023 = vpow.pop %v7022
        %v7024 = vmul.f32 %v7009, 1.442695
        %v7025 = vpow.pop %v7024
        %v7026 = vmul.f32 %v6986, %v7011
        %v7027 = vmul.f32 %v6987, %v7013
        %v7028 = vmul.f32 %v6988, %v7015
        %v7029 = vmul.f32 %v6989, %v7017
        %v7030 = vmul.f32 %v6990, %v7019
        %v7031 = vmul.f32 %v6991, %v7021
        %v7032 = vmul.f32 %v6992, %v7023
        %v7033 = vmul.f32 %v6993, %v7025
        %v7034 = vsub.f32 1.0, %v7026
        %v7035 = vsub.f32 1.0, %v7027
        %v7036 = vsub.f32 1.0, %v7028
        %v7037 = vsub.f32 1.0, %v7029
        %v7038 = vsub.f32 1.0, %v7030
        %v7039 = vsub.f32 1.0, %v7031
        %v7040 = vsub.f32 1.0, %v7032
        %v7041 = vsub.f32 1.0, %v7033
        %v7042 = vmul.f32 %v6770, %v7034
        %v7043 = vmul.f32 %v6771, %v7035
        %v7044 = vmul.f32 %v6772, %v7036
        %v7045 = vmul.f32 %v6773, %v7037
        %v7046 = vmul.f32 %v6774, %v7038
        %v7047 = vmul.f32 %v6775, %v7039
        %v7048 = vmul.f32 %v6776, %v7040
        %v7049 = vmul.f32 %v6777, %v7041
        %v7050 = vadd.f32 %v7042, 1.0
        %v7051 = vadd.f32 %v7043, 1.0
        %v7052 = vadd.f32 %v7044, 1.0
        %v7053 = vadd.f32 %v7045, 1.0
        %v7054 = vadd.f32 %v7046, 1.0
        %v7055 = vadd.f32 %v7047, 1.0
        %v7056 = vadd.f32 %v7048, 1.0
        %v7057 = vadd.f32 %v7049, 1.0
        %v7058 = vmul.f32 %v6746, %v7050
        %v7059 = vmul.f32 %v6747, %v7051
        %v7060 = vmul.f32 %v6748, %v7052
        %v7061 = vmul.f32 %v6749, %v7053
        %v7062 = vmul.f32 %v6750, %v7054
        %v7063 = vmul.f32 %v6751, %v7055
        %v7064 = vmul.f32 %v6752, %v7056
        %v7065 = vmul.f32 %v6753, %v7057
        %v7066 = vrot.slane %v7058, 7
        %v7067 = vrot.slane %v7059, 7
        %v7068 = vrot.slane %v7060, 7
        %v7069 = vrot.slane %v7061, 7
        %v7070 = vrot.slane %v7062, 7
        %v7071 = vrot.slane %v7063, 7
        %v7072 = vrot.slane %v7064, 7
        %v7073 = vrot.slane %v7065, 7
        %v7074 = vsel %vm845, %v7072, %v7073
        %v7075 = vsel %vm845, %v7071, %v7072
        %v7076 = vsel %vm845, %v7070, %v7071
        %v7077 = vsel %vm845, %v7069, %v7070
        %v7078 = vsel %vm845, %v7068, %v7069
        %v7079 = vsel %vm845, %v7067, %v7068
        %v7080 = vsel %vm845, %v7066, %v7067
        %v7081 = vsel %vm845, %v7073, %v7066
        %v7082 = vmul.f32 %v7074, %v4506
        %v7083 = vmul.f32 %v7081, %v4511
        %v7084 = vmul.f32 %v7080, %v4516
        %v7085 = vmul.f32 %v7079, %v4521
        %v7086 = vmul.f32 %v7078, %v4526
        %v7087 = vmul.f32 %v7077, %v4531
        %v7088 = vmul.f32 %v7076, %v4536
        %v7089 = vmul.f32 %v7075, %v4541
        %v7090 = vmul.f32 %v7065, %v4553
        %v7091 = vmul.f32 %v7058, %v4557
        %v7092 = vmul.f32 %v7059, %v4561
        %v7093 = vmul.f32 %v7060, %v4565
        %v7094 = vmul.f32 %v7061, %v4569
        %v7095 = vmul.f32 %v7062, %v4573
        %v7096 = vmul.f32 %v7063, %v4577
        %v7097 = vmul.f32 %v7064, %v4581
        %v7098 = vrot.slane %v7058, 1
        %v7099 = vrot.slane %v7059, 1
        %v7100 = vrot.slane %v7060, 1
        %v7101 = vrot.slane %v7061, 1
        %v7102 = vrot.slane %v7062, 1
        %v7103 = vrot.slane %v7063, 1
        %v7104 = vrot.slane %v7064, 1
        %v7105 = vrot.slane %v7065, 1
        %v7106 = vsel %vm1102, %v7104, %v7105
        %v7107 = vsel %vm1102, %v7103, %v7104
        %v7108 = vsel %vm1102, %v7102, %v7103
        %v7109 = vsel %vm1102, %v7101, %v7102
        %v7110 = vsel %vm1102, %v7100, %v7101
        %v7111 = vsel %vm1102, %v7099, %v7100
        %v7112 = vsel %vm1102, %v7098, %v7099
        %v7113 = vsel %vm1102, %v7105, %v7098
        %v7114 = vmul.f32 %v7113, %v4609
        %v7115 = vmul.f32 %v7112, %v4613
        %v7116 = vmul.f32 %v7111, %v4617
        %v7117 = vmul.f32 %v7110, %v4621
        %v7118 = vmul.f32 %v7109, %v4625
        %v7119 = vmul.f32 %v7108, %v4629
        %v7120 = vmul.f32 %v7107, %v4633
        %v7121 = vmul.f32 %v7106, %v4637
        %v7122 = vmul.f32 %v7081, %v4649
        %v7123 = vmul.f32 %v7080, %v4653
        %v7124 = vmul.f32 %v7079, %v4657
        %v7125 = vmul.f32 %v7078, %v4661
        %v7126 = vmul.f32 %v7077, %v4665
        %v7127 = vmul.f32 %v7076, %v4669
        %v7128 = vmul.f32 %v7075, %v4673
        %v7129 = vmul.f32 %v7074, %v4677
        %v7130 = vmul.f32 %v7112, %v4689
        %v7131 = vmul.f32 %v7111, %v4693
        %v7132 = vmul.f32 %v7110, %v4697
        %v7133 = vmul.f32 %v7109, %v4701
        %v7134 = vmul.f32 %v7108, %v4705
        %v7135 = vmul.f32 %v7107, %v4709
        %v7136 = vmul.f32 %v7106, %v4713
        %v7137 = vmul.f32 %v7113, %v4717
        %v7138 = vmul.f32 %v7080, %v4729
        %v7139 = vmul.f32 %v7079, %v4733
        %v7140 = vmul.f32 %v7078, %v4737
        %v7141 = vmul.f32 %v7077, %v4741
        %v7142 = vmul.f32 %v7076, %v4745
        %v7143 = vmul.f32 %v7075, %v4749
        %v7144 = vmul.f32 %v7074, %v4753
        %v7145 = vmul.f32 %v7081, %v4757
        %v7146 = vmul.f32 %v7059, %v4769
        %v7147 = vmul.f32 %v7060, %v4773
        %v7148 = vmul.f32 %v7061, %v4777
        %v7149 = vmul.f32 %v7062, %v4781
        %v7150 = vmul.f32 %v7063, %v4785
        %v7151 = vmul.f32 %v7064, %v4789
        %v7152 = vmul.f32 %v7065, %v4793
        %v7153 = vmul.f32 %v7058, %v4797
        %v7154 = vmul.f32 %v7111, %v4809
        %v7155 = vmul.f32 %v7110, %v4813
        %v7156 = vmul.f32 %v7109, %v4817
        %v7157 = vmul.f32 %v7108, %v4821
        %v7158 = vmul.f32 %v7107, %v4825
        %v7159 = vmul.f32 %v7106, %v4829
        %v7160 = vmul.f32 %v7113, %v4833
        %v7161 = vmul.f32 %v7112, %v4837
        %7170 = vrot.lane.b32.xlu0 %v7090, 16
        %v7171 = vpop.permute.xlu0 %7170
        %7172 = vrot.lane.b32.xlu0 %v7091, 16
        %v7173 = vpop.permute.xlu0 %7172
        %7174 = vrot.lane.b32.xlu0 %v7092, 16
        %v7175 = vpop.permute.xlu0 %7174
        %7176 = vrot.lane.b32.xlu0 %v7093, 16
        %v7177 = vpop.permute.xlu0 %7176
        %7178 = vrot.lane.b32.xlu0 %v7094, 16
        %v7179 = vpop.permute.xlu0 %7178
        %7180 = vrot.lane.b32.xlu0 %v7095, 16
        %v7181 = vpop.permute.xlu0 %7180
        %7182 = vrot.lane.b32.xlu0 %v7096, 16
        %v7183 = vpop.permute.xlu0 %7182
        %7184 = vrot.lane.b32.xlu0 %v7097, 16
        %v7185 = vpop.permute.xlu0 %7184
        %7202 = vrot.lane.b32.xlu0 %v7114, 32
        %v7203 = vpop.permute.xlu0 %7202
        %7204 = vrot.lane.b32.xlu0 %v7115, 32
        %v7205 = vpop.permute.xlu0 %7204
        %7206 = vrot.lane.b32.xlu0 %v7116, 32
        %v7207 = vpop.permute.xlu0 %7206
        %7208 = vrot.lane.b32.xlu0 %v7117, 32
        %v7209 = vpop.permute.xlu0 %7208
        %7210 = vrot.lane.b32.xlu0 %v7118, 32
        %v7211 = vpop.permute.xlu0 %7210
        %7212 = vrot.lane.b32.xlu0 %v7119, 32
        %v7213 = vpop.permute.xlu0 %7212
        %7214 = vrot.lane.b32.xlu0 %v7120, 32
        %v7215 = vpop.permute.xlu0 %7214
        %7216 = vrot.lane.b32.xlu0 %v7121, 32
        %v7217 = vpop.permute.xlu0 %7216
        %7234 = vrot.lane.b32.xlu0 %v7122, 48
        %v7235 = vpop.permute.xlu0 %7234
        %7236 = vrot.lane.b32.xlu0 %v7123, 48
        %v7237 = vpop.permute.xlu0 %7236
        %7238 = vrot.lane.b32.xlu0 %v7124, 48
        %v7239 = vpop.permute.xlu0 %7238
        %7240 = vrot.lane.b32.xlu0 %v7125, 48
        %v7241 = vpop.permute.xlu0 %7240
        %7242 = vrot.lane.b32.xlu0 %v7126, 48
        %v7243 = vpop.permute.xlu0 %7242
        %7244 = vrot.lane.b32.xlu0 %v7127, 48
        %v7245 = vpop.permute.xlu0 %7244
        %7246 = vrot.lane.b32.xlu0 %v7128, 48
        %v7247 = vpop.permute.xlu0 %7246
        %7248 = vrot.lane.b32.xlu0 %v7129, 48
        %v7249 = vpop.permute.xlu0 %7248
        %7266 = vrot.lane.b32.xlu0 %v7058, 64
        %v7267 = vpop.permute.xlu0 %7266
        %7268 = vrot.lane.b32.xlu0 %v7059, 64
        %v7269 = vpop.permute.xlu0 %7268
        %7270 = vrot.lane.b32.xlu0 %v7060, 64
        %v7271 = vpop.permute.xlu0 %7270
        %7272 = vrot.lane.b32.xlu0 %v7061, 64
        %v7273 = vpop.permute.xlu0 %7272
        %7274 = vrot.lane.b32.xlu0 %v7062, 64
        %v7275 = vpop.permute.xlu0 %7274
        %7276 = vrot.lane.b32.xlu0 %v7063, 64
        %v7277 = vpop.permute.xlu0 %7276
        %7278 = vrot.lane.b32.xlu0 %v7064, 64
        %v7279 = vpop.permute.xlu0 %7278
        %7280 = vrot.lane.b32.xlu0 %v7065, 64
        %v7281 = vpop.permute.xlu0 %7280
        %7298 = vrot.lane.b32.xlu0 %v7130, 80
        %v7299 = vpop.permute.xlu0 %7298
        %7300 = vrot.lane.b32.xlu0 %v7131, 80
        %v7301 = vpop.permute.xlu0 %7300
        %7302 = vrot.lane.b32.xlu0 %v7132, 80
        %v7303 = vpop.permute.xlu0 %7302
        %7304 = vrot.lane.b32.xlu0 %v7133, 80
        %v7305 = vpop.permute.xlu0 %7304
        %7306 = vrot.lane.b32.xlu0 %v7134, 80
        %v7307 = vpop.permute.xlu0 %7306
        %7308 = vrot.lane.b32.xlu0 %v7135, 80
        %v7309 = vpop.permute.xlu0 %7308
        %7310 = vrot.lane.b32.xlu0 %v7136, 80
        %v7311 = vpop.permute.xlu0 %7310
        %7312 = vrot.lane.b32.xlu0 %v7137, 80
        %v7313 = vpop.permute.xlu0 %7312
        %7330 = vrot.lane.b32.xlu0 %v7138, 96
        %v7331 = vpop.permute.xlu0 %7330
        %7332 = vrot.lane.b32.xlu0 %v7139, 96
        %v7333 = vpop.permute.xlu0 %7332
        %7334 = vrot.lane.b32.xlu0 %v7140, 96
        %v7335 = vpop.permute.xlu0 %7334
        %7336 = vrot.lane.b32.xlu0 %v7141, 96
        %v7337 = vpop.permute.xlu0 %7336
        %7338 = vrot.lane.b32.xlu0 %v7142, 96
        %v7339 = vpop.permute.xlu0 %7338
        %7340 = vrot.lane.b32.xlu0 %v7143, 96
        %v7341 = vpop.permute.xlu0 %7340
        %7342 = vrot.lane.b32.xlu0 %v7144, 96
        %v7343 = vpop.permute.xlu0 %7342
        %7344 = vrot.lane.b32.xlu0 %v7145, 96
        %v7345 = vpop.permute.xlu0 %7344
        %7362 = vrot.lane.b32.xlu0 %v7146, 112
        %v7363 = vpop.permute.xlu0 %7362
        %7364 = vrot.lane.b32.xlu0 %v7147, 112
        %v7365 = vpop.permute.xlu0 %7364
        %7366 = vrot.lane.b32.xlu0 %v7148, 112
        %v7367 = vpop.permute.xlu0 %7366
        %7368 = vrot.lane.b32.xlu0 %v7149, 112
        %v7369 = vpop.permute.xlu0 %7368
        %7370 = vrot.lane.b32.xlu0 %v7150, 112
        %v7371 = vpop.permute.xlu0 %7370
        %7372 = vrot.lane.b32.xlu0 %v7151, 112
        %v7373 = vpop.permute.xlu0 %7372
        %7374 = vrot.lane.b32.xlu0 %v7152, 112
        %v7375 = vpop.permute.xlu0 %7374
        %7376 = vrot.lane.b32.xlu0 %v7153, 112
        %v7377 = vpop.permute.xlu0 %7376
        %v7386 = vsel %vm5071, %v7082, %v7171
        %v7387 = vsel %vm5071, %v7083, %v7173
        %v7388 = vsel %vm5071, %v7084, %v7175
        %v7389 = vsel %vm5071, %v7085, %v7177
        %v7390 = vsel %vm5071, %v7086, %v7179
        %v7391 = vsel %vm5071, %v7087, %v7181
        %v7392 = vsel %vm5071, %v7088, %v7183
        %v7393 = vsel %vm5071, %v7089, %v7185
        %v7394 = vsel %vm5080, %v7386, %v7203
        %v7395 = vsel %vm5080, %v7387, %v7205
        %v7396 = vsel %vm5080, %v7388, %v7207
        %v7397 = vsel %vm5080, %v7389, %v7209
        %v7398 = vsel %vm5080, %v7390, %v7211
        %v7399 = vsel %vm5080, %v7391, %v7213
        %v7400 = vsel %vm5080, %v7392, %v7215
        %v7401 = vsel %vm5080, %v7393, %v7217
        %v7402 = vsel %vm5089, %v7394, %v7235
        %v7403 = vsel %vm5089, %v7395, %v7237
        %v7404 = vsel %vm5089, %v7396, %v7239
        %v7405 = vsel %vm5089, %v7397, %v7241
        %v7406 = vsel %vm5089, %v7398, %v7243
        %v7407 = vsel %vm5089, %v7399, %v7245
        %v7408 = vsel %vm5089, %v7400, %v7247
        %v7409 = vsel %vm5089, %v7401, %v7249
        %v7410 = vsel %vm5098, %v7402, %v7267
        %v7411 = vsel %vm5098, %v7403, %v7269
        %v7412 = vsel %vm5098, %v7404, %v7271
        %v7413 = vsel %vm5098, %v7405, %v7273
        %v7414 = vsel %vm5098, %v7406, %v7275
        %v7415 = vsel %vm5098, %v7407, %v7277
        %v7416 = vsel %vm5098, %v7408, %v7279
        %v7417 = vsel %vm5098, %v7409, %v7281
        %v7418 = vsel %vm5107, %v7410, %v7299
        %v7419 = vsel %vm5107, %v7411, %v7301
        %v7420 = vsel %vm5107, %v7412, %v7303
        %v7421 = vsel %vm5107, %v7413, %v7305
        %v7422 = vsel %vm5107, %v7414, %v7307
        %v7423 = vsel %vm5107, %v7415, %v7309
        %v7424 = vsel %vm5107, %v7416, %v7311
        %v7425 = vsel %vm5107, %v7417, %v7313
        %v7426 = vsel %vm5116, %v7418, %v7331
        %v7427 = vsel %vm5116, %v7419, %v7333
        %v7428 = vsel %vm5116, %v7420, %v7335
        %v7429 = vsel %vm5116, %v7421, %v7337
        %v7430 = vsel %vm5116, %v7422, %v7339
        %v7431 = vsel %vm5116, %v7423, %v7341
        %v7432 = vsel %vm5116, %v7424, %v7343
        %v7433 = vsel %vm5116, %v7425, %v7345
        %v7434 = vsel %vm5125, %v7426, %v7363
        %v7435 = vsel %vm5125, %v7427, %v7365
        %v7436 = vsel %vm5125, %v7428, %v7367
        %v7437 = vsel %vm5125, %v7429, %v7369
        %v7438 = vsel %vm5125, %v7430, %v7371
        %v7439 = vsel %vm5125, %v7431, %v7373
        %v7440 = vsel %vm5125, %v7432, %v7375
        %v7441 = vsel %vm5125, %v7433, %v7377
        %v7442 = vld [vmem:[#allocation5] sm:$0xff]
        %v7443 = vld [vmem:[#allocation5 + $0x8] sm:$0xff]
        %v7444 = vld [vmem:[#allocation5 + $0x10] sm:$0xff]
        %v7445 = vld [vmem:[#allocation5 + $0x18] sm:$0xff]
        %v7446 = vld [vmem:[#allocation5 + $0x20] sm:$0xff]
        %v7447 = vld [vmem:[#allocation5 + $0x28] sm:$0xff]
        %v7448 = vld [vmem:[#allocation5 + $0x30] sm:$0xff]
        %v7449 = vld [vmem:[#allocation5 + $0x38] sm:$0xff]
        %v7450 = vld [vmem:[#allocation5 + $0x40] sm:$0xff]
        %v7451 = vld [vmem:[#allocation5 + $0x48] sm:$0xff]
        %v7452 = vld [vmem:[#allocation5 + $0x50] sm:$0xff]
        %v7453 = vld [vmem:[#allocation5 + $0x58] sm:$0xff]
        %v7454 = vld [vmem:[#allocation5 + $0x60] sm:$0xff]
        %v7455 = vld [vmem:[#allocation5 + $0x68] sm:$0xff]
        %v7456 = vld [vmem:[#allocation5 + $0x70] sm:$0xff]
        %v7457 = vld [vmem:[#allocation5 + $0x78] sm:$0xff]
        %v7458 = vld [vmem:[#allocation5 + $0x80] sm:$0xff]
        %v7459 = vld [vmem:[#allocation5 + $0x88] sm:$0xff]
        %v7460 = vld [vmem:[%s10] sm:$0x1]
        %v7462 = vperm.slane %v7460, 0
        %v7465 = vsel %vm5071, %v7154, 0
        %v7468 = vsel %vm5071, %v7155, 0
        %v7471 = vsel %vm5071, %v7156, 0
        %v7474 = vsel %vm5071, %v7157, 0
        %v7477 = vsel %vm5071, %v7158, 0
        %v7480 = vsel %vm5071, %v7159, 0
        %v7483 = vsel %vm5071, %v7160, 0
        %v7486 = vsel %vm5071, %v7161, 0
        %7488 = vmatpush.msra.mxu0 %v7457
        %7489 = vmatpush.msra.mxu0 %v7456
        %7490 = vmatpush.msra.mxu0 %v7455
        %7491 = vmatpush.msra.mxu0 %v7454
        %7492 = vmatpush.msra.mxu0 %v7453
        %7493 = vmatpush.msra.mxu0 %v7452
        %7494 = vmatpush.msra.mxu0 %v7451
        %7495 = vmatpush.msra.mxu0 %v7450
        %7496 = vmatpush.msra.mxu0 %v7449
        %7497 = vmatpush.msra.mxu0 %v7448
        %7498 = vmatpush.msra.mxu0 %v7447
        %7499 = vmatpush.msra.mxu0 %v7446
        %7500 = vmatpush.msra.mxu0 %v7445
        %7501 = vmatpush.msra.mxu0 %v7444
        %7502 = vmatpush.msra.mxu0 %v7443
        %7503 = vmatpush.msra.mxu0 %v7442
        %7504 = vmatmul.f32.gmra.mxu0 %v7434
        %v7505 = vpop.f32.mrf.mxu0
        %v7506 = vadd.f32 %v7462, %v7505
        %7507 = vmatmul.f32.gmra.mxu0 %v7435
        %v7508 = vpop.f32.mrf.mxu0
        %v7509 = vadd.f32 %v7462, %v7508
        %7510 = vmatmul.f32.gmra.mxu0 %v7436
        %v7511 = vpop.f32.mrf.mxu0
        %v7512 = vadd.f32 %v7462, %v7511
        %7513 = vmatmul.f32.gmra.mxu0 %v7437
        %v7514 = vpop.f32.mrf.mxu0
        %v7515 = vadd.f32 %v7462, %v7514
        %7516 = vmatmul.f32.gmra.mxu0 %v7438
        %v7517 = vpop.f32.mrf.mxu0
        %v7518 = vadd.f32 %v7462, %v7517
        %7519 = vmatmul.f32.gmra.mxu0 %v7439
        %v7520 = vpop.f32.mrf.mxu0
        %v7521 = vadd.f32 %v7462, %v7520
        %7522 = vmatmul.f32.gmra.mxu0 %v7440
        %v7523 = vpop.f32.mrf.mxu0
        %v7524 = vadd.f32 %v7462, %v7523
        %7525 = vmatmul.f32.gmra.mxu0 %v7441
        %v7526 = vpop.f32.mrf.mxu0
        %v7527 = vadd.f32 %v7462, %v7526
        %7528 = vdwg.mxu0
        %7529 = vmatpush.msra.mxu0 0.0
        %7530 = vmatpush.msra.mxu0 0.0
        %7531 = vmatpush.msra.mxu0 0.0
        %7532 = vmatpush.msra.mxu0 0.0
        %7533 = vmatpush.msra.mxu0 0.0
        %7534 = vmatpush.msra.mxu0 0.0
        %7535 = vmatpush.msra.mxu0 0.0
        %7536 = vmatpush.msra.mxu0 0.0
        %7537 = vmatpush.msra.mxu0 0.0
        %7538 = vmatpush.msra.mxu0 0.0
        %7539 = vmatpush.msra.mxu0 0.0
        %7540 = vmatpush.msra.mxu0 0.0
        %7541 = vmatpush.msra.mxu0 0.0
        %7542 = vmatpush.msra.mxu0 0.0
        %7543 = vmatpush.msra.mxu0 %v7459
        %7544 = vmatpush.msra.mxu0 %v7458
        %7545 = vmatmul.f32.gmra.mxu0 %v7465
        %v7546 = vpop.f32.mrf.mxu0
        %v7547 = vadd.f32 %v7506, %v7546
        %7548 = vmatmul.f32.gmra.mxu0 %v7468
        %v7549 = vpop.f32.mrf.mxu0
        %v7550 = vadd.f32 %v7509, %v7549
        %7551 = vmatmul.f32.gmra.mxu0 %v7471
        %v7552 = vpop.f32.mrf.mxu0
        %v7553 = vadd.f32 %v7512, %v7552
        %7554 = vmatmul.f32.gmra.mxu0 %v7474
        %v7555 = vpop.f32.mrf.mxu0
        %v7556 = vadd.f32 %v7515, %v7555
        %7557 = vmatmul.f32.gmra.mxu0 %v7477
        %v7558 = vpop.f32.mrf.mxu0
        %v7559 = vadd.f32 %v7518, %v7558
        %7560 = vmatmul.f32.gmra.mxu0 %v7480
        %v7561 = vpop.f32.mrf.mxu0
        %v7562 = vadd.f32 %v7521, %v7561
        %7563 = vmatmul.f32.gmra.mxu0 %v7483
        %v7564 = vpop.f32.mrf.mxu0
        %v7565 = vadd.f32 %v7524, %v7564
        %7566 = vmatmul.f32.gmra.mxu0 %v7486
        %v7567 = vpop.f32.mrf.mxu0
        %v7568 = vadd.f32 %v7527, %v7567
        %7569 = vdwg.mxu0
        %v7570 = vmul.f32 %v7547, 0.5
        %v7571 = vmul.f32 %v7550, 0.5
        %v7572 = vmul.f32 %v7553, 0.5
        %v7573 = vmul.f32 %v7556, 0.5
        %v7574 = vmul.f32 %v7559, 0.5
        %v7575 = vmul.f32 %v7562, 0.5
        %v7576 = vmul.f32 %v7565, 0.5
        %v7577 = vmul.f32 %v7568, 0.5
        %v7578 = vmul.f32 %v7547, 0.70710677
        %v7579 = vmul.f32 %v7550, 0.70710677
        %v7580 = vmul.f32 %v7553, 0.70710677
        %v7581 = vmul.f32 %v7556, 0.70710677
        %v7582 = vmul.f32 %v7559, 0.70710677
        %v7583 = vmul.f32 %v7562, 0.70710677
        %v7584 = vmul.f32 %v7565, 0.70710677
        %v7585 = vmul.f32 %v7568, 0.70710677
        %vm7586 = vcmp.ge.f32.partialorder %v7578, 0.0
        %vm7587 = vcmp.ge.f32.partialorder %v7579, 0.0
        %vm7588 = vcmp.ge.f32.partialorder %v7580, 0.0
        %vm7589 = vcmp.ge.f32.partialorder %v7581, 0.0
        %vm7590 = vcmp.ge.f32.partialorder %v7582, 0.0
        %vm7591 = vcmp.ge.f32.partialorder %v7583, 0.0
        %vm7592 = vcmp.ge.f32.partialorder %v7584, 0.0
        %vm7593 = vcmp.ge.f32.partialorder %v7585, 0.0
        %v7594 = vsel %vm7586, 1.0, -1.0
        %v7595 = vsel %vm7587, 1.0, -1.0
        %v7596 = vsel %vm7588, 1.0, -1.0
        %v7597 = vsel %vm7589, 1.0, -1.0
        %v7598 = vsel %vm7590, 1.0, -1.0
        %v7599 = vsel %vm7591, 1.0, -1.0
        %v7600 = vsel %vm7592, 1.0, -1.0
        %v7601 = vsel %vm7593, 1.0, -1.0
        %v7602 = vand.u32 2147483647, %v7578
        %v7603 = vand.u32 2147483647, %v7579
        %v7604 = vand.u32 2147483647, %v7580
        %v7605 = vand.u32 2147483647, %v7581
        %v7606 = vand.u32 2147483647, %v7582
        %v7607 = vand.u32 2147483647, %v7583
        %v7608 = vand.u32 2147483647, %v7584
        %v7609 = vand.u32 2147483647, %v7585
        %v7610 = vmul.f32 %v7602, 0.3275911
        %v7611 = vmul.f32 %v7603, 0.3275911
        %v7612 = vmul.f32 %v7604, 0.3275911
        %v7613 = vmul.f32 %v7605, 0.3275911
        %v7614 = vmul.f32 %v7606, 0.3275911
        %v7615 = vmul.f32 %v7607, 0.3275911
        %v7616 = vmul.f32 %v7608, 0.3275911
        %v7617 = vmul.f32 %v7609, 0.3275911
        %v7618 = vadd.f32 %v7610, 1.0
        %v7619 = vadd.f32 %v7611, 1.0
        %v7620 = vadd.f32 %v7612, 1.0
        %v7621 = vadd.f32 %v7613, 1.0
        %v7622 = vadd.f32 %v7614, 1.0
        %v7623 = vadd.f32 %v7615, 1.0
        %v7624 = vadd.f32 %v7616, 1.0
        %v7625 = vadd.f32 %v7617, 1.0
        %v7626 = vrcp.pop %v7618
        %v7627 = vmul.f32 %v7618, %v7626
        %v7628 = vsub.f32 1.0, %v7627
        %v7629 = vmul.f32 %v7626, %v7628
        %v7630 = vadd.f32 %v7626, %v7629
        %vm7631 = vweird.f32 %v7618
        %vm7632 = vweird.f32 %v7626
        %vm7633 = vmor %vm7631, %vm7632
        %v7634 = vsel %vm7633, %v7626, %v7630
        %v7635 = vand.u32 2147483647, %v7618
        %vm7636 = vcmp.eq.f32.partialorder %v7635, 8.507059e+37
        %v7637 = vand.u32 %v7618, 2147483648
        %v7638 = vor.u32 1.1754944e-38, %v7637
        %v7639 = vsel %vm7636, %v7638, %v7634
        %v7640 = vmul.f32 1.0, %v7639
        %v7641 = vrcp.pop %v7619
        %v7642 = vmul.f32 %v7619, %v7641
        %v7643 = vsub.f32 1.0, %v7642
        %v7644 = vmul.f32 %v7641, %v7643
        %v7645 = vadd.f32 %v7641, %v7644
        %vm7646 = vweird.f32 %v7619
        %vm7647 = vweird.f32 %v7641
        %vm7648 = vmor %vm7646, %vm7647
        %v7649 = vsel %vm7648, %v7641, %v7645
        %v7650 = vand.u32 2147483647, %v7619
        %vm7651 = vcmp.eq.f32.partialorder %v7650, 8.507059e+37
        %v7652 = vand.u32 %v7619, 2147483648
        %v7653 = vor.u32 1.1754944e-38, %v7652
        %v7654 = vsel %vm7651, %v7653, %v7649
        %v7655 = vmul.f32 1.0, %v7654
        %v7656 = vrcp.pop %v7620
        %v7657 = vmul.f32 %v7620, %v7656
        %v7658 = vsub.f32 1.0, %v7657
        %v7659 = vmul.f32 %v7656, %v7658
        %v7660 = vadd.f32 %v7656, %v7659
        %vm7661 = vweird.f32 %v7620
        %vm7662 = vweird.f32 %v7656
        %vm7663 = vmor %vm7661, %vm7662
        %v7664 = vsel %vm7663, %v7656, %v7660
        %v7665 = vand.u32 2147483647, %v7620
        %vm7666 = vcmp.eq.f32.partialorder %v7665, 8.507059e+37
        %v7667 = vand.u32 %v7620, 2147483648
        %v7668 = vor.u32 1.1754944e-38, %v7667
        %v7669 = vsel %vm7666, %v7668, %v7664
        %v7670 = vmul.f32 1.0, %v7669
        %v7671 = vrcp.pop %v7621
        %v7672 = vmul.f32 %v7621, %v7671
        %v7673 = vsub.f32 1.0, %v7672
        %v7674 = vmul.f32 %v7671, %v7673
        %v7675 = vadd.f32 %v7671, %v7674
        %vm7676 = vweird.f32 %v7621
        %vm7677 = vweird.f32 %v7671
        %vm7678 = vmor %vm7676, %vm7677
        %v7679 = vsel %vm7678, %v7671, %v7675
        %v7680 = vand.u32 2147483647, %v7621
        %vm7681 = vcmp.eq.f32.partialorder %v7680, 8.507059e+37
        %v7682 = vand.u32 %v7621, 2147483648
        %v7683 = vor.u32 1.1754944e-38, %v7682
        %v7684 = vsel %vm7681, %v7683, %v7679
        %v7685 = vmul.f32 1.0, %v7684
        %v7686 = vrcp.pop %v7622
        %v7687 = vmul.f32 %v7622, %v7686
        %v7688 = vsub.f32 1.0, %v7687
        %v7689 = vmul.f32 %v7686, %v7688
        %v7690 = vadd.f32 %v7686, %v7689
        %vm7691 = vweird.f32 %v7622
        %vm7692 = vweird.f32 %v7686
        %vm7693 = vmor %vm7691, %vm7692
        %v7694 = vsel %vm7693, %v7686, %v7690
        %v7695 = vand.u32 2147483647, %v7622
        %vm7696 = vcmp.eq.f32.partialorder %v7695, 8.507059e+37
        %v7697 = vand.u32 %v7622, 2147483648
        %v7698 = vor.u32 1.1754944e-38, %v7697
        %v7699 = vsel %vm7696, %v7698, %v7694
        %v7700 = vmul.f32 1.0, %v7699
        %v7701 = vrcp.pop %v7623
        %v7702 = vmul.f32 %v7623, %v7701
        %v7703 = vsub.f32 1.0, %v7702
        %v7704 = vmul.f32 %v7701, %v7703
        %v7705 = vadd.f32 %v7701, %v7704
        %vm7706 = vweird.f32 %v7623
        %vm7707 = vweird.f32 %v7701
        %vm7708 = vmor %vm7706, %vm7707
        %v7709 = vsel %vm7708, %v7701, %v7705
        %v7710 = vand.u32 2147483647, %v7623
        %vm7711 = vcmp.eq.f32.partialorder %v7710, 8.507059e+37
        %v7712 = vand.u32 %v7623, 2147483648
        %v7713 = vor.u32 1.1754944e-38, %v7712
        %v7714 = vsel %vm7711, %v7713, %v7709
        %v7715 = vmul.f32 1.0, %v7714
        %v7716 = vrcp.pop %v7624
        %v7717 = vmul.f32 %v7624, %v7716
        %v7718 = vsub.f32 1.0, %v7717
        %v7719 = vmul.f32 %v7716, %v7718
        %v7720 = vadd.f32 %v7716, %v7719
        %vm7721 = vweird.f32 %v7624
        %vm7722 = vweird.f32 %v7716
        %vm7723 = vmor %vm7721, %vm7722
        %v7724 = vsel %vm7723, %v7716, %v7720
        %v7725 = vand.u32 2147483647, %v7624
        %vm7726 = vcmp.eq.f32.partialorder %v7725, 8.507059e+37
        %v7727 = vand.u32 %v7624, 2147483648
        %v7728 = vor.u32 1.1754944e-38, %v7727
        %v7729 = vsel %vm7726, %v7728, %v7724
        %v7730 = vmul.f32 1.0, %v7729
        %v7731 = vrcp.pop %v7625
        %v7732 = vmul.f32 %v7625, %v7731
        %v7733 = vsub.f32 1.0, %v7732
        %v7734 = vmul.f32 %v7731, %v7733
        %v7735 = vadd.f32 %v7731, %v7734
        %vm7736 = vweird.f32 %v7625
        %vm7737 = vweird.f32 %v7731
        %vm7738 = vmor %vm7736, %vm7737
        %v7739 = vsel %vm7738, %v7731, %v7735
        %v7740 = vand.u32 2147483647, %v7625
        %vm7741 = vcmp.eq.f32.partialorder %v7740, 8.507059e+37
        %v7742 = vand.u32 %v7625, 2147483648
        %v7743 = vor.u32 1.1754944e-38, %v7742
        %v7744 = vsel %vm7741, %v7743, %v7739
        %v7745 = vmul.f32 1.0, %v7744
        %v7746 = vmul.f32 %v7640, 1.0614054
        %v7747 = vmul.f32 %v7655, 1.0614054
        %v7748 = vmul.f32 %v7670, 1.0614054
        %v7749 = vmul.f32 %v7685, 1.0614054
        %v7750 = vmul.f32 %v7700, 1.0614054
        %v7751 = vmul.f32 %v7715, 1.0614054
        %v7752 = vmul.f32 %v7730, 1.0614054
        %v7753 = vmul.f32 %v7745, 1.0614054
        %v7754 = vadd.f32 %v7746, -1.4531521
        %v7755 = vadd.f32 %v7747, -1.4531521
        %v7756 = vadd.f32 %v7748, -1.4531521
        %v7757 = vadd.f32 %v7749, -1.4531521
        %v7758 = vadd.f32 %v7750, -1.4531521
        %v7759 = vadd.f32 %v7751, -1.4531521
        %v7760 = vadd.f32 %v7752, -1.4531521
        %v7761 = vadd.f32 %v7753, -1.4531521
        %v7762 = vmul.f32 %v7754, %v7640
        %v7763 = vmul.f32 %v7755, %v7655
        %v7764 = vmul.f32 %v7756, %v7670
        %v7765 = vmul.f32 %v7757, %v7685
        %v7766 = vmul.f32 %v7758, %v7700
        %v7767 = vmul.f32 %v7759, %v7715
        %v7768 = vmul.f32 %v7760, %v7730
        %v7769 = vmul.f32 %v7761, %v7745
        %v7770 = vadd.f32 %v7762, 1.4214138
        %v7771 = vadd.f32 %v7763, 1.4214138
        %v7772 = vadd.f32 %v7764, 1.4214138
        %v7773 = vadd.f32 %v7765, 1.4214138
        %v7774 = vadd.f32 %v7766, 1.4214138
        %v7775 = vadd.f32 %v7767, 1.4214138
        %v7776 = vadd.f32 %v7768, 1.4214138
        %v7777 = vadd.f32 %v7769, 1.4214138
        %v7778 = vmul.f32 %v7770, %v7640
        %v7779 = vmul.f32 %v7771, %v7655
        %v7780 = vmul.f32 %v7772, %v7670
        %v7781 = vmul.f32 %v7773, %v7685
        %v7782 = vmul.f32 %v7774, %v7700
        %v7783 = vmul.f32 %v7775, %v7715
        %v7784 = vmul.f32 %v7776, %v7730
        %v7785 = vmul.f32 %v7777, %v7745
        %v7786 = vadd.f32 %v7778, -0.28449672
        %v7787 = vadd.f32 %v7779, -0.28449672
        %v7788 = vadd.f32 %v7780, -0.28449672
        %v7789 = vadd.f32 %v7781, -0.28449672
        %v7790 = vadd.f32 %v7782, -0.28449672
        %v7791 = vadd.f32 %v7783, -0.28449672
        %v7792 = vadd.f32 %v7784, -0.28449672
        %v7793 = vadd.f32 %v7785, -0.28449672
        %v7794 = vmul.f32 %v7786, %v7640
        %v7795 = vmul.f32 %v7787, %v7655
        %v7796 = vmul.f32 %v7788, %v7670
        %v7797 = vmul.f32 %v7789, %v7685
        %v7798 = vmul.f32 %v7790, %v7700
        %v7799 = vmul.f32 %v7791, %v7715
        %v7800 = vmul.f32 %v7792, %v7730
        %v7801 = vmul.f32 %v7793, %v7745
        %v7802 = vadd.f32 %v7794, 0.2548296
        %v7803 = vadd.f32 %v7795, 0.2548296
        %v7804 = vadd.f32 %v7796, 0.2548296
        %v7805 = vadd.f32 %v7797, 0.2548296
        %v7806 = vadd.f32 %v7798, 0.2548296
        %v7807 = vadd.f32 %v7799, 0.2548296
        %v7808 = vadd.f32 %v7800, 0.2548296
        %v7809 = vadd.f32 %v7801, 0.2548296
        %v7810 = vmul.f32 %v7802, %v7640
        %v7811 = vmul.f32 %v7803, %v7655
        %v7812 = vmul.f32 %v7804, %v7670
        %v7813 = vmul.f32 %v7805, %v7685
        %v7814 = vmul.f32 %v7806, %v7700
        %v7815 = vmul.f32 %v7807, %v7715
        %v7816 = vmul.f32 %v7808, %v7730
        %v7817 = vmul.f32 %v7809, %v7745
        %v7818 = vsub.f32 0.0, %v7602
        %v7819 = vsub.f32 0.0, %v7603
        %v7820 = vsub.f32 0.0, %v7604
        %v7821 = vsub.f32 0.0, %v7605
        %v7822 = vsub.f32 0.0, %v7606
        %v7823 = vsub.f32 0.0, %v7607
        %v7824 = vsub.f32 0.0, %v7608
        %v7825 = vsub.f32 0.0, %v7609
        %v7826 = vmul.f32 %v7818, %v7602
        %v7827 = vmul.f32 %v7819, %v7603
        %v7828 = vmul.f32 %v7820, %v7604
        %v7829 = vmul.f32 %v7821, %v7605
        %v7830 = vmul.f32 %v7822, %v7606
        %v7831 = vmul.f32 %v7823, %v7607
        %v7832 = vmul.f32 %v7824, %v7608
        %v7833 = vmul.f32 %v7825, %v7609
        %v7834 = vmul.f32 %v7826, 1.442695
        %v7835 = vpow.pop %v7834
        %v7836 = vmul.f32 %v7827, 1.442695
        %v7837 = vpow.pop %v7836
        %v7838 = vmul.f32 %v7828, 1.442695
        %v7839 = vpow.pop %v7838
        %v7840 = vmul.f32 %v7829, 1.442695
        %v7841 = vpow.pop %v7840
        %v7842 = vmul.f32 %v7830, 1.442695
        %v7843 = vpow.pop %v7842
        %v7844 = vmul.f32 %v7831, 1.442695
        %v7845 = vpow.pop %v7844
        %v7846 = vmul.f32 %v7832, 1.442695
        %v7847 = vpow.pop %v7846
        %v7848 = vmul.f32 %v7833, 1.442695
        %v7849 = vpow.pop %v7848
        %v7850 = vmul.f32 %v7810, %v7835
        %v7851 = vmul.f32 %v7811, %v7837
        %v7852 = vmul.f32 %v7812, %v7839
        %v7853 = vmul.f32 %v7813, %v7841
        %v7854 = vmul.f32 %v7814, %v7843
        %v7855 = vmul.f32 %v7815, %v7845
        %v7856 = vmul.f32 %v7816, %v7847
        %v7857 = vmul.f32 %v7817, %v7849
        %v7858 = vsub.f32 1.0, %v7850
        %v7859 = vsub.f32 1.0, %v7851
        %v7860 = vsub.f32 1.0, %v7852
        %v7861 = vsub.f32 1.0, %v7853
        %v7862 = vsub.f32 1.0, %v7854
        %v7863 = vsub.f32 1.0, %v7855
        %v7864 = vsub.f32 1.0, %v7856
        %v7865 = vsub.f32 1.0, %v7857
        %v7866 = vmul.f32 %v7594, %v7858
        %v7867 = vmul.f32 %v7595, %v7859
        %v7868 = vmul.f32 %v7596, %v7860
        %v7869 = vmul.f32 %v7597, %v7861
        %v7870 = vmul.f32 %v7598, %v7862
        %v7871 = vmul.f32 %v7599, %v7863
        %v7872 = vmul.f32 %v7600, %v7864
        %v7873 = vmul.f32 %v7601, %v7865
        %v7874 = vadd.f32 %v7866, 1.0
        %v7875 = vadd.f32 %v7867, 1.0
        %v7876 = vadd.f32 %v7868, 1.0
        %v7877 = vadd.f32 %v7869, 1.0
        %v7878 = vadd.f32 %v7870, 1.0
        %v7879 = vadd.f32 %v7871, 1.0
        %v7880 = vadd.f32 %v7872, 1.0
        %v7881 = vadd.f32 %v7873, 1.0
        %v7882 = vmul.f32 %v7570, %v7874
        %v7883 = vmul.f32 %v7571, %v7875
        %v7884 = vmul.f32 %v7572, %v7876
        %v7885 = vmul.f32 %v7573, %v7877
        %v7886 = vmul.f32 %v7574, %v7878
        %v7887 = vmul.f32 %v7575, %v7879
        %v7888 = vmul.f32 %v7576, %v7880
        %v7889 = vmul.f32 %v7577, %v7881
        %v7890 = vld [vmem:[%s18] sm:$0xff]
        %v7891 = vld [vmem:[%s18 + $0x8] sm:$0xff]
        %v7892 = vld [vmem:[%s18 + $0x10] sm:$0xff]
        %v7893 = vld [vmem:[%s18 + $0x18] sm:$0xff]
        %v7894 = vld [vmem:[%s18 + $0x20] sm:$0xff]
        %v7895 = vld [vmem:[%s18 + $0x28] sm:$0xff]
        %v7896 = vld [vmem:[%s18 + $0x30] sm:$0xff]
        %v7897 = vld [vmem:[%s18 + $0x38] sm:$0xff]
        %v7898 = vld [vmem:[%s18 + $0x40] sm:$0xff]
        %v7899 = vld [vmem:[%s18 + $0x48] sm:$0xff]
        %v7900 = vld [vmem:[%s18 + $0x50] sm:$0xff]
        %v7901 = vld [vmem:[%s18 + $0x58] sm:$0xff]
        %v7902 = vld [vmem:[%s18 + $0x60] sm:$0xff]
        %v7903 = vld [vmem:[%s18 + $0x68] sm:$0xff]
        %v7904 = vld [vmem:[%s18 + $0x70] sm:$0xff]
        %v7905 = vld [vmem:[%s18 + $0x78] sm:$0xff]
        %v7906 = vld [vmem:[%s18 + $0x80] sm:$0xff]
        %v7907 = vld [vmem:[%s18 + $0x88] sm:$0xff]
        %v7908 = vld [vmem:[%s18 + $0x90] sm:$0xff]
        %v7909 = vld [vmem:[%s18 + $0x98] sm:$0xff]
        %v7910 = vld [vmem:[%s18 + $0xa0] sm:$0xff]
        %v7911 = vld [vmem:[%s18 + $0xa8] sm:$0xff]
        %v7912 = vld [vmem:[%s18 + $0xb0] sm:$0xff]
        %v7913 = vld [vmem:[%s18 + $0xb8] sm:$0xff]
        %v7914 = vld [vmem:[%s18 + $0xc0] sm:$0xff]
        %v7915 = vld [vmem:[%s18 + $0xc8] sm:$0xff]
        %v7916 = vld [vmem:[%s18 + $0xd0] sm:$0xff]
        %v7917 = vld [vmem:[%s18 + $0xd8] sm:$0xff]
        %v7918 = vld [vmem:[%s18 + $0xe0] sm:$0xff]
        %v7919 = vld [vmem:[%s18 + $0xe8] sm:$0xff]
        %v7920 = vld [vmem:[%s18 + $0xf0] sm:$0xff]
        %v7921 = vld [vmem:[%s18 + $0xf8] sm:$0xff]
        %v7923 = vsel %vm5098, %v7890, 0
        %v7926 = vsel %vm5098, %v7891, 0
        %v7929 = vsel %vm5098, %v7892, 0
        %v7932 = vsel %vm5098, %v7893, 0
        %v7935 = vsel %vm5098, %v7894, 0
        %v7938 = vsel %vm5098, %v7895, 0
        %v7941 = vsel %vm5098, %v7896, 0
        %v7944 = vsel %vm5098, %v7897, 0
        %v7947 = vsel %vm5098, %v7898, 0
        %v7950 = vsel %vm5098, %v7899, 0
        %v7953 = vsel %vm5098, %v7900, 0
        %v7956 = vsel %vm5098, %v7901, 0
        %v7959 = vsel %vm5098, %v7902, 0
        %v7962 = vsel %vm5098, %v7903, 0
        %v7965 = vsel %vm5098, %v7904, 0
        %v7968 = vsel %vm5098, %v7905, 0
        %v7971 = vsel %vm5098, %v7906, 0
        %v7974 = vsel %vm5098, %v7907, 0
        %v7977 = vsel %vm5098, %v7908, 0
        %v7980 = vsel %vm5098, %v7909, 0
        %v7983 = vsel %vm5098, %v7910, 0
        %v7986 = vsel %vm5098, %v7911, 0
        %v7989 = vsel %vm5098, %v7912, 0
        %v7992 = vsel %vm5098, %v7913, 0
        %v7995 = vsel %vm5098, %v7914, 0
        %v7998 = vsel %vm5098, %v7915, 0
        %v8001 = vsel %vm5098, %v7916, 0
        %v8004 = vsel %vm5098, %v7917, 0
        %v8007 = vsel %vm5098, %v7918, 0
        %v8010 = vsel %vm5098, %v7919, 0
        %v8013 = vsel %vm5098, %v7920, 0
        %v8016 = vsel %vm5098, %v7921, 0
        %8018 = vmatpush.msra.mxu0 0.0
        %8019 = vmatpush.msra.mxu0 0.0
        %8020 = vmatpush.msra.mxu0 0.0
        %8021 = vmatpush.msra.mxu0 0.0
        %8022 = vmatpush.msra.mxu0 0.0
        %8023 = vmatpush.msra.mxu0 0.0
        %8024 = vmatpush.msra.mxu0 0.0
        %8025 = vmatpush.msra.mxu0 0.0
        %8026 = vmatpush.msra.mxu0 %v7889
        %8027 = vmatpush.msra.mxu0 %v7888
        %8028 = vmatpush.msra.mxu0 %v7887
        %8029 = vmatpush.msra.mxu0 %v7886
        %8030 = vmatpush.msra.mxu0 %v7885
        %8031 = vmatpush.msra.mxu0 %v7884
        %8032 = vmatpush.msra.mxu0 %v7883
        %8033 = vmatpush.msra.mxu0 %v7882
        %8034 = vmatmul.f32.gmra.mxu0 %v7923
        %v8035 = vpop.f32.mrf.mxu0
        %v8036 = vadd.f32 0.0, %v8035
        %8037 = vmatmul.f32.gmra.mxu0 %v7926
        %v8038 = vpop.f32.mrf.mxu0
        %v8039 = vadd.f32 0.0, %v8038
        %8040 = vmatmul.f32.gmra.mxu0 %v7929
        %v8041 = vpop.f32.mrf.mxu0
        %v8042 = vadd.f32 0.0, %v8041
        %8043 = vmatmul.f32.gmra.mxu0 %v7932
        %v8044 = vpop.f32.mrf.mxu0
        %v8045 = vadd.f32 0.0, %v8044
        %8046 = vmatmul.f32.gmra.mxu0 %v7935
        %v8047 = vpop.f32.mrf.mxu0
        %v8048 = vadd.f32 0.0, %v8047
        %8049 = vmatmul.f32.gmra.mxu0 %v7938
        %v8050 = vpop.f32.mrf.mxu0
        %v8051 = vadd.f32 0.0, %v8050
        %8052 = vmatmul.f32.gmra.mxu0 %v7941
        %v8053 = vpop.f32.mrf.mxu0
        %v8054 = vadd.f32 0.0, %v8053
        %8055 = vmatmul.f32.gmra.mxu0 %v7944
        %v8056 = vpop.f32.mrf.mxu0
        %v8057 = vadd.f32 0.0, %v8056
        %8058 = vmatmul.f32.gmra.mxu0 %v7947
        %v8059 = vpop.f32.mrf.mxu0
        %v8060 = vadd.f32 0.0, %v8059
        %8061 = vmatmul.f32.gmra.mxu0 %v7950
        %v8062 = vpop.f32.mrf.mxu0
        %v8063 = vadd.f32 0.0, %v8062
        %8064 = vmatmul.f32.gmra.mxu0 %v7953
        %v8065 = vpop.f32.mrf.mxu0
        %v8066 = vadd.f32 0.0, %v8065
        %8067 = vmatmul.f32.gmra.mxu0 %v7956
        %v8068 = vpop.f32.mrf.mxu0
        %v8069 = vadd.f32 0.0, %v8068
        %8070 = vmatmul.f32.gmra.mxu0 %v7959
        %v8071 = vpop.f32.mrf.mxu0
        %v8072 = vadd.f32 0.0, %v8071
        %8073 = vmatmul.f32.gmra.mxu0 %v7962
        %v8074 = vpop.f32.mrf.mxu0
        %v8075 = vadd.f32 0.0, %v8074
        %8076 = vmatmul.f32.gmra.mxu0 %v7965
        %v8077 = vpop.f32.mrf.mxu0
        %v8078 = vadd.f32 0.0, %v8077
        %8079 = vmatmul.f32.gmra.mxu0 %v7968
        %v8080 = vpop.f32.mrf.mxu0
        %v8081 = vadd.f32 0.0, %v8080
        %8082 = vmatmul.f32.gmra.mxu0 %v7971
        %v8083 = vpop.f32.mrf.mxu0
        %v8084 = vadd.f32 0.0, %v8083
        %8085 = vmatmul.f32.gmra.mxu0 %v7974
        %v8086 = vpop.f32.mrf.mxu0
        %v8087 = vadd.f32 0.0, %v8086
        %8088 = vmatmul.f32.gmra.mxu0 %v7977
        %v8089 = vpop.f32.mrf.mxu0
        %v8090 = vadd.f32 0.0, %v8089
        %8091 = vmatmul.f32.gmra.mxu0 %v7980
        %v8092 = vpop.f32.mrf.mxu0
        %v8093 = vadd.f32 0.0, %v8092
        %8094 = vmatmul.f32.gmra.mxu0 %v7983
        %v8095 = vpop.f32.mrf.mxu0
        %v8096 = vadd.f32 0.0, %v8095
        %8097 = vmatmul.f32.gmra.mxu0 %v7986
        %v8098 = vpop.f32.mrf.mxu0
        %v8099 = vadd.f32 0.0, %v8098
        %8100 = vmatmul.f32.gmra.mxu0 %v7989
        %v8101 = vpop.f32.mrf.mxu0
        %v8102 = vadd.f32 0.0, %v8101
        %8103 = vmatmul.f32.gmra.mxu0 %v7992
        %v8104 = vpop.f32.mrf.mxu0
        %v8105 = vadd.f32 0.0, %v8104
        %8106 = vmatmul.f32.gmra.mxu0 %v7995
        %v8107 = vpop.f32.mrf.mxu0
        %v8108 = vadd.f32 0.0, %v8107
        %8109 = vmatmul.f32.gmra.mxu0 %v7998
        %v8110 = vpop.f32.mrf.mxu0
        %v8111 = vadd.f32 0.0, %v8110
        %8112 = vmatmul.f32.gmra.mxu0 %v8001
        %v8113 = vpop.f32.mrf.mxu0
        %v8114 = vadd.f32 0.0, %v8113
        %8115 = vmatmul.f32.gmra.mxu0 %v8004
        %v8116 = vpop.f32.mrf.mxu0
        %v8117 = vadd.f32 0.0, %v8116
        %8118 = vmatmul.f32.gmra.mxu0 %v8007
        %v8119 = vpop.f32.mrf.mxu0
        %v8120 = vadd.f32 0.0, %v8119
        %8121 = vmatmul.f32.gmra.mxu0 %v8010
        %v8122 = vpop.f32.mrf.mxu0
        %v8123 = vadd.f32 0.0, %v8122
        %8124 = vmatmul.f32.gmra.mxu0 %v8013
        %v8125 = vpop.f32.mrf.mxu0
        %v8126 = vadd.f32 0.0, %v8125
        %8127 = vmatmul.f32.gmra.mxu0 %v8016
        %v8128 = vpop.f32.mrf.mxu0
        %v8129 = vadd.f32 0.0, %v8128
        %8130 = vdwg.mxu0
        %v8131 = vrot.slane %v8036, 7
        %v8132 = vrot.slane %v8039, 7
        %v8133 = vrot.slane %v8042, 7
        %v8134 = vrot.slane %v8045, 7
        %v8135 = vrot.slane %v8048, 7
        %v8136 = vrot.slane %v8051, 7
        %v8137 = vrot.slane %v8054, 7
        %v8138 = vrot.slane %v8057, 7
        %v8139 = vrot.slane %v8060, 7
        %v8140 = vrot.slane %v8063, 7
        %v8141 = vrot.slane %v8066, 7
        %v8142 = vrot.slane %v8069, 7
        %v8143 = vrot.slane %v8072, 7
        %v8144 = vrot.slane %v8075, 7
        %v8145 = vrot.slane %v8078, 7
        %v8146 = vrot.slane %v8081, 7
        %v8147 = vrot.slane %v8084, 7
        %v8148 = vrot.slane %v8087, 7
        %v8149 = vrot.slane %v8090, 7
        %v8150 = vrot.slane %v8093, 7
        %v8151 = vrot.slane %v8096, 7
        %v8152 = vrot.slane %v8099, 7
        %v8153 = vrot.slane %v8102, 7
        %v8154 = vrot.slane %v8105, 7
        %v8155 = vrot.slane %v8108, 7
        %v8156 = vrot.slane %v8111, 7
        %v8157 = vrot.slane %v8114, 7
        %v8158 = vrot.slane %v8117, 7
        %v8159 = vrot.slane %v8120, 7
        %v8160 = vrot.slane %v8123, 7
        %v8161 = vrot.slane %v8126, 7
        %v8162 = vrot.slane %v8129, 7
        %v8163 = vsel %vm845, %v8161, %v8162
        %v8164 = vsel %vm845, %v8160, %v8161
        %v8165 = vsel %vm845, %v8159, %v8160
        %v8166 = vsel %vm845, %v8158, %v8159
        %v8167 = vsel %vm845, %v8157, %v8158
        %v8168 = vsel %vm845, %v8156, %v8157
        %v8169 = vsel %vm845, %v8155, %v8156
        %v8170 = vsel %vm845, %v8154, %v8155
        %v8171 = vsel %vm845, %v8153, %v8154
        %v8172 = vsel %vm845, %v8152, %v8153
        %v8173 = vsel %vm845, %v8151, %v8152
        %v8174 = vsel %vm845, %v8150, %v8151
        %v8175 = vsel %vm845, %v8149, %v8150
        %v8176 = vsel %vm845, %v8148, %v8149
        %v8177 = vsel %vm845, %v8147, %v8148
        %v8178 = vsel %vm845, %v8146, %v8147
        %v8179 = vsel %vm845, %v8145, %v8146
        %v8180 = vsel %vm845, %v8144, %v8145
        %v8181 = vsel %vm845, %v8143, %v8144
        %v8182 = vsel %vm845, %v8142, %v8143
        %v8183 = vsel %vm845, %v8141, %v8142
        %v8184 = vsel %vm845, %v8140, %v8141
        %v8185 = vsel %vm845, %v8139, %v8140
        %v8186 = vsel %vm845, %v8138, %v8139
        %v8187 = vsel %vm845, %v8137, %v8138
        %v8188 = vsel %vm845, %v8136, %v8137
        %v8189 = vsel %vm845, %v8135, %v8136
        %v8190 = vsel %vm845, %v8134, %v8135
        %v8191 = vsel %vm845, %v8133, %v8134
        %v8192 = vsel %vm845, %v8132, %v8133
        %v8193 = vsel %vm845, %v8131, %v8132
        %v8194 = vsel %vm845, %v8162, %v8131
        %8195 = vset.pattern.permute.xlu0 0
        %8196 = vperm.xlu0 %8195, %v739
        %v8197 = vpop.permute.xlu0 %8196
        %8199 = vset.pattern.permute.xlu0 0
        %8200 = vperm.xlu0 %8199, %v740
        %v8201 = vpop.permute.xlu0 %8200
        %8203 = vset.pattern.permute.xlu0 0
        %8204 = vperm.xlu0 %8203, %v741
        %v8205 = vpop.permute.xlu0 %8204
        %8207 = vset.pattern.permute.xlu0 0
        %8208 = vperm.xlu0 %8207, %v742
        %v8209 = vpop.permute.xlu0 %8208
        %8211 = vset.pattern.permute.xlu0 0
        %8212 = vperm.xlu0 %8211, %v743
        %v8213 = vpop.permute.xlu0 %8212
        %8215 = vset.pattern.permute.xlu0 0
        %8216 = vperm.xlu0 %8215, %v744
        %v8217 = vpop.permute.xlu0 %8216
        %8219 = vset.pattern.permute.xlu0 0
        %8220 = vperm.xlu0 %8219, %v745
        %v8221 = vpop.permute.xlu0 %8220
        %8223 = vset.pattern.permute.xlu0 0
        %8224 = vperm.xlu0 %8223, %v746
        %v8225 = vpop.permute.xlu0 %8224
        %8227 = vset.pattern.permute.xlu0 0
        %8228 = vperm.xlu0 %8227, %v747
        %v8229 = vpop.permute.xlu0 %8228
        %8231 = vset.pattern.permute.xlu0 0
        %8232 = vperm.xlu0 %8231, %v748
        %v8233 = vpop.permute.xlu0 %8232
        %8235 = vset.pattern.permute.xlu0 0
        %8236 = vperm.xlu0 %8235, %v749
        %v8237 = vpop.permute.xlu0 %8236
        %8239 = vset.pattern.permute.xlu0 0
        %8240 = vperm.xlu0 %8239, %v750
        %v8241 = vpop.permute.xlu0 %8240
        %8243 = vset.pattern.permute.xlu0 0
        %8244 = vperm.xlu0 %8243, %v751
        %v8245 = vpop.permute.xlu0 %8244
        %8247 = vset.pattern.permute.xlu0 0
        %8248 = vperm.xlu0 %8247, %v752
        %v8249 = vpop.permute.xlu0 %8248
        %8251 = vset.pattern.permute.xlu0 0
        %8252 = vperm.xlu0 %8251, %v753
        %v8253 = vpop.permute.xlu0 %8252
        %8255 = vset.pattern.permute.xlu0 0
        %8256 = vperm.xlu0 %8255, %v754
        %v8257 = vpop.permute.xlu0 %8256
        %8259 = vset.pattern.permute.xlu0 0
        %8260 = vperm.xlu0 %8259, %v755
        %v8261 = vpop.permute.xlu0 %8260
        %8263 = vset.pattern.permute.xlu0 0
        %8264 = vperm.xlu0 %8263, %v756
        %v8265 = vpop.permute.xlu0 %8264
        %8267 = vset.pattern.permute.xlu0 0
        %8268 = vperm.xlu0 %8267, %v757
        %v8269 = vpop.permute.xlu0 %8268
        %8271 = vset.pattern.permute.xlu0 0
        %8272 = vperm.xlu0 %8271, %v758
        %v8273 = vpop.permute.xlu0 %8272
        %8275 = vset.pattern.permute.xlu0 0
        %8276 = vperm.xlu0 %8275, %v759
        %v8277 = vpop.permute.xlu0 %8276
        %8279 = vset.pattern.permute.xlu0 0
        %8280 = vperm.xlu0 %8279, %v760
        %v8281 = vpop.permute.xlu0 %8280
        %8283 = vset.pattern.permute.xlu0 0
        %8284 = vperm.xlu0 %8283, %v761
        %v8285 = vpop.permute.xlu0 %8284
        %8287 = vset.pattern.permute.xlu0 0
        %8288 = vperm.xlu0 %8287, %v762
        %v8289 = vpop.permute.xlu0 %8288
        %8291 = vset.pattern.permute.xlu0 0
        %8292 = vperm.xlu0 %8291, %v763
        %v8293 = vpop.permute.xlu0 %8292
        %8295 = vset.pattern.permute.xlu0 0
        %8296 = vperm.xlu0 %8295, %v764
        %v8297 = vpop.permute.xlu0 %8296
        %8299 = vset.pattern.permute.xlu0 0
        %8300 = vperm.xlu0 %8299, %v765
        %v8301 = vpop.permute.xlu0 %8300
        %8303 = vset.pattern.permute.xlu0 0
        %8304 = vperm.xlu0 %8303, %v766
        %v8305 = vpop.permute.xlu0 %8304
        %8307 = vset.pattern.permute.xlu0 0
        %8308 = vperm.xlu0 %8307, %v767
        %v8309 = vpop.permute.xlu0 %8308
        %8311 = vset.pattern.permute.xlu0 0
        %8312 = vperm.xlu0 %8311, %v768
        %v8313 = vpop.permute.xlu0 %8312
        %8315 = vset.pattern.permute.xlu0 0
        %8316 = vperm.xlu0 %8315, %v769
        %v8317 = vpop.permute.xlu0 %8316
        %8319 = vset.pattern.permute.xlu0 0
        %8320 = vperm.xlu0 %8319, %v770
        %v8321 = vpop.permute.xlu0 %8320
        %v8323 = vmul.f32 %v8164, %v8197
        %v8324 = vmul.f32 %v8163, %v8201
        %v8325 = vmul.f32 %v8194, %v8205
        %v8326 = vmul.f32 %v8193, %v8209
        %v8327 = vmul.f32 %v8192, %v8213
        %v8328 = vmul.f32 %v8191, %v8217
        %v8329 = vmul.f32 %v8190, %v8221
        %v8330 = vmul.f32 %v8189, %v8225
        %v8331 = vmul.f32 %v8188, %v8229
        %v8332 = vmul.f32 %v8187, %v8233
        %v8333 = vmul.f32 %v8186, %v8237
        %v8334 = vmul.f32 %v8185, %v8241
        %v8335 = vmul.f32 %v8184, %v8245
        %v8336 = vmul.f32 %v8183, %v8249
        %v8337 = vmul.f32 %v8182, %v8253
        %v8338 = vmul.f32 %v8181, %v8257
        %v8339 = vmul.f32 %v8180, %v8261
        %v8340 = vmul.f32 %v8179, %v8265
        %v8341 = vmul.f32 %v8178, %v8269
        %v8342 = vmul.f32 %v8177, %v8273
        %v8343 = vmul.f32 %v8176, %v8277
        %v8344 = vmul.f32 %v8175, %v8281
        %v8345 = vmul.f32 %v8174, %v8285
        %v8346 = vmul.f32 %v8173, %v8289
        %v8347 = vmul.f32 %v8172, %v8293
        %v8348 = vmul.f32 %v8171, %v8297
        %v8349 = vmul.f32 %v8170, %v8301
        %v8350 = vmul.f32 %v8169, %v8305
        %v8351 = vmul.f32 %v8168, %v8309
        %v8352 = vmul.f32 %v8167, %v8313
        %v8353 = vmul.f32 %v8166, %v8317
        %v8354 = vmul.f32 %v8165, %v8321
        %8355 = vset.pattern.permute.xlu0 1
        %8356 = vperm.xlu0 %8355, %v739
        %v8357 = vpop.permute.xlu0 %8356
        %8359 = vset.pattern.permute.xlu0 1
        %8360 = vperm.xlu0 %8359, %v740
        %v8361 = vpop.permute.xlu0 %8360
        %8363 = vset.pattern.permute.xlu0 1
        %8364 = vperm.xlu0 %8363, %v741
        %v8365 = vpop.permute.xlu0 %8364
        %8367 = vset.pattern.permute.xlu0 1
        %8368 = vperm.xlu0 %8367, %v742
        %v8369 = vpop.permute.xlu0 %8368
        %8371 = vset.pattern.permute.xlu0 1
        %8372 = vperm.xlu0 %8371, %v743
        %v8373 = vpop.permute.xlu0 %8372
        %8375 = vset.pattern.permute.xlu0 1
        %8376 = vperm.xlu0 %8375, %v744
        %v8377 = vpop.permute.xlu0 %8376
        %8379 = vset.pattern.permute.xlu0 1
        %8380 = vperm.xlu0 %8379, %v745
        %v8381 = vpop.permute.xlu0 %8380
        %8383 = vset.pattern.permute.xlu0 1
        %8384 = vperm.xlu0 %8383, %v746
        %v8385 = vpop.permute.xlu0 %8384
        %8387 = vset.pattern.permute.xlu0 1
        %8388 = vperm.xlu0 %8387, %v747
        %v8389 = vpop.permute.xlu0 %8388
        %8391 = vset.pattern.permute.xlu0 1
        %8392 = vperm.xlu0 %8391, %v748
        %v8393 = vpop.permute.xlu0 %8392
        %8395 = vset.pattern.permute.xlu0 1
        %8396 = vperm.xlu0 %8395, %v749
        %v8397 = vpop.permute.xlu0 %8396
        %8399 = vset.pattern.permute.xlu0 1
        %8400 = vperm.xlu0 %8399, %v750
        %v8401 = vpop.permute.xlu0 %8400
        %8403 = vset.pattern.permute.xlu0 1
        %8404 = vperm.xlu0 %8403, %v751
        %v8405 = vpop.permute.xlu0 %8404
        %8407 = vset.pattern.permute.xlu0 1
        %8408 = vperm.xlu0 %8407, %v752
        %v8409 = vpop.permute.xlu0 %8408
        %8411 = vset.pattern.permute.xlu0 1
        %8412 = vperm.xlu0 %8411, %v753
        %v8413 = vpop.permute.xlu0 %8412
        %8415 = vset.pattern.permute.xlu0 1
        %8416 = vperm.xlu0 %8415, %v754
        %v8417 = vpop.permute.xlu0 %8416
        %8419 = vset.pattern.permute.xlu0 1
        %8420 = vperm.xlu0 %8419, %v755
        %v8421 = vpop.permute.xlu0 %8420
        %8423 = vset.pattern.permute.xlu0 1
        %8424 = vperm.xlu0 %8423, %v756
        %v8425 = vpop.permute.xlu0 %8424
        %8427 = vset.pattern.permute.xlu0 1
        %8428 = vperm.xlu0 %8427, %v757
        %v8429 = vpop.permute.xlu0 %8428
        %8431 = vset.pattern.permute.xlu0 1
        %8432 = vperm.xlu0 %8431, %v758
        %v8433 = vpop.permute.xlu0 %8432
        %8435 = vset.pattern.permute.xlu0 1
        %8436 = vperm.xlu0 %8435, %v759
        %v8437 = vpop.permute.xlu0 %8436
        %8439 = vset.pattern.permute.xlu0 1
        %8440 = vperm.xlu0 %8439, %v760
        %v8441 = vpop.permute.xlu0 %8440
        %8443 = vset.pattern.permute.xlu0 1
        %8444 = vperm.xlu0 %8443, %v761
        %v8445 = vpop.permute.xlu0 %8444
        %8447 = vset.pattern.permute.xlu0 1
        %8448 = vperm.xlu0 %8447, %v762
        %v8449 = vpop.permute.xlu0 %8448
        %8451 = vset.pattern.permute.xlu0 1
        %8452 = vperm.xlu0 %8451, %v763
        %v8453 = vpop.permute.xlu0 %8452
        %8455 = vset.pattern.permute.xlu0 1
        %8456 = vperm.xlu0 %8455, %v764
        %v8457 = vpop.permute.xlu0 %8456
        %8459 = vset.pattern.permute.xlu0 1
        %8460 = vperm.xlu0 %8459, %v765
        %v8461 = vpop.permute.xlu0 %8460
        %8463 = vset.pattern.permute.xlu0 1
        %8464 = vperm.xlu0 %8463, %v766
        %v8465 = vpop.permute.xlu0 %8464
        %8467 = vset.pattern.permute.xlu0 1
        %8468 = vperm.xlu0 %8467, %v767
        %v8469 = vpop.permute.xlu0 %8468
        %8471 = vset.pattern.permute.xlu0 1
        %8472 = vperm.xlu0 %8471, %v768
        %v8473 = vpop.permute.xlu0 %8472
        %8475 = vset.pattern.permute.xlu0 1
        %8476 = vperm.xlu0 %8475, %v769
        %v8477 = vpop.permute.xlu0 %8476
        %8479 = vset.pattern.permute.xlu0 1
        %8480 = vperm.xlu0 %8479, %v770
        %v8481 = vpop.permute.xlu0 %8480
        %v8483 = vmul.f32 %v8126, %v8357
        %v8484 = vmul.f32 %v8129, %v8361
        %v8485 = vmul.f32 %v8036, %v8365
        %v8486 = vmul.f32 %v8039, %v8369
        %v8487 = vmul.f32 %v8042, %v8373
        %v8488 = vmul.f32 %v8045, %v8377
        %v8489 = vmul.f32 %v8048, %v8381
        %v8490 = vmul.f32 %v8051, %v8385
        %v8491 = vmul.f32 %v8054, %v8389
        %v8492 = vmul.f32 %v8057, %v8393
        %v8493 = vmul.f32 %v8060, %v8397
        %v8494 = vmul.f32 %v8063, %v8401
        %v8495 = vmul.f32 %v8066, %v8405
        %v8496 = vmul.f32 %v8069, %v8409
        %v8497 = vmul.f32 %v8072, %v8413
        %v8498 = vmul.f32 %v8075, %v8417
        %v8499 = vmul.f32 %v8078, %v8421
        %v8500 = vmul.f32 %v8081, %v8425
        %v8501 = vmul.f32 %v8084, %v8429
        %v8502 = vmul.f32 %v8087, %v8433
        %v8503 = vmul.f32 %v8090, %v8437
        %v8504 = vmul.f32 %v8093, %v8441
        %v8505 = vmul.f32 %v8096, %v8445
        %v8506 = vmul.f32 %v8099, %v8449
        %v8507 = vmul.f32 %v8102, %v8453
        %v8508 = vmul.f32 %v8105, %v8457
        %v8509 = vmul.f32 %v8108, %v8461
        %v8510 = vmul.f32 %v8111, %v8465
        %v8511 = vmul.f32 %v8114, %v8469
        %v8512 = vmul.f32 %v8117, %v8473
        %v8513 = vmul.f32 %v8120, %v8477
        %v8514 = vmul.f32 %v8123, %v8481
        %v8515 = vrot.slane %v8036, 1
        %v8516 = vrot.slane %v8039, 1
        %v8517 = vrot.slane %v8042, 1
        %v8518 = vrot.slane %v8045, 1
        %v8519 = vrot.slane %v8048, 1
        %v8520 = vrot.slane %v8051, 1
        %v8521 = vrot.slane %v8054, 1
        %v8522 = vrot.slane %v8057, 1
        %v8523 = vrot.slane %v8060, 1
        %v8524 = vrot.slane %v8063, 1
        %v8525 = vrot.slane %v8066, 1
        %v8526 = vrot.slane %v8069, 1
        %v8527 = vrot.slane %v8072, 1
        %v8528 = vrot.slane %v8075, 1
        %v8529 = vrot.slane %v8078, 1
        %v8530 = vrot.slane %v8081, 1
        %v8531 = vrot.slane %v8084, 1
        %v8532 = vrot.slane %v8087, 1
        %v8533 = vrot.slane %v8090, 1
        %v8534 = vrot.slane %v8093, 1
        %v8535 = vrot.slane %v8096, 1
        %v8536 = vrot.slane %v8099, 1
        %v8537 = vrot.slane %v8102, 1
        %v8538 = vrot.slane %v8105, 1
        %v8539 = vrot.slane %v8108, 1
        %v8540 = vrot.slane %v8111, 1
        %v8541 = vrot.slane %v8114, 1
        %v8542 = vrot.slane %v8117, 1
        %v8543 = vrot.slane %v8120, 1
        %v8544 = vrot.slane %v8123, 1
        %v8545 = vrot.slane %v8126, 1
        %v8546 = vrot.slane %v8129, 1
        %v8547 = vsel %vm1102, %v8545, %v8546
        %v8548 = vsel %vm1102, %v8544, %v8545
        %v8549 = vsel %vm1102, %v8543, %v8544
        %v8550 = vsel %vm1102, %v8542, %v8543
        %v8551 = vsel %vm1102, %v8541, %v8542
        %v8552 = vsel %vm1102, %v8540, %v8541
        %v8553 = vsel %vm1102, %v8539, %v8540
        %v8554 = vsel %vm1102, %v8538, %v8539
        %v8555 = vsel %vm1102, %v8537, %v8538
        %v8556 = vsel %vm1102, %v8536, %v8537
        %v8557 = vsel %vm1102, %v8535, %v8536
        %v8558 = vsel %vm1102, %v8534, %v8535
        %v8559 = vsel %vm1102, %v8533, %v8534
        %v8560 = vsel %vm1102, %v8532, %v8533
        %v8561 = vsel %vm1102, %v8531, %v8532
        %v8562 = vsel %vm1102, %v8530, %v8531
        %v8563 = vsel %vm1102, %v8529, %v8530
        %v8564 = vsel %vm1102, %v8528, %v8529
        %v8565 = vsel %vm1102, %v8527, %v8528
        %v8566 = vsel %vm1102, %v8526, %v8527
        %v8567 = vsel %vm1102, %v8525, %v8526
        %v8568 = vsel %vm1102, %v8524, %v8525
        %v8569 = vsel %vm1102, %v8523, %v8524
        %v8570 = vsel %vm1102, %v8522, %v8523
        %v8571 = vsel %vm1102, %v8521, %v8522
        %v8572 = vsel %vm1102, %v8520, %v8521
        %v8573 = vsel %vm1102, %v8519, %v8520
        %v8574 = vsel %vm1102, %v8518, %v8519
        %v8575 = vsel %vm1102, %v8517, %v8518
        %v8576 = vsel %vm1102, %v8516, %v8517
        %v8577 = vsel %vm1102, %v8515, %v8516
        %v8578 = vsel %vm1102, %v8546, %v8515
        %8579 = vset.pattern.permute.xlu0 2
        %8580 = vperm.xlu0 %8579, %v739
        %v8581 = vpop.permute.xlu0 %8580
        %8583 = vset.pattern.permute.xlu0 2
        %8584 = vperm.xlu0 %8583, %v740
        %v8585 = vpop.permute.xlu0 %8584
        %8587 = vset.pattern.permute.xlu0 2
        %8588 = vperm.xlu0 %8587, %v741
        %v8589 = vpop.permute.xlu0 %8588
        %8591 = vset.pattern.permute.xlu0 2
        %8592 = vperm.xlu0 %8591, %v742
        %v8593 = vpop.permute.xlu0 %8592
        %8595 = vset.pattern.permute.xlu0 2
        %8596 = vperm.xlu0 %8595, %v743
        %v8597 = vpop.permute.xlu0 %8596
        %8599 = vset.pattern.permute.xlu0 2
        %8600 = vperm.xlu0 %8599, %v744
        %v8601 = vpop.permute.xlu0 %8600
        %8603 = vset.pattern.permute.xlu0 2
        %8604 = vperm.xlu0 %8603, %v745
        %v8605 = vpop.permute.xlu0 %8604
        %8607 = vset.pattern.permute.xlu0 2
        %8608 = vperm.xlu0 %8607, %v746
        %v8609 = vpop.permute.xlu0 %8608
        %8611 = vset.pattern.permute.xlu0 2
        %8612 = vperm.xlu0 %8611, %v747
        %v8613 = vpop.permute.xlu0 %8612
        %8615 = vset.pattern.permute.xlu0 2
        %8616 = vperm.xlu0 %8615, %v748
        %v8617 = vpop.permute.xlu0 %8616
        %8619 = vset.pattern.permute.xlu0 2
        %8620 = vperm.xlu0 %8619, %v749
        %v8621 = vpop.permute.xlu0 %8620
        %8623 = vset.pattern.permute.xlu0 2
        %8624 = vperm.xlu0 %8623, %v750
        %v8625 = vpop.permute.xlu0 %8624
        %8627 = vset.pattern.permute.xlu0 2
        %8628 = vperm.xlu0 %8627, %v751
        %v8629 = vpop.permute.xlu0 %8628
        %8631 = vset.pattern.permute.xlu0 2
        %8632 = vperm.xlu0 %8631, %v752
        %v8633 = vpop.permute.xlu0 %8632
        %8635 = vset.pattern.permute.xlu0 2
        %8636 = vperm.xlu0 %8635, %v753
        %v8637 = vpop.permute.xlu0 %8636
        %8639 = vset.pattern.permute.xlu0 2
        %8640 = vperm.xlu0 %8639, %v754
        %v8641 = vpop.permute.xlu0 %8640
        %8643 = vset.pattern.permute.xlu0 2
        %8644 = vperm.xlu0 %8643, %v755
        %v8645 = vpop.permute.xlu0 %8644
        %8647 = vset.pattern.permute.xlu0 2
        %8648 = vperm.xlu0 %8647, %v756
        %v8649 = vpop.permute.xlu0 %8648
        %8651 = vset.pattern.permute.xlu0 2
        %8652 = vperm.xlu0 %8651, %v757
        %v8653 = vpop.permute.xlu0 %8652
        %8655 = vset.pattern.permute.xlu0 2
        %8656 = vperm.xlu0 %8655, %v758
        %v8657 = vpop.permute.xlu0 %8656
        %8659 = vset.pattern.permute.xlu0 2
        %8660 = vperm.xlu0 %8659, %v759
        %v8661 = vpop.permute.xlu0 %8660
        %8663 = vset.pattern.permute.xlu0 2
        %8664 = vperm.xlu0 %8663, %v760
        %v8665 = vpop.permute.xlu0 %8664
        %8667 = vset.pattern.permute.xlu0 2
        %8668 = vperm.xlu0 %8667, %v761
        %v8669 = vpop.permute.xlu0 %8668
        %8671 = vset.pattern.permute.xlu0 2
        %8672 = vperm.xlu0 %8671, %v762
        %v8673 = vpop.permute.xlu0 %8672
        %8675 = vset.pattern.permute.xlu0 2
        %8676 = vperm.xlu0 %8675, %v763
        %v8677 = vpop.permute.xlu0 %8676
        %8679 = vset.pattern.permute.xlu0 2
        %8680 = vperm.xlu0 %8679, %v764
        %v8681 = vpop.permute.xlu0 %8680
        %8683 = vset.pattern.permute.xlu0 2
        %8684 = vperm.xlu0 %8683, %v765
        %v8685 = vpop.permute.xlu0 %8684
        %8687 = vset.pattern.permute.xlu0 2
        %8688 = vperm.xlu0 %8687, %v766
        %v8689 = vpop.permute.xlu0 %8688
        %8691 = vset.pattern.permute.xlu0 2
        %8692 = vperm.xlu0 %8691, %v767
        %v8693 = vpop.permute.xlu0 %8692
        %8695 = vset.pattern.permute.xlu0 2
        %8696 = vperm.xlu0 %8695, %v768
        %v8697 = vpop.permute.xlu0 %8696
        %8699 = vset.pattern.permute.xlu0 2
        %8700 = vperm.xlu0 %8699, %v769
        %v8701 = vpop.permute.xlu0 %8700
        %8703 = vset.pattern.permute.xlu0 2
        %8704 = vperm.xlu0 %8703, %v770
        %v8705 = vpop.permute.xlu0 %8704
        %v8707 = vmul.f32 %v8547, %v8581
        %v8708 = vmul.f32 %v8578, %v8585
        %v8709 = vmul.f32 %v8577, %v8589
        %v8710 = vmul.f32 %v8576, %v8593
        %v8711 = vmul.f32 %v8575, %v8597
        %v8712 = vmul.f32 %v8574, %v8601
        %v8713 = vmul.f32 %v8573, %v8605
        %v8714 = vmul.f32 %v8572, %v8609
        %v8715 = vmul.f32 %v8571, %v8613
        %v8716 = vmul.f32 %v8570, %v8617
        %v8717 = vmul.f32 %v8569, %v8621
        %v8718 = vmul.f32 %v8568, %v8625
        %v8719 = vmul.f32 %v8567, %v8629
        %v8720 = vmul.f32 %v8566, %v8633
        %v8721 = vmul.f32 %v8565, %v8637
        %v8722 = vmul.f32 %v8564, %v8641
        %v8723 = vmul.f32 %v8563, %v8645
        %v8724 = vmul.f32 %v8562, %v8649
        %v8725 = vmul.f32 %v8561, %v8653
        %v8726 = vmul.f32 %v8560, %v8657
        %v8727 = vmul.f32 %v8559, %v8661
        %v8728 = vmul.f32 %v8558, %v8665
        %v8729 = vmul.f32 %v8557, %v8669
        %v8730 = vmul.f32 %v8556, %v8673
        %v8731 = vmul.f32 %v8555, %v8677
        %v8732 = vmul.f32 %v8554, %v8681
        %v8733 = vmul.f32 %v8553, %v8685
        %v8734 = vmul.f32 %v8552, %v8689
        %v8735 = vmul.f32 %v8551, %v8693
        %v8736 = vmul.f32 %v8550, %v8697
        %v8737 = vmul.f32 %v8549, %v8701
        %v8738 = vmul.f32 %v8548, %v8705
        %8739 = vset.pattern.permute.xlu0 3
        %8740 = vperm.xlu0 %8739, %v739
        %v8741 = vpop.permute.xlu0 %8740
        %8743 = vset.pattern.permute.xlu0 3
        %8744 = vperm.xlu0 %8743, %v740
        %v8745 = vpop.permute.xlu0 %8744
        %8747 = vset.pattern.permute.xlu0 3
        %8748 = vperm.xlu0 %8747, %v741
        %v8749 = vpop.permute.xlu0 %8748
        %8751 = vset.pattern.permute.xlu0 3
        %8752 = vperm.xlu0 %8751, %v742
        %v8753 = vpop.permute.xlu0 %8752
        %8755 = vset.pattern.permute.xlu0 3
        %8756 = vperm.xlu0 %8755, %v743
        %v8757 = vpop.permute.xlu0 %8756
        %8759 = vset.pattern.permute.xlu0 3
        %8760 = vperm.xlu0 %8759, %v744
        %v8761 = vpop.permute.xlu0 %8760
        %8763 = vset.pattern.permute.xlu0 3
        %8764 = vperm.xlu0 %8763, %v745
        %v8765 = vpop.permute.xlu0 %8764
        %8767 = vset.pattern.permute.xlu0 3
        %8768 = vperm.xlu0 %8767, %v746
        %v8769 = vpop.permute.xlu0 %8768
        %8771 = vset.pattern.permute.xlu0 3
        %8772 = vperm.xlu0 %8771, %v747
        %v8773 = vpop.permute.xlu0 %8772
        %8775 = vset.pattern.permute.xlu0 3
        %8776 = vperm.xlu0 %8775, %v748
        %v8777 = vpop.permute.xlu0 %8776
        %8779 = vset.pattern.permute.xlu0 3
        %8780 = vperm.xlu0 %8779, %v749
        %v8781 = vpop.permute.xlu0 %8780
        %8783 = vset.pattern.permute.xlu0 3
        %8784 = vperm.xlu0 %8783, %v750
        %v8785 = vpop.permute.xlu0 %8784
        %8787 = vset.pattern.permute.xlu0 3
        %8788 = vperm.xlu0 %8787, %v751
        %v8789 = vpop.permute.xlu0 %8788
        %8791 = vset.pattern.permute.xlu0 3
        %8792 = vperm.xlu0 %8791, %v752
        %v8793 = vpop.permute.xlu0 %8792
        %8795 = vset.pattern.permute.xlu0 3
        %8796 = vperm.xlu0 %8795, %v753
        %v8797 = vpop.permute.xlu0 %8796
        %8799 = vset.pattern.permute.xlu0 3
        %8800 = vperm.xlu0 %8799, %v754
        %v8801 = vpop.permute.xlu0 %8800
        %8803 = vset.pattern.permute.xlu0 3
        %8804 = vperm.xlu0 %8803, %v755
        %v8805 = vpop.permute.xlu0 %8804
        %8807 = vset.pattern.permute.xlu0 3
        %8808 = vperm.xlu0 %8807, %v756
        %v8809 = vpop.permute.xlu0 %8808
        %8811 = vset.pattern.permute.xlu0 3
        %8812 = vperm.xlu0 %8811, %v757
        %v8813 = vpop.permute.xlu0 %8812
        %8815 = vset.pattern.permute.xlu0 3
        %8816 = vperm.xlu0 %8815, %v758
        %v8817 = vpop.permute.xlu0 %8816
        %8819 = vset.pattern.permute.xlu0 3
        %8820 = vperm.xlu0 %8819, %v759
        %v8821 = vpop.permute.xlu0 %8820
        %8823 = vset.pattern.permute.xlu0 3
        %8824 = vperm.xlu0 %8823, %v760
        %v8825 = vpop.permute.xlu0 %8824
        %8827 = vset.pattern.permute.xlu0 3
        %8828 = vperm.xlu0 %8827, %v761
        %v8829 = vpop.permute.xlu0 %8828
        %8831 = vset.pattern.permute.xlu0 3
        %8832 = vperm.xlu0 %8831, %v762
        %v8833 = vpop.permute.xlu0 %8832
        %8835 = vset.pattern.permute.xlu0 3
        %8836 = vperm.xlu0 %8835, %v763
        %v8837 = vpop.permute.xlu0 %8836
        %8839 = vset.pattern.permute.xlu0 3
        %8840 = vperm.xlu0 %8839, %v764
        %v8841 = vpop.permute.xlu0 %8840
        %8843 = vset.pattern.permute.xlu0 3
        %8844 = vperm.xlu0 %8843, %v765
        %v8845 = vpop.permute.xlu0 %8844
        %8847 = vset.pattern.permute.xlu0 3
        %8848 = vperm.xlu0 %8847, %v766
        %v8849 = vpop.permute.xlu0 %8848
        %8851 = vset.pattern.permute.xlu0 3
        %8852 = vperm.xlu0 %8851, %v767
        %v8853 = vpop.permute.xlu0 %8852
        %8855 = vset.pattern.permute.xlu0 3
        %8856 = vperm.xlu0 %8855, %v768
        %v8857 = vpop.permute.xlu0 %8856
        %8859 = vset.pattern.permute.xlu0 3
        %8860 = vperm.xlu0 %8859, %v769
        %v8861 = vpop.permute.xlu0 %8860
        %8863 = vset.pattern.permute.xlu0 3
        %8864 = vperm.xlu0 %8863, %v770
        %v8865 = vpop.permute.xlu0 %8864
        %v8867 = vmul.f32 %v8194, %v8741
        %v8868 = vmul.f32 %v8193, %v8745
        %v8869 = vmul.f32 %v8192, %v8749
        %v8870 = vmul.f32 %v8191, %v8753
        %v8871 = vmul.f32 %v8190, %v8757
        %v8872 = vmul.f32 %v8189, %v8761
        %v8873 = vmul.f32 %v8188, %v8765
        %v8874 = vmul.f32 %v8187, %v8769
        %v8875 = vmul.f32 %v8186, %v8773
        %v8876 = vmul.f32 %v8185, %v8777
        %v8877 = vmul.f32 %v8184, %v8781
        %v8878 = vmul.f32 %v8183, %v8785
        %v8879 = vmul.f32 %v8182, %v8789
        %v8880 = vmul.f32 %v8181, %v8793
        %v8881 = vmul.f32 %v8180, %v8797
        %v8882 = vmul.f32 %v8179, %v8801
        %v8883 = vmul.f32 %v8178, %v8805
        %v8884 = vmul.f32 %v8177, %v8809
        %v8885 = vmul.f32 %v8176, %v8813
        %v8886 = vmul.f32 %v8175, %v8817
        %v8887 = vmul.f32 %v8174, %v8821
        %v8888 = vmul.f32 %v8173, %v8825
        %v8889 = vmul.f32 %v8172, %v8829
        %v8890 = vmul.f32 %v8171, %v8833
        %v8891 = vmul.f32 %v8170, %v8837
        %v8892 = vmul.f32 %v8169, %v8841
        %v8893 = vmul.f32 %v8168, %v8845
        %v8894 = vmul.f32 %v8167, %v8849
        %v8895 = vmul.f32 %v8166, %v8853
        %v8896 = vmul.f32 %v8165, %v8857
        %v8897 = vmul.f32 %v8164, %v8861
        %v8898 = vmul.f32 %v8163, %v8865
        %8899 = vset.pattern.permute.xlu0 5
        %8900 = vperm.xlu0 %8899, %v739
        %v8901 = vpop.permute.xlu0 %8900
        %8903 = vset.pattern.permute.xlu0 5
        %8904 = vperm.xlu0 %8903, %v740
        %v8905 = vpop.permute.xlu0 %8904
        %8907 = vset.pattern.permute.xlu0 5
        %8908 = vperm.xlu0 %8907, %v741
        %v8909 = vpop.permute.xlu0 %8908
        %8911 = vset.pattern.permute.xlu0 5
        %8912 = vperm.xlu0 %8911, %v742
        %v8913 = vpop.permute.xlu0 %8912
        %8915 = vset.pattern.permute.xlu0 5
        %8916 = vperm.xlu0 %8915, %v743
        %v8917 = vpop.permute.xlu0 %8916
        %8919 = vset.pattern.permute.xlu0 5
        %8920 = vperm.xlu0 %8919, %v744
        %v8921 = vpop.permute.xlu0 %8920
        %8923 = vset.pattern.permute.xlu0 5
        %8924 = vperm.xlu0 %8923, %v745
        %v8925 = vpop.permute.xlu0 %8924
        %8927 = vset.pattern.permute.xlu0 5
        %8928 = vperm.xlu0 %8927, %v746
        %v8929 = vpop.permute.xlu0 %8928
        %8931 = vset.pattern.permute.xlu0 5
        %8932 = vperm.xlu0 %8931, %v747
        %v8933 = vpop.permute.xlu0 %8932
        %8935 = vset.pattern.permute.xlu0 5
        %8936 = vperm.xlu0 %8935, %v748
        %v8937 = vpop.permute.xlu0 %8936
        %8939 = vset.pattern.permute.xlu0 5
        %8940 = vperm.xlu0 %8939, %v749
        %v8941 = vpop.permute.xlu0 %8940
        %8943 = vset.pattern.permute.xlu0 5
        %8944 = vperm.xlu0 %8943, %v750
        %v8945 = vpop.permute.xlu0 %8944
        %8947 = vset.pattern.permute.xlu0 5
        %8948 = vperm.xlu0 %8947, %v751
        %v8949 = vpop.permute.xlu0 %8948
        %8951 = vset.pattern.permute.xlu0 5
        %8952 = vperm.xlu0 %8951, %v752
        %v8953 = vpop.permute.xlu0 %8952
        %8955 = vset.pattern.permute.xlu0 5
        %8956 = vperm.xlu0 %8955, %v753
        %v8957 = vpop.permute.xlu0 %8956
        %8959 = vset.pattern.permute.xlu0 5
        %8960 = vperm.xlu0 %8959, %v754
        %v8961 = vpop.permute.xlu0 %8960
        %8963 = vset.pattern.permute.xlu0 5
        %8964 = vperm.xlu0 %8963, %v755
        %v8965 = vpop.permute.xlu0 %8964
        %8967 = vset.pattern.permute.xlu0 5
        %8968 = vperm.xlu0 %8967, %v756
        %v8969 = vpop.permute.xlu0 %8968
        %8971 = vset.pattern.permute.xlu0 5
        %8972 = vperm.xlu0 %8971, %v757
        %v8973 = vpop.permute.xlu0 %8972
        %8975 = vset.pattern.permute.xlu0 5
        %8976 = vperm.xlu0 %8975, %v758
        %v8977 = vpop.permute.xlu0 %8976
        %8979 = vset.pattern.permute.xlu0 5
        %8980 = vperm.xlu0 %8979, %v759
        %v8981 = vpop.permute.xlu0 %8980
        %8983 = vset.pattern.permute.xlu0 5
        %8984 = vperm.xlu0 %8983, %v760
        %v8985 = vpop.permute.xlu0 %8984
        %8987 = vset.pattern.permute.xlu0 5
        %8988 = vperm.xlu0 %8987, %v761
        %v8989 = vpop.permute.xlu0 %8988
        %8991 = vset.pattern.permute.xlu0 5
        %8992 = vperm.xlu0 %8991, %v762
        %v8993 = vpop.permute.xlu0 %8992
        %8995 = vset.pattern.permute.xlu0 5
        %8996 = vperm.xlu0 %8995, %v763
        %v8997 = vpop.permute.xlu0 %8996
        %8999 = vset.pattern.permute.xlu0 5
        %9000 = vperm.xlu0 %8999, %v764
        %v9001 = vpop.permute.xlu0 %9000
        %9003 = vset.pattern.permute.xlu0 5
        %9004 = vperm.xlu0 %9003, %v765
        %v9005 = vpop.permute.xlu0 %9004
        %9007 = vset.pattern.permute.xlu0 5
        %9008 = vperm.xlu0 %9007, %v766
        %v9009 = vpop.permute.xlu0 %9008
        %9011 = vset.pattern.permute.xlu0 5
        %9012 = vperm.xlu0 %9011, %v767
        %v9013 = vpop.permute.xlu0 %9012
        %9015 = vset.pattern.permute.xlu0 5
        %9016 = vperm.xlu0 %9015, %v768
        %v9017 = vpop.permute.xlu0 %9016
        %9019 = vset.pattern.permute.xlu0 5
        %9020 = vperm.xlu0 %9019, %v769
        %v9021 = vpop.permute.xlu0 %9020
        %9023 = vset.pattern.permute.xlu0 5
        %9024 = vperm.xlu0 %9023, %v770
        %v9025 = vpop.permute.xlu0 %9024
        %v9027 = vmul.f32 %v8577, %v8901
        %v9028 = vmul.f32 %v8576, %v8905
        %v9029 = vmul.f32 %v8575, %v8909
        %v9030 = vmul.f32 %v8574, %v8913
        %v9031 = vmul.f32 %v8573, %v8917
        %v9032 = vmul.f32 %v8572, %v8921
        %v9033 = vmul.f32 %v8571, %v8925
        %v9034 = vmul.f32 %v8570, %v8929
        %v9035 = vmul.f32 %v8569, %v8933
        %v9036 = vmul.f32 %v8568, %v8937
        %v9037 = vmul.f32 %v8567, %v8941
        %v9038 = vmul.f32 %v8566, %v8945
        %v9039 = vmul.f32 %v8565, %v8949
        %v9040 = vmul.f32 %v8564, %v8953
        %v9041 = vmul.f32 %v8563, %v8957
        %v9042 = vmul.f32 %v8562, %v8961
        %v9043 = vmul.f32 %v8561, %v8965
        %v9044 = vmul.f32 %v8560, %v8969
        %v9045 = vmul.f32 %v8559, %v8973
        %v9046 = vmul.f32 %v8558, %v8977
        %v9047 = vmul.f32 %v8557, %v8981
        %v9048 = vmul.f32 %v8556, %v8985
        %v9049 = vmul.f32 %v8555, %v8989
        %v9050 = vmul.f32 %v8554, %v8993
        %v9051 = vmul.f32 %v8553, %v8997
        %v9052 = vmul.f32 %v8552, %v9001
        %v9053 = vmul.f32 %v8551, %v9005
        %v9054 = vmul.f32 %v8550, %v9009
        %v9055 = vmul.f32 %v8549, %v9013
        %v9056 = vmul.f32 %v8548, %v9017
        %v9057 = vmul.f32 %v8547, %v9021
        %v9058 = vmul.f32 %v8578, %v9025
        %9059 = vset.pattern.permute.xlu0 6
        %9060 = vperm.xlu0 %9059, %v739
        %v9061 = vpop.permute.xlu0 %9060
        %9063 = vset.pattern.permute.xlu0 6
        %9064 = vperm.xlu0 %9063, %v740
        %v9065 = vpop.permute.xlu0 %9064
        %9067 = vset.pattern.permute.xlu0 6
        %9068 = vperm.xlu0 %9067, %v741
        %v9069 = vpop.permute.xlu0 %9068
        %9071 = vset.pattern.permute.xlu0 6
        %9072 = vperm.xlu0 %9071, %v742
        %v9073 = vpop.permute.xlu0 %9072
        %9075 = vset.pattern.permute.xlu0 6
        %9076 = vperm.xlu0 %9075, %v743
        %v9077 = vpop.permute.xlu0 %9076
        %9079 = vset.pattern.permute.xlu0 6
        %9080 = vperm.xlu0 %9079, %v744
        %v9081 = vpop.permute.xlu0 %9080
        %9083 = vset.pattern.permute.xlu0 6
        %9084 = vperm.xlu0 %9083, %v745
        %v9085 = vpop.permute.xlu0 %9084
        %9087 = vset.pattern.permute.xlu0 6
        %9088 = vperm.xlu0 %9087, %v746
        %v9089 = vpop.permute.xlu0 %9088
        %9091 = vset.pattern.permute.xlu0 6
        %9092 = vperm.xlu0 %9091, %v747
        %v9093 = vpop.permute.xlu0 %9092
        %9095 = vset.pattern.permute.xlu0 6
        %9096 = vperm.xlu0 %9095, %v748
        %v9097 = vpop.permute.xlu0 %9096
        %9099 = vset.pattern.permute.xlu0 6
        %9100 = vperm.xlu0 %9099, %v749
        %v9101 = vpop.permute.xlu0 %9100
        %9103 = vset.pattern.permute.xlu0 6
        %9104 = vperm.xlu0 %9103, %v750
        %v9105 = vpop.permute.xlu0 %9104
        %9107 = vset.pattern.permute.xlu0 6
        %9108 = vperm.xlu0 %9107, %v751
        %v9109 = vpop.permute.xlu0 %9108
        %9111 = vset.pattern.permute.xlu0 6
        %9112 = vperm.xlu0 %9111, %v752
        %v9113 = vpop.permute.xlu0 %9112
        %9115 = vset.pattern.permute.xlu0 6
        %9116 = vperm.xlu0 %9115, %v753
        %v9117 = vpop.permute.xlu0 %9116
        %9119 = vset.pattern.permute.xlu0 6
        %9120 = vperm.xlu0 %9119, %v754
        %v9121 = vpop.permute.xlu0 %9120
        %9123 = vset.pattern.permute.xlu0 6
        %9124 = vperm.xlu0 %9123, %v755
        %v9125 = vpop.permute.xlu0 %9124
        %9127 = vset.pattern.permute.xlu0 6
        %9128 = vperm.xlu0 %9127, %v756
        %v9129 = vpop.permute.xlu0 %9128
        %9131 = vset.pattern.permute.xlu0 6
        %9132 = vperm.xlu0 %9131, %v757
        %v9133 = vpop.permute.xlu0 %9132
        %9135 = vset.pattern.permute.xlu0 6
        %9136 = vperm.xlu0 %9135, %v758
        %v9137 = vpop.permute.xlu0 %9136
        %9139 = vset.pattern.permute.xlu0 6
        %9140 = vperm.xlu0 %9139, %v759
        %v9141 = vpop.permute.xlu0 %9140
        %9143 = vset.pattern.permute.xlu0 6
        %9144 = vperm.xlu0 %9143, %v760
        %v9145 = vpop.permute.xlu0 %9144
        %9147 = vset.pattern.permute.xlu0 6
        %9148 = vperm.xlu0 %9147, %v761
        %v9149 = vpop.permute.xlu0 %9148
        %9151 = vset.pattern.permute.xlu0 6
        %9152 = vperm.xlu0 %9151, %v762
        %v9153 = vpop.permute.xlu0 %9152
        %9155 = vset.pattern.permute.xlu0 6
        %9156 = vperm.xlu0 %9155, %v763
        %v9157 = vpop.permute.xlu0 %9156
        %9159 = vset.pattern.permute.xlu0 6
        %9160 = vperm.xlu0 %9159, %v764
        %v9161 = vpop.permute.xlu0 %9160
        %9163 = vset.pattern.permute.xlu0 6
        %9164 = vperm.xlu0 %9163, %v765
        %v9165 = vpop.permute.xlu0 %9164
        %9167 = vset.pattern.permute.xlu0 6
        %9168 = vperm.xlu0 %9167, %v766
        %v9169 = vpop.permute.xlu0 %9168
        %9171 = vset.pattern.permute.xlu0 6
        %9172 = vperm.xlu0 %9171, %v767
        %v9173 = vpop.permute.xlu0 %9172
        %9175 = vset.pattern.permute.xlu0 6
        %9176 = vperm.xlu0 %9175, %v768
        %v9177 = vpop.permute.xlu0 %9176
        %9179 = vset.pattern.permute.xlu0 6
        %9180 = vperm.xlu0 %9179, %v769
        %v9181 = vpop.permute.xlu0 %9180
        %9183 = vset.pattern.permute.xlu0 6
        %9184 = vperm.xlu0 %9183, %v770
        %v9185 = vpop.permute.xlu0 %9184
        %v9187 = vmul.f32 %v8192, %v9061
        %v9188 = vmul.f32 %v8191, %v9065
        %v9189 = vmul.f32 %v8190, %v9069
        %v9190 = vmul.f32 %v8189, %v9073
        %v9191 = vmul.f32 %v8188, %v9077
        %v9192 = vmul.f32 %v8187, %v9081
        %v9193 = vmul.f32 %v8186, %v9085
        %v9194 = vmul.f32 %v8185, %v9089
        %v9195 = vmul.f32 %v8184, %v9093
        %v9196 = vmul.f32 %v8183, %v9097
        %v9197 = vmul.f32 %v8182, %v9101
        %v9198 = vmul.f32 %v8181, %v9105
        %v9199 = vmul.f32 %v8180, %v9109
        %v9200 = vmul.f32 %v8179, %v9113
        %v9201 = vmul.f32 %v8178, %v9117
        %v9202 = vmul.f32 %v8177, %v9121
        %v9203 = vmul.f32 %v8176, %v9125
        %v9204 = vmul.f32 %v8175, %v9129
        %v9205 = vmul.f32 %v8174, %v9133
        %v9206 = vmul.f32 %v8173, %v9137
        %v9207 = vmul.f32 %v8172, %v9141
        %v9208 = vmul.f32 %v8171, %v9145
        %v9209 = vmul.f32 %v8170, %v9149
        %v9210 = vmul.f32 %v8169, %v9153
        %v9211 = vmul.f32 %v8168, %v9157
        %v9212 = vmul.f32 %v8167, %v9161
        %v9213 = vmul.f32 %v8166, %v9165
        %v9214 = vmul.f32 %v8165, %v9169
        %v9215 = vmul.f32 %v8164, %v9173
        %v9216 = vmul.f32 %v8163, %v9177
        %v9217 = vmul.f32 %v8194, %v9181
        %v9218 = vmul.f32 %v8193, %v9185
        %9219 = vset.pattern.permute.xlu0 7
        %9220 = vperm.xlu0 %9219, %v739
        %v9221 = vpop.permute.xlu0 %9220
        %9223 = vset.pattern.permute.xlu0 7
        %9224 = vperm.xlu0 %9223, %v740
        %v9225 = vpop.permute.xlu0 %9224
        %9227 = vset.pattern.permute.xlu0 7
        %9228 = vperm.xlu0 %9227, %v741
        %v9229 = vpop.permute.xlu0 %9228
        %9231 = vset.pattern.permute.xlu0 7
        %9232 = vperm.xlu0 %9231, %v742
        %v9233 = vpop.permute.xlu0 %9232
        %9235 = vset.pattern.permute.xlu0 7
        %9236 = vperm.xlu0 %9235, %v743
        %v9237 = vpop.permute.xlu0 %9236
        %9239 = vset.pattern.permute.xlu0 7
        %9240 = vperm.xlu0 %9239, %v744
        %v9241 = vpop.permute.xlu0 %9240
        %9243 = vset.pattern.permute.xlu0 7
        %9244 = vperm.xlu0 %9243, %v745
        %v9245 = vpop.permute.xlu0 %9244
        %9247 = vset.pattern.permute.xlu0 7
        %9248 = vperm.xlu0 %9247, %v746
        %v9249 = vpop.permute.xlu0 %9248
        %9251 = vset.pattern.permute.xlu0 7
        %9252 = vperm.xlu0 %9251, %v747
        %v9253 = vpop.permute.xlu0 %9252
        %9255 = vset.pattern.permute.xlu0 7
        %9256 = vperm.xlu0 %9255, %v748
        %v9257 = vpop.permute.xlu0 %9256
        %9259 = vset.pattern.permute.xlu0 7
        %9260 = vperm.xlu0 %9259, %v749
        %v9261 = vpop.permute.xlu0 %9260
        %9263 = vset.pattern.permute.xlu0 7
        %9264 = vperm.xlu0 %9263, %v750
        %v9265 = vpop.permute.xlu0 %9264
        %9267 = vset.pattern.permute.xlu0 7
        %9268 = vperm.xlu0 %9267, %v751
        %v9269 = vpop.permute.xlu0 %9268
        %9271 = vset.pattern.permute.xlu0 7
        %9272 = vperm.xlu0 %9271, %v752
        %v9273 = vpop.permute.xlu0 %9272
        %9275 = vset.pattern.permute.xlu0 7
        %9276 = vperm.xlu0 %9275, %v753
        %v9277 = vpop.permute.xlu0 %9276
        %9279 = vset.pattern.permute.xlu0 7
        %9280 = vperm.xlu0 %9279, %v754
        %v9281 = vpop.permute.xlu0 %9280
        %9283 = vset.pattern.permute.xlu0 7
        %9284 = vperm.xlu0 %9283, %v755
        %v9285 = vpop.permute.xlu0 %9284
        %9287 = vset.pattern.permute.xlu0 7
        %9288 = vperm.xlu0 %9287, %v756
        %v9289 = vpop.permute.xlu0 %9288
        %9291 = vset.pattern.permute.xlu0 7
        %9292 = vperm.xlu0 %9291, %v757
        %v9293 = vpop.permute.xlu0 %9292
        %9295 = vset.pattern.permute.xlu0 7
        %9296 = vperm.xlu0 %9295, %v758
        %v9297 = vpop.permute.xlu0 %9296
        %9299 = vset.pattern.permute.xlu0 7
        %9300 = vperm.xlu0 %9299, %v759
        %v9301 = vpop.permute.xlu0 %9300
        %9303 = vset.pattern.permute.xlu0 7
        %9304 = vperm.xlu0 %9303, %v760
        %v9305 = vpop.permute.xlu0 %9304
        %9307 = vset.pattern.permute.xlu0 7
        %9308 = vperm.xlu0 %9307, %v761
        %v9309 = vpop.permute.xlu0 %9308
        %9311 = vset.pattern.permute.xlu0 7
        %9312 = vperm.xlu0 %9311, %v762
        %v9313 = vpop.permute.xlu0 %9312
        %9315 = vset.pattern.permute.xlu0 7
        %9316 = vperm.xlu0 %9315, %v763
        %v9317 = vpop.permute.xlu0 %9316
        %9319 = vset.pattern.permute.xlu0 7
        %9320 = vperm.xlu0 %9319, %v764
        %v9321 = vpop.permute.xlu0 %9320
        %9323 = vset.pattern.permute.xlu0 7
        %9324 = vperm.xlu0 %9323, %v765
        %v9325 = vpop.permute.xlu0 %9324
        %9327 = vset.pattern.permute.xlu0 7
        %9328 = vperm.xlu0 %9327, %v766
        %v9329 = vpop.permute.xlu0 %9328
        %9331 = vset.pattern.permute.xlu0 7
        %9332 = vperm.xlu0 %9331, %v767
        %v9333 = vpop.permute.xlu0 %9332
        %9335 = vset.pattern.permute.xlu0 7
        %9336 = vperm.xlu0 %9335, %v768
        %v9337 = vpop.permute.xlu0 %9336
        %9339 = vset.pattern.permute.xlu0 7
        %9340 = vperm.xlu0 %9339, %v769
        %v9341 = vpop.permute.xlu0 %9340
        %9343 = vset.pattern.permute.xlu0 7
        %9344 = vperm.xlu0 %9343, %v770
        %v9345 = vpop.permute.xlu0 %9344
        %v9347 = vmul.f32 %v8042, %v9221
        %v9348 = vmul.f32 %v8045, %v9225
        %v9349 = vmul.f32 %v8048, %v9229
        %v9350 = vmul.f32 %v8051, %v9233
        %v9351 = vmul.f32 %v8054, %v9237
        %v9352 = vmul.f32 %v8057, %v9241
        %v9353 = vmul.f32 %v8060, %v9245
        %v9354 = vmul.f32 %v8063, %v9249
        %v9355 = vmul.f32 %v8066, %v9253
        %v9356 = vmul.f32 %v8069, %v9257
        %v9357 = vmul.f32 %v8072, %v9261
        %v9358 = vmul.f32 %v8075, %v9265
        %v9359 = vmul.f32 %v8078, %v9269
        %v9360 = vmul.f32 %v8081, %v9273
        %v9361 = vmul.f32 %v8084, %v9277
        %v9362 = vmul.f32 %v8087, %v9281
        %v9363 = vmul.f32 %v8090, %v9285
        %v9364 = vmul.f32 %v8093, %v9289
        %v9365 = vmul.f32 %v8096, %v9293
        %v9366 = vmul.f32 %v8099, %v9297
        %v9367 = vmul.f32 %v8102, %v9301
        %v9368 = vmul.f32 %v8105, %v9305
        %v9369 = vmul.f32 %v8108, %v9309
        %v9370 = vmul.f32 %v8111, %v9313
        %v9371 = vmul.f32 %v8114, %v9317
        %v9372 = vmul.f32 %v8117, %v9321
        %v9373 = vmul.f32 %v8120, %v9325
        %v9374 = vmul.f32 %v8123, %v9329
        %v9375 = vmul.f32 %v8126, %v9333
        %v9376 = vmul.f32 %v8129, %v9337
        %v9377 = vmul.f32 %v8036, %v9341
        %v9378 = vmul.f32 %v8039, %v9345
        %9379 = vset.pattern.permute.xlu0 8
        %9380 = vperm.xlu0 %9379, %v739
        %v9381 = vpop.permute.xlu0 %9380
        %9383 = vset.pattern.permute.xlu0 8
        %9384 = vperm.xlu0 %9383, %v740
        %v9385 = vpop.permute.xlu0 %9384
        %9387 = vset.pattern.permute.xlu0 8
        %9388 = vperm.xlu0 %9387, %v741
        %v9389 = vpop.permute.xlu0 %9388
        %9391 = vset.pattern.permute.xlu0 8
        %9392 = vperm.xlu0 %9391, %v742
        %v9393 = vpop.permute.xlu0 %9392
        %9395 = vset.pattern.permute.xlu0 8
        %9396 = vperm.xlu0 %9395, %v743
        %v9397 = vpop.permute.xlu0 %9396
        %9399 = vset.pattern.permute.xlu0 8
        %9400 = vperm.xlu0 %9399, %v744
        %v9401 = vpop.permute.xlu0 %9400
        %9403 = vset.pattern.permute.xlu0 8
        %9404 = vperm.xlu0 %9403, %v745
        %v9405 = vpop.permute.xlu0 %9404
        %9407 = vset.pattern.permute.xlu0 8
        %9408 = vperm.xlu0 %9407, %v746
        %v9409 = vpop.permute.xlu0 %9408
        %9411 = vset.pattern.permute.xlu0 8
        %9412 = vperm.xlu0 %9411, %v747
        %v9413 = vpop.permute.xlu0 %9412
        %9415 = vset.pattern.permute.xlu0 8
        %9416 = vperm.xlu0 %9415, %v748
        %v9417 = vpop.permute.xlu0 %9416
        %9419 = vset.pattern.permute.xlu0 8
        %9420 = vperm.xlu0 %9419, %v749
        %v9421 = vpop.permute.xlu0 %9420
        %9423 = vset.pattern.permute.xlu0 8
        %9424 = vperm.xlu0 %9423, %v750
        %v9425 = vpop.permute.xlu0 %9424
        %9427 = vset.pattern.permute.xlu0 8
        %9428 = vperm.xlu0 %9427, %v751
        %v9429 = vpop.permute.xlu0 %9428
        %9431 = vset.pattern.permute.xlu0 8
        %9432 = vperm.xlu0 %9431, %v752
        %v9433 = vpop.permute.xlu0 %9432
        %9435 = vset.pattern.permute.xlu0 8
        %9436 = vperm.xlu0 %9435, %v753
        %v9437 = vpop.permute.xlu0 %9436
        %9439 = vset.pattern.permute.xlu0 8
        %9440 = vperm.xlu0 %9439, %v754
        %v9441 = vpop.permute.xlu0 %9440
        %9443 = vset.pattern.permute.xlu0 8
        %9444 = vperm.xlu0 %9443, %v755
        %v9445 = vpop.permute.xlu0 %9444
        %9447 = vset.pattern.permute.xlu0 8
        %9448 = vperm.xlu0 %9447, %v756
        %v9449 = vpop.permute.xlu0 %9448
        %9451 = vset.pattern.permute.xlu0 8
        %9452 = vperm.xlu0 %9451, %v757
        %v9453 = vpop.permute.xlu0 %9452
        %9455 = vset.pattern.permute.xlu0 8
        %9456 = vperm.xlu0 %9455, %v758
        %v9457 = vpop.permute.xlu0 %9456
        %9459 = vset.pattern.permute.xlu0 8
        %9460 = vperm.xlu0 %9459, %v759
        %v9461 = vpop.permute.xlu0 %9460
        %9463 = vset.pattern.permute.xlu0 8
        %9464 = vperm.xlu0 %9463, %v760
        %v9465 = vpop.permute.xlu0 %9464
        %9467 = vset.pattern.permute.xlu0 8
        %9468 = vperm.xlu0 %9467, %v761
        %v9469 = vpop.permute.xlu0 %9468
        %9471 = vset.pattern.permute.xlu0 8
        %9472 = vperm.xlu0 %9471, %v762
        %v9473 = vpop.permute.xlu0 %9472
        %9475 = vset.pattern.permute.xlu0 8
        %9476 = vperm.xlu0 %9475, %v763
        %v9477 = vpop.permute.xlu0 %9476
        %9479 = vset.pattern.permute.xlu0 8
        %9480 = vperm.xlu0 %9479, %v764
        %v9481 = vpop.permute.xlu0 %9480
        %9483 = vset.pattern.permute.xlu0 8
        %9484 = vperm.xlu0 %9483, %v765
        %v9485 = vpop.permute.xlu0 %9484
        %9487 = vset.pattern.permute.xlu0 8
        %9488 = vperm.xlu0 %9487, %v766
        %v9489 = vpop.permute.xlu0 %9488
        %9491 = vset.pattern.permute.xlu0 8
        %9492 = vperm.xlu0 %9491, %v767
        %v9493 = vpop.permute.xlu0 %9492
        %9495 = vset.pattern.permute.xlu0 8
        %9496 = vperm.xlu0 %9495, %v768
        %v9497 = vpop.permute.xlu0 %9496
        %9499 = vset.pattern.permute.xlu0 8
        %9500 = vperm.xlu0 %9499, %v769
        %v9501 = vpop.permute.xlu0 %9500
        %9503 = vset.pattern.permute.xlu0 8
        %9504 = vperm.xlu0 %9503, %v770
        %v9505 = vpop.permute.xlu0 %9504
        %v9507 = vmul.f32 %v8575, %v9381
        %v9508 = vmul.f32 %v8574, %v9385
        %v9509 = vmul.f32 %v8573, %v9389
        %v9510 = vmul.f32 %v8572, %v9393
        %v9511 = vmul.f32 %v8571, %v9397
        %v9512 = vmul.f32 %v8570, %v9401
        %v9513 = vmul.f32 %v8569, %v9405
        %v9514 = vmul.f32 %v8568, %v9409
        %v9515 = vmul.f32 %v8567, %v9413
        %v9516 = vmul.f32 %v8566, %v9417
        %v9517 = vmul.f32 %v8565, %v9421
        %v9518 = vmul.f32 %v8564, %v9425
        %v9519 = vmul.f32 %v8563, %v9429
        %v9520 = vmul.f32 %v8562, %v9433
        %v9521 = vmul.f32 %v8561, %v9437
        %v9522 = vmul.f32 %v8560, %v9441
        %v9523 = vmul.f32 %v8559, %v9445
        %v9524 = vmul.f32 %v8558, %v9449
        %v9525 = vmul.f32 %v8557, %v9453
        %v9526 = vmul.f32 %v8556, %v9457
        %v9527 = vmul.f32 %v8555, %v9461
        %v9528 = vmul.f32 %v8554, %v9465
        %v9529 = vmul.f32 %v8553, %v9469
        %v9530 = vmul.f32 %v8552, %v9473
        %v9531 = vmul.f32 %v8551, %v9477
        %v9532 = vmul.f32 %v8550, %v9481
        %v9533 = vmul.f32 %v8549, %v9485
        %v9534 = vmul.f32 %v8548, %v9489
        %v9535 = vmul.f32 %v8547, %v9493
        %v9536 = vmul.f32 %v8578, %v9497
        %v9537 = vmul.f32 %v8577, %v9501
        %v9538 = vmul.f32 %v8576, %v9505
        %v9539 = vld [vmem:[%s11] sm:$0x1]
        %v9541 = vperm.slane %v9539, 0
        %v9543 = vmul.f32 %v8323, %v9541
        %v9544 = vmul.f32 %v8324, %v9541
        %v9545 = vmul.f32 %v8325, %v9541
        %v9546 = vmul.f32 %v8326, %v9541
        %v9547 = vmul.f32 %v8327, %v9541
        %v9548 = vmul.f32 %v8328, %v9541
        %v9549 = vmul.f32 %v8329, %v9541
        %v9550 = vmul.f32 %v8330, %v9541
        %v9551 = vmul.f32 %v8331, %v9541
        %v9552 = vmul.f32 %v8332, %v9541
        %v9553 = vmul.f32 %v8333, %v9541
        %v9554 = vmul.f32 %v8334, %v9541
        %v9555 = vmul.f32 %v8335, %v9541
        %v9556 = vmul.f32 %v8336, %v9541
        %v9557 = vmul.f32 %v8337, %v9541
        %v9558 = vmul.f32 %v8338, %v9541
        %v9559 = vmul.f32 %v8339, %v9541
        %v9560 = vmul.f32 %v8340, %v9541
        %v9561 = vmul.f32 %v8341, %v9541
        %v9562 = vmul.f32 %v8342, %v9541
        %v9563 = vmul.f32 %v8343, %v9541
        %v9564 = vmul.f32 %v8344, %v9541
        %v9565 = vmul.f32 %v8345, %v9541
        %v9566 = vmul.f32 %v8346, %v9541
        %v9567 = vmul.f32 %v8347, %v9541
        %v9568 = vmul.f32 %v8348, %v9541
        %v9569 = vmul.f32 %v8349, %v9541
        %v9570 = vmul.f32 %v8350, %v9541
        %v9571 = vmul.f32 %v8351, %v9541
        %v9572 = vmul.f32 %v8352, %v9541
        %v9573 = vmul.f32 %v8353, %v9541
        %v9574 = vmul.f32 %v8354, %v9541
        %9575 = vrot.lane.b32.xlu0 %v9541, 112
        %v9576 = vpop.permute.xlu0 %9575
        %v9578 = vmul.f32 %v8483, %v9576
        %v9579 = vmul.f32 %v8484, %v9576
        %v9580 = vmul.f32 %v8485, %v9576
        %v9581 = vmul.f32 %v8486, %v9576
        %v9582 = vmul.f32 %v8487, %v9576
        %v9583 = vmul.f32 %v8488, %v9576
        %v9584 = vmul.f32 %v8489, %v9576
        %v9585 = vmul.f32 %v8490, %v9576
        %v9586 = vmul.f32 %v8491, %v9576
        %v9587 = vmul.f32 %v8492, %v9576
        %v9588 = vmul.f32 %v8493, %v9576
        %v9589 = vmul.f32 %v8494, %v9576
        %v9590 = vmul.f32 %v8495, %v9576
        %v9591 = vmul.f32 %v8496, %v9576
        %v9592 = vmul.f32 %v8497, %v9576
        %v9593 = vmul.f32 %v8498, %v9576
        %v9594 = vmul.f32 %v8499, %v9576
        %v9595 = vmul.f32 %v8500, %v9576
        %v9596 = vmul.f32 %v8501, %v9576
        %v9597 = vmul.f32 %v8502, %v9576
        %v9598 = vmul.f32 %v8503, %v9576
        %v9599 = vmul.f32 %v8504, %v9576
        %v9600 = vmul.f32 %v8505, %v9576
        %v9601 = vmul.f32 %v8506, %v9576
        %v9602 = vmul.f32 %v8507, %v9576
        %v9603 = vmul.f32 %v8508, %v9576
        %v9604 = vmul.f32 %v8509, %v9576
        %v9605 = vmul.f32 %v8510, %v9576
        %v9606 = vmul.f32 %v8511, %v9576
        %v9607 = vmul.f32 %v8512, %v9576
        %v9608 = vmul.f32 %v8513, %v9576
        %v9609 = vmul.f32 %v8514, %v9576
        %v9610 = vadd.f32 %v9543, %v9578
        %v9611 = vadd.f32 %v9544, %v9579
        %v9612 = vadd.f32 %v9545, %v9580
        %v9613 = vadd.f32 %v9546, %v9581
        %v9614 = vadd.f32 %v9547, %v9582
        %v9615 = vadd.f32 %v9548, %v9583
        %v9616 = vadd.f32 %v9549, %v9584
        %v9617 = vadd.f32 %v9550, %v9585
        %v9618 = vadd.f32 %v9551, %v9586
        %v9619 = vadd.f32 %v9552, %v9587
        %v9620 = vadd.f32 %v9553, %v9588
        %v9621 = vadd.f32 %v9554, %v9589
        %v9622 = vadd.f32 %v9555, %v9590
        %v9623 = vadd.f32 %v9556, %v9591
        %v9624 = vadd.f32 %v9557, %v9592
        %v9625 = vadd.f32 %v9558, %v9593
        %v9626 = vadd.f32 %v9559, %v9594
        %v9627 = vadd.f32 %v9560, %v9595
        %v9628 = vadd.f32 %v9561, %v9596
        %v9629 = vadd.f32 %v9562, %v9597
        %v9630 = vadd.f32 %v9563, %v9598
        %v9631 = vadd.f32 %v9564, %v9599
        %v9632 = vadd.f32 %v9565, %v9600
        %v9633 = vadd.f32 %v9566, %v9601
        %v9634 = vadd.f32 %v9567, %v9602
        %v9635 = vadd.f32 %v9568, %v9603
        %v9636 = vadd.f32 %v9569, %v9604
        %v9637 = vadd.f32 %v9570, %v9605
        %v9638 = vadd.f32 %v9571, %v9606
        %v9639 = vadd.f32 %v9572, %v9607
        %v9640 = vadd.f32 %v9573, %v9608
        %v9641 = vadd.f32 %v9574, %v9609
        %9642 = vrot.lane.b32.xlu0 %v9541, 96
        %v9643 = vpop.permute.xlu0 %9642
        %v9645 = vmul.f32 %v8707, %v9643
        %v9646 = vmul.f32 %v8708, %v9643
        %v9647 = vmul.f32 %v8709, %v9643
        %v9648 = vmul.f32 %v8710, %v9643
        %v9649 = vmul.f32 %v8711, %v9643
        %v9650 = vmul.f32 %v8712, %v9643
        %v9651 = vmul.f32 %v8713, %v9643
        %v9652 = vmul.f32 %v8714, %v9643
        %v9653 = vmul.f32 %v8715, %v9643
        %v9654 = vmul.f32 %v8716, %v9643
        %v9655 = vmul.f32 %v8717, %v9643
        %v9656 = vmul.f32 %v8718, %v9643
        %v9657 = vmul.f32 %v8719, %v9643
        %v9658 = vmul.f32 %v8720, %v9643
        %v9659 = vmul.f32 %v8721, %v9643
        %v9660 = vmul.f32 %v8722, %v9643
        %v9661 = vmul.f32 %v8723, %v9643
        %v9662 = vmul.f32 %v8724, %v9643
        %v9663 = vmul.f32 %v8725, %v9643
        %v9664 = vmul.f32 %v8726, %v9643
        %v9665 = vmul.f32 %v8727, %v9643
        %v9666 = vmul.f32 %v8728, %v9643
        %v9667 = vmul.f32 %v8729, %v9643
        %v9668 = vmul.f32 %v8730, %v9643
        %v9669 = vmul.f32 %v8731, %v9643
        %v9670 = vmul.f32 %v8732, %v9643
        %v9671 = vmul.f32 %v8733, %v9643
        %v9672 = vmul.f32 %v8734, %v9643
        %v9673 = vmul.f32 %v8735, %v9643
        %v9674 = vmul.f32 %v8736, %v9643
        %v9675 = vmul.f32 %v8737, %v9643
        %v9676 = vmul.f32 %v8738, %v9643
        %v9677 = vadd.f32 %v9610, %v9645
        %v9678 = vadd.f32 %v9611, %v9646
        %v9679 = vadd.f32 %v9612, %v9647
        %v9680 = vadd.f32 %v9613, %v9648
        %v9681 = vadd.f32 %v9614, %v9649
        %v9682 = vadd.f32 %v9615, %v9650
        %v9683 = vadd.f32 %v9616, %v9651
        %v9684 = vadd.f32 %v9617, %v9652
        %v9685 = vadd.f32 %v9618, %v9653
        %v9686 = vadd.f32 %v9619, %v9654
        %v9687 = vadd.f32 %v9620, %v9655
        %v9688 = vadd.f32 %v9621, %v9656
        %v9689 = vadd.f32 %v9622, %v9657
        %v9690 = vadd.f32 %v9623, %v9658
        %v9691 = vadd.f32 %v9624, %v9659
        %v9692 = vadd.f32 %v9625, %v9660
        %v9693 = vadd.f32 %v9626, %v9661
        %v9694 = vadd.f32 %v9627, %v9662
        %v9695 = vadd.f32 %v9628, %v9663
        %v9696 = vadd.f32 %v9629, %v9664
        %v9697 = vadd.f32 %v9630, %v9665
        %v9698 = vadd.f32 %v9631, %v9666
        %v9699 = vadd.f32 %v9632, %v9667
        %v9700 = vadd.f32 %v9633, %v9668
        %v9701 = vadd.f32 %v9634, %v9669
        %v9702 = vadd.f32 %v9635, %v9670
        %v9703 = vadd.f32 %v9636, %v9671
        %v9704 = vadd.f32 %v9637, %v9672
        %v9705 = vadd.f32 %v9638, %v9673
        %v9706 = vadd.f32 %v9639, %v9674
        %v9707 = vadd.f32 %v9640, %v9675
        %v9708 = vadd.f32 %v9641, %v9676
        %9709 = vrot.lane.b32.xlu0 %v9541, 80
        %v9710 = vpop.permute.xlu0 %9709
        %v9712 = vmul.f32 %v8867, %v9710
        %v9713 = vmul.f32 %v8868, %v9710
        %v9714 = vmul.f32 %v8869, %v9710
        %v9715 = vmul.f32 %v8870, %v9710
        %v9716 = vmul.f32 %v8871, %v9710
        %v9717 = vmul.f32 %v8872, %v9710
        %v9718 = vmul.f32 %v8873, %v9710
        %v9719 = vmul.f32 %v8874, %v9710
        %v9720 = vmul.f32 %v8875, %v9710
        %v9721 = vmul.f32 %v8876, %v9710
        %v9722 = vmul.f32 %v8877, %v9710
        %v9723 = vmul.f32 %v8878, %v9710
        %v9724 = vmul.f32 %v8879, %v9710
        %v9725 = vmul.f32 %v8880, %v9710
        %v9726 = vmul.f32 %v8881, %v9710
        %v9727 = vmul.f32 %v8882, %v9710
        %v9728 = vmul.f32 %v8883, %v9710
        %v9729 = vmul.f32 %v8884, %v9710
        %v9730 = vmul.f32 %v8885, %v9710
        %v9731 = vmul.f32 %v8886, %v9710
        %v9732 = vmul.f32 %v8887, %v9710
        %v9733 = vmul.f32 %v8888, %v9710
        %v9734 = vmul.f32 %v8889, %v9710
        %v9735 = vmul.f32 %v8890, %v9710
        %v9736 = vmul.f32 %v8891, %v9710
        %v9737 = vmul.f32 %v8892, %v9710
        %v9738 = vmul.f32 %v8893, %v9710
        %v9739 = vmul.f32 %v8894, %v9710
        %v9740 = vmul.f32 %v8895, %v9710
        %v9741 = vmul.f32 %v8896, %v9710
        %v9742 = vmul.f32 %v8897, %v9710
        %v9743 = vmul.f32 %v8898, %v9710
        %v9744 = vadd.f32 %v9677, %v9712
        %v9745 = vadd.f32 %v9678, %v9713
        %v9746 = vadd.f32 %v9679, %v9714
        %v9747 = vadd.f32 %v9680, %v9715
        %v9748 = vadd.f32 %v9681, %v9716
        %v9749 = vadd.f32 %v9682, %v9717
        %v9750 = vadd.f32 %v9683, %v9718
        %v9751 = vadd.f32 %v9684, %v9719
        %v9752 = vadd.f32 %v9685, %v9720
        %v9753 = vadd.f32 %v9686, %v9721
        %v9754 = vadd.f32 %v9687, %v9722
        %v9755 = vadd.f32 %v9688, %v9723
        %v9756 = vadd.f32 %v9689, %v9724
        %v9757 = vadd.f32 %v9690, %v9725
        %v9758 = vadd.f32 %v9691, %v9726
        %v9759 = vadd.f32 %v9692, %v9727
        %v9760 = vadd.f32 %v9693, %v9728
        %v9761 = vadd.f32 %v9694, %v9729
        %v9762 = vadd.f32 %v9695, %v9730
        %v9763 = vadd.f32 %v9696, %v9731
        %v9764 = vadd.f32 %v9697, %v9732
        %v9765 = vadd.f32 %v9698, %v9733
        %v9766 = vadd.f32 %v9699, %v9734
        %v9767 = vadd.f32 %v9700, %v9735
        %v9768 = vadd.f32 %v9701, %v9736
        %v9769 = vadd.f32 %v9702, %v9737
        %v9770 = vadd.f32 %v9703, %v9738
        %v9771 = vadd.f32 %v9704, %v9739
        %v9772 = vadd.f32 %v9705, %v9740
        %v9773 = vadd.f32 %v9706, %v9741
        %v9774 = vadd.f32 %v9707, %v9742
        %v9775 = vadd.f32 %v9708, %v9743
        %9776 = vrot.lane.b32.xlu0 %v9541, 64
        %v9777 = vpop.permute.xlu0 %9776
        %v9779 = vmul.f32 %v8036, %v9777
        %v9780 = vmul.f32 %v8039, %v9777
        %v9781 = vmul.f32 %v8042, %v9777
        %v9782 = vmul.f32 %v8045, %v9777
        %v9783 = vmul.f32 %v8048, %v9777
        %v9784 = vmul.f32 %v8051, %v9777
        %v9785 = vmul.f32 %v8054, %v9777
        %v9786 = vmul.f32 %v8057, %v9777
        %v9787 = vmul.f32 %v8060, %v9777
        %v9788 = vmul.f32 %v8063, %v9777
        %v9789 = vmul.f32 %v8066, %v9777
        %v9790 = vmul.f32 %v8069, %v9777
        %v9791 = vmul.f32 %v8072, %v9777
        %v9792 = vmul.f32 %v8075, %v9777
        %v9793 = vmul.f32 %v8078, %v9777
        %v9794 = vmul.f32 %v8081, %v9777
        %v9795 = vmul.f32 %v8084, %v9777
        %v9796 = vmul.f32 %v8087, %v9777
        %v9797 = vmul.f32 %v8090, %v9777
        %v9798 = vmul.f32 %v8093, %v9777
        %v9799 = vmul.f32 %v8096, %v9777
        %v9800 = vmul.f32 %v8099, %v9777
        %v9801 = vmul.f32 %v8102, %v9777
        %v9802 = vmul.f32 %v8105, %v9777
        %v9803 = vmul.f32 %v8108, %v9777
        %v9804 = vmul.f32 %v8111, %v9777
        %v9805 = vmul.f32 %v8114, %v9777
        %v9806 = vmul.f32 %v8117, %v9777
        %v9807 = vmul.f32 %v8120, %v9777
        %v9808 = vmul.f32 %v8123, %v9777
        %v9809 = vmul.f32 %v8126, %v9777
        %v9810 = vmul.f32 %v8129, %v9777
        %v9811 = vadd.f32 %v9744, %v9779
        %v9812 = vadd.f32 %v9745, %v9780
        %v9813 = vadd.f32 %v9746, %v9781
        %v9814 = vadd.f32 %v9747, %v9782
        %v9815 = vadd.f32 %v9748, %v9783
        %v9816 = vadd.f32 %v9749, %v9784
        %v9817 = vadd.f32 %v9750, %v9785
        %v9818 = vadd.f32 %v9751, %v9786
        %v9819 = vadd.f32 %v9752, %v9787
        %v9820 = vadd.f32 %v9753, %v9788
        %v9821 = vadd.f32 %v9754, %v9789
        %v9822 = vadd.f32 %v9755, %v9790
        %v9823 = vadd.f32 %v9756, %v9791
        %v9824 = vadd.f32 %v9757, %v9792
        %v9825 = vadd.f32 %v9758, %v9793
        %v9826 = vadd.f32 %v9759, %v9794
        %v9827 = vadd.f32 %v9760, %v9795
        %v9828 = vadd.f32 %v9761, %v9796
        %v9829 = vadd.f32 %v9762, %v9797
        %v9830 = vadd.f32 %v9763, %v9798
        %v9831 = vadd.f32 %v9764, %v9799
        %v9832 = vadd.f32 %v9765, %v9800
        %v9833 = vadd.f32 %v9766, %v9801
        %v9834 = vadd.f32 %v9767, %v9802
        %v9835 = vadd.f32 %v9768, %v9803
        %v9836 = vadd.f32 %v9769, %v9804
        %v9837 = vadd.f32 %v9770, %v9805
        %v9838 = vadd.f32 %v9771, %v9806
        %v9839 = vadd.f32 %v9772, %v9807
        %v9840 = vadd.f32 %v9773, %v9808
        %v9841 = vadd.f32 %v9774, %v9809
        %v9842 = vadd.f32 %v9775, %v9810
        %9843 = vrot.lane.b32.xlu0 %v9541, 48
        %v9844 = vpop.permute.xlu0 %9843
        %v9846 = vmul.f32 %v9027, %v9844
        %v9847 = vmul.f32 %v9028, %v9844
        %v9848 = vmul.f32 %v9029, %v9844
        %v9849 = vmul.f32 %v9030, %v9844
        %v9850 = vmul.f32 %v9031, %v9844
        %v9851 = vmul.f32 %v9032, %v9844
        %v9852 = vmul.f32 %v9033, %v9844
        %v9853 = vmul.f32 %v9034, %v9844
        %v9854 = vmul.f32 %v9035, %v9844
        %v9855 = vmul.f32 %v9036, %v9844
        %v9856 = vmul.f32 %v9037, %v9844
        %v9857 = vmul.f32 %v9038, %v9844
        %v9858 = vmul.f32 %v9039, %v9844
        %v9859 = vmul.f32 %v9040, %v9844
        %v9860 = vmul.f32 %v9041, %v9844
        %v9861 = vmul.f32 %v9042, %v9844
        %v9862 = vmul.f32 %v9043, %v9844
        %v9863 = vmul.f32 %v9044, %v9844
        %v9864 = vmul.f32 %v9045, %v9844
        %v9865 = vmul.f32 %v9046, %v9844
        %v9866 = vmul.f32 %v9047, %v9844
        %v9867 = vmul.f32 %v9048, %v9844
        %v9868 = vmul.f32 %v9049, %v9844
        %v9869 = vmul.f32 %v9050, %v9844
        %v9870 = vmul.f32 %v9051, %v9844
        %v9871 = vmul.f32 %v9052, %v9844
        %v9872 = vmul.f32 %v9053, %v9844
        %v9873 = vmul.f32 %v9054, %v9844
        %v9874 = vmul.f32 %v9055, %v9844
        %v9875 = vmul.f32 %v9056, %v9844
        %v9876 = vmul.f32 %v9057, %v9844
        %v9877 = vmul.f32 %v9058, %v9844
        %v9878 = vadd.f32 %v9811, %v9846
        %v9879 = vadd.f32 %v9812, %v9847
        %v9880 = vadd.f32 %v9813, %v9848
        %v9881 = vadd.f32 %v9814, %v9849
        %v9882 = vadd.f32 %v9815, %v9850
        %v9883 = vadd.f32 %v9816, %v9851
        %v9884 = vadd.f32 %v9817, %v9852
        %v9885 = vadd.f32 %v9818, %v9853
        %v9886 = vadd.f32 %v9819, %v9854
        %v9887 = vadd.f32 %v9820, %v9855
        %v9888 = vadd.f32 %v9821, %v9856
        %v9889 = vadd.f32 %v9822, %v9857
        %v9890 = vadd.f32 %v9823, %v9858
        %v9891 = vadd.f32 %v9824, %v9859
        %v9892 = vadd.f32 %v9825, %v9860
        %v9893 = vadd.f32 %v9826, %v9861
        %v9894 = vadd.f32 %v9827, %v9862
        %v9895 = vadd.f32 %v9828, %v9863
        %v9896 = vadd.f32 %v9829, %v9864
        %v9897 = vadd.f32 %v9830, %v9865
        %v9898 = vadd.f32 %v9831, %v9866
        %v9899 = vadd.f32 %v9832, %v9867
        %v9900 = vadd.f32 %v9833, %v9868
        %v9901 = vadd.f32 %v9834, %v9869
        %v9902 = vadd.f32 %v9835, %v9870
        %v9903 = vadd.f32 %v9836, %v9871
        %v9904 = vadd.f32 %v9837, %v9872
        %v9905 = vadd.f32 %v9838, %v9873
        %v9906 = vadd.f32 %v9839, %v9874
        %v9907 = vadd.f32 %v9840, %v9875
        %v9908 = vadd.f32 %v9841, %v9876
        %v9909 = vadd.f32 %v9842, %v9877
        %9910 = vrot.lane.b32.xlu0 %v9541, 32
        %v9911 = vpop.permute.xlu0 %9910
        %v9913 = vmul.f32 %v9187, %v9911
        %v9914 = vmul.f32 %v9188, %v9911
        %v9915 = vmul.f32 %v9189, %v9911
        %v9916 = vmul.f32 %v9190, %v9911
        %v9917 = vmul.f32 %v9191, %v9911
        %v9918 = vmul.f32 %v9192, %v9911
        %v9919 = vmul.f32 %v9193, %v9911
        %v9920 = vmul.f32 %v9194, %v9911
        %v9921 = vmul.f32 %v9195, %v9911
        %v9922 = vmul.f32 %v9196, %v9911
        %v9923 = vmul.f32 %v9197, %v9911
        %v9924 = vmul.f32 %v9198, %v9911
        %v9925 = vmul.f32 %v9199, %v9911
        %v9926 = vmul.f32 %v9200, %v9911
        %v9927 = vmul.f32 %v9201, %v9911
        %v9928 = vmul.f32 %v9202, %v9911
        %v9929 = vmul.f32 %v9203, %v9911
        %v9930 = vmul.f32 %v9204, %v9911
        %v9931 = vmul.f32 %v9205, %v9911
        %v9932 = vmul.f32 %v9206, %v9911
        %v9933 = vmul.f32 %v9207, %v9911
        %v9934 = vmul.f32 %v9208, %v9911
        %v9935 = vmul.f32 %v9209, %v9911
        %v9936 = vmul.f32 %v9210, %v9911
        %v9937 = vmul.f32 %v9211, %v9911
        %v9938 = vmul.f32 %v9212, %v9911
        %v9939 = vmul.f32 %v9213, %v9911
        %v9940 = vmul.f32 %v9214, %v9911
        %v9941 = vmul.f32 %v9215, %v9911
        %v9942 = vmul.f32 %v9216, %v9911
        %v9943 = vmul.f32 %v9217, %v9911
        %v9944 = vmul.f32 %v9218, %v9911
        %v9945 = vadd.f32 %v9878, %v9913
        %v9946 = vadd.f32 %v9879, %v9914
        %v9947 = vadd.f32 %v9880, %v9915
        %v9948 = vadd.f32 %v9881, %v9916
        %v9949 = vadd.f32 %v9882, %v9917
        %v9950 = vadd.f32 %v9883, %v9918
        %v9951 = vadd.f32 %v9884, %v9919
        %v9952 = vadd.f32 %v9885, %v9920
        %v9953 = vadd.f32 %v9886, %v9921
        %v9954 = vadd.f32 %v9887, %v9922
        %v9955 = vadd.f32 %v9888, %v9923
        %v9956 = vadd.f32 %v9889, %v9924
        %v9957 = vadd.f32 %v9890, %v9925
        %v9958 = vadd.f32 %v9891, %v9926
        %v9959 = vadd.f32 %v9892, %v9927
        %v9960 = vadd.f32 %v9893, %v9928
        %v9961 = vadd.f32 %v9894, %v9929
        %v9962 = vadd.f32 %v9895, %v9930
        %v9963 = vadd.f32 %v9896, %v9931
        %v9964 = vadd.f32 %v9897, %v9932
        %v9965 = vadd.f32 %v9898, %v9933
        %v9966 = vadd.f32 %v9899, %v9934
        %v9967 = vadd.f32 %v9900, %v9935
        %v9968 = vadd.f32 %v9901, %v9936
        %v9969 = vadd.f32 %v9902, %v9937
        %v9970 = vadd.f32 %v9903, %v9938
        %v9971 = vadd.f32 %v9904, %v9939
        %v9972 = vadd.f32 %v9905, %v9940
        %v9973 = vadd.f32 %v9906, %v9941
        %v9974 = vadd.f32 %v9907, %v9942
        %v9975 = vadd.f32 %v9908, %v9943
        %v9976 = vadd.f32 %v9909, %v9944
        %9977 = vrot.lane.b32.xlu0 %v9541, 16
        %v9978 = vpop.permute.xlu0 %9977
        %v9980 = vmul.f32 %v9347, %v9978
        %v9981 = vmul.f32 %v9348, %v9978
        %v9982 = vmul.f32 %v9349, %v9978
        %v9983 = vmul.f32 %v9350, %v9978
        %v9984 = vmul.f32 %v9351, %v9978
        %v9985 = vmul.f32 %v9352, %v9978
        %v9986 = vmul.f32 %v9353, %v9978
        %v9987 = vmul.f32 %v9354, %v9978
        %v9988 = vmul.f32 %v9355, %v9978
        %v9989 = vmul.f32 %v9356, %v9978
        %v9990 = vmul.f32 %v9357, %v9978
        %v9991 = vmul.f32 %v9358, %v9978
        %v9992 = vmul.f32 %v9359, %v9978
        %v9993 = vmul.f32 %v9360, %v9978
        %v9994 = vmul.f32 %v9361, %v9978
        %v9995 = vmul.f32 %v9362, %v9978
        %v9996 = vmul.f32 %v9363, %v9978
        %v9997 = vmul.f32 %v9364, %v9978
        %v9998 = vmul.f32 %v9365, %v9978
        %v9999 = vmul.f32 %v9366, %v9978
        %v10000 = vmul.f32 %v9367, %v9978
        %v10001 = vmul.f32 %v9368, %v9978
        %v10002 = vmul.f32 %v9369, %v9978
        %v10003 = vmul.f32 %v9370, %v9978
        %v10004 = vmul.f32 %v9371, %v9978
        %v10005 = vmul.f32 %v9372, %v9978
        %v10006 = vmul.f32 %v9373, %v9978
        %v10007 = vmul.f32 %v9374, %v9978
        %v10008 = vmul.f32 %v9375, %v9978
        %v10009 = vmul.f32 %v9376, %v9978
        %v10010 = vmul.f32 %v9377, %v9978
        %v10011 = vmul.f32 %v9378, %v9978
        %v10012 = vadd.f32 %v9945, %v9980
        %v10013 = vadd.f32 %v9946, %v9981
        %v10014 = vadd.f32 %v9947, %v9982
        %v10015 = vadd.f32 %v9948, %v9983
        %v10016 = vadd.f32 %v9949, %v9984
        %v10017 = vadd.f32 %v9950, %v9985
        %v10018 = vadd.f32 %v9951, %v9986
        %v10019 = vadd.f32 %v9952, %v9987
        %v10020 = vadd.f32 %v9953, %v9988
        %v10021 = vadd.f32 %v9954, %v9989
        %v10022 = vadd.f32 %v9955, %v9990
        %v10023 = vadd.f32 %v9956, %v9991
        %v10024 = vadd.f32 %v9957, %v9992
        %v10025 = vadd.f32 %v9958, %v9993
        %v10026 = vadd.f32 %v9959, %v9994
        %v10027 = vadd.f32 %v9960, %v9995
        %v10028 = vadd.f32 %v9961, %v9996
        %v10029 = vadd.f32 %v9962, %v9997
        %v10030 = vadd.f32 %v9963, %v9998
        %v10031 = vadd.f32 %v9964, %v9999
        %v10032 = vadd.f32 %v9965, %v10000
        %v10033 = vadd.f32 %v9966, %v10001
        %v10034 = vadd.f32 %v9967, %v10002
        %v10035 = vadd.f32 %v9968, %v10003
        %v10036 = vadd.f32 %v9969, %v10004
        %v10037 = vadd.f32 %v9970, %v10005
        %v10038 = vadd.f32 %v9971, %v10006
        %v10039 = vadd.f32 %v9972, %v10007
        %v10040 = vadd.f32 %v9973, %v10008
        %v10041 = vadd.f32 %v9974, %v10009
        %v10042 = vadd.f32 %v9975, %v10010
        %v10043 = vadd.f32 %v9976, %v10011
        %v10044 = vld [vmem:[%s11 + $0x1] sm:$0x1]
        %v10046 = vperm.slane %v10044, 0
        %v10048 = vmul.f32 %v9507, %v10046
        %v10049 = vmul.f32 %v9508, %v10046
        %v10050 = vmul.f32 %v9509, %v10046
        %v10051 = vmul.f32 %v9510, %v10046
        %v10052 = vmul.f32 %v9511, %v10046
        %v10053 = vmul.f32 %v9512, %v10046
        %v10054 = vmul.f32 %v9513, %v10046
        %v10055 = vmul.f32 %v9514, %v10046
        %v10056 = vmul.f32 %v9515, %v10046
        %v10057 = vmul.f32 %v9516, %v10046
        %v10058 = vmul.f32 %v9517, %v10046
        %v10059 = vmul.f32 %v9518, %v10046
        %v10060 = vmul.f32 %v9519, %v10046
        %v10061 = vmul.f32 %v9520, %v10046
        %v10062 = vmul.f32 %v9521, %v10046
        %v10063 = vmul.f32 %v9522, %v10046
        %v10064 = vmul.f32 %v9523, %v10046
        %v10065 = vmul.f32 %v9524, %v10046
        %v10066 = vmul.f32 %v9525, %v10046
        %v10067 = vmul.f32 %v9526, %v10046
        %v10068 = vmul.f32 %v9527, %v10046
        %v10069 = vmul.f32 %v9528, %v10046
        %v10070 = vmul.f32 %v9529, %v10046
        %v10071 = vmul.f32 %v9530, %v10046
        %v10072 = vmul.f32 %v9531, %v10046
        %v10073 = vmul.f32 %v9532, %v10046
        %v10074 = vmul.f32 %v9533, %v10046
        %v10075 = vmul.f32 %v9534, %v10046
        %v10076 = vmul.f32 %v9535, %v10046
        %v10077 = vmul.f32 %v9536, %v10046
        %v10078 = vmul.f32 %v9537, %v10046
        %v10079 = vmul.f32 %v9538, %v10046
        %v10080 = vadd.f32 %v10012, %v10048
        %v10081 = vadd.f32 %v10013, %v10049
        %v10082 = vadd.f32 %v10014, %v10050
        %v10083 = vadd.f32 %v10015, %v10051
        %v10084 = vadd.f32 %v10016, %v10052
        %v10085 = vadd.f32 %v10017, %v10053
        %v10086 = vadd.f32 %v10018, %v10054
        %v10087 = vadd.f32 %v10019, %v10055
        %v10088 = vadd.f32 %v10020, %v10056
        %v10089 = vadd.f32 %v10021, %v10057
        %v10090 = vadd.f32 %v10022, %v10058
        %v10091 = vadd.f32 %v10023, %v10059
        %v10092 = vadd.f32 %v10024, %v10060
        %v10093 = vadd.f32 %v10025, %v10061
        %v10094 = vadd.f32 %v10026, %v10062
        %v10095 = vadd.f32 %v10027, %v10063
        %v10096 = vadd.f32 %v10028, %v10064
        %v10097 = vadd.f32 %v10029, %v10065
        %v10098 = vadd.f32 %v10030, %v10066
        %v10099 = vadd.f32 %v10031, %v10067
        %v10100 = vadd.f32 %v10032, %v10068
        %v10101 = vadd.f32 %v10033, %v10069
        %v10102 = vadd.f32 %v10034, %v10070
        %v10103 = vadd.f32 %v10035, %v10071
        %v10104 = vadd.f32 %v10036, %v10072
        %v10105 = vadd.f32 %v10037, %v10073
        %v10106 = vadd.f32 %v10038, %v10074
        %v10107 = vadd.f32 %v10039, %v10075
        %v10108 = vadd.f32 %v10040, %v10076
        %v10109 = vadd.f32 %v10041, %v10077
        %v10110 = vadd.f32 %v10042, %v10078
        %v10111 = vadd.f32 %v10043, %v10079
        %v10112 = vsel %vm5071, %v10080, 0.0
        %10113 = vadd.xlane.f32.xlu0 %v10112
        %v10114 = vpop.xlane.xlu0 %10113
        %v10115 = vsel %vm5071, %v10081, 0.0
        %10116 = vadd.xlane.f32.xlu0 %v10115
        %v10117 = vpop.xlane.xlu0 %10116
        %v10118 = vsel %vm5071, %v10082, 0.0
        %10119 = vadd.xlane.f32.xlu0 %v10118
        %v10120 = vpop.xlane.xlu0 %10119
        %v10121 = vsel %vm5071, %v10083, 0.0
        %10122 = vadd.xlane.f32.xlu0 %v10121
        %v10123 = vpop.xlane.xlu0 %10122
        %v10124 = vsel %vm5071, %v10084, 0.0
        %10125 = vadd.xlane.f32.xlu0 %v10124
        %v10126 = vpop.xlane.xlu0 %10125
        %v10127 = vsel %vm5071, %v10085, 0.0
        %10128 = vadd.xlane.f32.xlu0 %v10127
        %v10129 = vpop.xlane.xlu0 %10128
        %v10130 = vsel %vm5071, %v10086, 0.0
        %10131 = vadd.xlane.f32.xlu0 %v10130
        %v10132 = vpop.xlane.xlu0 %10131
        %v10133 = vsel %vm5071, %v10087, 0.0
        %10134 = vadd.xlane.f32.xlu0 %v10133
        %v10135 = vpop.xlane.xlu0 %10134
        %v10136 = vsel %vm5071, %v10088, 0.0
        %10137 = vadd.xlane.f32.xlu0 %v10136
        %v10138 = vpop.xlane.xlu0 %10137
        %v10139 = vsel %vm5071, %v10089, 0.0
        %10140 = vadd.xlane.f32.xlu0 %v10139
        %v10141 = vpop.xlane.xlu0 %10140
        %v10142 = vsel %vm5071, %v10090, 0.0
        %10143 = vadd.xlane.f32.xlu0 %v10142
        %v10144 = vpop.xlane.xlu0 %10143
        %v10145 = vsel %vm5071, %v10091, 0.0
        %10146 = vadd.xlane.f32.xlu0 %v10145
        %v10147 = vpop.xlane.xlu0 %10146
        %v10148 = vsel %vm5071, %v10092, 0.0
        %10149 = vadd.xlane.f32.xlu0 %v10148
        %v10150 = vpop.xlane.xlu0 %10149
        %v10151 = vsel %vm5071, %v10093, 0.0
        %10152 = vadd.xlane.f32.xlu0 %v10151
        %v10153 = vpop.xlane.xlu0 %10152
        %v10154 = vsel %vm5071, %v10094, 0.0
        %10155 = vadd.xlane.f32.xlu0 %v10154
        %v10156 = vpop.xlane.xlu0 %10155
        %v10157 = vsel %vm5071, %v10095, 0.0
        %10158 = vadd.xlane.f32.xlu0 %v10157
        %v10159 = vpop.xlane.xlu0 %10158
        %v10160 = vsel %vm5071, %v10096, 0.0
        %10161 = vadd.xlane.f32.xlu0 %v10160
        %v10162 = vpop.xlane.xlu0 %10161
        %v10163 = vsel %vm5071, %v10097, 0.0
        %10164 = vadd.xlane.f32.xlu0 %v10163
        %v10165 = vpop.xlane.xlu0 %10164
        %v10166 = vsel %vm5071, %v10098, 0.0
        %10167 = vadd.xlane.f32.xlu0 %v10166
        %v10168 = vpop.xlane.xlu0 %10167
        %v10169 = vsel %vm5071, %v10099, 0.0
        %10170 = vadd.xlane.f32.xlu0 %v10169
        %v10171 = vpop.xlane.xlu0 %10170
        %v10172 = vsel %vm5071, %v10100, 0.0
        %10173 = vadd.xlane.f32.xlu0 %v10172
        %v10174 = vpop.xlane.xlu0 %10173
        %v10175 = vsel %vm5071, %v10101, 0.0
        %10176 = vadd.xlane.f32.xlu0 %v10175
        %v10177 = vpop.xlane.xlu0 %10176
        %v10178 = vsel %vm5071, %v10102, 0.0
        %10179 = vadd.xlane.f32.xlu0 %v10178
        %v10180 = vpop.xlane.xlu0 %10179
        %v10181 = vsel %vm5071, %v10103, 0.0
        %10182 = vadd.xlane.f32.xlu0 %v10181
        %v10183 = vpop.xlane.xlu0 %10182
        %v10184 = vsel %vm5071, %v10104, 0.0
        %10185 = vadd.xlane.f32.xlu0 %v10184
        %v10186 = vpop.xlane.xlu0 %10185
        %v10187 = vsel %vm5071, %v10105, 0.0
        %10188 = vadd.xlane.f32.xlu0 %v10187
        %v10189 = vpop.xlane.xlu0 %10188
        %v10190 = vsel %vm5071, %v10106, 0.0
        %10191 = vadd.xlane.f32.xlu0 %v10190
        %v10192 = vpop.xlane.xlu0 %10191
        %v10193 = vsel %vm5071, %v10107, 0.0
        %10194 = vadd.xlane.f32.xlu0 %v10193
        %v10195 = vpop.xlane.xlu0 %10194
        %v10196 = vsel %vm5071, %v10108, 0.0
        %10197 = vadd.xlane.f32.xlu0 %v10196
        %v10198 = vpop.xlane.xlu0 %10197
        %v10199 = vsel %vm5071, %v10109, 0.0
        %10200 = vadd.xlane.f32.xlu0 %v10199
        %v10201 = vpop.xlane.xlu0 %10200
        %v10202 = vsel %vm5071, %v10110, 0.0
        %10203 = vadd.xlane.f32.xlu0 %v10202
        %v10204 = vpop.xlane.xlu0 %10203
        %v10205 = vsel %vm5071, %v10111, 0.0
        %10206 = vadd.xlane.f32.xlu0 %v10205
        %v10207 = vpop.xlane.xlu0 %10206
        %v10208 = vld [vmem:[#allocation2] sm:$0x1]
        %v10210 = vperm.slane %v10208, 0
        %v10212 = vadd.f32 %v10114, %v10210
        %v10213 = vadd.f32 %v10117, %v10210
        %v10214 = vadd.f32 %v10120, %v10210
        %v10215 = vadd.f32 %v10123, %v10210
        %v10216 = vadd.f32 %v10126, %v10210
        %v10217 = vadd.f32 %v10129, %v10210
        %v10218 = vadd.f32 %v10132, %v10210
        %v10219 = vadd.f32 %v10135, %v10210
        %v10220 = vadd.f32 %v10138, %v10210
        %v10221 = vadd.f32 %v10141, %v10210
        %v10222 = vadd.f32 %v10144, %v10210
        %v10223 = vadd.f32 %v10147, %v10210
        %v10224 = vadd.f32 %v10150, %v10210
        %v10225 = vadd.f32 %v10153, %v10210
        %v10226 = vadd.f32 %v10156, %v10210
        %v10227 = vadd.f32 %v10159, %v10210
        %v10228 = vadd.f32 %v10162, %v10210
        %v10229 = vadd.f32 %v10165, %v10210
        %v10230 = vadd.f32 %v10168, %v10210
        %v10231 = vadd.f32 %v10171, %v10210
        %v10232 = vadd.f32 %v10174, %v10210
        %v10233 = vadd.f32 %v10177, %v10210
        %v10234 = vadd.f32 %v10180, %v10210
        %v10235 = vadd.f32 %v10183, %v10210
        %v10236 = vadd.f32 %v10186, %v10210
        %v10237 = vadd.f32 %v10189, %v10210
        %v10238 = vadd.f32 %v10192, %v10210
        %v10239 = vadd.f32 %v10195, %v10210
        %v10240 = vadd.f32 %v10198, %v10210
        %v10241 = vadd.f32 %v10201, %v10210
        %v10242 = vadd.f32 %v10204, %v10210
        %v10243 = vadd.f32 %v10207, %v10210
        %v10244 = vmax.f32 %v10212, -1.0
        %v10245 = vmax.f32 %v10213, -1.0
        %v10246 = vmax.f32 %v10214, -1.0
        %v10247 = vmax.f32 %v10215, -1.0
        %v10248 = vmax.f32 %v10216, -1.0
        %v10249 = vmax.f32 %v10217, -1.0
        %v10250 = vmax.f32 %v10218, -1.0
        %v10251 = vmax.f32 %v10219, -1.0
        %v10252 = vmax.f32 %v10220, -1.0
        %v10253 = vmax.f32 %v10221, -1.0
        %v10254 = vmax.f32 %v10222, -1.0
        %v10255 = vmax.f32 %v10223, -1.0
        %v10256 = vmax.f32 %v10224, -1.0
        %v10257 = vmax.f32 %v10225, -1.0
        %v10258 = vmax.f32 %v10226, -1.0
        %v10259 = vmax.f32 %v10227, -1.0
        %v10260 = vmax.f32 %v10228, -1.0
        %v10261 = vmax.f32 %v10229, -1.0
        %v10262 = vmax.f32 %v10230, -1.0
        %v10263 = vmax.f32 %v10231, -1.0
        %v10264 = vmax.f32 %v10232, -1.0
        %v10265 = vmax.f32 %v10233, -1.0
        %v10266 = vmax.f32 %v10234, -1.0
        %v10267 = vmax.f32 %v10235, -1.0
        %v10268 = vmax.f32 %v10236, -1.0
        %v10269 = vmax.f32 %v10237, -1.0
        %v10270 = vmax.f32 %v10238, -1.0
        %v10271 = vmax.f32 %v10239, -1.0
        %v10272 = vmax.f32 %v10240, -1.0
        %v10273 = vmax.f32 %v10241, -1.0
        %v10274 = vmax.f32 %v10242, -1.0
        %v10275 = vmax.f32 %v10243, -1.0
        %v10276 = vmin.f32 %v10244, 1.0
        %v10277 = vmin.f32 %v10245, 1.0
        %v10278 = vmin.f32 %v10246, 1.0
        %v10279 = vmin.f32 %v10247, 1.0
        %v10280 = vmin.f32 %v10248, 1.0
        %v10281 = vmin.f32 %v10249, 1.0
        %v10282 = vmin.f32 %v10250, 1.0
        %v10283 = vmin.f32 %v10251, 1.0
        %v10284 = vmin.f32 %v10252, 1.0
        %v10285 = vmin.f32 %v10253, 1.0
        %v10286 = vmin.f32 %v10254, 1.0
        %v10287 = vmin.f32 %v10255, 1.0
        %v10288 = vmin.f32 %v10256, 1.0
        %v10289 = vmin.f32 %v10257, 1.0
        %v10290 = vmin.f32 %v10258, 1.0
        %v10291 = vmin.f32 %v10259, 1.0
        %v10292 = vmin.f32 %v10260, 1.0
        %v10293 = vmin.f32 %v10261, 1.0
        %v10294 = vmin.f32 %v10262, 1.0
        %v10295 = vmin.f32 %v10263, 1.0
        %v10296 = vmin.f32 %v10264, 1.0
        %v10297 = vmin.f32 %v10265, 1.0
        %v10298 = vmin.f32 %v10266, 1.0
        %v10299 = vmin.f32 %v10267, 1.0
        %v10300 = vmin.f32 %v10268, 1.0
        %v10301 = vmin.f32 %v10269, 1.0
        %v10302 = vmin.f32 %v10270, 1.0
        %v10303 = vmin.f32 %v10271, 1.0
        %v10304 = vmin.f32 %v10272, 1.0
        %v10305 = vmin.f32 %v10273, 1.0
        %v10306 = vmin.f32 %v10274, 1.0
        %v10307 = vmin.f32 %v10275, 1.0
        %10308 = vst.msk [vmem:[%s733] sm:$0xff] %vm6172, %v10276
        %10309 = vst.msk [vmem:[%s733 + $0x8] sm:$0xff] %vm6172, %v10277
        %10310 = vst.msk [vmem:[%s733 + $0x10] sm:$0xff] %vm6172, %v10278
        %10311 = vst.msk [vmem:[%s733 + $0x18] sm:$0xff] %vm6172, %v10279
        %10312 = vst.msk [vmem:[%s733 + $0x20] sm:$0xff] %vm6172, %v10280
        %10313 = vst.msk [vmem:[%s733 + $0x28] sm:$0xff] %vm6172, %v10281
        %10314 = vst.msk [vmem:[%s733 + $0x30] sm:$0xff] %vm6172, %v10282
        %10315 = vst.msk [vmem:[%s733 + $0x38] sm:$0xff] %vm6172, %v10283
        %10316 = vst.msk [vmem:[%s733 + $0x40] sm:$0xff] %vm6172, %v10284
        %10317 = vst.msk [vmem:[%s733 + $0x48] sm:$0xff] %vm6172, %v10285
        %10318 = vst.msk [vmem:[%s733 + $0x50] sm:$0xff] %vm6172, %v10286
        %10319 = vst.msk [vmem:[%s733 + $0x58] sm:$0xff] %vm6172, %v10287
        %10320 = vst.msk [vmem:[%s733 + $0x60] sm:$0xff] %vm6172, %v10288
        %10321 = vst.msk [vmem:[%s733 + $0x68] sm:$0xff] %vm6172, %v10289
        %10322 = vst.msk [vmem:[%s733 + $0x70] sm:$0xff] %vm6172, %v10290
        %10323 = vst.msk [vmem:[%s733 + $0x78] sm:$0xff] %vm6172, %v10291
        %10324 = vst.msk [vmem:[%s733 + $0x80] sm:$0xff] %vm6172, %v10292
        %10325 = vst.msk [vmem:[%s733 + $0x88] sm:$0xff] %vm6172, %v10293
        %10326 = vst.msk [vmem:[%s733 + $0x90] sm:$0xff] %vm6172, %v10294
        %10327 = vst.msk [vmem:[%s733 + $0x98] sm:$0xff] %vm6172, %v10295
        %10328 = vst.msk [vmem:[%s733 + $0xa0] sm:$0xff] %vm6172, %v10296
        %10329 = vst.msk [vmem:[%s733 + $0xa8] sm:$0xff] %vm6172, %v10297
        %10330 = vst.msk [vmem:[%s733 + $0xb0] sm:$0xff] %vm6172, %v10298
        %10331 = vst.msk [vmem:[%s733 + $0xb8] sm:$0xff] %vm6172, %v10299
        %10332 = vst.msk [vmem:[%s733 + $0xc0] sm:$0xff] %vm6172, %v10300
        %10333 = vst.msk [vmem:[%s733 + $0xc8] sm:$0xff] %vm6172, %v10301
        %10334 = vst.msk [vmem:[%s733 + $0xd0] sm:$0xff] %vm6172, %v10302
        %10335 = vst.msk [vmem:[%s733 + $0xd8] sm:$0xff] %vm6172, %v10303
        %10336 = vst.msk [vmem:[%s733 + $0xe0] sm:$0xff] %vm6172, %v10304
        %10337 = vst.msk [vmem:[%s733 + $0xe8] sm:$0xff] %vm6172, %v10305
        %10338 = vst.msk [vmem:[%s733 + $0xf0] sm:$0xff] %vm6172, %v10306
        %10339 = vst.msk [vmem:[%s733 + $0xf8] sm:$0xff] %vm6172, %v10307
        %p10340 = scmp.lt.s32.totalorder %s38, 1
        %s10341 = scalar_select %p10340, %s38, 1
        %s10342 = smul.addr %s10341, 32
        %s10343 = smul.addr %s10342, 8
        %s10344 = scalar_lea.vmem %s20, %s10343
        %p10345 = scmp.lt.s32.totalorder %s38, 1
        %s10346 = scalar_select %p10345, %s38, 1
        %s10347 = smul.addr %s10346, 2
        %s10348 = smul.addr %s10347, 8
        %s10349 = scalar_lea.vmem %s21, %s10348
        // Predicated region
        $region117: #{lfq_autoencoder_forward.1} parent=99 // pred_check
          %p10350 = pneg %p481
        $region118: #{lfq_autoencoder_forward.1} parent=99 // pred_check_branch
          %10352 = sbr.rel (%p10350) target = $region120
        $region119: #{lfq_autoencoder_forward.1} parent=99 // pred_region
          _
        $region120: #{lfq_autoencoder_forward.1} parent=99 // pred_fallthru
          _
        // Predicated region
        $region121: #{lfq_autoencoder_forward.1} parent=99 // pred_check
          %p10353 = pneg %p507
        $region122: #{lfq_autoencoder_forward.1} parent=99 // pred_check_branch
          %10355 = sbr.rel (%p10353) target = $region124
        $region123: #{lfq_autoencoder_forward.1} parent=99 // pred_region
          _
        $region124: #{lfq_autoencoder_forward.1} parent=99 // pred_fallthru
          _
      $region100: #{lfq_autoencoder_forward.1} parent=5 // pred_fallthru
        _
      %p10356 = scmp.le.s32.totalorder 2, %s33
      // Predicated region
      $region125: #{lfq_autoencoder_forward.1} parent=5 // pred_check
        %p10357 = pneg %p10356
      $region126: #{lfq_autoencoder_forward.1} parent=5 // pred_check_branch
        %10359 = sbr.rel (%p10357) target = $region128
      $region127: #{lfq_autoencoder_forward.1} parent=5 // pred_region
        %s10360 = ssub.s32 %s33, 2
        // Predicated region
        $region129: #{lfq_autoencoder_forward.1} parent=127 // pred_check
          %p10361 = pneg %p487
        $region130: #{lfq_autoencoder_forward.1} parent=127 // pred_check_branch
          %10363 = sbr.rel (%p10361) target = $region132
        $region131: #{lfq_autoencoder_forward.1} parent=127 // pred_region
          %p10364 = scmp.lt.s32.totalorder %s39, 1
          %s10365 = scalar_select %p10364, %s39, 1
          %s10366 = smul.addr %s10365, 32
          %s10367 = smul.addr %s10366, 8
          %s10368 = scalar_lea.vmem %s20, %s10367
        $region132: #{lfq_autoencoder_forward.1} parent=127 // pred_fallthru
          _
        // Predicated region
        $region133: #{lfq_autoencoder_forward.1} parent=127 // pred_check
          %p10369 = pneg %p513
        $region134: #{lfq_autoencoder_forward.1} parent=127 // pred_check_branch
          %10371 = sbr.rel (%p10369) target = $region136
        $region135: #{lfq_autoencoder_forward.1} parent=127 // pred_region
          %p10372 = scmp.lt.s32.totalorder %s39, 1
          %s10373 = scalar_select %p10372, %s39, 1
          %s10374 = smul.addr %s10373, 2
          %s10375 = smul.addr %s10374, 8
          %s10376 = scalar_lea.vmem %s21, %s10375
        $region136: #{lfq_autoencoder_forward.1} parent=127 // pred_fallthru
          _
      $region128: #{lfq_autoencoder_forward.1} parent=5 // pred_fallthru
        _
    $region6: #{lfq_autoencoder_forward.1} parent=1 // loop_footer
      %s37 = sadd.s32 1, %s33
    $region7: #{lfq_autoencoder_forward.1} parent=1 // loop_footer_branch
      %32 = sbr.rel target = $region3
    $region8: #{lfq_autoencoder_forward.1} parent=1 // loop_exit
      _
    %10377 = vsyncpa [#allocation4], 1
    %s10378 = scalar_lea.sflag [#allocation4], 1
    %10379 = vsyncpa %s10378, 1
    %10380 = vsyncpa [#allocation6], 1
    %10381 = vsyncpa [#allocation9], 1

</llo_original>
